<compile_context>
chip_gen: v7x
topology: tpu7x:2x2x1
jax: 0.10.0
libtpu: 0.0.40
codegen_flags: <defaults>
</compile_context>

<pallas_src>
import functools

import jax
import jax.numpy as jnp
from jax.experimental import pallas as pl
from jax.experimental.pallas import tpu as pltpu


# ----------------------------------------------------------------------------
# Static helpers
# ----------------------------------------------------------------------------
def _vmem_budget_bytes():
    """Generation-aware VMEM budget (v5e/v6e: 128 MiB phys, v7x: 64 MiB)."""
    cap = 64 * 1024 * 1024                      # conservative fallback (v7x)
    try:
        cap = int(pltpu.get_tpu_info().vmem_capacity_bytes)
    except Exception:
        pass
    return max(32 * 1024 * 1024, min(cap * 3 // 4, 56 * 1024 * 1024))


_VMEM_LIMIT = _vmem_budget_bytes()


def _round_up(n, m):
    return ((n + m - 1) // m) * m


def _divisors_mult8(n, cap):
    """Multiples of 8 that divide n (n itself is a multiple of 8), up to cap."""
    ds = [d for d in range(8, min(n, cap) + 1, 8) if n % d == 0]
    return ds if ds else [8]


def _plan_fused(b_p, t_pad, d_in, h_p, o_p, num_layers, w_bytes):
    """Batch-block size for the single-kernel fast path, or None if too big."""
    if t_pad > 64:                              # bound the static unroll
        return None
    if b_p <= 8:
        b_blk = b_p
    else:                                       # >= 2 blocks: megacore can engage
        b_blk = _divisors_mult8(b_p, max(8, b_p // 2))[-1]
    d_max = max(d_in, h_p)
    est = (2 * b_blk * t_pad * d_max * 4                       # input block (dbuf)
           + b_blk * t_pad * h_p * 4                           # seq scratch
           + b_blk * t_pad * 4 * h_p * 4                       # gate scratch
           + 2 * num_layers * (d_max + h_p + 1) * 4 * h_p * w_bytes
           + 2 * (h_p + 1) * o_p * 4
           + 4 * b_blk * (h_p + o_p))
    if est > _VMEM_LIMIT * 2 // 5:
        return None
    return b_blk


def _plan_general(b_p, t_pad, d_in, h_p, w_bytes):
    """(b_blk, tc) for the per-layer path, shrunk to the VMEM budget."""
    tcs = _divisors_mult8(t_pad, 64)
    if b_p <= 8:
        bbs = [b_p]
    else:                                       # split batch once B_p >= 16
        bbs = _divisors_mult8(b_p, min(128, max(8, b_p // 2)))
    d_max = max(d_in, h_p)

    def est(bb, tc):
        return (2 * bb * tc * d_max * 4                        # in block (dbuf)
                + 2 * bb * tc * h_p * 4                        # out block (dbuf)
                + bb * tc * 4 * h_p * 4                        # gate scratch
                + 2 * (d_max + h_p + 1) * 4 * h_p * w_bytes    # weights (dbuf)
                + 4 * bb * h_p * 4)

    bi, ti = len(bbs) - 1, len(tcs) - 1
    while est(bbs[bi], tcs[ti]) > _VMEM_LIMIT * 3 // 5 and (bi > 0 or ti > 0):
        if ti > 0:
            ti -= 1
        else:
            bi -= 1
    return bbs[bi], tcs[ti]


# ----------------------------------------------------------------------------
# In-kernel cell math
# ----------------------------------------------------------------------------
def _lstm_gates(g, c, hidden_p):
    """Elementwise LSTM update from pre-activations g=(b, 4H); gates consumed
    eagerly to keep peak vreg pressure low."""
    f = jax.nn.sigmoid(g[:, hidden_p:2 * hidden_p])
    c = f * c
    i = jax.nn.sigmoid(g[:, 0:hidden_p])
    gg = jnp.tanh(g[:, 2 * hidden_p:3 * hidden_p])
    c = c + i * gg
    o = jax.nn.sigmoid(g[:, 3 * hidden_p:4 * hidden_p])
    h = o * jnp.tanh(c)
    return h, c


# ----------------------------------------------------------------------------
# Pallas kernels
# ----------------------------------------------------------------------------
def _layer_seq_kernel(x_ref, w_ih_ref, w_hh_ref, b_ref, out_ref,
                      gx_sc, h_sc, c_sc, *, hidden_p, tc, b_blk, in_dim,
                      t_real, t_pad):
    """One (non-final) LSTM layer over one (batch block, time chunk).

    The x @ W_ih projection for the whole chunk is a single MXU matmul (off the
    serial h-chain); only h @ W_hh + gate math sits on the time chain.  The
    recurrent state is carried across the innermost ('arbitrary') time axis.
    """
    @pl.when(pl.program_id(1) == 0)
    def _():
        h_sc[...] = jnp.zeros_like(h_sc)
        c_sc[...] = jnp.zeros_like(c_sc)

    w_ih = w_ih_ref[...]
    w_hh = w_hh_ref[...]

    x2 = x_ref[...].astype(jnp.float32).reshape(b_blk * tc, in_dim)
    gx = jnp.dot(x2.astype(w_ih.dtype), w_ih,
                 preferred_element_type=jnp.float32) + b_ref[...]
    gx_sc[...] = gx.reshape(b_blk, tc, 4 * hidden_p)

    h = h_sc[...]
    c = c_sc[...]
    h_mm = h.astype(w_hh.dtype)
    for i in range(tc):                          # static unroll over the chunk
        g = gx_sc[:, i, :] + jnp.dot(h_mm, w_hh,
                                     preferred_element_type=jnp.float32)
        h_new, c_new = _lstm_gates(g, c, hidden_p)
        if t_pad != t_real:                      # freeze state on padded steps
            t_idx = pl.program_id(1) * tc + i
            valid = jnp.full((b_blk, hidden_p), t_idx, jnp.int32) < t_real
            h = jnp.where(valid, h_new, h)
            c = jnp.where(valid, c_new, c)
        else:
            h, c = h_new, c_new
        h_mm = h.astype(w_hh.dtype)
        out_ref[:, i, :] = h.astype(out_ref.dtype)
    h_sc[...] = h
    c_sc[...] = c


def _layer_last_kernel(x_ref, w_ih_ref, w_hh_ref, b_ref, lin_w_ref, lin_b_ref,
                       h_out_ref, y_out_ref, gx_sc, h_sc, c_sc, *,
                       hidden_p, tc, b_blk, in_dim, t_real, t_pad):
    """Final LSTM layer + fused Linear.  No per-step HBM writeback: only h_{T-1}
    and the logits are emitted once, under pl.when(last time chunk)."""
    @pl.when(pl.program_id(1) == 0)
    def _():
        h_sc[...] = jnp.zeros_like(h_sc)
        c_sc[...] = jnp.zeros_like(c_sc)

    w_ih = w_ih_ref[...]
    w_hh = w_hh_ref[...]

    x2 = x_ref[...].astype(jnp.float32).reshape(b_blk * tc, in_dim)
    gx = jnp.dot(x2.astype(w_ih.dtype), w_ih,
                 preferred_element_type=jnp.float32) + b_ref[...]
    gx_sc[...] = gx.reshape(b_blk, tc, 4 * hidden_p)

    h = h_sc[...]
    c = c_sc[...]
    h_mm = h.astype(w_hh.dtype)
    for i in range(tc):
        g = gx_sc[:, i, :] + jnp.dot(h_mm, w_hh,
                                     preferred_element_type=jnp.float32)
        h_new, c_new = _lstm_gates(g, c, hidden_p)
        if t_pad != t_real:
            t_idx = pl.program_id(1) * tc + i
            valid = jnp.full((b_blk, hidden_p), t_idx, jnp.int32) < t_real
            h = jnp.where(valid, h_new, h)
            c = jnp.where(valid, c_new, c)
        else:
            h, c = h_new, c_new
        h_mm = h.astype(w_hh.dtype)
    h_sc[...] = h
    c_sc[...] = c

    @pl.when(pl.program_id(1) == pl.num_programs(1) - 1)
    def _():
        h_out_ref[...] = h.astype(h_out_ref.dtype)
        y = jnp.dot(h.astype(lin_w_ref.dtype), lin_w_ref[...],
                    preferred_element_type=jnp.float32) + lin_b_ref[...]
        y_out_ref[...] = y.astype(y_out_ref.dtype)


def _fused_kernel(*refs, num_layers, hidden_p, t_pad, t_real, b_blk, in_dim):
    """All LSTM layers + final Linear in one pallas_call (small-shape fast path).

    refs = [x, (w_ih, w_hh, b) * L, lin_w, lin_b, h_out, y_out, seq_sc, gx_sc].
    The inter-layer hidden sequence lives entirely in VMEM scratch; only h_{T-1}
    and the logits ever reach HBM.
    """
    x_ref = refs[0]
    lw = refs[1:1 + 3 * num_layers]
    lin_w_ref = refs[1 + 3 * num_layers]
    lin_b_ref = refs[2 + 3 * num_layers]
    h_out_ref = refs[3 + 3 * num_layers]
    y_out_ref = refs[4 + 3 * num_layers]
    seq_sc = refs[5 + 3 * num_layers]
    gx_sc = refs[6 + 3 * num_layers]

    if t_pad != t_real and num_layers > 1:
        seq_sc[...] = jnp.zeros_like(seq_sc)     # keep padded rows defined

    h = None
    for layer in range(num_layers):
        w_ih = lw[3 * layer][...]
        w_hh = lw[3 * layer + 1][...]
        bias = lw[3 * layer + 2][...]
        if layer == 0:
            x2 = x_ref[...].astype(jnp.float32).reshape(b_blk * t_pad, in_dim)
        else:
            x2 = seq_sc[...].reshape(b_blk * t_pad, hidden_p)
        gx = jnp.dot(x2.astype(w_ih.dtype), w_ih,
                     preferred_element_type=jnp.float32) + bias
        gx_sc[...] = gx.reshape(b_blk, t_pad, 4 * hidden_p)

        h = jnp.zeros((b_blk, hidden_p), jnp.float32)
        c = jnp.zeros((b_blk, hidden_p), jnp.float32)
        h_mm = h.astype(w_hh.dtype)
        last = layer == num_layers - 1
        for i in range(t_real):                  # padded steps skipped statically
            g = gx_sc[:, i, :] + jnp.dot(h_mm, w_hh,
                                         preferred_element_type=jnp.float32)
            h, c = _lstm_gates(g, c, hidden_p)
            h_mm = h.astype(w_hh.dtype)
            if not last:
                seq_sc[:, i, :] = h              # safe in-place: row i read first

    h_out_ref[...] = h.astype(h_out_ref.dtype)
    y = jnp.dot(h.astype(lin_w_ref.dtype), lin_w_ref[...],
                preferred_element_type=jnp.float32) + lin_b_ref[...]
    y_out_ref[...] = y.astype(y_out_ref.dtype)


# ----------------------------------------------------------------------------
# pallas_call wrappers
# ----------------------------------------------------------------------------
def _run_layer(x_seq, w_ih, w_hh, bias, *, tc, b_blk, t_real, out_dtype):
    b_p, t_pad, d = x_seq.shape
    h_p = w_hh.shape[0]
    g4 = 4 * h_p
    grid = (b_p // b_blk, t_pad // tc)
    kernel = functools.partial(_layer_seq_kernel, hidden_p=h_p, tc=tc,
                               b_blk=b_blk, in_dim=d, t_real=t_real, t_pad=t_pad)
    return pl.pallas_call(
        kernel,
        out_shape=jax.ShapeDtypeStruct((b_p, t_pad, h_p), out_dtype),
        grid_spec=pltpu.PrefetchScalarGridSpec(
            num_scalar_prefetch=0,
            grid=grid,
            in_specs=[
                pl.BlockSpec((b_blk, tc, d), lambda nb, c: (nb, c, 0)),
                pl.BlockSpec((d, g4), lambda nb, c: (0, 0)),
                pl.BlockSpec((h_p, g4), lambda nb, c: (0, 0)),
                pl.BlockSpec((1, g4), lambda nb, c: (0, 0)),
            ],
            out_specs=pl.BlockSpec((b_blk, tc, h_p), lambda nb, c: (nb, c, 0)),
            scratch_shapes=[pltpu.VMEM((b_blk, tc, g4), jnp.float32),
                            pltpu.VMEM((b_blk, h_p), jnp.float32),
                            pltpu.VMEM((b_blk, h_p), jnp.float32)],
        ),
        compiler_params=pltpu.CompilerParams(
            dimension_semantics=("parallel", "arbitrary"),
            vmem_limit_bytes=_VMEM_LIMIT),
    )(x_seq, w_ih, w_hh, bias)


def _run_last_layer(x_seq, w_ih, w_hh, bias, lin_w, lin_b, *, tc, b_blk, t_real):
    b_p, t_pad, d = x_seq.shape
    h_p = w_hh.shape[0]
    g4 = 4 * h_p
    o_p = lin_w.shape[1]
    grid = (b_p // b_blk, t_pad // tc)
    kernel = functools.partial(_layer_last_kernel, hidden_p=h_p, tc=tc,
                               b_blk=b_blk, in_dim=d, t_real=t_real, t_pad=t_pad)
    return pl.pallas_call(
        kernel,
        out_shape=(jax.ShapeDtypeStruct((b_p, h_p), jnp.float32),
                   jax.ShapeDtypeStruct((b_p, o_p), jnp.float32)),
        grid_spec=pltpu.PrefetchScalarGridSpec(
            num_scalar_prefetch=0,
            grid=grid,
            in_specs=[
                pl.BlockSpec((b_blk, tc, d), lambda nb, c: (nb, c, 0)),
                pl.BlockSpec((d, g4), lambda nb, c: (0, 0)),
                pl.BlockSpec((h_p, g4), lambda nb, c: (0, 0)),
                pl.BlockSpec((1, g4), lambda nb, c: (0, 0)),
                pl.BlockSpec((h_p, o_p), lambda nb, c: (0, 0)),
                pl.BlockSpec((1, o_p), lambda nb, c: (0, 0)),
            ],
            out_specs=(pl.BlockSpec((b_blk, h_p), lambda nb, c: (nb, 0)),
                       pl.BlockSpec((b_blk, o_p), lambda nb, c: (nb, 0))),
            scratch_shapes=[pltpu.VMEM((b_blk, tc, g4), jnp.float32),
                            pltpu.VMEM((b_blk, h_p), jnp.float32),
                            pltpu.VMEM((b_blk, h_p), jnp.float32)],
        ),
        compiler_params=pltpu.CompilerParams(
            dimension_semantics=("parallel", "arbitrary"),
            vmem_limit_bytes=_VMEM_LIMIT),
    )(x_seq, w_ih, w_hh, bias, lin_w, lin_b)


def _run_fused(x, layer_params, lin_w, lin_b, *, b_blk, t_real):
    b_p, t_pad, d = x.shape
    num_layers = len(layer_params)
    h_p = layer_params[0][1].shape[0]
    g4 = 4 * h_p
    o_p = lin_w.shape[1]
    kernel = functools.partial(_fused_kernel, num_layers=num_layers, hidden_p=h_p,
                               t_pad=t_pad, t_real=t_real, b_blk=b_blk, in_dim=d)
    in_specs = [pl.BlockSpec((b_blk, t_pad, d), lambda nb: (nb, 0, 0))]
    args = [x]
    for (w_ih, w_hh, bias) in layer_params:
        d_l = w_ih.shape[0]
        in_specs += [pl.BlockSpec((d_l, g4), lambda nb: (0, 0)),
                     pl.BlockSpec((h_p, g4), lambda nb: (0, 0)),
                     pl.BlockSpec((1, g4), lambda nb: (0, 0))]
        args += [w_ih, w_hh, bias]
    in_specs += [pl.BlockSpec((h_p, o_p), lambda nb: (0, 0)),
                 pl.BlockSpec((1, o_p), lambda nb: (0, 0))]
    args += [lin_w, lin_b]
    return pl.pallas_call(
        kernel,
        out_shape=(jax.ShapeDtypeStruct((b_p, h_p), jnp.float32),
                   jax.ShapeDtypeStruct((b_p, o_p), jnp.float32)),
        grid_spec=pltpu.PrefetchScalarGridSpec(
            num_scalar_prefetch=0,
            grid=(b_p // b_blk,),
            in_specs=in_specs,
            out_specs=(pl.BlockSpec((b_blk, h_p), lambda nb: (nb, 0)),
                       pl.BlockSpec((b_blk, o_p), lambda nb: (nb, 0))),
            scratch_shapes=[pltpu.VMEM((b_blk, t_pad, h_p), jnp.float32),
                            pltpu.VMEM((b_blk, t_pad, g4), jnp.float32)],
        ),
        compiler_params=pltpu.CompilerParams(
            dimension_semantics=("parallel",),
            vmem_limit_bytes=_VMEM_LIMIT),
    )(*args)


# ----------------------------------------------------------------------------
# Forward pass (matches LSTMs.forward semantics)
# ----------------------------------------------------------------------------
@functools.partial(jax.jit, static_argnames=("hidden_dim", "out_dim", "force_general"))
def lstms_forward(x, params, *, hidden_dim, out_dim, force_general=False):
    """x: (B, T, input_dim) batch-first. Returns (out[:, -1, :].squeeze(), linear(.))."""
    b, t, d = x.shape
    b_p = _round_up(b, 8)
    t_pad = _round_up(t, 8)
    x_p = x.astype(jnp.float32)
    if (b_p, t_pad) != (b, t):
        x_p = jnp.pad(x_p, ((0, b_p - b), (0, t_pad - t), (0, 0)))

    layer_params = params["lstm"]
    num_layers = len(layer_params)
    w_dtype = layer_params[0][0].dtype
    w_bytes = jnp.dtype(w_dtype).itemsize
    h_p = layer_params[0][1].shape[0]
    o_p = params["lin_w"].shape[1]
    handoff_dtype = jnp.bfloat16 if w_dtype == jnp.bfloat16 else jnp.float32

    fused_b_blk = None if force_general else _plan_fused(
        b_p, t_pad, d, h_p, o_p, num_layers, w_bytes)

    if fused_b_blk is not None:
        h_last_p, logits_p = _run_fused(
            x_p, layer_params, params["lin_w"], params["lin_b"],
            b_blk=fused_b_blk, t_real=t)
    else:
        b_blk, tc = _plan_general(b_p, t_pad, d, h_p, w_bytes)
        h_seq = x_p
        for (w_ih, w_hh, bias) in layer_params[:-1]:
            h_seq = _run_layer(h_seq, w_ih, w_hh, bias, tc=tc, b_blk=b_blk,
                               t_real=t, out_dtype=handoff_dtype)
        w_ih, w_hh, bias = layer_params[-1]
        h_last_p, logits_p = _run_last_layer(
            h_seq, w_ih, w_hh, bias, params["lin_w"], params["lin_b"],
            tc=tc, b_blk=b_blk, t_real=t)

    last_hidden_out = jnp.squeeze(h_last_p[:b, :hidden_dim])     # out[:, -1, :].squeeze()
    logits = logits_p[:b, :out_dim]
    if last_hidden_out.ndim == 1:
        logits = jnp.squeeze(logits)
    return last_hidden_out, logits


# ----------------------------------------------------------------------------
# Parameters: PyTorch-style raw init + padded/transposed kernel layout
# ----------------------------------------------------------------------------
def init_raw_params(key, input_dim, hidden_dim, out_dim, layers):
    """PyTorch-layout params with uniform(-1/sqrt(H), 1/sqrt(H)) init."""
    k = 1.0 / (hidden_dim ** 0.5)
    raw = {"lstm": []}
    for layer in range(layers):
        in_dim = input_dim if layer == 0 else hidden_dim
        key, k1, k2, k3, k4 = jax.random.split(key, 5)
        w_ih = jax.random.uniform(k1, (4 * hidden_dim, in_dim), minval=-k, maxval=k)
        w_hh = jax.random.uniform(k2, (4 * hidden_dim, hidden_dim), minval=-k, maxval=k)
        b_ih = jax.random.uniform(k3, (4 * hidden_dim,), minval=-k, maxval=k)
        b_hh = jax.random.uniform(k4, (4 * hidden_dim,), minval=-k, maxval=k)
        raw["lstm"].append((w_ih, w_hh, b_ih, b_hh))
    key, k1, k2 = jax.random.split(key, 3)
    raw["lin_w"] = jax.random.uniform(k1, (out_dim, hidden_dim), minval=-k, maxval=k)
    raw["lin_b"] = jax.random.uniform(k2, (out_dim,), minval=-k, maxval=k)
    return raw


def _pad_gate_cols(w, hidden, hidden_p):
    """(rows, 4*H) -> (rows, 4*H_p): zero-pad each (i, f, g, o) gate block to H_p."""
    rows = w.shape[0]
    w = w.reshape(rows, 4, hidden)
    w = jnp.pad(w, ((0, 0), (0, 0), (0, hidden_p - hidden)))
    return w.reshape(rows, 4 * hidden_p)


def prepare_params(raw, weight_dtype=jnp.float32):
    """Transpose + zero-pad params into the kernel layout.

    Hidden/out dims padded to multiples of 128 so every gate slice and store is a
    full 128-lane tile; zero-padded weights/bias keep padded hidden units at 0.
    bf16 weights are fine on every generation (v5e/v6e/v7x MXU is bf16); bias,
    cell state and all accumulation stay f32.
    """
    hidden = raw["lstm"][0][1].shape[1]
    out_dim = raw["lin_w"].shape[0]
    hidden_p = _round_up(hidden, 128)
    out_p = _round_up(out_dim, 128)

    params = {"lstm": []}
    for layer, (w_ih, w_hh, b_ih, b_hh) in enumerate(raw["lstm"]):
        w_ih_t = w_ih.T.astype(jnp.float32)                     # (in_dim, 4H)
        w_hh_t = w_hh.T.astype(jnp.float32)                     # (H, 4H)
        if layer > 0:
            w_ih_t = jnp.pad(w_ih_t, ((0, hidden_p - hidden), (0, 0)))
        w_hh_t = jnp.pad(w_hh_t, ((0, hidden_p - hidden), (0, 0)))
        w_ih_t = _pad_gate_cols(w_ih_t, hidden, hidden_p).astype(weight_dtype)
        w_hh_t = _pad_gate_cols(w_hh_t, hidden, hidden_p).astype(weight_dtype)
        bias = _pad_gate_cols((b_ih + b_hh).astype(jnp.float32)[None, :],
                              hidden, hidden_p)
        params["lstm"].append((w_ih_t, w_hh_t, bias))

    lin_w = raw["lin_w"].T.astype(jnp.float32)                  # (H, O)
    lin_w = jnp.pad(lin_w, ((0, hidden_p - hidden), (0, out_p - out_dim)))
    params["lin_w"] = lin_w.astype(weight_dtype)
    params["lin_b"] = jnp.pad(raw["lin_b"].astype(jnp.float32),
                              (0, out_p - out_dim))[None, :]
    return params


# ----------------------------------------------------------------------------
# Pure-JAX reference (PyTorch semantics)
# ----------------------------------------------------------------------------
def lstms_reference(x, raw):
    b = x.shape[0]
    h_seq = jnp.transpose(x, (1, 0, 2)).astype(jnp.float32)     # (T, B, D)
    for (w_ih, w_hh, b_ih, b_hh) in raw["lstm"]:
        hdim = w_hh.shape[1]
        w_ih_t, w_hh_t = w_ih.T, w_hh.T
        bias = (b_ih + b_hh)[None, :]
        h = jnp.zeros((b, hdim), jnp.float32)
        c = jnp.zeros((b, hdim), jnp.float32)
        outs = []
        for t in range(h_seq.shape[0]):
            gates = h_seq[t] @ w_ih_t + h @ w_hh_t + bias
            i = jax.nn.sigmoid(gates[:, 0 * hdim:1 * hdim])
            f = jax.nn.sigmoid(gates[:, 1 * hdim:2 * hdim])
            g = jnp.tanh(gates[:, 2 * hdim:3 * hdim])
            o = jax.nn.sigmoid(gates[:, 3 * hdim:4 * hdim])
            c = f * c + i * g
            h = o * jnp.tanh(c)
            outs.append(h)
        h_seq = jnp.stack(outs, axis=0)
    last = jnp.squeeze(h_seq[-1])
    logits = h_seq[-1] @ raw["lin_w"].T + raw["lin_b"][None, :]
    if last.ndim == 1:
        logits = jnp.squeeze(logits)
    return last, logits


# ----------------------------------------------------------------------------
if __name__ == "__main__":
    B, T, INPUT_DIM, HIDDEN_DIM, OUT_DIM, LAYERS = 2, 8, 16, 32, 4, 2

    key = jax.random.PRNGKey(0)
    key, kx, kx2 = jax.random.split(key, 3)
    x = jax.random.normal(kx, (B, T, INPUT_DIM), dtype=jnp.float32)
    raw = init_raw_params(key, INPUT_DIM, HIDDEN_DIM, OUT_DIM, LAYERS)
    ref_last, ref_logits = lstms_reference(x, raw)

    params_f32 = prepare_params(raw, weight_dtype=jnp.float32)

    # 1) Fully fused single-kernel path (auto-selected at these small shapes).
    last_f, log_f = lstms_forward(x, params_f32, hidden_dim=HIDDEN_DIM, out_dim=OUT_DIM)
    jax.block_until_ready((last_f, log_f))
    assert last_f.shape == ref_last.shape
    assert jnp.allclose(last_f, ref_last, rtol=1e-3, atol=1e-3)
    assert jnp.allclose(jnp.squeeze(log_f), jnp.squeeze(ref_logits), rtol=1e-3, atol=1e-3)

    # 2) General per-layer path (projection fused into the recurrence; no gx in HBM).
    last_g, log_g = lstms_forward(x, params_f32, hidden_dim=HIDDEN_DIM,
                                  out_dim=OUT_DIM, force_general=True)
    jax.block_until_ready((last_g, log_g))
    assert jnp.allclose(last_g, ref_last, rtol=1e-3, atol=1e-3)
    assert jnp.allclose(jnp.squeeze(log_g), jnp.squeeze(ref_logits), rtol=1e-3, atol=1e-3)

    # 3) Ragged sequence length (T=6, not a multiple of 8): exercises time padding
    #    with state-freezing masks on the padded steps.
    x2 = jax.random.normal(kx2, (B, 6, INPUT_DIM), dtype=jnp.float32)
    ref2_last, ref2_logits = lstms_reference(x2, raw)
    last2, log2 = lstms_forward(x2, params_f32, hidden_dim=HIDDEN_DIM,
                                out_dim=OUT_DIM, force_general=True)
    jax.block_until_ready((last2, log2))
    assert jnp.allclose(last2, ref2_last, rtol=1e-3, atol=1e-3)
    assert jnp.allclose(jnp.squeeze(log2), jnp.squeeze(ref2_logits), rtol=1e-3, atol=1e-3)

    # 4) bf16 weights + bf16 inter-layer hand-off (recommended on all generations).
    params_bf16 = prepare_params(raw, weight_dtype=jnp.bfloat16)
    last_b, log_b = lstms_forward(x, params_bf16, hidden_dim=HIDDEN_DIM,
                                  out_dim=OUT_DIM, force_general=True)
    jax.block_until_ready((last_b, log_b))
    assert jnp.allclose(last_b, ref_last, rtol=1e-1, atol=1e-1)
    assert jnp.allclose(jnp.squeeze(log_b), jnp.squeeze(ref_logits), rtol=1e-1, atol=1e-1)

    print("KERNEL_OK")
</pallas_src>

<mosaic_0001>
module attributes {stable_mosaic.version = 11 : i64} {
  func.func @_fused_kernel(%arg0: i32, %arg1: memref<8x8x16xf32, #tpu.memory_space<vmem>>, %arg2: memref<16x512xf32, #tpu.memory_space<vmem>>, %arg3: memref<128x512xf32, #tpu.memory_space<vmem>>, %arg4: memref<1x512xf32, #tpu.memory_space<vmem>>, %arg5: memref<128x512xf32, #tpu.memory_space<vmem>>, %arg6: memref<128x512xf32, #tpu.memory_space<vmem>>, %arg7: memref<1x512xf32, #tpu.memory_space<vmem>>, %arg8: memref<128x128xf32, #tpu.memory_space<vmem>>, %arg9: memref<1x128xf32, #tpu.memory_space<vmem>>, %arg10: memref<8x128xf32, #tpu.memory_space<vmem>>, %arg11: memref<8x128xf32, #tpu.memory_space<vmem>>, %arg12: memref<8x8x128xf32, #tpu.memory_space<vmem>>, %arg13: memref<8x8x512xf32, #tpu.memory_space<vmem>>) attributes {dimension_semantics = [#tpu.dimension_semantics<parallel>], iteration_bounds = array<i64: 1>, scalar_prefetch = 0 : i64, scratch_operands = 2 : i64, tpu.core_type = #tpu.core_type<tc>, window_params = [{transform_indices = @transform_0, window_bounds = array<i64: 8, 8, 16>}, {pipeline_mode = #tpu.pipeline_mode<synchronous>, transform_indices = @transform_1, window_bounds = array<i64: 16, 512>}, {pipeline_mode = #tpu.pipeline_mode<synchronous>, transform_indices = @transform_2, window_bounds = array<i64: 128, 512>}, {pipeline_mode = #tpu.pipeline_mode<synchronous>, transform_indices = @transform_3, window_bounds = array<i64: 1, 512>}, {pipeline_mode = #tpu.pipeline_mode<synchronous>, transform_indices = @transform_4, window_bounds = array<i64: 128, 512>}, {pipeline_mode = #tpu.pipeline_mode<synchronous>, transform_indices = @transform_5, window_bounds = array<i64: 128, 512>}, {pipeline_mode = #tpu.pipeline_mode<synchronous>, transform_indices = @transform_6, window_bounds = array<i64: 1, 512>}, {pipeline_mode = #tpu.pipeline_mode<synchronous>, transform_indices = @transform_7, window_bounds = array<i64: 128, 128>}, {pipeline_mode = #tpu.pipeline_mode<synchronous>, transform_indices = @transform_8, window_bounds = array<i64: 1, 128>}, {transform_indices = @transform_9, window_bounds = array<i64: 8, 128>}, {transform_indices = @transform_10, window_bounds = array<i64: 8, 128>}]} {
    %c0 = arith.constant 0 : index
    %c0_0 = arith.constant 0 : index
    %0 = vector.load %arg2[%c0, %c0_0] : memref<16x512xf32, #tpu.memory_space<vmem>>, vector<16x512xf32>
    %c0_1 = arith.constant 0 : index
    %c0_2 = arith.constant 0 : index
    %1 = vector.load %arg3[%c0_1, %c0_2] : memref<128x512xf32, #tpu.memory_space<vmem>>, vector<128x512xf32>
    %c0_3 = arith.constant 0 : index
    %c0_4 = arith.constant 0 : index
    %2 = vector.load %arg4[%c0_3, %c0_4] : memref<1x512xf32, #tpu.memory_space<vmem>>, vector<1x512xf32>
    %c0_5 = arith.constant 0 : index
    %c0_6 = arith.constant 0 : index
    %c0_7 = arith.constant 0 : index
    %3 = vector.load %arg1[%c0_5, %c0_6, %c0_7] : memref<8x8x16xf32, #tpu.memory_space<vmem>>, vector<8x8x16xf32>
    %4 = vector.shape_cast %3 : vector<8x8x16xf32> to vector<64x16xf32>
    %cst = arith.constant dense<0.000000e+00> : vector<64x512xf32>
    %5 = tpu.matmul %4, %0, %cst {dimension_numbers = #tpu.dot_dimension_numbers<[1], [0], [0], [1], [0, 0, 1, 1], [], []>} : vector<64x16xf32>, vector<16x512xf32>, vector<64x512xf32> -> vector<64x512xf32>
    %6 = vector.broadcast %2 : vector<1x512xf32> to vector<64x512xf32>
    %7 = arith.addf %5, %6 : vector<64x512xf32>
    %8 = vector.shape_cast %7 : vector<64x512xf32> to vector<8x8x512xf32>
    %c0_8 = arith.constant 0 : index
    %c0_9 = arith.constant 0 : index
    %c0_10 = arith.constant 0 : index
    %9 = vector.load %arg13[%c0_8, %c0_9, %c0_10] : memref<8x8x512xf32, #tpu.memory_space<vmem>>, vector<8x8x512xf32>
    tpu.vector_store %arg13[%c0_8, %c0_9, %c0_10], %8 {strides = array<i32>} : memref<8x8x512xf32, #tpu.memory_space<vmem>>, vector<8x8x512xf32>,
    %cst_11 = arith.constant 0.000000e+00 : f32
    %10 = vector.broadcast %cst_11 : f32 to vector<8x128xf32>
    %cst_12 = arith.constant 0.000000e+00 : f32
    %11 = vector.broadcast %cst_12 : f32 to vector<8x128xf32>
    %c0_13 = arith.constant 0 : index
    %c0_14 = arith.constant 0 : index
    %c0_15 = arith.constant 0 : index
    %12 = vector.load %arg13[%c0_13, %c0_14, %c0_15] : memref<8x8x512xf32, #tpu.memory_space<vmem>>, vector<8x1x512xf32>
    %13 = vector.shape_cast %12 : vector<8x1x512xf32> to vector<8x512xf32>
    %cst_16 = arith.constant dense<0.000000e+00> : vector<8x512xf32>
    %14 = tpu.matmul %10, %1, %cst_16 {dimension_numbers = #tpu.dot_dimension_numbers<[1], [0], [0], [1], [0, 0, 1, 1], [], []>} : vector<8x128xf32>, vector<128x512xf32>, vector<8x512xf32> -> vector<8x512xf32>
    %15 = arith.addf %13, %14 : vector<8x512xf32>
    %16 = vector.extract_strided_slice %15 {offsets = [0, 128], sizes = [8, 128], strides = [1, 1]} : vector<8x512xf32> to vector<8x128xf32>
    %17 = arith.negf %16 : vector<8x128xf32>
    %18 = math.exp %17 : vector<8x128xf32>
    %cst_17 = arith.constant 1.000000e+00 : f32
    %19 = vector.broadcast %cst_17 : f32 to vector<8x128xf32>
    %20 = arith.addf %19, %18 : vector<8x128xf32>
    %21 = arith.divf %19, %20 : vector<8x128xf32>
    %22 = arith.mulf %21, %11 : vector<8x128xf32>
    %23 = vector.extract_strided_slice %15 {offsets = [0, 0], sizes = [8, 128], strides = [1, 1]} : vector<8x512xf32> to vector<8x128xf32>
    %24 = arith.negf %23 : vector<8x128xf32>
    %25 = math.exp %24 : vector<8x128xf32>
    %cst_18 = arith.constant 1.000000e+00 : f32
    %26 = vector.broadcast %cst_18 : f32 to vector<8x128xf32>
    %27 = arith.addf %26, %25 : vector<8x128xf32>
    %28 = arith.divf %26, %27 : vector<8x128xf32>
    %29 = vector.extract_strided_slice %15 {offsets = [0, 256], sizes = [8, 128], strides = [1, 1]} : vector<8x512xf32> to vector<8x128xf32>
    %30 = math.tanh %29 : vector<8x128xf32>
    %31 = arith.mulf %28, %30 : vector<8x128xf32>
    %32 = arith.addf %22, %31 : vector<8x128xf32>
    %33 = vector.extract_strided_slice %15 {offsets = [0, 384], sizes = [8, 128], strides = [1, 1]} : vector<8x512xf32> to vector<8x128xf32>
    %34 = arith.negf %33 : vector<8x128xf32>
    %35 = math.exp %34 : vector<8x128xf32>
    %cst_19 = arith.constant 1.000000e+00 : f32
    %36 = vector.broadcast %cst_19 : f32 to vector<8x128xf32>
    %37 = arith.addf %36, %35 : vector<8x128xf32>
    %38 = arith.divf %36, %37 : vector<8x128xf32>
    %39 = math.tanh %32 : vector<8x128xf32>
    %40 = arith.mulf %38, %39 : vector<8x128xf32>
    %c0_20 = arith.constant 0 : index
    %c0_21 = arith.constant 0 : index
    %c0_22 = arith.constant 0 : index
    %41 = vector.load %arg12[%c0_20, %c0_21, %c0_22] : memref<8x8x128xf32, #tpu.memory_space<vmem>>, vector<8x1x128xf32>
    %42 = vector.shape_cast %41 : vector<8x1x128xf32> to vector<8x128xf32>
    %43 = vector.shape_cast %40 : vector<8x128xf32> to vector<8x1x128xf32>
    tpu.vector_store %arg12[%c0_20, %c0_21, %c0_22], %43 {strides = array<i32>} : memref<8x8x128xf32, #tpu.memory_space<vmem>>, vector<8x1x128xf32>,
    %c0_23 = arith.constant 0 : index
    %c1 = arith.constant 1 : index
    %c0_24 = arith.constant 0 : index
    %44 = vector.load %arg13[%c0_23, %c1, %c0_24] : memref<8x8x512xf32, #tpu.memory_space<vmem>>, vector<8x1x512xf32>
    %45 = vector.shape_cast %44 : vector<8x1x512xf32> to vector<8x512xf32>
    %cst_25 = arith.constant dense<0.000000e+00> : vector<8x512xf32>
    %46 = tpu.matmul %40, %1, %cst_25 {dimension_numbers = #tpu.dot_dimension_numbers<[1], [0], [0], [1], [0, 0, 1, 1], [], []>} : vector<8x128xf32>, vector<128x512xf32>, vector<8x512xf32> -> vector<8x512xf32>
    %47 = arith.addf %45, %46 : vector<8x512xf32>
    %48 = vector.extract_strided_slice %47 {offsets = [0, 128], sizes = [8, 128], strides = [1, 1]} : vector<8x512xf32> to vector<8x128xf32>
    %49 = arith.negf %48 : vector<8x128xf32>
    %50 = math.exp %49 : vector<8x128xf32>
    %cst_26 = arith.constant 1.000000e+00 : f32
    %51 = vector.broadcast %cst_26 : f32 to vector<8x128xf32>
    %52 = arith.addf %51, %50 : vector<8x128xf32>
    %53 = arith.divf %51, %52 : vector<8x128xf32>
    %54 = arith.mulf %53, %32 : vector<8x128xf32>
    %55 = vector.extract_strided_slice %47 {offsets = [0, 0], sizes = [8, 128], strides = [1, 1]} : vector<8x512xf32> to vector<8x128xf32>
    %56 = arith.negf %55 : vector<8x128xf32>
    %57 = math.exp %56 : vector<8x128xf32>
    %cst_27 = arith.constant 1.000000e+00 : f32
    %58 = vector.broadcast %cst_27 : f32 to vector<8x128xf32>
    %59 = arith.addf %58, %57 : vector<8x128xf32>
    %60 = arith.divf %58, %59 : vector<8x128xf32>
    %61 = vector.extract_strided_slice %47 {offsets = [0, 256], sizes = [8, 128], strides = [1, 1]} : vector<8x512xf32> to vector<8x128xf32>
    %62 = math.tanh %61 : vector<8x128xf32>
    %63 = arith.mulf %60, %62 : vector<8x128xf32>
    %64 = arith.addf %54, %63 : vector<8x128xf32>
    %65 = vector.extract_strided_slice %47 {offsets = [0, 384], sizes = [8, 128], strides = [1, 1]} : vector<8x512xf32> to vector<8x128xf32>
    %66 = arith.negf %65 : vector<8x128xf32>
    %67 = math.exp %66 : vector<8x128xf32>
    %cst_28 = arith.constant 1.000000e+00 : f32
    %68 = vector.broadcast %cst_28 : f32 to vector<8x128xf32>
    %69 = arith.addf %68, %67 : vector<8x128xf32>
    %70 = arith.divf %68, %69 : vector<8x128xf32>
    %71 = math.tanh %64 : vector<8x128xf32>
    %72 = arith.mulf %70, %71 : vector<8x128xf32>
    %c0_29 = arith.constant 0 : index
    %c1_30 = arith.constant 1 : index
    %c0_31 = arith.constant 0 : index
    %73 = vector.load %arg12[%c0_29, %c1_30, %c0_31] : memref<8x8x128xf32, #tpu.memory_space<vmem>>, vector<8x1x128xf32>
    %74 = vector.shape_cast %73 : vector<8x1x128xf32> to vector<8x128xf32>
    %75 = vector.shape_cast %72 : vector<8x128xf32> to vector<8x1x128xf32>
    tpu.vector_store %arg12[%c0_29, %c1_30, %c0_31], %75 {strides = array<i32>} : memref<8x8x128xf32, #tpu.memory_space<vmem>>, vector<8x1x128xf32>,
    %c0_32 = arith.constant 0 : index
    %c2 = arith.constant 2 : index
    %c0_33 = arith.constant 0 : index
    %76 = vector.load %arg13[%c0_32, %c2, %c0_33] : memref<8x8x512xf32, #tpu.memory_space<vmem>>, vector<8x1x512xf32>
    %77 = vector.shape_cast %76 : vector<8x1x512xf32> to vector<8x512xf32>
    %cst_34 = arith.constant dense<0.000000e+00> : vector<8x512xf32>
    %78 = tpu.matmul %72, %1, %cst_34 {dimension_numbers = #tpu.dot_dimension_numbers<[1], [0], [0], [1], [0, 0, 1, 1], [], []>} : vector<8x128xf32>, vector<128x512xf32>, vector<8x512xf32> -> vector<8x512xf32>
    %79 = arith.addf %77, %78 : vector<8x512xf32>
    %80 = vector.extract_strided_slice %79 {offsets = [0, 128], sizes = [8, 128], strides = [1, 1]} : vector<8x512xf32> to vector<8x128xf32>
    %81 = arith.negf %80 : vector<8x128xf32>
    %82 = math.exp %81 : vector<8x128xf32>
    %cst_35 = arith.constant 1.000000e+00 : f32
    %83 = vector.broadcast %cst_35 : f32 to vector<8x128xf32>
    %84 = arith.addf %83, %82 : vector<8x128xf32>
    %85 = arith.divf %83, %84 : vector<8x128xf32>
    %86 = arith.mulf %85, %64 : vector<8x128xf32>
    %87 = vector.extract_strided_slice %79 {offsets = [0, 0], sizes = [8, 128], strides = [1, 1]} : vector<8x512xf32> to vector<8x128xf32>
    %88 = arith.negf %87 : vector<8x128xf32>
    %89 = math.exp %88 : vector<8x128xf32>
    %cst_36 = arith.constant 1.000000e+00 : f32
    %90 = vector.broadcast %cst_36 : f32 to vector<8x128xf32>
    %91 = arith.addf %90, %89 : vector<8x128xf32>
    %92 = arith.divf %90, %91 : vector<8x128xf32>
    %93 = vector.extract_strided_slice %79 {offsets = [0, 256], sizes = [8, 128], strides = [1, 1]} : vector<8x512xf32> to vector<8x128xf32>
    %94 = math.tanh %93 : vector<8x128xf32>
    %95 = arith.mulf %92, %94 : vector<8x128xf32>
    %96 = arith.addf %86, %95 : vector<8x128xf32>
    %97 = vector.extract_strided_slice %79 {offsets = [0, 384], sizes = [8, 128], strides = [1, 1]} : vector<8x512xf32> to vector<8x128xf32>
    %98 = arith.negf %97 : vector<8x128xf32>
    %99 = math.exp %98 : vector<8x128xf32>
    %cst_37 = arith.constant 1.000000e+00 : f32
    %100 = vector.broadcast %cst_37 : f32 to vector<8x128xf32>
    %101 = arith.addf %100, %99 : vector<8x128xf32>
    %102 = arith.divf %100, %101 : vector<8x128xf32>
    %103 = math.tanh %96 : vector<8x128xf32>
    %104 = arith.mulf %102, %103 : vector<8x128xf32>
    %c0_38 = arith.constant 0 : index
    %c2_39 = arith.constant 2 : index
    %c0_40 = arith.constant 0 : index
    %105 = vector.load %arg12[%c0_38, %c2_39, %c0_40] : memref<8x8x128xf32, #tpu.memory_space<vmem>>, vector<8x1x128xf32>
    %106 = vector.shape_cast %105 : vector<8x1x128xf32> to vector<8x128xf32>
    %107 = vector.shape_cast %104 : vector<8x128xf32> to vector<8x1x128xf32>
    tpu.vector_store %arg12[%c0_38, %c2_39, %c0_40], %107 {strides = array<i32>} : memref<8x8x128xf32, #tpu.memory_space<vmem>>, vector<8x1x128xf32>,
    %c0_41 = arith.constant 0 : index
    %c3 = arith.constant 3 : index
    %c0_42 = arith.constant 0 : index
    %108 = vector.load %arg13[%c0_41, %c3, %c0_42] : memref<8x8x512xf32, #tpu.memory_space<vmem>>, vector<8x1x512xf32>
    %109 = vector.shape_cast %108 : vector<8x1x512xf32> to vector<8x512xf32>
    %cst_43 = arith.constant dense<0.000000e+00> : vector<8x512xf32>
    %110 = tpu.matmul %104, %1, %cst_43 {dimension_numbers = #tpu.dot_dimension_numbers<[1], [0], [0], [1], [0, 0, 1, 1], [], []>} : vector<8x128xf32>, vector<128x512xf32>, vector<8x512xf32> -> vector<8x512xf32>
    %111 = arith.addf %109, %110 : vector<8x512xf32>
    %112 = vector.extract_strided_slice %111 {offsets = [0, 128], sizes = [8, 128], strides = [1, 1]} : vector<8x512xf32> to vector<8x128xf32>
    %113 = arith.negf %112 : vector<8x128xf32>
    %114 = math.exp %113 : vector<8x128xf32>
    %cst_44 = arith.constant 1.000000e+00 : f32
    %115 = vector.broadcast %cst_44 : f32 to vector<8x128xf32>
    %116 = arith.addf %115, %114 : vector<8x128xf32>
    %117 = arith.divf %115, %116 : vector<8x128xf32>
    %118 = arith.mulf %117, %96 : vector<8x128xf32>
    %119 = vector.extract_strided_slice %111 {offsets = [0, 0], sizes = [8, 128], strides = [1, 1]} : vector<8x512xf32> to vector<8x128xf32>
    %120 = arith.negf %119 : vector<8x128xf32>
    %121 = math.exp %120 : vector<8x128xf32>
    %cst_45 = arith.constant 1.000000e+00 : f32
    %122 = vector.broadcast %cst_45 : f32 to vector<8x128xf32>
    %123 = arith.addf %122, %121 : vector<8x128xf32>
    %124 = arith.divf %122, %123 : vector<8x128xf32>
    %125 = vector.extract_strided_slice %111 {offsets = [0, 256], sizes = [8, 128], strides = [1, 1]} : vector<8x512xf32> to vector<8x128xf32>
    %126 = math.tanh %125 : vector<8x128xf32>
    %127 = arith.mulf %124, %126 : vector<8x128xf32>
    %128 = arith.addf %118, %127 : vector<8x128xf32>
    %129 = vector.extract_strided_slice %111 {offsets = [0, 384], sizes = [8, 128], strides = [1, 1]} : vector<8x512xf32> to vector<8x128xf32>
    %130 = arith.negf %129 : vector<8x128xf32>
    %131 = math.exp %130 : vector<8x128xf32>
    %cst_46 = arith.constant 1.000000e+00 : f32
    %132 = vector.broadcast %cst_46 : f32 to vector<8x128xf32>
    %133 = arith.addf %132, %131 : vector<8x128xf32>
    %134 = arith.divf %132, %133 : vector<8x128xf32>
    %135 = math.tanh %128 : vector<8x128xf32>
    %136 = arith.mulf %134, %135 : vector<8x128xf32>
    %c0_47 = arith.constant 0 : index
    %c3_48 = arith.constant 3 : index
    %c0_49 = arith.constant 0 : index
    %137 = vector.load %arg12[%c0_47, %c3_48, %c0_49] : memref<8x8x128xf32, #tpu.memory_space<vmem>>, vector<8x1x128xf32>
    %138 = vector.shape_cast %137 : vector<8x1x128xf32> to vector<8x128xf32>
    %139 = vector.shape_cast %136 : vector<8x128xf32> to vector<8x1x128xf32>
    tpu.vector_store %arg12[%c0_47, %c3_48, %c0_49], %139 {strides = array<i32>} : memref<8x8x128xf32, #tpu.memory_space<vmem>>, vector<8x1x128xf32>,
    %c0_50 = arith.constant 0 : index
    %c4 = arith.constant 4 : index
    %c0_51 = arith.constant 0 : index
    %140 = vector.load %arg13[%c0_50, %c4, %c0_51] : memref<8x8x512xf32, #tpu.memory_space<vmem>>, vector<8x1x512xf32>
    %141 = vector.shape_cast %140 : vector<8x1x512xf32> to vector<8x512xf32>
    %cst_52 = arith.constant dense<0.000000e+00> : vector<8x512xf32>
    %142 = tpu.matmul %136, %1, %cst_52 {dimension_numbers = #tpu.dot_dimension_numbers<[1], [0], [0], [1], [0, 0, 1, 1], [], []>} : vector<8x128xf32>, vector<128x512xf32>, vector<8x512xf32> -> vector<8x512xf32>
    %143 = arith.addf %141, %142 : vector<8x512xf32>
    %144 = vector.extract_strided_slice %143 {offsets = [0, 128], sizes = [8, 128], strides = [1, 1]} : vector<8x512xf32> to vector<8x128xf32>
    %145 = arith.negf %144 : vector<8x128xf32>
    %146 = math.exp %145 : vector<8x128xf32>
    %cst_53 = arith.constant 1.000000e+00 : f32
    %147 = vector.broadcast %cst_53 : f32 to vector<8x128xf32>
    %148 = arith.addf %147, %146 : vector<8x128xf32>
    %149 = arith.divf %147, %148 : vector<8x128xf32>
    %150 = arith.mulf %149, %128 : vector<8x128xf32>
    %151 = vector.extract_strided_slice %143 {offsets = [0, 0], sizes = [8, 128], strides = [1, 1]} : vector<8x512xf32> to vector<8x128xf32>
    %152 = arith.negf %151 : vector<8x128xf32>
    %153 = math.exp %152 : vector<8x128xf32>
    %cst_54 = arith.constant 1.000000e+00 : f32
    %154 = vector.broadcast %cst_54 : f32 to vector<8x128xf32>
    %155 = arith.addf %154, %153 : vector<8x128xf32>
    %156 = arith.divf %154, %155 : vector<8x128xf32>
    %157 = vector.extract_strided_slice %143 {offsets = [0, 256], sizes = [8, 128], strides = [1, 1]} : vector<8x512xf32> to vector<8x128xf32>
    %158 = math.tanh %157 : vector<8x128xf32>
    %159 = arith.mulf %156, %158 : vector<8x128xf32>
    %160 = arith.addf %150, %159 : vector<8x128xf32>
    %161 = vector.extract_strided_slice %143 {offsets = [0, 384], sizes = [8, 128], strides = [1, 1]} : vector<8x512xf32> to vector<8x128xf32>
    %162 = arith.negf %161 : vector<8x128xf32>
    %163 = math.exp %162 : vector<8x128xf32>
    %cst_55 = arith.constant 1.000000e+00 : f32
    %164 = vector.broadcast %cst_55 : f32 to vector<8x128xf32>
    %165 = arith.addf %164, %163 : vector<8x128xf32>
    %166 = arith.divf %164, %165 : vector<8x128xf32>
    %167 = math.tanh %160 : vector<8x128xf32>
    %168 = arith.mulf %166, %167 : vector<8x128xf32>
    %c0_56 = arith.constant 0 : index
    %c4_57 = arith.constant 4 : index
    %c0_58 = arith.constant 0 : index
    %169 = vector.load %arg12[%c0_56, %c4_57, %c0_58] : memref<8x8x128xf32, #tpu.memory_space<vmem>>, vector<8x1x128xf32>
    %170 = vector.shape_cast %169 : vector<8x1x128xf32> to vector<8x128xf32>
    %171 = vector.shape_cast %168 : vector<8x128xf32> to vector<8x1x128xf32>
    tpu.vector_store %arg12[%c0_56, %c4_57, %c0_58], %171 {strides = array<i32>} : memref<8x8x128xf32, #tpu.memory_space<vmem>>, vector<8x1x128xf32>,
    %c0_59 = arith.constant 0 : index
    %c5 = arith.constant 5 : index
    %c0_60 = arith.constant 0 : index
    %172 = vector.load %arg13[%c0_59, %c5, %c0_60] : memref<8x8x512xf32, #tpu.memory_space<vmem>>, vector<8x1x512xf32>
    %173 = vector.shape_cast %172 : vector<8x1x512xf32> to vector<8x512xf32>
    %cst_61 = arith.constant dense<0.000000e+00> : vector<8x512xf32>
    %174 = tpu.matmul %168, %1, %cst_61 {dimension_numbers = #tpu.dot_dimension_numbers<[1], [0], [0], [1], [0, 0, 1, 1], [], []>} : vector<8x128xf32>, vector<128x512xf32>, vector<8x512xf32> -> vector<8x512xf32>
    %175 = arith.addf %173, %174 : vector<8x512xf32>
    %176 = vector.extract_strided_slice %175 {offsets = [0, 128], sizes = [8, 128], strides = [1, 1]} : vector<8x512xf32> to vector<8x128xf32>
    %177 = arith.negf %176 : vector<8x128xf32>
    %178 = math.exp %177 : vector<8x128xf32>
    %cst_62 = arith.constant 1.000000e+00 : f32
    %179 = vector.broadcast %cst_62 : f32 to vector<8x128xf32>
    %180 = arith.addf %179, %178 : vector<8x128xf32>
    %181 = arith.divf %179, %180 : vector<8x128xf32>
    %182 = arith.mulf %181, %160 : vector<8x128xf32>
    %183 = vector.extract_strided_slice %175 {offsets = [0, 0], sizes = [8, 128], strides = [1, 1]} : vector<8x512xf32> to vector<8x128xf32>
    %184 = arith.negf %183 : vector<8x128xf32>
    %185 = math.exp %184 : vector<8x128xf32>
    %cst_63 = arith.constant 1.000000e+00 : f32
    %186 = vector.broadcast %cst_63 : f32 to vector<8x128xf32>
    %187 = arith.addf %186, %185 : vector<8x128xf32>
    %188 = arith.divf %186, %187 : vector<8x128xf32>
    %189 = vector.extract_strided_slice %175 {offsets = [0, 256], sizes = [8, 128], strides = [1, 1]} : vector<8x512xf32> to vector<8x128xf32>
    %190 = math.tanh %189 : vector<8x128xf32>
    %191 = arith.mulf %188, %190 : vector<8x128xf32>
    %192 = arith.addf %182, %191 : vector<8x128xf32>
    %193 = vector.extract_strided_slice %175 {offsets = [0, 384], sizes = [8, 128], strides = [1, 1]} : vector<8x512xf32> to vector<8x128xf32>
    %194 = arith.negf %193 : vector<8x128xf32>
    %195 = math.exp %194 : vector<8x128xf32>
    %cst_64 = arith.constant 1.000000e+00 : f32
    %196 = vector.broadcast %cst_64 : f32 to vector<8x128xf32>
    %197 = arith.addf %196, %195 : vector<8x128xf32>
    %198 = arith.divf %196, %197 : vector<8x128xf32>
    %199 = math.tanh %192 : vector<8x128xf32>
    %200 = arith.mulf %198, %199 : vector<8x128xf32>
    %c0_65 = arith.constant 0 : index
    %c5_66 = arith.constant 5 : index
    %c0_67 = arith.constant 0 : index
    %201 = vector.load %arg12[%c0_65, %c5_66, %c0_67] : memref<8x8x128xf32, #tpu.memory_space<vmem>>, vector<8x1x128xf32>
    %202 = vector.shape_cast %201 : vector<8x1x128xf32> to vector<8x128xf32>
    %203 = vector.shape_cast %200 : vector<8x128xf32> to vector<8x1x128xf32>
    tpu.vector_store %arg12[%c0_65, %c5_66, %c0_67], %203 {strides = array<i32>} : memref<8x8x128xf32, #tpu.memory_space<vmem>>, vector<8x1x128xf32>,
    %c0_68 = arith.constant 0 : index
    %c6 = arith.constant 6 : index
    %c0_69 = arith.constant 0 : index
    %204 = vector.load %arg13[%c0_68, %c6, %c0_69] : memref<8x8x512xf32, #tpu.memory_space<vmem>>, vector<8x1x512xf32>
    %205 = vector.shape_cast %204 : vector<8x1x512xf32> to vector<8x512xf32>
    %cst_70 = arith.constant dense<0.000000e+00> : vector<8x512xf32>
    %206 = tpu.matmul %200, %1, %cst_70 {dimension_numbers = #tpu.dot_dimension_numbers<[1], [0], [0], [1], [0, 0, 1, 1], [], []>} : vector<8x128xf32>, vector<128x512xf32>, vector<8x512xf32> -> vector<8x512xf32>
    %207 = arith.addf %205, %206 : vector<8x512xf32>
    %208 = vector.extract_strided_slice %207 {offsets = [0, 128], sizes = [8, 128], strides = [1, 1]} : vector<8x512xf32> to vector<8x128xf32>
    %209 = arith.negf %208 : vector<8x128xf32>
    %210 = math.exp %209 : vector<8x128xf32>
    %cst_71 = arith.constant 1.000000e+00 : f32
    %211 = vector.broadcast %cst_71 : f32 to vector<8x128xf32>
    %212 = arith.addf %211, %210 : vector<8x128xf32>
    %213 = arith.divf %211, %212 : vector<8x128xf32>
    %214 = arith.mulf %213, %192 : vector<8x128xf32>
    %215 = vector.extract_strided_slice %207 {offsets = [0, 0], sizes = [8, 128], strides = [1, 1]} : vector<8x512xf32> to vector<8x128xf32>
    %216 = arith.negf %215 : vector<8x128xf32>
    %217 = math.exp %216 : vector<8x128xf32>
    %cst_72 = arith.constant 1.000000e+00 : f32
    %218 = vector.broadcast %cst_72 : f32 to vector<8x128xf32>
    %219 = arith.addf %218, %217 : vector<8x128xf32>
    %220 = arith.divf %218, %219 : vector<8x128xf32>
    %221 = vector.extract_strided_slice %207 {offsets = [0, 256], sizes = [8, 128], strides = [1, 1]} : vector<8x512xf32> to vector<8x128xf32>
    %222 = math.tanh %221 : vector<8x128xf32>
    %223 = arith.mulf %220, %222 : vector<8x128xf32>
    %224 = arith.addf %214, %223 : vector<8x128xf32>
    %225 = vector.extract_strided_slice %207 {offsets = [0, 384], sizes = [8, 128], strides = [1, 1]} : vector<8x512xf32> to vector<8x128xf32>
    %226 = arith.negf %225 : vector<8x128xf32>
    %227 = math.exp %226 : vector<8x128xf32>
    %cst_73 = arith.constant 1.000000e+00 : f32
    %228 = vector.broadcast %cst_73 : f32 to vector<8x128xf32>
    %229 = arith.addf %228, %227 : vector<8x128xf32>
    %230 = arith.divf %228, %229 : vector<8x128xf32>
    %231 = math.tanh %224 : vector<8x128xf32>
    %232 = arith.mulf %230, %231 : vector<8x128xf32>
    %c0_74 = arith.constant 0 : index
    %c6_75 = arith.constant 6 : index
    %c0_76 = arith.constant 0 : index
    %233 = vector.load %arg12[%c0_74, %c6_75, %c0_76] : memref<8x8x128xf32, #tpu.memory_space<vmem>>, vector<8x1x128xf32>
    %234 = vector.shape_cast %233 : vector<8x1x128xf32> to vector<8x128xf32>
    %235 = vector.shape_cast %232 : vector<8x128xf32> to vector<8x1x128xf32>
    tpu.vector_store %arg12[%c0_74, %c6_75, %c0_76], %235 {strides = array<i32>} : memref<8x8x128xf32, #tpu.memory_space<vmem>>, vector<8x1x128xf32>,
    %c0_77 = arith.constant 0 : index
    %c7 = arith.constant 7 : index
    %c0_78 = arith.constant 0 : index
    %236 = vector.load %arg13[%c0_77, %c7, %c0_78] : memref<8x8x512xf32, #tpu.memory_space<vmem>>, vector<8x1x512xf32>
    %237 = vector.shape_cast %236 : vector<8x1x512xf32> to vector<8x512xf32>
    %cst_79 = arith.constant dense<0.000000e+00> : vector<8x512xf32>
    %238 = tpu.matmul %232, %1, %cst_79 {dimension_numbers = #tpu.dot_dimension_numbers<[1], [0], [0], [1], [0, 0, 1, 1], [], []>} : vector<8x128xf32>, vector<128x512xf32>, vector<8x512xf32> -> vector<8x512xf32>
    %239 = arith.addf %237, %238 : vector<8x512xf32>
    %240 = vector.extract_strided_slice %239 {offsets = [0, 128], sizes = [8, 128], strides = [1, 1]} : vector<8x512xf32> to vector<8x128xf32>
    %241 = arith.negf %240 : vector<8x128xf32>
    %242 = math.exp %241 : vector<8x128xf32>
    %cst_80 = arith.constant 1.000000e+00 : f32
    %243 = vector.broadcast %cst_80 : f32 to vector<8x128xf32>
    %244 = arith.addf %243, %242 : vector<8x128xf32>
    %245 = arith.divf %243, %244 : vector<8x128xf32>
    %246 = arith.mulf %245, %224 : vector<8x128xf32>
    %247 = vector.extract_strided_slice %239 {offsets = [0, 0], sizes = [8, 128], strides = [1, 1]} : vector<8x512xf32> to vector<8x128xf32>
    %248 = arith.negf %247 : vector<8x128xf32>
    %249 = math.exp %248 : vector<8x128xf32>
    %cst_81 = arith.constant 1.000000e+00 : f32
    %250 = vector.broadcast %cst_81 : f32 to vector<8x128xf32>
    %251 = arith.addf %250, %249 : vector<8x128xf32>
    %252 = arith.divf %250, %251 : vector<8x128xf32>
    %253 = vector.extract_strided_slice %239 {offsets = [0, 256], sizes = [8, 128], strides = [1, 1]} : vector<8x512xf32> to vector<8x128xf32>
    %254 = math.tanh %253 : vector<8x128xf32>
    %255 = arith.mulf %252, %254 : vector<8x128xf32>
    %256 = arith.addf %246, %255 : vector<8x128xf32>
    %257 = vector.extract_strided_slice %239 {offsets = [0, 384], sizes = [8, 128], strides = [1, 1]} : vector<8x512xf32> to vector<8x128xf32>
    %258 = arith.negf %257 : vector<8x128xf32>
    %259 = math.exp %258 : vector<8x128xf32>
    %cst_82 = arith.constant 1.000000e+00 : f32
    %260 = vector.broadcast %cst_82 : f32 to vector<8x128xf32>
    %261 = arith.addf %260, %259 : vector<8x128xf32>
    %262 = arith.divf %260, %261 : vector<8x128xf32>
    %263 = math.tanh %256 : vector<8x128xf32>
    %264 = arith.mulf %262, %263 : vector<8x128xf32>
    %c0_83 = arith.constant 0 : index
    %c7_84 = arith.constant 7 : index
    %c0_85 = arith.constant 0 : index
    %265 = vector.load %arg12[%c0_83, %c7_84, %c0_85] : memref<8x8x128xf32, #tpu.memory_space<vmem>>, vector<8x1x128xf32>
    %266 = vector.shape_cast %265 : vector<8x1x128xf32> to vector<8x128xf32>
    %267 = vector.shape_cast %264 : vector<8x128xf32> to vector<8x1x128xf32>
    tpu.vector_store %arg12[%c0_83, %c7_84, %c0_85], %267 {strides = array<i32>} : memref<8x8x128xf32, #tpu.memory_space<vmem>>, vector<8x1x128xf32>,
    %c0_86 = arith.constant 0 : index
    %c0_87 = arith.constant 0 : index
    %268 = vector.load %arg5[%c0_86, %c0_87] : memref<128x512xf32, #tpu.memory_space<vmem>>, vector<128x512xf32>
    %c0_88 = arith.constant 0 : index
    %c0_89 = arith.constant 0 : index
    %269 = vector.load %arg6[%c0_88, %c0_89] : memref<128x512xf32, #tpu.memory_space<vmem>>, vector<128x512xf32>
    %c0_90 = arith.constant 0 : index
    %c0_91 = arith.constant 0 : index
    %270 = vector.load %arg7[%c0_90, %c0_91] : memref<1x512xf32, #tpu.memory_space<vmem>>, vector<1x512xf32>
    %c0_92 = arith.constant 0 : index
    %c0_93 = arith.constant 0 : index
    %c0_94 = arith.constant 0 : index
    %271 = vector.load %arg12[%c0_92, %c0_93, %c0_94] : memref<8x8x128xf32, #tpu.memory_space<vmem>>, vector<8x8x128xf32>
    %272 = vector.shape_cast %271 : vector<8x8x128xf32> to vector<64x128xf32>
    %cst_95 = arith.constant dense<0.000000e+00> : vector<64x512xf32>
    %273 = tpu.matmul %272, %268, %cst_95 {dimension_numbers = #tpu.dot_dimension_numbers<[1], [0], [0], [1], [0, 0, 1, 1], [], []>} : vector<64x128xf32>, vector<128x512xf32>, vector<64x512xf32> -> vector<64x512xf32>
    %274 = vector.broadcast %270 : vector<1x512xf32> to vector<64x512xf32>
    %275 = arith.addf %273, %274 : vector<64x512xf32>
    %276 = vector.shape_cast %275 : vector<64x512xf32> to vector<8x8x512xf32>
    %c0_96 = arith.constant 0 : index
    %c0_97 = arith.constant 0 : index
    %c0_98 = arith.constant 0 : index
    %277 = vector.load %arg13[%c0_96, %c0_97, %c0_98] : memref<8x8x512xf32, #tpu.memory_space<vmem>>, vector<8x8x512xf32>
    tpu.vector_store %arg13[%c0_96, %c0_97, %c0_98], %276 {strides = array<i32>} : memref<8x8x512xf32, #tpu.memory_space<vmem>>, vector<8x8x512xf32>,
    %cst_99 = arith.constant 0.000000e+00 : f32
    %278 = vector.broadcast %cst_99 : f32 to vector<8x128xf32>
    %cst_100 = arith.constant 0.000000e+00 : f32
    %279 = vector.broadcast %cst_100 : f32 to vector<8x128xf32>
    %c0_101 = arith.constant 0 : index
    %c0_102 = arith.constant 0 : index
    %c0_103 = arith.constant 0 : index
    %280 = vector.load %arg13[%c0_101, %c0_102, %c0_103] : memref<8x8x512xf32, #tpu.memory_space<vmem>>, vector<8x1x512xf32>
    %281 = vector.shape_cast %280 : vector<8x1x512xf32> to vector<8x512xf32>
    %cst_104 = arith.constant dense<0.000000e+00> : vector<8x512xf32>
    %282 = tpu.matmul %278, %269, %cst_104 {dimension_numbers = #tpu.dot_dimension_numbers<[1], [0], [0], [1], [0, 0, 1, 1], [], []>} : vector<8x128xf32>, vector<128x512xf32>, vector<8x512xf32> -> vector<8x512xf32>
    %283 = arith.addf %281, %282 : vector<8x512xf32>
    %284 = vector.extract_strided_slice %283 {offsets = [0, 128], sizes = [8, 128], strides = [1, 1]} : vector<8x512xf32> to vector<8x128xf32>
    %285 = arith.negf %284 : vector<8x128xf32>
    %286 = math.exp %285 : vector<8x128xf32>
    %cst_105 = arith.constant 1.000000e+00 : f32
    %287 = vector.broadcast %cst_105 : f32 to vector<8x128xf32>
    %288 = arith.addf %287, %286 : vector<8x128xf32>
    %289 = arith.divf %287, %288 : vector<8x128xf32>
    %290 = arith.mulf %289, %279 : vector<8x128xf32>
    %291 = vector.extract_strided_slice %283 {offsets = [0, 0], sizes = [8, 128], strides = [1, 1]} : vector<8x512xf32> to vector<8x128xf32>
    %292 = arith.negf %291 : vector<8x128xf32>
    %293 = math.exp %292 : vector<8x128xf32>
    %cst_106 = arith.constant 1.000000e+00 : f32
    %294 = vector.broadcast %cst_106 : f32 to vector<8x128xf32>
    %295 = arith.addf %294, %293 : vector<8x128xf32>
    %296 = arith.divf %294, %295 : vector<8x128xf32>
    %297 = vector.extract_strided_slice %283 {offsets = [0, 256], sizes = [8, 128], strides = [1, 1]} : vector<8x512xf32> to vector<8x128xf32>
    %298 = math.tanh %297 : vector<8x128xf32>
    %299 = arith.mulf %296, %298 : vector<8x128xf32>
    %300 = arith.addf %290, %299 : vector<8x128xf32>
    %301 = vector.extract_strided_slice %283 {offsets = [0, 384], sizes = [8, 128], strides = [1, 1]} : vector<8x512xf32> to vector<8x128xf32>
    %302 = arith.negf %301 : vector<8x128xf32>
    %303 = math.exp %302 : vector<8x128xf32>
    %cst_107 = arith.constant 1.000000e+00 : f32
    %304 = vector.broadcast %cst_107 : f32 to vector<8x128xf32>
    %305 = arith.addf %304, %303 : vector<8x128xf32>
    %306 = arith.divf %304, %305 : vector<8x128xf32>
    %307 = math.tanh %300 : vector<8x128xf32>
    %308 = arith.mulf %306, %307 : vector<8x128xf32>
    %c0_108 = arith.constant 0 : index
    %c1_109 = arith.constant 1 : index
    %c0_110 = arith.constant 0 : index
    %309 = vector.load %arg13[%c0_108, %c1_109, %c0_110] : memref<8x8x512xf32, #tpu.memory_space<vmem>>, vector<8x1x512xf32>
    %310 = vector.shape_cast %309 : vector<8x1x512xf32> to vector<8x512xf32>
    %cst_111 = arith.constant dense<0.000000e+00> : vector<8x512xf32>
    %311 = tpu.matmul %308, %269, %cst_111 {dimension_numbers = #tpu.dot_dimension_numbers<[1], [0], [0], [1], [0, 0, 1, 1], [], []>} : vector<8x128xf32>, vector<128x512xf32>, vector<8x512xf32> -> vector<8x512xf32>
    %312 = arith.addf %310, %311 : vector<8x512xf32>
    %313 = vector.extract_strided_slice %312 {offsets = [0, 128], sizes = [8, 128], strides = [1, 1]} : vector<8x512xf32> to vector<8x128xf32>
    %314 = arith.negf %313 : vector<8x128xf32>
    %315 = math.exp %314 : vector<8x128xf32>
    %cst_112 = arith.constant 1.000000e+00 : f32
    %316 = vector.broadcast %cst_112 : f32 to vector<8x128xf32>
    %317 = arith.addf %316, %315 : vector<8x128xf32>
    %318 = arith.divf %316, %317 : vector<8x128xf32>
    %319 = arith.mulf %318, %300 : vector<8x128xf32>
    %320 = vector.extract_strided_slice %312 {offsets = [0, 0], sizes = [8, 128], strides = [1, 1]} : vector<8x512xf32> to vector<8x128xf32>
    %321 = arith.negf %320 : vector<8x128xf32>
    %322 = math.exp %321 : vector<8x128xf32>
    %cst_113 = arith.constant 1.000000e+00 : f32
    %323 = vector.broadcast %cst_113 : f32 to vector<8x128xf32>
    %324 = arith.addf %323, %322 : vector<8x128xf32>
    %325 = arith.divf %323, %324 : vector<8x128xf32>
    %326 = vector.extract_strided_slice %312 {offsets = [0, 256], sizes = [8, 128], strides = [1, 1]} : vector<8x512xf32> to vector<8x128xf32>
    %327 = math.tanh %326 : vector<8x128xf32>
    %328 = arith.mulf %325, %327 : vector<8x128xf32>
    %329 = arith.addf %319, %328 : vector<8x128xf32>
    %330 = vector.extract_strided_slice %312 {offsets = [0, 384], sizes = [8, 128], strides = [1, 1]} : vector<8x512xf32> to vector<8x128xf32>
    %331 = arith.negf %330 : vector<8x128xf32>
    %332 = math.exp %331 : vector<8x128xf32>
    %cst_114 = arith.constant 1.000000e+00 : f32
    %333 = vector.broadcast %cst_114 : f32 to vector<8x128xf32>
    %334 = arith.addf %333, %332 : vector<8x128xf32>
    %335 = arith.divf %333, %334 : vector<8x128xf32>
    %336 = math.tanh %329 : vector<8x128xf32>
    %337 = arith.mulf %335, %336 : vector<8x128xf32>
    %c0_115 = arith.constant 0 : index
    %c2_116 = arith.constant 2 : index
    %c0_117 = arith.constant 0 : index
    %338 = vector.load %arg13[%c0_115, %c2_116, %c0_117] : memref<8x8x512xf32, #tpu.memory_space<vmem>>, vector<8x1x512xf32>
    %339 = vector.shape_cast %338 : vector<8x1x512xf32> to vector<8x512xf32>
    %cst_118 = arith.constant dense<0.000000e+00> : vector<8x512xf32>
    %340 = tpu.matmul %337, %269, %cst_118 {dimension_numbers = #tpu.dot_dimension_numbers<[1], [0], [0], [1], [0, 0, 1, 1], [], []>} : vector<8x128xf32>, vector<128x512xf32>, vector<8x512xf32> -> vector<8x512xf32>
    %341 = arith.addf %339, %340 : vector<8x512xf32>
    %342 = vector.extract_strided_slice %341 {offsets = [0, 128], sizes = [8, 128], strides = [1, 1]} : vector<8x512xf32> to vector<8x128xf32>
    %343 = arith.negf %342 : vector<8x128xf32>
    %344 = math.exp %343 : vector<8x128xf32>
    %cst_119 = arith.constant 1.000000e+00 : f32
    %345 = vector.broadcast %cst_119 : f32 to vector<8x128xf32>
    %346 = arith.addf %345, %344 : vector<8x128xf32>
    %347 = arith.divf %345, %346 : vector<8x128xf32>
    %348 = arith.mulf %347, %329 : vector<8x128xf32>
    %349 = vector.extract_strided_slice %341 {offsets = [0, 0], sizes = [8, 128], strides = [1, 1]} : vector<8x512xf32> to vector<8x128xf32>
    %350 = arith.negf %349 : vector<8x128xf32>
    %351 = math.exp %350 : vector<8x128xf32>
    %cst_120 = arith.constant 1.000000e+00 : f32
    %352 = vector.broadcast %cst_120 : f32 to vector<8x128xf32>
    %353 = arith.addf %352, %351 : vector<8x128xf32>
    %354 = arith.divf %352, %353 : vector<8x128xf32>
    %355 = vector.extract_strided_slice %341 {offsets = [0, 256], sizes = [8, 128], strides = [1, 1]} : vector<8x512xf32> to vector<8x128xf32>
    %356 = math.tanh %355 : vector<8x128xf32>
    %357 = arith.mulf %354, %356 : vector<8x128xf32>
    %358 = arith.addf %348, %357 : vector<8x128xf32>
    %359 = vector.extract_strided_slice %341 {offsets = [0, 384], sizes = [8, 128], strides = [1, 1]} : vector<8x512xf32> to vector<8x128xf32>
    %360 = arith.negf %359 : vector<8x128xf32>
    %361 = math.exp %360 : vector<8x128xf32>
    %cst_121 = arith.constant 1.000000e+00 : f32
    %362 = vector.broadcast %cst_121 : f32 to vector<8x128xf32>
    %363 = arith.addf %362, %361 : vector<8x128xf32>
    %364 = arith.divf %362, %363 : vector<8x128xf32>
    %365 = math.tanh %358 : vector<8x128xf32>
    %366 = arith.mulf %364, %365 : vector<8x128xf32>
    %c0_122 = arith.constant 0 : index
    %c3_123 = arith.constant 3 : index
    %c0_124 = arith.constant 0 : index
    %367 = vector.load %arg13[%c0_122, %c3_123, %c0_124] : memref<8x8x512xf32, #tpu.memory_space<vmem>>, vector<8x1x512xf32>
    %368 = vector.shape_cast %367 : vector<8x1x512xf32> to vector<8x512xf32>
    %cst_125 = arith.constant dense<0.000000e+00> : vector<8x512xf32>
    %369 = tpu.matmul %366, %269, %cst_125 {dimension_numbers = #tpu.dot_dimension_numbers<[1], [0], [0], [1], [0, 0, 1, 1], [], []>} : vector<8x128xf32>, vector<128x512xf32>, vector<8x512xf32> -> vector<8x512xf32>
    %370 = arith.addf %368, %369 : vector<8x512xf32>
    %371 = vector.extract_strided_slice %370 {offsets = [0, 128], sizes = [8, 128], strides = [1, 1]} : vector<8x512xf32> to vector<8x128xf32>
    %372 = arith.negf %371 : vector<8x128xf32>
    %373 = math.exp %372 : vector<8x128xf32>
    %cst_126 = arith.constant 1.000000e+00 : f32
    %374 = vector.broadcast %cst_126 : f32 to vector<8x128xf32>
    %375 = arith.addf %374, %373 : vector<8x128xf32>
    %376 = arith.divf %374, %375 : vector<8x128xf32>
    %377 = arith.mulf %376, %358 : vector<8x128xf32>
    %378 = vector.extract_strided_slice %370 {offsets = [0, 0], sizes = [8, 128], strides = [1, 1]} : vector<8x512xf32> to vector<8x128xf32>
    %379 = arith.negf %378 : vector<8x128xf32>
    %380 = math.exp %379 : vector<8x128xf32>
    %cst_127 = arith.constant 1.000000e+00 : f32
    %381 = vector.broadcast %cst_127 : f32 to vector<8x128xf32>
    %382 = arith.addf %381, %380 : vector<8x128xf32>
    %383 = arith.divf %381, %382 : vector<8x128xf32>
    %384 = vector.extract_strided_slice %370 {offsets = [0, 256], sizes = [8, 128], strides = [1, 1]} : vector<8x512xf32> to vector<8x128xf32>
    %385 = math.tanh %384 : vector<8x128xf32>
    %386 = arith.mulf %383, %385 : vector<8x128xf32>
    %387 = arith.addf %377, %386 : vector<8x128xf32>
    %388 = vector.extract_strided_slice %370 {offsets = [0, 384], sizes = [8, 128], strides = [1, 1]} : vector<8x512xf32> to vector<8x128xf32>
    %389 = arith.negf %388 : vector<8x128xf32>
    %390 = math.exp %389 : vector<8x128xf32>
    %cst_128 = arith.constant 1.000000e+00 : f32
    %391 = vector.broadcast %cst_128 : f32 to vector<8x128xf32>
    %392 = arith.addf %391, %390 : vector<8x128xf32>
    %393 = arith.divf %391, %392 : vector<8x128xf32>
    %394 = math.tanh %387 : vector<8x128xf32>
    %395 = arith.mulf %393, %394 : vector<8x128xf32>
    %c0_129 = arith.constant 0 : index
    %c4_130 = arith.constant 4 : index
    %c0_131 = arith.constant 0 : index
    %396 = vector.load %arg13[%c0_129, %c4_130, %c0_131] : memref<8x8x512xf32, #tpu.memory_space<vmem>>, vector<8x1x512xf32>
    %397 = vector.shape_cast %396 : vector<8x1x512xf32> to vector<8x512xf32>
    %cst_132 = arith.constant dense<0.000000e+00> : vector<8x512xf32>
    %398 = tpu.matmul %395, %269, %cst_132 {dimension_numbers = #tpu.dot_dimension_numbers<[1], [0], [0], [1], [0, 0, 1, 1], [], []>} : vector<8x128xf32>, vector<128x512xf32>, vector<8x512xf32> -> vector<8x512xf32>
    %399 = arith.addf %397, %398 : vector<8x512xf32>
    %400 = vector.extract_strided_slice %399 {offsets = [0, 128], sizes = [8, 128], strides = [1, 1]} : vector<8x512xf32> to vector<8x128xf32>
    %401 = arith.negf %400 : vector<8x128xf32>
    %402 = math.exp %401 : vector<8x128xf32>
    %cst_133 = arith.constant 1.000000e+00 : f32
    %403 = vector.broadcast %cst_133 : f32 to vector<8x128xf32>
    %404 = arith.addf %403, %402 : vector<8x128xf32>
    %405 = arith.divf %403, %404 : vector<8x128xf32>
    %406 = arith.mulf %405, %387 : vector<8x128xf32>
    %407 = vector.extract_strided_slice %399 {offsets = [0, 0], sizes = [8, 128], strides = [1, 1]} : vector<8x512xf32> to vector<8x128xf32>
    %408 = arith.negf %407 : vector<8x128xf32>
    %409 = math.exp %408 : vector<8x128xf32>
    %cst_134 = arith.constant 1.000000e+00 : f32
    %410 = vector.broadcast %cst_134 : f32 to vector<8x128xf32>
    %411 = arith.addf %410, %409 : vector<8x128xf32>
    %412 = arith.divf %410, %411 : vector<8x128xf32>
    %413 = vector.extract_strided_slice %399 {offsets = [0, 256], sizes = [8, 128], strides = [1, 1]} : vector<8x512xf32> to vector<8x128xf32>
    %414 = math.tanh %413 : vector<8x128xf32>
    %415 = arith.mulf %412, %414 : vector<8x128xf32>
    %416 = arith.addf %406, %415 : vector<8x128xf32>
    %417 = vector.extract_strided_slice %399 {offsets = [0, 384], sizes = [8, 128], strides = [1, 1]} : vector<8x512xf32> to vector<8x128xf32>
    %418 = arith.negf %417 : vector<8x128xf32>
    %419 = math.exp %418 : vector<8x128xf32>
    %cst_135 = arith.constant 1.000000e+00 : f32
    %420 = vector.broadcast %cst_135 : f32 to vector<8x128xf32>
    %421 = arith.addf %420, %419 : vector<8x128xf32>
    %422 = arith.divf %420, %421 : vector<8x128xf32>
    %423 = math.tanh %416 : vector<8x128xf32>
    %424 = arith.mulf %422, %423 : vector<8x128xf32>
    %c0_136 = arith.constant 0 : index
    %c5_137 = arith.constant 5 : index
    %c0_138 = arith.constant 0 : index
    %425 = vector.load %arg13[%c0_136, %c5_137, %c0_138] : memref<8x8x512xf32, #tpu.memory_space<vmem>>, vector<8x1x512xf32>
    %426 = vector.shape_cast %425 : vector<8x1x512xf32> to vector<8x512xf32>
    %cst_139 = arith.constant dense<0.000000e+00> : vector<8x512xf32>
    %427 = tpu.matmul %424, %269, %cst_139 {dimension_numbers = #tpu.dot_dimension_numbers<[1], [0], [0], [1], [0, 0, 1, 1], [], []>} : vector<8x128xf32>, vector<128x512xf32>, vector<8x512xf32> -> vector<8x512xf32>
    %428 = arith.addf %426, %427 : vector<8x512xf32>
    %429 = vector.extract_strided_slice %428 {offsets = [0, 128], sizes = [8, 128], strides = [1, 1]} : vector<8x512xf32> to vector<8x128xf32>
    %430 = arith.negf %429 : vector<8x128xf32>
    %431 = math.exp %430 : vector<8x128xf32>
    %cst_140 = arith.constant 1.000000e+00 : f32
    %432 = vector.broadcast %cst_140 : f32 to vector<8x128xf32>
    %433 = arith.addf %432, %431 : vector<8x128xf32>
    %434 = arith.divf %432, %433 : vector<8x128xf32>
    %435 = arith.mulf %434, %416 : vector<8x128xf32>
    %436 = vector.extract_strided_slice %428 {offsets = [0, 0], sizes = [8, 128], strides = [1, 1]} : vector<8x512xf32> to vector<8x128xf32>
    %437 = arith.negf %436 : vector<8x128xf32>
    %438 = math.exp %437 : vector<8x128xf32>
    %cst_141 = arith.constant 1.000000e+00 : f32
    %439 = vector.broadcast %cst_141 : f32 to vector<8x128xf32>
    %440 = arith.addf %439, %438 : vector<8x128xf32>
    %441 = arith.divf %439, %440 : vector<8x128xf32>
    %442 = vector.extract_strided_slice %428 {offsets = [0, 256], sizes = [8, 128], strides = [1, 1]} : vector<8x512xf32> to vector<8x128xf32>
    %443 = math.tanh %442 : vector<8x128xf32>
    %444 = arith.mulf %441, %443 : vector<8x128xf32>
    %445 = arith.addf %435, %444 : vector<8x128xf32>
    %446 = vector.extract_strided_slice %428 {offsets = [0, 384], sizes = [8, 128], strides = [1, 1]} : vector<8x512xf32> to vector<8x128xf32>
    %447 = arith.negf %446 : vector<8x128xf32>
    %448 = math.exp %447 : vector<8x128xf32>
    %cst_142 = arith.constant 1.000000e+00 : f32
    %449 = vector.broadcast %cst_142 : f32 to vector<8x128xf32>
    %450 = arith.addf %449, %448 : vector<8x128xf32>
    %451 = arith.divf %449, %450 : vector<8x128xf32>
    %452 = math.tanh %445 : vector<8x128xf32>
    %453 = arith.mulf %451, %452 : vector<8x128xf32>
    %c0_143 = arith.constant 0 : index
    %c6_144 = arith.constant 6 : index
    %c0_145 = arith.constant 0 : index
    %454 = vector.load %arg13[%c0_143, %c6_144, %c0_145] : memref<8x8x512xf32, #tpu.memory_space<vmem>>, vector<8x1x512xf32>
    %455 = vector.shape_cast %454 : vector<8x1x512xf32> to vector<8x512xf32>
    %cst_146 = arith.constant dense<0.000000e+00> : vector<8x512xf32>
    %456 = tpu.matmul %453, %269, %cst_146 {dimension_numbers = #tpu.dot_dimension_numbers<[1], [0], [0], [1], [0, 0, 1, 1], [], []>} : vector<8x128xf32>, vector<128x512xf32>, vector<8x512xf32> -> vector<8x512xf32>
    %457 = arith.addf %455, %456 : vector<8x512xf32>
    %458 = vector.extract_strided_slice %457 {offsets = [0, 128], sizes = [8, 128], strides = [1, 1]} : vector<8x512xf32> to vector<8x128xf32>
    %459 = arith.negf %458 : vector<8x128xf32>
    %460 = math.exp %459 : vector<8x128xf32>
    %cst_147 = arith.constant 1.000000e+00 : f32
    %461 = vector.broadcast %cst_147 : f32 to vector<8x128xf32>
    %462 = arith.addf %461, %460 : vector<8x128xf32>
    %463 = arith.divf %461, %462 : vector<8x128xf32>
    %464 = arith.mulf %463, %445 : vector<8x128xf32>
    %465 = vector.extract_strided_slice %457 {offsets = [0, 0], sizes = [8, 128], strides = [1, 1]} : vector<8x512xf32> to vector<8x128xf32>
    %466 = arith.negf %465 : vector<8x128xf32>
    %467 = math.exp %466 : vector<8x128xf32>
    %cst_148 = arith.constant 1.000000e+00 : f32
    %468 = vector.broadcast %cst_148 : f32 to vector<8x128xf32>
    %469 = arith.addf %468, %467 : vector<8x128xf32>
    %470 = arith.divf %468, %469 : vector<8x128xf32>
    %471 = vector.extract_strided_slice %457 {offsets = [0, 256], sizes = [8, 128], strides = [1, 1]} : vector<8x512xf32> to vector<8x128xf32>
    %472 = math.tanh %471 : vector<8x128xf32>
    %473 = arith.mulf %470, %472 : vector<8x128xf32>
    %474 = arith.addf %464, %473 : vector<8x128xf32>
    %475 = vector.extract_strided_slice %457 {offsets = [0, 384], sizes = [8, 128], strides = [1, 1]} : vector<8x512xf32> to vector<8x128xf32>
    %476 = arith.negf %475 : vector<8x128xf32>
    %477 = math.exp %476 : vector<8x128xf32>
    %cst_149 = arith.constant 1.000000e+00 : f32
    %478 = vector.broadcast %cst_149 : f32 to vector<8x128xf32>
    %479 = arith.addf %478, %477 : vector<8x128xf32>
    %480 = arith.divf %478, %479 : vector<8x128xf32>
    %481 = math.tanh %474 : vector<8x128xf32>
    %482 = arith.mulf %480, %481 : vector<8x128xf32>
    %c0_150 = arith.constant 0 : index
    %c7_151 = arith.constant 7 : index
    %c0_152 = arith.constant 0 : index
    %483 = vector.load %arg13[%c0_150, %c7_151, %c0_152] : memref<8x8x512xf32, #tpu.memory_space<vmem>>, vector<8x1x512xf32>
    %484 = vector.shape_cast %483 : vector<8x1x512xf32> to vector<8x512xf32>
    %cst_153 = arith.constant dense<0.000000e+00> : vector<8x512xf32>
    %485 = tpu.matmul %482, %269, %cst_153 {dimension_numbers = #tpu.dot_dimension_numbers<[1], [0], [0], [1], [0, 0, 1, 1], [], []>} : vector<8x128xf32>, vector<128x512xf32>, vector<8x512xf32> -> vector<8x512xf32>
    %486 = arith.addf %484, %485 : vector<8x512xf32>
    %487 = vector.extract_strided_slice %486 {offsets = [0, 128], sizes = [8, 128], strides = [1, 1]} : vector<8x512xf32> to vector<8x128xf32>
    %488 = arith.negf %487 : vector<8x128xf32>
    %489 = math.exp %488 : vector<8x128xf32>
    %cst_154 = arith.constant 1.000000e+00 : f32
    %490 = vector.broadcast %cst_154 : f32 to vector<8x128xf32>
    %491 = arith.addf %490, %489 : vector<8x128xf32>
    %492 = arith.divf %490, %491 : vector<8x128xf32>
    %493 = arith.mulf %492, %474 : vector<8x128xf32>
    %494 = vector.extract_strided_slice %486 {offsets = [0, 0], sizes = [8, 128], strides = [1, 1]} : vector<8x512xf32> to vector<8x128xf32>
    %495 = arith.negf %494 : vector<8x128xf32>
    %496 = math.exp %495 : vector<8x128xf32>
    %cst_155 = arith.constant 1.000000e+00 : f32
    %497 = vector.broadcast %cst_155 : f32 to vector<8x128xf32>
    %498 = arith.addf %497, %496 : vector<8x128xf32>
    %499 = arith.divf %497, %498 : vector<8x128xf32>
    %500 = vector.extract_strided_slice %486 {offsets = [0, 256], sizes = [8, 128], strides = [1, 1]} : vector<8x512xf32> to vector<8x128xf32>
    %501 = math.tanh %500 : vector<8x128xf32>
    %502 = arith.mulf %499, %501 : vector<8x128xf32>
    %503 = arith.addf %493, %502 : vector<8x128xf32>
    %504 = vector.extract_strided_slice %486 {offsets = [0, 384], sizes = [8, 128], strides = [1, 1]} : vector<8x512xf32> to vector<8x128xf32>
    %505 = arith.negf %504 : vector<8x128xf32>
    %506 = math.exp %505 : vector<8x128xf32>
    %cst_156 = arith.constant 1.000000e+00 : f32
    %507 = vector.broadcast %cst_156 : f32 to vector<8x128xf32>
    %508 = arith.addf %507, %506 : vector<8x128xf32>
    %509 = arith.divf %507, %508 : vector<8x128xf32>
    %510 = math.tanh %503 : vector<8x128xf32>
    %511 = arith.mulf %509, %510 : vector<8x128xf32>
    %c0_157 = arith.constant 0 : index
    %c0_158 = arith.constant 0 : index
    %512 = vector.load %arg10[%c0_157, %c0_158] : memref<8x128xf32, #tpu.memory_space<vmem>>, vector<8x128xf32>
    tpu.vector_store %arg10[%c0_157, %c0_158], %511 {strides = array<i32>} : memref<8x128xf32, #tpu.memory_space<vmem>>, vector<8x128xf32>,
    %c0_159 = arith.constant 0 : index
    %c0_160 = arith.constant 0 : index
    %513 = vector.load %arg8[%c0_159, %c0_160] : memref<128x128xf32, #tpu.memory_space<vmem>>, vector<128x128xf32>
    %cst_161 = arith.constant dense<0.000000e+00> : vector<8x128xf32>
    %514 = tpu.matmul %511, %513, %cst_161 {dimension_numbers = #tpu.dot_dimension_numbers<[1], [0], [0], [1], [0, 0, 1, 1], [], []>} : vector<8x128xf32>, vector<128x128xf32>, vector<8x128xf32> -> vector<8x128xf32>
    %c0_162 = arith.constant 0 : index
    %c0_163 = arith.constant 0 : index
    %515 = vector.load %arg9[%c0_162, %c0_163] : memref<1x128xf32, #tpu.memory_space<vmem>>, vector<1x128xf32>
    %516 = vector.broadcast %515 : vector<1x128xf32> to vector<8x128xf32>
    %517 = arith.addf %514, %516 : vector<8x128xf32>
    %c0_164 = arith.constant 0 : index
    %c0_165 = arith.constant 0 : index
    %518 = vector.load %arg11[%c0_164, %c0_165] : memref<8x128xf32, #tpu.memory_space<vmem>>, vector<8x128xf32>
    tpu.vector_store %arg11[%c0_164, %c0_165], %517 {strides = array<i32>} : memref<8x128xf32, #tpu.memory_space<vmem>>, vector<8x128xf32>,
    return
  }
  func.func @transform_0(%arg0: i32) -> (i32, i32, i32) {
    %c0_i32 = arith.constant 0 : i32
    %c0_i32_0 = arith.constant 0 : i32
    %c0_i32_1 = arith.constant 0 : i32
    return %arg0, %c0_i32, %c0_i32_0 : i32, i32, i32
  }
  func.func @transform_1(%arg0: i32) -> (i32, i32) {
    %c0_i32 = arith.constant 0 : i32
    %c0_i32_0 = arith.constant 0 : i32
    %c0_i32_1 = arith.constant 0 : i32
    return %c0_i32, %c0_i32_0 : i32, i32
  }
  func.func @transform_2(%arg0: i32) -> (i32, i32) {
    %c0_i32 = arith.constant 0 : i32
    %c0_i32_0 = arith.constant 0 : i32
    %c0_i32_1 = arith.constant 0 : i32
    return %c0_i32, %c0_i32_0 : i32, i32
  }
  func.func @transform_3(%arg0: i32) -> (i32, i32) {
    %c0_i32 = arith.constant 0 : i32
    %c0_i32_0 = arith.constant 0 : i32
    %c0_i32_1 = arith.constant 0 : i32
    return %c0_i32, %c0_i32_0 : i32, i32
  }
  func.func @transform_4(%arg0: i32) -> (i32, i32) {
    %c0_i32 = arith.constant 0 : i32
    %c0_i32_0 = arith.constant 0 : i32
    %c0_i32_1 = arith.constant 0 : i32
    return %c0_i32, %c0_i32_0 : i32, i32
  }
  func.func @transform_5(%arg0: i32) -> (i32, i32) {
    %c0_i32 = arith.constant 0 : i32
    %c0_i32_0 = arith.constant 0 : i32
    %c0_i32_1 = arith.constant 0 : i32
    return %c0_i32, %c0_i32_0 : i32, i32
  }
  func.func @transform_6(%arg0: i32) -> (i32, i32) {
    %c0_i32 = arith.constant 0 : i32
    %c0_i32_0 = arith.constant 0 : i32
    %c0_i32_1 = arith.constant 0 : i32
    return %c0_i32, %c0_i32_0 : i32, i32
  }
  func.func @transform_7(%arg0: i32) -> (i32, i32) {
    %c0_i32 = arith.constant 0 : i32
    %c0_i32_0 = arith.constant 0 : i32
    %c0_i32_1 = arith.constant 0 : i32
    return %c0_i32, %c0_i32_0 : i32, i32
  }
  func.func @transform_8(%arg0: i32) -> (i32, i32) {
    %c0_i32 = arith.constant 0 : i32
    %c0_i32_0 = arith.constant 0 : i32
    %c0_i32_1 = arith.constant 0 : i32
    return %c0_i32, %c0_i32_0 : i32, i32
  }
  func.func @transform_9(%arg0: i32) -> (i32, i32) {
    %c0_i32 = arith.constant 0 : i32
    %c0_i32_0 = arith.constant 0 : i32
    return %arg0, %c0_i32 : i32, i32
  }
  func.func @transform_10(%arg0: i32) -> (i32, i32) {
    %c0_i32 = arith.constant 0 : i32
    %c0_i32_0 = arith.constant 0 : i32
    return %arg0, %c0_i32 : i32, i32
  }
}

</mosaic_0001>

<llo_original>
// kernel: lstms_forward.1
$region0: #{lstms_forward.1}
  #allocation0 [shape = 'u32[]', space=smem, size = 0x4, offset = 0x4, fixed_abs, tag = 'smem constant byte address 0x4 - core index']
  #allocation1 [shape = 'u32[144,128]{1,0:T(1,128)}', space=vmem, size = 0x12000, scoped, tag = 'internal scratch']
  #allocation2 [shape = 'f32[8,8,128]{2,1,0:T(8,128)}', space=vmem, size = 0x8000, scoped, tag = 'scratch operand']
  #allocation3 [shape = 'f32[8,8,512]{2,1,0:T(8,128)}', space=vmem, size = 0x20000, scoped, tag = 'scratch operand']
  %s0 = inlined_call_operand.vmem [shape: f32[8,8,16], index: 0, kind: input, shape index: {}]
  %s1 = inlined_call_operand.vmem [shape: f32[16,512], index: 1, kind: input, shape index: {}]
  %s2 = inlined_call_operand.hbm [shape: f32[128,512], index: 2, kind: input, shape index: {}]
  %s3 = inlined_call_operand.vmem [shape: f32[1,512], index: 3, kind: input, shape index: {}]
  %s4 = inlined_call_operand.hbm [shape: f32[128,512], index: 4, kind: input, shape index: {}]
  %s5 = inlined_call_operand.hbm [shape: f32[128,512], index: 5, kind: input, shape index: {}]
  %s6 = inlined_call_operand.vmem [shape: f32[1,512], index: 6, kind: input, shape index: {}]
  %s7 = inlined_call_operand.hbm [shape: f32[128,128], index: 7, kind: input, shape index: {}]
  %s8 = inlined_call_operand.vmem [shape: f32[1,128], index: 8, kind: input, shape index: {}]
  %s9 = inlined_call_operand.vmem [shape: f32[8,128], index: 9, kind: output, shape index: {0}]
  %s10 = inlined_call_operand.vmem [shape: f32[8,128], index: 10, kind: output, shape index: {1}]
  %11 = xla_tuple %s9, %s10
  %s12 = sld [smem:[#allocation0]]
  $region70: #{lstms_forward.1} parent=0
    _
  %s14 = ssub.s32 1, %s12
  %s15 = scalar_select 0, %s14, %s12
  $region1: #{lstms_forward.1} parent=0
    #allocation4 [shape = 'u8[262144]{0}', space=vmem, size = 0x40000, scoped, tag = 'input window, operand 2, single buffered']
    #allocation5 [shape = 's32[1]{0}', space=sflag, size = 0x4, scoped, tag = 'scoped memory for lstms_forward.1']
    #allocation6 [shape = 'u8[262144]{0}', space=vmem, size = 0x40000, scoped, tag = 'input window, operand 4, single buffered']
    #allocation7 [shape = 's32[1]{0}', space=sflag, size = 0x4, scoped, tag = 'scoped memory for lstms_forward.1']
    #allocation8 [shape = 'u8[262144]{0}', space=vmem, size = 0x40000, scoped, tag = 'input window, operand 5, single buffered']
    #allocation9 [shape = 'u8[65536]{0}', space=vmem, size = 0x10000, scoped, tag = 'input window, operand 7, single buffered']
    #allocation10 [shape = 's32[1]{0}', space=sflag, size = 0x4, scoped, tag = 'scoped memory for lstms_forward.1']
    %16 = vsyncpa [#allocation5], 0
    %17 = vsyncpa [#allocation7], 0
    %18 = vsyncpa [#allocation10], 0
    // Predicated region
    $region2: #{lstms_forward.1} parent=1 // pred_check
      _
    $region3: #{lstms_forward.1} parent=1 // pred_check_branch
      %20 = sbr.rel (0) target = $region5
    $region4: #{lstms_forward.1} parent=1 // pred_region
      _
    $region5: #{lstms_forward.1} parent=1 // pred_fallthru
      _
    // Predicated region
    $region6: #{lstms_forward.1} parent=1 // pred_check
      _
    $region7: #{lstms_forward.1} parent=1 // pred_check_branch
      %22 = sbr.rel (0) target = $region9
    $region8: #{lstms_forward.1} parent=1 // pred_region
      _
    $region9: #{lstms_forward.1} parent=1 // pred_fallthru
      _
    // Predicated region
    $region10: #{lstms_forward.1} parent=1 // pred_check
      _
    $region11: #{lstms_forward.1} parent=1 // pred_check_branch
      %24 = sbr.rel (0) target = $region13
    $region12: #{lstms_forward.1} parent=1 // pred_region
      %s26 = ssub.s32 8192, 8192
      %27 = vsyncadd [#allocation5], %s26
      %s28 = sshll.u32 [#allocation4], 4
      %s29 = int_to_ptr.vmem [resolvable:$true] %s28
      %34 = dma.hbm_to_vmem [thread:$0]  %s2, 8192, %s29, [#allocation5], 512, 512, 32
    $region13: #{lstms_forward.1} parent=1 // pred_fallthru
      _
    // Predicated region
    $region14: #{lstms_forward.1} parent=1 // pred_check
      _
    $region15: #{lstms_forward.1} parent=1 // pred_check_branch
      %36 = sbr.rel (0) target = $region17
    $region16: #{lstms_forward.1} parent=1 // pred_region
      _
    $region17: #{lstms_forward.1} parent=1 // pred_fallthru
      _
    // Predicated region
    $region18: #{lstms_forward.1} parent=1 // pred_check
      _
    $region19: #{lstms_forward.1} parent=1 // pred_check_branch
      %38 = sbr.rel (0) target = $region21
    $region20: #{lstms_forward.1} parent=1 // pred_region
      %s40 = ssub.s32 8192, 8192
      %41 = vsyncadd [#allocation7], %s40
      %s42 = sshll.u32 [#allocation6], 4
      %s43 = int_to_ptr.vmem [resolvable:$true] %s42
      %48 = dma.hbm_to_vmem [thread:$0]  %s4, 8192, %s43, [#allocation7], 512, 512, 32
    $region21: #{lstms_forward.1} parent=1 // pred_fallthru
      _
    // Predicated region
    $region22: #{lstms_forward.1} parent=1 // pred_check
      _
    $region23: #{lstms_forward.1} parent=1 // pred_check_branch
      %50 = sbr.rel (0) target = $region25
    $region24: #{lstms_forward.1} parent=1 // pred_region
      %s52 = ssub.s32 8192, 8192
      %53 = vsyncadd [#allocation7], %s52
      %s54 = sshll.u32 [#allocation8], 4
      %s55 = int_to_ptr.vmem [resolvable:$true] %s54
      %60 = dma.hbm_to_vmem [thread:$0]  %s5, 8192, %s55, [#allocation7], 512, 512, 32
    $region25: #{lstms_forward.1} parent=1 // pred_fallthru
      _
    // Predicated region
    $region26: #{lstms_forward.1} parent=1 // pred_check
      _
    $region27: #{lstms_forward.1} parent=1 // pred_check_branch
      %62 = sbr.rel (0) target = $region29
    $region28: #{lstms_forward.1} parent=1 // pred_region
      _
    $region29: #{lstms_forward.1} parent=1 // pred_fallthru
      _
    // Predicated region
    $region30: #{lstms_forward.1} parent=1 // pred_check
      _
    $region31: #{lstms_forward.1} parent=1 // pred_check_branch
      %64 = sbr.rel (0) target = $region33
    $region32: #{lstms_forward.1} parent=1 // pred_region
      %s66 = ssub.s32 2048, 2048
      %67 = vsyncadd [#allocation10], %s66
      %s68 = sshll.u32 [#allocation9], 4
      %s69 = int_to_ptr.vmem [resolvable:$true] %s68
      %74 = dma.hbm_to_vmem [thread:$0]  %s7, 2048, %s69, [#allocation10], 128, 128, 8
    $region33: #{lstms_forward.1} parent=1 // pred_fallthru
      _
    // Predicated region
    $region34: #{lstms_forward.1} parent=1 // pred_check
      _
    $region35: #{lstms_forward.1} parent=1 // pred_check_branch
      %76 = sbr.rel (0) target = $region37
    $region36: #{lstms_forward.1} parent=1 // pred_region
      _
    $region37: #{lstms_forward.1} parent=1 // pred_fallthru
      _
    // Predicated region
    $region38: #{lstms_forward.1} parent=1 // pred_check
      _
    $region39: #{lstms_forward.1} parent=1 // pred_check_branch
      %78 = sbr.rel (0) target = $region41
    $region40: #{lstms_forward.1} parent=1 // pred_region
      %79 = dma.done [#allocation5], 8192
    $region41: #{lstms_forward.1} parent=1 // pred_fallthru
      _
    // Predicated region
    $region42: #{lstms_forward.1} parent=1 // pred_check
      _
    $region43: #{lstms_forward.1} parent=1 // pred_check_branch
      %81 = sbr.rel (0) target = $region45
    $region44: #{lstms_forward.1} parent=1 // pred_region
      %82 = dma.done [#allocation7], 8192
    $region45: #{lstms_forward.1} parent=1 // pred_fallthru
      _
    // Predicated region
    $region46: #{lstms_forward.1} parent=1 // pred_check
      _
    $region47: #{lstms_forward.1} parent=1 // pred_check_branch
      %84 = sbr.rel (0) target = $region49
    $region48: #{lstms_forward.1} parent=1 // pred_region
      %85 = dma.done [#allocation7], 8192
    $region49: #{lstms_forward.1} parent=1 // pred_fallthru
      _
    // Predicated region
    $region50: #{lstms_forward.1} parent=1 // pred_check
      _
    $region51: #{lstms_forward.1} parent=1 // pred_check_branch
      %87 = sbr.rel (0) target = $region53
    $region52: #{lstms_forward.1} parent=1 // pred_region
      %88 = dma.done [#allocation10], 2048
    $region53: #{lstms_forward.1} parent=1 // pred_fallthru
      _
    %v89 = vld [vmem:[%s1] sm:$0xff]
    %v90 = vld [vmem:[%s1 + $0x8] sm:$0xff]
    %v91 = vld [vmem:[%s1 + $0x10] sm:$0xff]
    %v92 = vld [vmem:[%s1 + $0x18] sm:$0xff]
    %v93 = vld [vmem:[%s1 + $0x20] sm:$0xff]
    %v94 = vld [vmem:[%s1 + $0x28] sm:$0xff]
    %v95 = vld [vmem:[%s1 + $0x30] sm:$0xff]
    %v96 = vld [vmem:[%s1 + $0x38] sm:$0xff]
    %v97 = vld [vmem:[#allocation4] sm:$0xff]
    %v98 = vld [vmem:[#allocation4 + $0x8] sm:$0xff]
    %v99 = vld [vmem:[#allocation4 + $0x10] sm:$0xff]
    %v100 = vld [vmem:[#allocation4 + $0x18] sm:$0xff]
    %v101 = vld [vmem:[#allocation4 + $0x20] sm:$0xff]
    %v102 = vld [vmem:[#allocation4 + $0x28] sm:$0xff]
    %v103 = vld [vmem:[#allocation4 + $0x30] sm:$0xff]
    %v104 = vld [vmem:[#allocation4 + $0x38] sm:$0xff]
    %v105 = vld [vmem:[#allocation4 + $0x40] sm:$0xff]
    %v106 = vld [vmem:[#allocation4 + $0x48] sm:$0xff]
    %v107 = vld [vmem:[#allocation4 + $0x50] sm:$0xff]
    %v108 = vld [vmem:[#allocation4 + $0x58] sm:$0xff]
    %v109 = vld [vmem:[#allocation4 + $0x60] sm:$0xff]
    %v110 = vld [vmem:[#allocation4 + $0x68] sm:$0xff]
    %v111 = vld [vmem:[#allocation4 + $0x70] sm:$0xff]
    %v112 = vld [vmem:[#allocation4 + $0x78] sm:$0xff]
    %v113 = vld [vmem:[#allocation4 + $0x80] sm:$0xff]
    %v114 = vld [vmem:[#allocation4 + $0x88] sm:$0xff]
    %v115 = vld [vmem:[#allocation4 + $0x90] sm:$0xff]
    %v116 = vld [vmem:[#allocation4 + $0x98] sm:$0xff]
    %v117 = vld [vmem:[#allocation4 + $0xa0] sm:$0xff]
    %v118 = vld [vmem:[#allocation4 + $0xa8] sm:$0xff]
    %v119 = vld [vmem:[#allocation4 + $0xb0] sm:$0xff]
    %v120 = vld [vmem:[#allocation4 + $0xb8] sm:$0xff]
    %v121 = vld [vmem:[#allocation4 + $0xc0] sm:$0xff]
    %v122 = vld [vmem:[#allocation4 + $0xc8] sm:$0xff]
    %v123 = vld [vmem:[#allocation4 + $0xd0] sm:$0xff]
    %v124 = vld [vmem:[#allocation4 + $0xd8] sm:$0xff]
    %v125 = vld [vmem:[#allocation4 + $0xe0] sm:$0xff]
    %v126 = vld [vmem:[#allocation4 + $0xe8] sm:$0xff]
    %v127 = vld [vmem:[#allocation4 + $0xf0] sm:$0xff]
    %v128 = vld [vmem:[#allocation4 + $0xf8] sm:$0xff]
    %v129 = vld [vmem:[#allocation4 + $0x100] sm:$0xff]
    %v130 = vld [vmem:[#allocation4 + $0x108] sm:$0xff]
    %v131 = vld [vmem:[#allocation4 + $0x110] sm:$0xff]
    %v132 = vld [vmem:[#allocation4 + $0x118] sm:$0xff]
    %v133 = vld [vmem:[#allocation4 + $0x120] sm:$0xff]
    %v134 = vld [vmem:[#allocation4 + $0x128] sm:$0xff]
    %v135 = vld [vmem:[#allocation4 + $0x130] sm:$0xff]
    %v136 = vld [vmem:[#allocation4 + $0x138] sm:$0xff]
    %v137 = vld [vmem:[#allocation4 + $0x140] sm:$0xff]
    %v138 = vld [vmem:[#allocation4 + $0x148] sm:$0xff]
    %v139 = vld [vmem:[#allocation4 + $0x150] sm:$0xff]
    %v140 = vld [vmem:[#allocation4 + $0x158] sm:$0xff]
    %v141 = vld [vmem:[#allocation4 + $0x160] sm:$0xff]
    %v142 = vld [vmem:[#allocation4 + $0x168] sm:$0xff]
    %v143 = vld [vmem:[#allocation4 + $0x170] sm:$0xff]
    %v144 = vld [vmem:[#allocation4 + $0x178] sm:$0xff]
    %v145 = vld [vmem:[#allocation4 + $0x180] sm:$0xff]
    %v146 = vld [vmem:[#allocation4 + $0x188] sm:$0xff]
    %v147 = vld [vmem:[#allocation4 + $0x190] sm:$0xff]
    %v148 = vld [vmem:[#allocation4 + $0x198] sm:$0xff]
    %v149 = vld [vmem:[#allocation4 + $0x1a0] sm:$0xff]
    %v150 = vld [vmem:[#allocation4 + $0x1a8] sm:$0xff]
    %v151 = vld [vmem:[#allocation4 + $0x1b0] sm:$0xff]
    %v152 = vld [vmem:[#allocation4 + $0x1b8] sm:$0xff]
    %v153 = vld [vmem:[#allocation4 + $0x1c0] sm:$0xff]
    %v154 = vld [vmem:[#allocation4 + $0x1c8] sm:$0xff]
    %v155 = vld [vmem:[#allocation4 + $0x1d0] sm:$0xff]
    %v156 = vld [vmem:[#allocation4 + $0x1d8] sm:$0xff]
    %v157 = vld [vmem:[#allocation4 + $0x1e0] sm:$0xff]
    %v158 = vld [vmem:[#allocation4 + $0x1e8] sm:$0xff]
    %v159 = vld [vmem:[#allocation4 + $0x1f0] sm:$0xff]
    %v160 = vld [vmem:[#allocation4 + $0x1f8] sm:$0xff]
    %v161 = vld [vmem:[%s3] sm:$0xf]
    %v162 = vld [vmem:[%s0] sm:$0xff]
    %v163 = vld [vmem:[%s0 + $0x8] sm:$0xff]
    %v164 = vld [vmem:[%s0 + $0x10] sm:$0xff]
    %v165 = vld [vmem:[%s0 + $0x18] sm:$0xff]
    %v166 = vld [vmem:[%s0 + $0x20] sm:$0xff]
    %v167 = vld [vmem:[%s0 + $0x28] sm:$0xff]
    %v168 = vld [vmem:[%s0 + $0x30] sm:$0xff]
    %v169 = vld [vmem:[%s0 + $0x38] sm:$0xff]
    %v171 = vlaneseq
    %v172 = vshrl.u32 %v171, 7
    %v173 = vsub.s32 0, %v172
    %v174 = vrot.slane %v161, %v173
    %v175 = vlaneseq
    %v176 = vshrl.u32 %v175, 7
    %v177 = vsub.s32 1, %v176
    %v178 = vrot.slane %v161, %v177
    %v179 = vlaneseq
    %v180 = vshrl.u32 %v179, 7
    %v181 = vsub.s32 2, %v180
    %v182 = vrot.slane %v161, %v181
    %v183 = vlaneseq
    %v184 = vshrl.u32 %v183, 7
    %v185 = vsub.s32 3, %v184
    %v186 = vrot.slane %v161, %v185
    %vm191 = vcmask 130048
    %v193 = vsel %vm191, %v162, 0
    %v196 = vsel %vm191, %v163, 0
    %v199 = vsel %vm191, %v164, 0
    %v202 = vsel %vm191, %v165, 0
    %v205 = vsel %vm191, %v166, 0
    %v208 = vsel %vm191, %v167, 0
    %v211 = vsel %vm191, %v168, 0
    %v214 = vsel %vm191, %v169, 0
    %216 = vmatprep.subr.mxu0 %v90
    %217 = vmatpush1.msra.mxu0 %v89
    %218 = vmatprep.subr.mxu0 %v94
    %219 = vmatpush1.msra.mxu0 %v93
    %220 = vmatprep.subr.mxu0 0.0
    %221 = vmatpush1.msra.mxu0 0.0
    %222 = vmatprep.subr.mxu0 0.0
    %223 = vmatpush1.msra.mxu0 0.0
    %224 = vmatprep.subr.mxu0 0.0
    %225 = vmatpush1.msra.mxu0 0.0
    %226 = vmatprep.subr.mxu0 0.0
    %227 = vmatpush1.msra.mxu0 0.0
    %228 = vmatprep.subr.mxu0 0.0
    %229 = vmatpush1.msra.mxu0 0.0
    %230 = vmatprep.subr.mxu0 0.0
    %231 = vmatpush1.msra.mxu0 0.0
    %232 = vmatprep.subr.mxu0 0.0
    %233 = vmatpush1.msra.mxu0 0.0
    %234 = vmatprep.subr.mxu0 0.0
    %235 = vmatpush1.msra.mxu0 0.0
    %236 = vmatprep.subr.mxu0 0.0
    %237 = vmatpush1.msra.mxu0 0.0
    %238 = vmatprep.subr.mxu0 0.0
    %239 = vmatpush1.msra.mxu0 0.0
    %240 = vmatprep.subr.mxu0 0.0
    %241 = vmatpush1.msra.mxu0 0.0
    %242 = vmatprep.subr.mxu0 0.0
    %243 = vmatpush1.msra.mxu0 0.0
    %244 = vmatprep.subr.mxu0 0.0
    %245 = vmatpush1.msra.mxu0 0.0
    %246 = vmatprep.subr.mxu0 0.0
    %247 = vmatpush1.msra.mxu0 0.0
    %248 = vmatprep.subr.mxu0 0.0
    %249 = vmatpush1.msra.mxu0 0.0
    %250 = vmatprep.subr.mxu0 0.0
    %251 = vmatpush1.msra.mxu0 0.0
    %252 = vmatprep.subr.mxu0 0.0
    %253 = vmatpush1.msra.mxu0 0.0
    %254 = vmatprep.subr.mxu0 0.0
    %255 = vmatpush1.msra.mxu0 0.0
    %256 = vmatprep.subr.mxu0 0.0
    %257 = vmatpush1.msra.mxu0 0.0
    %258 = vmatprep.subr.mxu0 0.0
    %259 = vmatpush1.msra.mxu0 0.0
    %260 = vmatprep.subr.mxu0 0.0
    %261 = vmatpush1.msra.mxu0 0.0
    %262 = vmatprep.subr.mxu0 0.0
    %263 = vmatpush1.msra.mxu0 0.0
    %264 = vmatprep.subr.mxu0 0.0
    %265 = vmatpush1.msra.mxu0 0.0
    %266 = vmatprep.subr.mxu0 0.0
    %267 = vmatpush1.msra.mxu0 0.0
    %268 = vmatprep.subr.mxu0 0.0
    %269 = vmatpush1.msra.mxu0 0.0
    %270 = vmatprep.subr.mxu0 0.0
    %271 = vmatpush1.msra.mxu0 0.0
    %272 = vmatprep.subr.mxu0 0.0
    %273 = vmatpush1.msra.mxu0 0.0
    %274 = vmatprep.subr.mxu0 0.0
    %275 = vmatpush1.msra.mxu0 0.0
    %276 = vmatprep.subr.mxu0 0.0
    %277 = vmatpush1.msra.mxu0 0.0
    %278 = vmatprep.subr.mxu0 0.0
    %279 = vmatpush1.msra.mxu0 0.0
    %280 = vmatprep.mubr.f32.mxu0 0.0
    %281 = vmatmul.mubr.f32.gmra.mrb[0].mxu0 %v193
    %v282 = vpop.f32.mrb[0].mxu0
    %v283 = vadd.f32 %v174, %v282
    %v284 = vpop.f32.mrb[0].mxu0
    %v285 = vadd.f32 %v178, %v284
    %286 = vmatprep.mubr.f32.mxu0 0.0
    %287 = vmatmul.mubr.f32.gmra.mrb[0].mxu0 %v196
    %v288 = vpop.f32.mrb[0].mxu0
    %v289 = vadd.f32 %v174, %v288
    %v290 = vpop.f32.mrb[0].mxu0
    %v291 = vadd.f32 %v178, %v290
    %292 = vmatprep.mubr.f32.mxu0 0.0
    %293 = vmatmul.mubr.f32.gmra.mrb[0].mxu0 %v199
    %v294 = vpop.f32.mrb[0].mxu0
    %v295 = vadd.f32 %v174, %v294
    %v296 = vpop.f32.mrb[0].mxu0
    %v297 = vadd.f32 %v178, %v296
    %298 = vmatprep.mubr.f32.mxu0 0.0
    %299 = vmatmul.mubr.f32.gmra.mrb[0].mxu0 %v202
    %v300 = vpop.f32.mrb[0].mxu0
    %v301 = vadd.f32 %v174, %v300
    %v302 = vpop.f32.mrb[0].mxu0
    %v303 = vadd.f32 %v178, %v302
    %304 = vmatprep.mubr.f32.mxu0 0.0
    %305 = vmatmul.mubr.f32.gmra.mrb[0].mxu0 %v205
    %v306 = vpop.f32.mrb[0].mxu0
    %v307 = vadd.f32 %v174, %v306
    %v308 = vpop.f32.mrb[0].mxu0
    %v309 = vadd.f32 %v178, %v308
    %310 = vmatprep.mubr.f32.mxu0 0.0
    %311 = vmatmul.mubr.f32.gmra.mrb[0].mxu0 %v208
    %v312 = vpop.f32.mrb[0].mxu0
    %v313 = vadd.f32 %v174, %v312
    %v314 = vpop.f32.mrb[0].mxu0
    %v315 = vadd.f32 %v178, %v314
    %316 = vmatprep.mubr.f32.mxu0 0.0
    %317 = vmatmul.mubr.f32.gmra.mrb[0].mxu0 %v211
    %v318 = vpop.f32.mrb[0].mxu0
    %v319 = vadd.f32 %v174, %v318
    %v320 = vpop.f32.mrb[0].mxu0
    %v321 = vadd.f32 %v178, %v320
    %322 = vmatprep.mubr.f32.mxu0 0.0
    %323 = vmatmul.mubr.f32.gmra.mrb[0].mxu0 %v214
    %v324 = vpop.f32.mrb[0].mxu0
    %v325 = vadd.f32 %v174, %v324
    %v326 = vpop.f32.mrb[0].mxu0
    %v327 = vadd.f32 %v178, %v326
    %328 = vdwg.mxu0
    %329 = vmatprep.subr.mxu0 %v92
    %330 = vmatpush1.msra.mxu0 %v91
    %331 = vmatprep.subr.mxu0 %v96
    %332 = vmatpush1.msra.mxu0 %v95
    %333 = vmatprep.subr.mxu0 0.0
    %334 = vmatpush1.msra.mxu0 0.0
    %335 = vmatprep.subr.mxu0 0.0
    %336 = vmatpush1.msra.mxu0 0.0
    %337 = vmatprep.subr.mxu0 0.0
    %338 = vmatpush1.msra.mxu0 0.0
    %339 = vmatprep.subr.mxu0 0.0
    %340 = vmatpush1.msra.mxu0 0.0
    %341 = vmatprep.subr.mxu0 0.0
    %342 = vmatpush1.msra.mxu0 0.0
    %343 = vmatprep.subr.mxu0 0.0
    %344 = vmatpush1.msra.mxu0 0.0
    %345 = vmatprep.subr.mxu0 0.0
    %346 = vmatpush1.msra.mxu0 0.0
    %347 = vmatprep.subr.mxu0 0.0
    %348 = vmatpush1.msra.mxu0 0.0
    %349 = vmatprep.subr.mxu0 0.0
    %350 = vmatpush1.msra.mxu0 0.0
    %351 = vmatprep.subr.mxu0 0.0
    %352 = vmatpush1.msra.mxu0 0.0
    %353 = vmatprep.subr.mxu0 0.0
    %354 = vmatpush1.msra.mxu0 0.0
    %355 = vmatprep.subr.mxu0 0.0
    %356 = vmatpush1.msra.mxu0 0.0
    %357 = vmatprep.subr.mxu0 0.0
    %358 = vmatpush1.msra.mxu0 0.0
    %359 = vmatprep.subr.mxu0 0.0
    %360 = vmatpush1.msra.mxu0 0.0
    %361 = vmatprep.subr.mxu0 0.0
    %362 = vmatpush1.msra.mxu0 0.0
    %363 = vmatprep.subr.mxu0 0.0
    %364 = vmatpush1.msra.mxu0 0.0
    %365 = vmatprep.subr.mxu0 0.0
    %366 = vmatpush1.msra.mxu0 0.0
    %367 = vmatprep.subr.mxu0 0.0
    %368 = vmatpush1.msra.mxu0 0.0
    %369 = vmatprep.subr.mxu0 0.0
    %370 = vmatpush1.msra.mxu0 0.0
    %371 = vmatprep.subr.mxu0 0.0
    %372 = vmatpush1.msra.mxu0 0.0
    %373 = vmatprep.subr.mxu0 0.0
    %374 = vmatpush1.msra.mxu0 0.0
    %375 = vmatprep.subr.mxu0 0.0
    %376 = vmatpush1.msra.mxu0 0.0
    %377 = vmatprep.subr.mxu0 0.0
    %378 = vmatpush1.msra.mxu0 0.0
    %379 = vmatprep.subr.mxu0 0.0
    %380 = vmatpush1.msra.mxu0 0.0
    %381 = vmatprep.subr.mxu0 0.0
    %382 = vmatpush1.msra.mxu0 0.0
    %383 = vmatprep.subr.mxu0 0.0
    %384 = vmatpush1.msra.mxu0 0.0
    %385 = vmatprep.subr.mxu0 0.0
    %386 = vmatpush1.msra.mxu0 0.0
    %387 = vmatprep.subr.mxu0 0.0
    %388 = vmatpush1.msra.mxu0 0.0
    %389 = vmatprep.subr.mxu0 0.0
    %390 = vmatpush1.msra.mxu0 0.0
    %391 = vmatprep.subr.mxu0 0.0
    %392 = vmatpush1.msra.mxu0 0.0
    %393 = vmatprep.mubr.f32.mxu0 0.0
    %394 = vmatmul.mubr.f32.gmra.mrb[0].mxu0 %v193
    %v395 = vpop.f32.mrb[0].mxu0
    %v396 = vadd.f32 %v182, %v395
    %v397 = vpop.f32.mrb[0].mxu0
    %v398 = vadd.f32 %v186, %v397
    %399 = vmatprep.mubr.f32.mxu0 0.0
    %400 = vmatmul.mubr.f32.gmra.mrb[0].mxu0 %v196
    %v401 = vpop.f32.mrb[0].mxu0
    %v402 = vadd.f32 %v182, %v401
    %v403 = vpop.f32.mrb[0].mxu0
    %v404 = vadd.f32 %v186, %v403
    %405 = vmatprep.mubr.f32.mxu0 0.0
    %406 = vmatmul.mubr.f32.gmra.mrb[0].mxu0 %v199
    %v407 = vpop.f32.mrb[0].mxu0
    %v408 = vadd.f32 %v182, %v407
    %v409 = vpop.f32.mrb[0].mxu0
    %v410 = vadd.f32 %v186, %v409
    %411 = vmatprep.mubr.f32.mxu0 0.0
    %412 = vmatmul.mubr.f32.gmra.mrb[0].mxu0 %v202
    %v413 = vpop.f32.mrb[0].mxu0
    %v414 = vadd.f32 %v182, %v413
    %v415 = vpop.f32.mrb[0].mxu0
    %v416 = vadd.f32 %v186, %v415
    %417 = vmatprep.mubr.f32.mxu0 0.0
    %418 = vmatmul.mubr.f32.gmra.mrb[0].mxu0 %v205
    %v419 = vpop.f32.mrb[0].mxu0
    %v420 = vadd.f32 %v182, %v419
    %v421 = vpop.f32.mrb[0].mxu0
    %v422 = vadd.f32 %v186, %v421
    %423 = vmatprep.mubr.f32.mxu0 0.0
    %424 = vmatmul.mubr.f32.gmra.mrb[0].mxu0 %v208
    %v425 = vpop.f32.mrb[0].mxu0
    %v426 = vadd.f32 %v182, %v425
    %v427 = vpop.f32.mrb[0].mxu0
    %v428 = vadd.f32 %v186, %v427
    %429 = vmatprep.mubr.f32.mxu0 0.0
    %430 = vmatmul.mubr.f32.gmra.mrb[0].mxu0 %v211
    %v431 = vpop.f32.mrb[0].mxu0
    %v432 = vadd.f32 %v182, %v431
    %v433 = vpop.f32.mrb[0].mxu0
    %v434 = vadd.f32 %v186, %v433
    %435 = vmatprep.mubr.f32.mxu0 0.0
    %436 = vmatmul.mubr.f32.gmra.mrb[0].mxu0 %v214
    %v437 = vpop.f32.mrb[0].mxu0
    %v438 = vadd.f32 %v182, %v437
    %v439 = vpop.f32.mrb[0].mxu0
    %v440 = vadd.f32 %v186, %v439
    %441 = vdwg.mxu0
    %442 = vst [vmem:[#allocation3] sm:$0xff] %v283
    %443 = vst [vmem:[#allocation3 + $0x8] sm:$0xff] %v285
    %444 = vst [vmem:[#allocation3 + $0x10] sm:$0xff] %v396
    %445 = vst [vmem:[#allocation3 + $0x18] sm:$0xff] %v398
    %446 = vst [vmem:[#allocation3 + $0x20] sm:$0xff] %v289
    %447 = vst [vmem:[#allocation3 + $0x28] sm:$0xff] %v291
    %448 = vst [vmem:[#allocation3 + $0x30] sm:$0xff] %v402
    %449 = vst [vmem:[#allocation3 + $0x38] sm:$0xff] %v404
    %450 = vst [vmem:[#allocation3 + $0x40] sm:$0xff] %v295
    %451 = vst [vmem:[#allocation3 + $0x48] sm:$0xff] %v297
    %452 = vst [vmem:[#allocation3 + $0x50] sm:$0xff] %v408
    %453 = vst [vmem:[#allocation3 + $0x58] sm:$0xff] %v410
    %454 = vst [vmem:[#allocation3 + $0x60] sm:$0xff] %v301
    %455 = vst [vmem:[#allocation3 + $0x68] sm:$0xff] %v303
    %456 = vst [vmem:[#allocation3 + $0x70] sm:$0xff] %v414
    %457 = vst [vmem:[#allocation3 + $0x78] sm:$0xff] %v416
    %458 = vst [vmem:[#allocation3 + $0x80] sm:$0xff] %v307
    %459 = vst [vmem:[#allocation3 + $0x88] sm:$0xff] %v309
    %460 = vst [vmem:[#allocation3 + $0x90] sm:$0xff] %v420
    %461 = vst [vmem:[#allocation3 + $0x98] sm:$0xff] %v422
    %462 = vst [vmem:[#allocation3 + $0xa0] sm:$0xff] %v313
    %463 = vst [vmem:[#allocation3 + $0xa8] sm:$0xff] %v315
    %464 = vst [vmem:[#allocation3 + $0xb0] sm:$0xff] %v426
    %465 = vst [vmem:[#allocation3 + $0xb8] sm:$0xff] %v428
    %466 = vst [vmem:[#allocation3 + $0xc0] sm:$0xff] %v319
    %467 = vst [vmem:[#allocation3 + $0xc8] sm:$0xff] %v321
    %468 = vst [vmem:[#allocation3 + $0xd0] sm:$0xff] %v432
    %469 = vst [vmem:[#allocation3 + $0xd8] sm:$0xff] %v434
    %470 = vst [vmem:[#allocation3 + $0xe0] sm:$0xff] %v325
    %471 = vst [vmem:[#allocation3 + $0xe8] sm:$0xff] %v327
    %472 = vst [vmem:[#allocation3 + $0xf0] sm:$0xff] %v438
    %473 = vst [vmem:[#allocation3 + $0xf8] sm:$0xff] %v440
    %v474 = vld [vmem:[#allocation3] ss:$8 sm:$0xf]
    %s475 = scalar_lea.vmem [#allocation3], 32
    %v476 = vld [vmem:[%s475] ss:$8 sm:$0xf]
    %s477 = scalar_lea.vmem [#allocation3], 64
    %v478 = vld [vmem:[%s477] ss:$8 sm:$0xf]
    %s479 = scalar_lea.vmem [#allocation3], 96
    %v480 = vld [vmem:[%s479] ss:$8 sm:$0xf]
    %s481 = scalar_lea.vmem [#allocation3], 128
    %v482 = vld [vmem:[%s481] ss:$8 sm:$0xf]
    %s483 = scalar_lea.vmem [#allocation3], 160
    %v484 = vld [vmem:[%s483] ss:$8 sm:$0xf]
    %s485 = scalar_lea.vmem [#allocation3], 192
    %v486 = vld [vmem:[%s485] ss:$8 sm:$0xf]
    %s487 = scalar_lea.vmem [#allocation3], 224
    %v488 = vld [vmem:[%s487] ss:$8 sm:$0xf]
    %489 = vmatprep.subr.mxu0 %v98
    %490 = vmatpush1.msra.mxu0 %v97
    %491 = vmatprep.subr.mxu0 %v102
    %492 = vmatpush1.msra.mxu0 %v101
    %493 = vmatprep.subr.mxu0 %v106
    %494 = vmatpush1.msra.mxu0 %v105
    %495 = vmatprep.subr.mxu0 %v110
    %496 = vmatpush1.msra.mxu0 %v109
    %497 = vmatprep.subr.mxu0 %v114
    %498 = vmatpush1.msra.mxu0 %v113
    %499 = vmatprep.subr.mxu0 %v118
    %500 = vmatpush1.msra.mxu0 %v117
    %501 = vmatprep.subr.mxu0 %v122
    %502 = vmatpush1.msra.mxu0 %v121
    %503 = vmatprep.subr.mxu0 %v126
    %504 = vmatpush1.msra.mxu0 %v125
    %505 = vmatprep.subr.mxu0 %v130
    %506 = vmatpush1.msra.mxu0 %v129
    %507 = vmatprep.subr.mxu0 %v134
    %508 = vmatpush1.msra.mxu0 %v133
    %509 = vmatprep.subr.mxu0 %v138
    %510 = vmatpush1.msra.mxu0 %v137
    %511 = vmatprep.subr.mxu0 %v142
    %512 = vmatpush1.msra.mxu0 %v141
    %513 = vmatprep.subr.mxu0 %v146
    %514 = vmatpush1.msra.mxu0 %v145
    %515 = vmatprep.subr.mxu0 %v150
    %516 = vmatpush1.msra.mxu0 %v149
    %517 = vmatprep.subr.mxu0 %v154
    %518 = vmatpush1.msra.mxu0 %v153
    %519 = vmatprep.subr.mxu0 %v158
    %520 = vmatpush1.msra.mxu0 %v157
    %521 = vmatprep.subr.mxu0 0.0
    %522 = vmatpush1.msra.mxu0 0.0
    %523 = vmatprep.subr.mxu0 0.0
    %524 = vmatpush1.msra.mxu0 0.0
    %525 = vmatprep.subr.mxu0 0.0
    %526 = vmatpush1.msra.mxu0 0.0
    %527 = vmatprep.subr.mxu0 0.0
    %528 = vmatpush1.msra.mxu0 0.0
    %529 = vmatprep.subr.mxu0 0.0
    %530 = vmatpush1.msra.mxu0 0.0
    %531 = vmatprep.subr.mxu0 0.0
    %532 = vmatpush1.msra.mxu0 0.0
    %533 = vmatprep.subr.mxu0 0.0
    %534 = vmatpush1.msra.mxu0 0.0
    %535 = vmatprep.subr.mxu0 0.0
    %536 = vmatpush1.msra.mxu0 0.0
    %537 = vmatprep.subr.mxu0 0.0
    %538 = vmatpush1.msra.mxu0 0.0
    %539 = vmatprep.subr.mxu0 0.0
    %540 = vmatpush1.msra.mxu0 0.0
    %541 = vmatprep.subr.mxu0 0.0
    %542 = vmatpush1.msra.mxu0 0.0
    %543 = vmatprep.subr.mxu0 0.0
    %544 = vmatpush1.msra.mxu0 0.0
    %545 = vmatprep.subr.mxu0 0.0
    %546 = vmatpush1.msra.mxu0 0.0
    %547 = vmatprep.subr.mxu0 0.0
    %548 = vmatpush1.msra.mxu0 0.0
    %549 = vmatprep.subr.mxu0 0.0
    %550 = vmatpush1.msra.mxu0 0.0
    %551 = vmatprep.subr.mxu0 0.0
    %552 = vmatpush1.msra.mxu0 0.0
    %553 = vmatprep.mubr.f32.mxu0 0.0
    %554 = vmatmul.mubr.f32.gmra.mrb[0].mxu0 0.0
    %v555 = vpop.f32.mrb[0].mxu0
    %v556 = vadd.f32 0.0, %v555
    %v557 = vpop.f32.mrb[0].mxu0
    %v558 = vadd.f32 0.0, %v557
    %559 = vdwg.mxu0
    %560 = vmatprep.subr.mxu0 %v100
    %561 = vmatpush1.msra.mxu0 %v99
    %562 = vmatprep.subr.mxu0 %v104
    %563 = vmatpush1.msra.mxu0 %v103
    %564 = vmatprep.subr.mxu0 %v108
    %565 = vmatpush1.msra.mxu0 %v107
    %566 = vmatprep.subr.mxu0 %v112
    %567 = vmatpush1.msra.mxu0 %v111
    %568 = vmatprep.subr.mxu0 %v116
    %569 = vmatpush1.msra.mxu0 %v115
    %570 = vmatprep.subr.mxu0 %v120
    %571 = vmatpush1.msra.mxu0 %v119
    %572 = vmatprep.subr.mxu0 %v124
    %573 = vmatpush1.msra.mxu0 %v123
    %574 = vmatprep.subr.mxu0 %v128
    %575 = vmatpush1.msra.mxu0 %v127
    %576 = vmatprep.subr.mxu0 %v132
    %577 = vmatpush1.msra.mxu0 %v131
    %578 = vmatprep.subr.mxu0 %v136
    %579 = vmatpush1.msra.mxu0 %v135
    %580 = vmatprep.subr.mxu0 %v140
    %581 = vmatpush1.msra.mxu0 %v139
    %582 = vmatprep.subr.mxu0 %v144
    %583 = vmatpush1.msra.mxu0 %v143
    %584 = vmatprep.subr.mxu0 %v148
    %585 = vmatpush1.msra.mxu0 %v147
    %586 = vmatprep.subr.mxu0 %v152
    %587 = vmatpush1.msra.mxu0 %v151
    %588 = vmatprep.subr.mxu0 %v156
    %589 = vmatpush1.msra.mxu0 %v155
    %590 = vmatprep.subr.mxu0 %v160
    %591 = vmatpush1.msra.mxu0 %v159
    %592 = vmatprep.subr.mxu0 0.0
    %593 = vmatpush1.msra.mxu0 0.0
    %594 = vmatprep.subr.mxu0 0.0
    %595 = vmatpush1.msra.mxu0 0.0
    %596 = vmatprep.subr.mxu0 0.0
    %597 = vmatpush1.msra.mxu0 0.0
    %598 = vmatprep.subr.mxu0 0.0
    %599 = vmatpush1.msra.mxu0 0.0
    %600 = vmatprep.subr.mxu0 0.0
    %601 = vmatpush1.msra.mxu0 0.0
    %602 = vmatprep.subr.mxu0 0.0
    %603 = vmatpush1.msra.mxu0 0.0
    %604 = vmatprep.subr.mxu0 0.0
    %605 = vmatpush1.msra.mxu0 0.0
    %606 = vmatprep.subr.mxu0 0.0
    %607 = vmatpush1.msra.mxu0 0.0
    %608 = vmatprep.subr.mxu0 0.0
    %609 = vmatpush1.msra.mxu0 0.0
    %610 = vmatprep.subr.mxu0 0.0
    %611 = vmatpush1.msra.mxu0 0.0
    %612 = vmatprep.subr.mxu0 0.0
    %613 = vmatpush1.msra.mxu0 0.0
    %614 = vmatprep.subr.mxu0 0.0
    %615 = vmatpush1.msra.mxu0 0.0
    %616 = vmatprep.subr.mxu0 0.0
    %617 = vmatpush1.msra.mxu0 0.0
    %618 = vmatprep.subr.mxu0 0.0
    %619 = vmatpush1.msra.mxu0 0.0
    %620 = vmatprep.subr.mxu0 0.0
    %621 = vmatpush1.msra.mxu0 0.0
    %622 = vmatprep.subr.mxu0 0.0
    %623 = vmatpush1.msra.mxu0 0.0
    %624 = vmatprep.mubr.f32.mxu0 0.0
    %625 = vmatmul.mubr.f32.gmra.mrb[0].mxu0 0.0
    %v626 = vpop.f32.mrb[0].mxu0
    %v627 = vadd.f32 0.0, %v626
    %v628 = vpop.f32.mrb[0].mxu0
    %v629 = vadd.f32 0.0, %v628
    %630 = vdwg.mxu0
    %v635 = vcombine.low %v556, %v558
    %v636 = vcombine.high %v556, %v558
    %v637 = vcombine.low %v627, %v629
    %v638 = vcombine.high %v627, %v629
    %v640 = vunpack.c.l.s4 1966171168
    %v641 = vunpack.c.0.s8 %v640
    %v642 = vlaneseq
    %v643 = vshrl.u32 %v642, 7
    %v644 = vsub.s32 %v641, %v643
    %v645 = vrot.slane %v635, %v644
    %v647 = vunpack.c.l.s4 1966171168
    %v648 = vunpack.c.0.s8 %v647
    %v649 = vlaneseq
    %v650 = vshrl.u32 %v649, 7
    %v651 = vsub.s32 %v648, %v650
    %v652 = vrot.slane %v636, %v651
    %v654 = vunpack.c.l.s4 1966171168
    %v655 = vunpack.c.0.s8 %v654
    %v656 = vlaneseq
    %v657 = vshrl.u32 %v656, 7
    %v658 = vsub.s32 %v655, %v657
    %v659 = vrot.slane %v637, %v658
    %v661 = vunpack.c.l.s4 1966171168
    %v662 = vunpack.c.0.s8 %v661
    %v663 = vlaneseq
    %v664 = vshrl.u32 %v663, 7
    %v665 = vsub.s32 %v662, %v664
    %v666 = vrot.slane %v638, %v665
    %v667 = vcombine.low %v645, %v659
    %v668 = vcombine.high %v645, %v659
    %v669 = vcombine.low %v652, %v666
    %v670 = vcombine.high %v652, %v666
    %v672 = vunpack.c.l.s4 1966171168
    %v673 = vunpack.c.0.s8 %v672
    %v674 = vlaneseq
    %v675 = vshrl.u32 %v674, 7
    %v676 = vsub.s32 %v673, %v675
    %v677 = vrot.slane %v667, %v676
    %v679 = vunpack.c.l.s4 1966171168
    %v680 = vunpack.c.0.s8 %v679
    %v681 = vlaneseq
    %v682 = vshrl.u32 %v681, 7
    %v683 = vsub.s32 %v680, %v682
    %v684 = vrot.slane %v669, %v683
    %v686 = vunpack.c.l.s4 1966171168
    %v687 = vunpack.c.0.s8 %v686
    %v688 = vlaneseq
    %v689 = vshrl.u32 %v688, 7
    %v690 = vsub.s32 %v687, %v689
    %v691 = vrot.slane %v668, %v690
    %v693 = vunpack.c.l.s4 1966171168
    %v694 = vunpack.c.0.s8 %v693
    %v695 = vlaneseq
    %v696 = vshrl.u32 %v695, 7
    %v697 = vsub.s32 %v694, %v696
    %v698 = vrot.slane %v670, %v697
    %v699 = vcombine.high %v677, %v677
    %v700 = vcombine.high %v684, %v684
    %v701 = vcombine.high %v691, %v691
    %v702 = vcombine.high %v698, %v698
    %v711 = vadd.f32 %v474, %v677
    %v712 = vadd.f32 %v476, %v691
    %v713 = vadd.f32 %v478, %v699
    %v714 = vadd.f32 %v480, %v701
    %v715 = vadd.f32 %v482, %v684
    %v716 = vadd.f32 %v484, %v698
    %v717 = vadd.f32 %v486, %v700
    %v718 = vadd.f32 %v488, %v702
    %v727 = vrot.slane %v711, 1
    %v728 = vrot.slane %v712, 1
    %v729 = vrot.slane %v713, 1
    %v730 = vrot.slane %v714, 1
    %v731 = vrot.slane %v715, 1
    %v732 = vrot.slane %v716, 1
    %v733 = vrot.slane %v717, 1
    %v734 = vrot.slane %v718, 1
    %v743 = vxor.u32 %v727, 2147483648
    %v744 = vxor.u32 %v728, 2147483648
    %v745 = vxor.u32 %v729, 2147483648
    %v746 = vxor.u32 %v730, 2147483648
    %v747 = vxor.u32 %v731, 2147483648
    %v748 = vxor.u32 %v732, 2147483648
    %v749 = vxor.u32 %v733, 2147483648
    %v750 = vxor.u32 %v734, 2147483648
    %v751 = vmul.f32 %v743, 1.442695
    %v752 = vpow.pop %v751
    %v753 = vmul.f32 %v744, 1.442695
    %v754 = vpow.pop %v753
    %v755 = vmul.f32 %v745, 1.442695
    %v756 = vpow.pop %v755
    %v757 = vmul.f32 %v746, 1.442695
    %v758 = vpow.pop %v757
    %v759 = vmul.f32 %v747, 1.442695
    %v760 = vpow.pop %v759
    %v761 = vmul.f32 %v748, 1.442695
    %v762 = vpow.pop %v761
    %v763 = vmul.f32 %v749, 1.442695
    %v764 = vpow.pop %v763
    %v765 = vmul.f32 %v750, 1.442695
    %v766 = vpow.pop %v765
    %v767 = vadd.f32 %v752, 1.0
    %v768 = vadd.f32 %v754, 1.0
    %v769 = vadd.f32 %v756, 1.0
    %v770 = vadd.f32 %v758, 1.0
    %v771 = vadd.f32 %v760, 1.0
    %v772 = vadd.f32 %v762, 1.0
    %v773 = vadd.f32 %v764, 1.0
    %v774 = vadd.f32 %v766, 1.0
    %v775 = vrcp.pop %v767
    %v776 = vmul.f32 1.0, %v775
    %v777 = vrcp.pop %v768
    %v778 = vmul.f32 1.0, %v777
    %v779 = vrcp.pop %v769
    %v780 = vmul.f32 1.0, %v779
    %v781 = vrcp.pop %v770
    %v782 = vmul.f32 1.0, %v781
    %v783 = vrcp.pop %v771
    %v784 = vmul.f32 1.0, %v783
    %v785 = vrcp.pop %v772
    %v786 = vmul.f32 1.0, %v785
    %v787 = vrcp.pop %v773
    %v788 = vmul.f32 1.0, %v787
    %v789 = vrcp.pop %v774
    %v790 = vmul.f32 1.0, %v789
    %v791 = vmul.f32 %v776, 0.0
    %v792 = vmul.f32 %v778, 0.0
    %v793 = vmul.f32 %v780, 0.0
    %v794 = vmul.f32 %v782, 0.0
    %v795 = vmul.f32 %v784, 0.0
    %v796 = vmul.f32 %v786, 0.0
    %v797 = vmul.f32 %v788, 0.0
    %v798 = vmul.f32 %v790, 0.0
    %v799 = vxor.u32 %v711, 2147483648
    %v800 = vxor.u32 %v712, 2147483648
    %v801 = vxor.u32 %v713, 2147483648
    %v802 = vxor.u32 %v714, 2147483648
    %v803 = vxor.u32 %v715, 2147483648
    %v804 = vxor.u32 %v716, 2147483648
    %v805 = vxor.u32 %v717, 2147483648
    %v806 = vxor.u32 %v718, 2147483648
    %v807 = vmul.f32 %v799, 1.442695
    %v808 = vpow.pop %v807
    %v809 = vmul.f32 %v800, 1.442695
    %v810 = vpow.pop %v809
    %v811 = vmul.f32 %v801, 1.442695
    %v812 = vpow.pop %v811
    %v813 = vmul.f32 %v802, 1.442695
    %v814 = vpow.pop %v813
    %v815 = vmul.f32 %v803, 1.442695
    %v816 = vpow.pop %v815
    %v817 = vmul.f32 %v804, 1.442695
    %v818 = vpow.pop %v817
    %v819 = vmul.f32 %v805, 1.442695
    %v820 = vpow.pop %v819
    %v821 = vmul.f32 %v806, 1.442695
    %v822 = vpow.pop %v821
    %v823 = vadd.f32 %v808, 1.0
    %v824 = vadd.f32 %v810, 1.0
    %v825 = vadd.f32 %v812, 1.0
    %v826 = vadd.f32 %v814, 1.0
    %v827 = vadd.f32 %v816, 1.0
    %v828 = vadd.f32 %v818, 1.0
    %v829 = vadd.f32 %v820, 1.0
    %v830 = vadd.f32 %v822, 1.0
    %v831 = vrcp.pop %v823
    %v832 = vmul.f32 1.0, %v831
    %v833 = vrcp.pop %v824
    %v834 = vmul.f32 1.0, %v833
    %v835 = vrcp.pop %v825
    %v836 = vmul.f32 1.0, %v835
    %v837 = vrcp.pop %v826
    %v838 = vmul.f32 1.0, %v837
    %v839 = vrcp.pop %v827
    %v840 = vmul.f32 1.0, %v839
    %v841 = vrcp.pop %v828
    %v842 = vmul.f32 1.0, %v841
    %v843 = vrcp.pop %v829
    %v844 = vmul.f32 1.0, %v843
    %v845 = vrcp.pop %v830
    %v846 = vmul.f32 1.0, %v845
    %v847 = vrot.slane %v711, 2
    %v848 = vrot.slane %v712, 2
    %v849 = vrot.slane %v713, 2
    %v850 = vrot.slane %v714, 2
    %v851 = vrot.slane %v715, 2
    %v852 = vrot.slane %v716, 2
    %v853 = vrot.slane %v717, 2
    %v854 = vrot.slane %v718, 2
    %v863 = vtanh.pop %v847
    %v864 = vtanh.pop %v848
    %v865 = vtanh.pop %v849
    %v866 = vtanh.pop %v850
    %v867 = vtanh.pop %v851
    %v868 = vtanh.pop %v852
    %v869 = vtanh.pop %v853
    %v870 = vtanh.pop %v854
    %v871 = vmul.f32 %v832, %v863
    %v872 = vmul.f32 %v834, %v864
    %v873 = vmul.f32 %v836, %v865
    %v874 = vmul.f32 %v838, %v866
    %v875 = vmul.f32 %v840, %v867
    %v876 = vmul.f32 %v842, %v868
    %v877 = vmul.f32 %v844, %v869
    %v878 = vmul.f32 %v846, %v870
    %v879 = vadd.f32 %v791, %v871
    %v880 = vadd.f32 %v792, %v872
    %v881 = vadd.f32 %v793, %v873
    %v882 = vadd.f32 %v794, %v874
    %v883 = vadd.f32 %v795, %v875
    %v884 = vadd.f32 %v796, %v876
    %v885 = vadd.f32 %v797, %v877
    %v886 = vadd.f32 %v798, %v878
    %v887 = vrot.slane %v711, 3
    %v888 = vrot.slane %v712, 3
    %v889 = vrot.slane %v713, 3
    %v890 = vrot.slane %v714, 3
    %v891 = vrot.slane %v715, 3
    %v892 = vrot.slane %v716, 3
    %v893 = vrot.slane %v717, 3
    %v894 = vrot.slane %v718, 3
    %v903 = vxor.u32 %v887, 2147483648
    %v904 = vxor.u32 %v888, 2147483648
    %v905 = vxor.u32 %v889, 2147483648
    %v906 = vxor.u32 %v890, 2147483648
    %v907 = vxor.u32 %v891, 2147483648
    %v908 = vxor.u32 %v892, 2147483648
    %v909 = vxor.u32 %v893, 2147483648
    %v910 = vxor.u32 %v894, 2147483648
    %v911 = vmul.f32 %v903, 1.442695
    %v912 = vpow.pop %v911
    %v913 = vmul.f32 %v904, 1.442695
    %v914 = vpow.pop %v913
    %v915 = vmul.f32 %v905, 1.442695
    %v916 = vpow.pop %v915
    %v917 = vmul.f32 %v906, 1.442695
    %v918 = vpow.pop %v917
    %v919 = vmul.f32 %v907, 1.442695
    %v920 = vpow.pop %v919
    %v921 = vmul.f32 %v908, 1.442695
    %v922 = vpow.pop %v921
    %v923 = vmul.f32 %v909, 1.442695
    %v924 = vpow.pop %v923
    %v925 = vmul.f32 %v910, 1.442695
    %v926 = vpow.pop %v925
    %v927 = vadd.f32 %v912, 1.0
    %v928 = vadd.f32 %v914, 1.0
    %v929 = vadd.f32 %v916, 1.0
    %v930 = vadd.f32 %v918, 1.0
    %v931 = vadd.f32 %v920, 1.0
    %v932 = vadd.f32 %v922, 1.0
    %v933 = vadd.f32 %v924, 1.0
    %v934 = vadd.f32 %v926, 1.0
    %v935 = vrcp.pop %v927
    %v936 = vmul.f32 1.0, %v935
    %v937 = vrcp.pop %v928
    %v938 = vmul.f32 1.0, %v937
    %v939 = vrcp.pop %v929
    %v940 = vmul.f32 1.0, %v939
    %v941 = vrcp.pop %v930
    %v942 = vmul.f32 1.0, %v941
    %v943 = vrcp.pop %v931
    %v944 = vmul.f32 1.0, %v943
    %v945 = vrcp.pop %v932
    %v946 = vmul.f32 1.0, %v945
    %v947 = vrcp.pop %v933
    %v948 = vmul.f32 1.0, %v947
    %v949 = vrcp.pop %v934
    %v950 = vmul.f32 1.0, %v949
    %v951 = vtanh.pop %v879
    %v952 = vtanh.pop %v880
    %v953 = vtanh.pop %v881
    %v954 = vtanh.pop %v882
    %v955 = vtanh.pop %v883
    %v956 = vtanh.pop %v884
    %v957 = vtanh.pop %v885
    %v958 = vtanh.pop %v886
    %v959 = vmul.f32 %v936, %v951
    %v960 = vmul.f32 %v938, %v952
    %v961 = vmul.f32 %v940, %v953
    %v962 = vmul.f32 %v942, %v954
    %v963 = vmul.f32 %v944, %v955
    %v964 = vmul.f32 %v946, %v956
    %v965 = vmul.f32 %v948, %v957
    %v966 = vmul.f32 %v950, %v958
    %967 = vst [vmem:[#allocation2] sm:$0x1] %v959
    %968 = vst [vmem:[#allocation2 + $0x8] sm:$0x1] %v960
    %969 = vst [vmem:[#allocation2 + $0x10] sm:$0x1] %v961
    %970 = vst [vmem:[#allocation2 + $0x18] sm:$0x1] %v962
    %971 = vst [vmem:[#allocation2 + $0x20] sm:$0x1] %v963
    %972 = vst [vmem:[#allocation2 + $0x28] sm:$0x1] %v964
    %973 = vst [vmem:[#allocation2 + $0x30] sm:$0x1] %v965
    %974 = vst [vmem:[#allocation2 + $0x38] sm:$0x1] %v966
    %s975 = scalar_lea.vmem [#allocation3], 1
    %v976 = vld [vmem:[%s975] ss:$8 sm:$0xf]
    %s977 = scalar_lea.vmem [#allocation3], 33
    %v978 = vld [vmem:[%s977] ss:$8 sm:$0xf]
    %s979 = scalar_lea.vmem [#allocation3], 65
    %v980 = vld [vmem:[%s979] ss:$8 sm:$0xf]
    %s981 = scalar_lea.vmem [#allocation3], 97
    %v982 = vld [vmem:[%s981] ss:$8 sm:$0xf]
    %s983 = scalar_lea.vmem [#allocation3], 129
    %v984 = vld [vmem:[%s983] ss:$8 sm:$0xf]
    %s985 = scalar_lea.vmem [#allocation3], 161
    %v986 = vld [vmem:[%s985] ss:$8 sm:$0xf]
    %s987 = scalar_lea.vmem [#allocation3], 193
    %v988 = vld [vmem:[%s987] ss:$8 sm:$0xf]
    %s989 = scalar_lea.vmem [#allocation3], 225
    %v990 = vld [vmem:[%s989] ss:$8 sm:$0xf]
    %v999 = vcombine.low %v959, %v960
    %v1000 = vcombine.low %v961, %v962
    %v1001 = vcombine.low %v963, %v964
    %v1002 = vcombine.low %v965, %v966
    %v1004 = vunpack.c.l.s4 1966171168
    %v1005 = vunpack.c.0.s8 %v1004
    %v1006 = vlaneseq
    %v1007 = vshrl.u32 %v1006, 7
    %v1008 = vsub.s32 %v1005, %v1007
    %v1009 = vrot.slane %v999, %v1008
    %v1011 = vunpack.c.l.s4 1966171168
    %v1012 = vunpack.c.0.s8 %v1011
    %v1013 = vlaneseq
    %v1014 = vshrl.u32 %v1013, 7
    %v1015 = vsub.s32 %v1012, %v1014
    %v1016 = vrot.slane %v1000, %v1015
    %v1018 = vunpack.c.l.s4 1966171168
    %v1019 = vunpack.c.0.s8 %v1018
    %v1020 = vlaneseq
    %v1021 = vshrl.u32 %v1020, 7
    %v1022 = vsub.s32 %v1019, %v1021
    %v1023 = vrot.slane %v1001, %v1022
    %v1025 = vunpack.c.l.s4 1966171168
    %v1026 = vunpack.c.0.s8 %v1025
    %v1027 = vlaneseq
    %v1028 = vshrl.u32 %v1027, 7
    %v1029 = vsub.s32 %v1026, %v1028
    %v1030 = vrot.slane %v1002, %v1029
    %v1031 = vcombine.low %v1009, %v1016
    %v1032 = vcombine.low %v1023, %v1030
    %v1034 = vunpack.c.l.s4 1966171168
    %v1035 = vunpack.c.0.s8 %v1034
    %v1036 = vlaneseq
    %v1037 = vshrl.u32 %v1036, 7
    %v1038 = vsub.s32 %v1035, %v1037
    %v1039 = vrot.slane %v1031, %v1038
    %v1041 = vunpack.c.l.s4 1966171168
    %v1042 = vunpack.c.0.s8 %v1041
    %v1043 = vlaneseq
    %v1044 = vshrl.u32 %v1043, 7
    %v1045 = vsub.s32 %v1042, %v1044
    %v1046 = vrot.slane %v1032, %v1045
    %v1047 = vcombine.low %v1039, %v1046
    %1049 = vmatprep.subr.mxu0 %v98
    %1050 = vmatpush1.msra.mxu0 %v97
    %1051 = vmatprep.subr.mxu0 %v102
    %1052 = vmatpush1.msra.mxu0 %v101
    %1053 = vmatprep.subr.mxu0 %v106
    %1054 = vmatpush1.msra.mxu0 %v105
    %1055 = vmatprep.subr.mxu0 %v110
    %1056 = vmatpush1.msra.mxu0 %v109
    %1057 = vmatprep.subr.mxu0 %v114
    %1058 = vmatpush1.msra.mxu0 %v113
    %1059 = vmatprep.subr.mxu0 %v118
    %1060 = vmatpush1.msra.mxu0 %v117
    %1061 = vmatprep.subr.mxu0 %v122
    %1062 = vmatpush1.msra.mxu0 %v121
    %1063 = vmatprep.subr.mxu0 %v126
    %1064 = vmatpush1.msra.mxu0 %v125
    %1065 = vmatprep.subr.mxu0 %v130
    %1066 = vmatpush1.msra.mxu0 %v129
    %1067 = vmatprep.subr.mxu0 %v134
    %1068 = vmatpush1.msra.mxu0 %v133
    %1069 = vmatprep.subr.mxu0 %v138
    %1070 = vmatpush1.msra.mxu0 %v137
    %1071 = vmatprep.subr.mxu0 %v142
    %1072 = vmatpush1.msra.mxu0 %v141
    %1073 = vmatprep.subr.mxu0 %v146
    %1074 = vmatpush1.msra.mxu0 %v145
    %1075 = vmatprep.subr.mxu0 %v150
    %1076 = vmatpush1.msra.mxu0 %v149
    %1077 = vmatprep.subr.mxu0 %v154
    %1078 = vmatpush1.msra.mxu0 %v153
    %1079 = vmatprep.subr.mxu0 %v158
    %1080 = vmatpush1.msra.mxu0 %v157
    %1081 = vmatprep.subr.mxu0 0.0
    %1082 = vmatpush1.msra.mxu0 0.0
    %1083 = vmatprep.subr.mxu0 0.0
    %1084 = vmatpush1.msra.mxu0 0.0
    %1085 = vmatprep.subr.mxu0 0.0
    %1086 = vmatpush1.msra.mxu0 0.0
    %1087 = vmatprep.subr.mxu0 0.0
    %1088 = vmatpush1.msra.mxu0 0.0
    %1089 = vmatprep.subr.mxu0 0.0
    %1090 = vmatpush1.msra.mxu0 0.0
    %1091 = vmatprep.subr.mxu0 0.0
    %1092 = vmatpush1.msra.mxu0 0.0
    %1093 = vmatprep.subr.mxu0 0.0
    %1094 = vmatpush1.msra.mxu0 0.0
    %1095 = vmatprep.subr.mxu0 0.0
    %1096 = vmatpush1.msra.mxu0 0.0
    %1097 = vmatprep.subr.mxu0 0.0
    %1098 = vmatpush1.msra.mxu0 0.0
    %1099 = vmatprep.subr.mxu0 0.0
    %1100 = vmatpush1.msra.mxu0 0.0
    %1101 = vmatprep.subr.mxu0 0.0
    %1102 = vmatpush1.msra.mxu0 0.0
    %1103 = vmatprep.subr.mxu0 0.0
    %1104 = vmatpush1.msra.mxu0 0.0
    %1105 = vmatprep.subr.mxu0 0.0
    %1106 = vmatpush1.msra.mxu0 0.0
    %1107 = vmatprep.subr.mxu0 0.0
    %1108 = vmatpush1.msra.mxu0 0.0
    %1109 = vmatprep.subr.mxu0 0.0
    %1110 = vmatpush1.msra.mxu0 0.0
    %1111 = vmatprep.subr.mxu0 0.0
    %1112 = vmatpush1.msra.mxu0 0.0
    %1113 = vmatprep.mubr.f32.mxu0 0.0
    %1114 = vmatmul.mubr.f32.gmra.mrb[0].mxu0 %v1047
    %v1115 = vpop.f32.mrb[0].mxu0
    %v1116 = vadd.f32 0.0, %v1115
    %v1117 = vpop.f32.mrb[0].mxu0
    %v1118 = vadd.f32 0.0, %v1117
    %1119 = vdwg.mxu0
    %1120 = vmatprep.subr.mxu0 %v100
    %1121 = vmatpush1.msra.mxu0 %v99
    %1122 = vmatprep.subr.mxu0 %v104
    %1123 = vmatpush1.msra.mxu0 %v103
    %1124 = vmatprep.subr.mxu0 %v108
    %1125 = vmatpush1.msra.mxu0 %v107
    %1126 = vmatprep.subr.mxu0 %v112
    %1127 = vmatpush1.msra.mxu0 %v111
    %1128 = vmatprep.subr.mxu0 %v116
    %1129 = vmatpush1.msra.mxu0 %v115
    %1130 = vmatprep.subr.mxu0 %v120
    %1131 = vmatpush1.msra.mxu0 %v119
    %1132 = vmatprep.subr.mxu0 %v124
    %1133 = vmatpush1.msra.mxu0 %v123
    %1134 = vmatprep.subr.mxu0 %v128
    %1135 = vmatpush1.msra.mxu0 %v127
    %1136 = vmatprep.subr.mxu0 %v132
    %1137 = vmatpush1.msra.mxu0 %v131
    %1138 = vmatprep.subr.mxu0 %v136
    %1139 = vmatpush1.msra.mxu0 %v135
    %1140 = vmatprep.subr.mxu0 %v140
    %1141 = vmatpush1.msra.mxu0 %v139
    %1142 = vmatprep.subr.mxu0 %v144
    %1143 = vmatpush1.msra.mxu0 %v143
    %1144 = vmatprep.subr.mxu0 %v148
    %1145 = vmatpush1.msra.mxu0 %v147
    %1146 = vmatprep.subr.mxu0 %v152
    %1147 = vmatpush1.msra.mxu0 %v151
    %1148 = vmatprep.subr.mxu0 %v156
    %1149 = vmatpush1.msra.mxu0 %v155
    %1150 = vmatprep.subr.mxu0 %v160
    %1151 = vmatpush1.msra.mxu0 %v159
    %1152 = vmatprep.subr.mxu0 0.0
    %1153 = vmatpush1.msra.mxu0 0.0
    %1154 = vmatprep.subr.mxu0 0.0
    %1155 = vmatpush1.msra.mxu0 0.0
    %1156 = vmatprep.subr.mxu0 0.0
    %1157 = vmatpush1.msra.mxu0 0.0
    %1158 = vmatprep.subr.mxu0 0.0
    %1159 = vmatpush1.msra.mxu0 0.0
    %1160 = vmatprep.subr.mxu0 0.0
    %1161 = vmatpush1.msra.mxu0 0.0
    %1162 = vmatprep.subr.mxu0 0.0
    %1163 = vmatpush1.msra.mxu0 0.0
    %1164 = vmatprep.subr.mxu0 0.0
    %1165 = vmatpush1.msra.mxu0 0.0
    %1166 = vmatprep.subr.mxu0 0.0
    %1167 = vmatpush1.msra.mxu0 0.0
    %1168 = vmatprep.subr.mxu0 0.0
    %1169 = vmatpush1.msra.mxu0 0.0
    %1170 = vmatprep.subr.mxu0 0.0
    %1171 = vmatpush1.msra.mxu0 0.0
    %1172 = vmatprep.subr.mxu0 0.0
    %1173 = vmatpush1.msra.mxu0 0.0
    %1174 = vmatprep.subr.mxu0 0.0
    %1175 = vmatpush1.msra.mxu0 0.0
    %1176 = vmatprep.subr.mxu0 0.0
    %1177 = vmatpush1.msra.mxu0 0.0
    %1178 = vmatprep.subr.mxu0 0.0
    %1179 = vmatpush1.msra.mxu0 0.0
    %1180 = vmatprep.subr.mxu0 0.0
    %1181 = vmatpush1.msra.mxu0 0.0
    %1182 = vmatprep.subr.mxu0 0.0
    %1183 = vmatpush1.msra.mxu0 0.0
    %1184 = vmatprep.mubr.f32.mxu0 0.0
    %1185 = vmatmul.mubr.f32.gmra.mrb[0].mxu0 %v1047
    %v1186 = vpop.f32.mrb[0].mxu0
    %v1187 = vadd.f32 0.0, %v1186
    %v1188 = vpop.f32.mrb[0].mxu0
    %v1189 = vadd.f32 0.0, %v1188
    %1190 = vdwg.mxu0
    %v1195 = vcombine.low %v1116, %v1118
    %v1196 = vcombine.high %v1116, %v1118
    %v1197 = vcombine.low %v1187, %v1189
    %v1198 = vcombine.high %v1187, %v1189
    %v1200 = vunpack.c.l.s4 1966171168
    %v1201 = vunpack.c.0.s8 %v1200
    %v1202 = vlaneseq
    %v1203 = vshrl.u32 %v1202, 7
    %v1204 = vsub.s32 %v1201, %v1203
    %v1205 = vrot.slane %v1195, %v1204
    %v1207 = vunpack.c.l.s4 1966171168
    %v1208 = vunpack.c.0.s8 %v1207
    %v1209 = vlaneseq
    %v1210 = vshrl.u32 %v1209, 7
    %v1211 = vsub.s32 %v1208, %v1210
    %v1212 = vrot.slane %v1196, %v1211
    %v1214 = vunpack.c.l.s4 1966171168
    %v1215 = vunpack.c.0.s8 %v1214
    %v1216 = vlaneseq
    %v1217 = vshrl.u32 %v1216, 7
    %v1218 = vsub.s32 %v1215, %v1217
    %v1219 = vrot.slane %v1197, %v1218
    %v1221 = vunpack.c.l.s4 1966171168
    %v1222 = vunpack.c.0.s8 %v1221
    %v1223 = vlaneseq
    %v1224 = vshrl.u32 %v1223, 7
    %v1225 = vsub.s32 %v1222, %v1224
    %v1226 = vrot.slane %v1198, %v1225
    %v1227 = vcombine.low %v1205, %v1219
    %v1228 = vcombine.high %v1205, %v1219
    %v1229 = vcombine.low %v1212, %v1226
    %v1230 = vcombine.high %v1212, %v1226
    %v1232 = vunpack.c.l.s4 1966171168
    %v1233 = vunpack.c.0.s8 %v1232
    %v1234 = vlaneseq
    %v1235 = vshrl.u32 %v1234, 7
    %v1236 = vsub.s32 %v1233, %v1235
    %v1237 = vrot.slane %v1227, %v1236
    %v1239 = vunpack.c.l.s4 1966171168
    %v1240 = vunpack.c.0.s8 %v1239
    %v1241 = vlaneseq
    %v1242 = vshrl.u32 %v1241, 7
    %v1243 = vsub.s32 %v1240, %v1242
    %v1244 = vrot.slane %v1229, %v1243
    %v1246 = vunpack.c.l.s4 1966171168
    %v1247 = vunpack.c.0.s8 %v1246
    %v1248 = vlaneseq
    %v1249 = vshrl.u32 %v1248, 7
    %v1250 = vsub.s32 %v1247, %v1249
    %v1251 = vrot.slane %v1228, %v1250
    %v1253 = vunpack.c.l.s4 1966171168
    %v1254 = vunpack.c.0.s8 %v1253
    %v1255 = vlaneseq
    %v1256 = vshrl.u32 %v1255, 7
    %v1257 = vsub.s32 %v1254, %v1256
    %v1258 = vrot.slane %v1230, %v1257
    %v1259 = vcombine.high %v1237, %v1237
    %v1260 = vcombine.high %v1244, %v1244
    %v1261 = vcombine.high %v1251, %v1251
    %v1262 = vcombine.high %v1258, %v1258
    %v1271 = vadd.f32 %v976, %v1237
    %v1272 = vadd.f32 %v978, %v1251
    %v1273 = vadd.f32 %v980, %v1259
    %v1274 = vadd.f32 %v982, %v1261
    %v1275 = vadd.f32 %v984, %v1244
    %v1276 = vadd.f32 %v986, %v1258
    %v1277 = vadd.f32 %v988, %v1260
    %v1278 = vadd.f32 %v990, %v1262
    %v1287 = vrot.slane %v1271, 1
    %v1288 = vrot.slane %v1272, 1
    %v1289 = vrot.slane %v1273, 1
    %v1290 = vrot.slane %v1274, 1
    %v1291 = vrot.slane %v1275, 1
    %v1292 = vrot.slane %v1276, 1
    %v1293 = vrot.slane %v1277, 1
    %v1294 = vrot.slane %v1278, 1
    %v1303 = vxor.u32 %v1287, 2147483648
    %v1304 = vxor.u32 %v1288, 2147483648
    %v1305 = vxor.u32 %v1289, 2147483648
    %v1306 = vxor.u32 %v1290, 2147483648
    %v1307 = vxor.u32 %v1291, 2147483648
    %v1308 = vxor.u32 %v1292, 2147483648
    %v1309 = vxor.u32 %v1293, 2147483648
    %v1310 = vxor.u32 %v1294, 2147483648
    %v1311 = vmul.f32 %v1303, 1.442695
    %v1312 = vpow.pop %v1311
    %v1313 = vmul.f32 %v1304, 1.442695
    %v1314 = vpow.pop %v1313
    %v1315 = vmul.f32 %v1305, 1.442695
    %v1316 = vpow.pop %v1315
    %v1317 = vmul.f32 %v1306, 1.442695
    %v1318 = vpow.pop %v1317
    %v1319 = vmul.f32 %v1307, 1.442695
    %v1320 = vpow.pop %v1319
    %v1321 = vmul.f32 %v1308, 1.442695
    %v1322 = vpow.pop %v1321
    %v1323 = vmul.f32 %v1309, 1.442695
    %v1324 = vpow.pop %v1323
    %v1325 = vmul.f32 %v1310, 1.442695
    %v1326 = vpow.pop %v1325
    %v1327 = vadd.f32 %v1312, 1.0
    %v1328 = vadd.f32 %v1314, 1.0
    %v1329 = vadd.f32 %v1316, 1.0
    %v1330 = vadd.f32 %v1318, 1.0
    %v1331 = vadd.f32 %v1320, 1.0
    %v1332 = vadd.f32 %v1322, 1.0
    %v1333 = vadd.f32 %v1324, 1.0
    %v1334 = vadd.f32 %v1326, 1.0
    %v1335 = vrcp.pop %v1327
    %v1336 = vmul.f32 1.0, %v1335
    %v1337 = vrcp.pop %v1328
    %v1338 = vmul.f32 1.0, %v1337
    %v1339 = vrcp.pop %v1329
    %v1340 = vmul.f32 1.0, %v1339
    %v1341 = vrcp.pop %v1330
    %v1342 = vmul.f32 1.0, %v1341
    %v1343 = vrcp.pop %v1331
    %v1344 = vmul.f32 1.0, %v1343
    %v1345 = vrcp.pop %v1332
    %v1346 = vmul.f32 1.0, %v1345
    %v1347 = vrcp.pop %v1333
    %v1348 = vmul.f32 1.0, %v1347
    %v1349 = vrcp.pop %v1334
    %v1350 = vmul.f32 1.0, %v1349
    %v1351 = vmul.f32 %v1336, %v879
    %v1352 = vmul.f32 %v1338, %v880
    %v1353 = vmul.f32 %v1340, %v881
    %v1354 = vmul.f32 %v1342, %v882
    %v1355 = vmul.f32 %v1344, %v883
    %v1356 = vmul.f32 %v1346, %v884
    %v1357 = vmul.f32 %v1348, %v885
    %v1358 = vmul.f32 %v1350, %v886
    %v1359 = vxor.u32 %v1271, 2147483648
    %v1360 = vxor.u32 %v1272, 2147483648
    %v1361 = vxor.u32 %v1273, 2147483648
    %v1362 = vxor.u32 %v1274, 2147483648
    %v1363 = vxor.u32 %v1275, 2147483648
    %v1364 = vxor.u32 %v1276, 2147483648
    %v1365 = vxor.u32 %v1277, 2147483648
    %v1366 = vxor.u32 %v1278, 2147483648
    %v1367 = vmul.f32 %v1359, 1.442695
    %v1368 = vpow.pop %v1367
    %v1369 = vmul.f32 %v1360, 1.442695
    %v1370 = vpow.pop %v1369
    %v1371 = vmul.f32 %v1361, 1.442695
    %v1372 = vpow.pop %v1371
    %v1373 = vmul.f32 %v1362, 1.442695
    %v1374 = vpow.pop %v1373
    %v1375 = vmul.f32 %v1363, 1.442695
    %v1376 = vpow.pop %v1375
    %v1377 = vmul.f32 %v1364, 1.442695
    %v1378 = vpow.pop %v1377
    %v1379 = vmul.f32 %v1365, 1.442695
    %v1380 = vpow.pop %v1379
    %v1381 = vmul.f32 %v1366, 1.442695
    %v1382 = vpow.pop %v1381
    %v1383 = vadd.f32 %v1368, 1.0
    %v1384 = vadd.f32 %v1370, 1.0
    %v1385 = vadd.f32 %v1372, 1.0
    %v1386 = vadd.f32 %v1374, 1.0
    %v1387 = vadd.f32 %v1376, 1.0
    %v1388 = vadd.f32 %v1378, 1.0
    %v1389 = vadd.f32 %v1380, 1.0
    %v1390 = vadd.f32 %v1382, 1.0
    %v1391 = vrcp.pop %v1383
    %v1392 = vmul.f32 1.0, %v1391
    %v1393 = vrcp.pop %v1384
    %v1394 = vmul.f32 1.0, %v1393
    %v1395 = vrcp.pop %v1385
    %v1396 = vmul.f32 1.0, %v1395
    %v1397 = vrcp.pop %v1386
    %v1398 = vmul.f32 1.0, %v1397
    %v1399 = vrcp.pop %v1387
    %v1400 = vmul.f32 1.0, %v1399
    %v1401 = vrcp.pop %v1388
    %v1402 = vmul.f32 1.0, %v1401
    %v1403 = vrcp.pop %v1389
    %v1404 = vmul.f32 1.0, %v1403
    %v1405 = vrcp.pop %v1390
    %v1406 = vmul.f32 1.0, %v1405
    %v1407 = vrot.slane %v1271, 2
    %v1408 = vrot.slane %v1272, 2
    %v1409 = vrot.slane %v1273, 2
    %v1410 = vrot.slane %v1274, 2
    %v1411 = vrot.slane %v1275, 2
    %v1412 = vrot.slane %v1276, 2
    %v1413 = vrot.slane %v1277, 2
    %v1414 = vrot.slane %v1278, 2
    %v1423 = vtanh.pop %v1407
    %v1424 = vtanh.pop %v1408
    %v1425 = vtanh.pop %v1409
    %v1426 = vtanh.pop %v1410
    %v1427 = vtanh.pop %v1411
    %v1428 = vtanh.pop %v1412
    %v1429 = vtanh.pop %v1413
    %v1430 = vtanh.pop %v1414
    %v1431 = vmul.f32 %v1392, %v1423
    %v1432 = vmul.f32 %v1394, %v1424
    %v1433 = vmul.f32 %v1396, %v1425
    %v1434 = vmul.f32 %v1398, %v1426
    %v1435 = vmul.f32 %v1400, %v1427
    %v1436 = vmul.f32 %v1402, %v1428
    %v1437 = vmul.f32 %v1404, %v1429
    %v1438 = vmul.f32 %v1406, %v1430
    %v1439 = vadd.f32 %v1351, %v1431
    %v1440 = vadd.f32 %v1352, %v1432
    %v1441 = vadd.f32 %v1353, %v1433
    %v1442 = vadd.f32 %v1354, %v1434
    %v1443 = vadd.f32 %v1355, %v1435
    %v1444 = vadd.f32 %v1356, %v1436
    %v1445 = vadd.f32 %v1357, %v1437
    %v1446 = vadd.f32 %v1358, %v1438
    %v1447 = vrot.slane %v1271, 3
    %v1448 = vrot.slane %v1272, 3
    %v1449 = vrot.slane %v1273, 3
    %v1450 = vrot.slane %v1274, 3
    %v1451 = vrot.slane %v1275, 3
    %v1452 = vrot.slane %v1276, 3
    %v1453 = vrot.slane %v1277, 3
    %v1454 = vrot.slane %v1278, 3
    %v1463 = vxor.u32 %v1447, 2147483648
    %v1464 = vxor.u32 %v1448, 2147483648
    %v1465 = vxor.u32 %v1449, 2147483648
    %v1466 = vxor.u32 %v1450, 2147483648
    %v1467 = vxor.u32 %v1451, 2147483648
    %v1468 = vxor.u32 %v1452, 2147483648
    %v1469 = vxor.u32 %v1453, 2147483648
    %v1470 = vxor.u32 %v1454, 2147483648
    %v1471 = vmul.f32 %v1463, 1.442695
    %v1472 = vpow.pop %v1471
    %v1473 = vmul.f32 %v1464, 1.442695
    %v1474 = vpow.pop %v1473
    %v1475 = vmul.f32 %v1465, 1.442695
    %v1476 = vpow.pop %v1475
    %v1477 = vmul.f32 %v1466, 1.442695
    %v1478 = vpow.pop %v1477
    %v1479 = vmul.f32 %v1467, 1.442695
    %v1480 = vpow.pop %v1479
    %v1481 = vmul.f32 %v1468, 1.442695
    %v1482 = vpow.pop %v1481
    %v1483 = vmul.f32 %v1469, 1.442695
    %v1484 = vpow.pop %v1483
    %v1485 = vmul.f32 %v1470, 1.442695
    %v1486 = vpow.pop %v1485
    %v1487 = vadd.f32 %v1472, 1.0
    %v1488 = vadd.f32 %v1474, 1.0
    %v1489 = vadd.f32 %v1476, 1.0
    %v1490 = vadd.f32 %v1478, 1.0
    %v1491 = vadd.f32 %v1480, 1.0
    %v1492 = vadd.f32 %v1482, 1.0
    %v1493 = vadd.f32 %v1484, 1.0
    %v1494 = vadd.f32 %v1486, 1.0
    %v1495 = vrcp.pop %v1487
    %v1496 = vmul.f32 1.0, %v1495
    %v1497 = vrcp.pop %v1488
    %v1498 = vmul.f32 1.0, %v1497
    %v1499 = vrcp.pop %v1489
    %v1500 = vmul.f32 1.0, %v1499
    %v1501 = vrcp.pop %v1490
    %v1502 = vmul.f32 1.0, %v1501
    %v1503 = vrcp.pop %v1491
    %v1504 = vmul.f32 1.0, %v1503
    %v1505 = vrcp.pop %v1492
    %v1506 = vmul.f32 1.0, %v1505
    %v1507 = vrcp.pop %v1493
    %v1508 = vmul.f32 1.0, %v1507
    %v1509 = vrcp.pop %v1494
    %v1510 = vmul.f32 1.0, %v1509
    %v1511 = vtanh.pop %v1439
    %v1512 = vtanh.pop %v1440
    %v1513 = vtanh.pop %v1441
    %v1514 = vtanh.pop %v1442
    %v1515 = vtanh.pop %v1443
    %v1516 = vtanh.pop %v1444
    %v1517 = vtanh.pop %v1445
    %v1518 = vtanh.pop %v1446
    %v1519 = vmul.f32 %v1496, %v1511
    %v1520 = vmul.f32 %v1498, %v1512
    %v1521 = vmul.f32 %v1500, %v1513
    %v1522 = vmul.f32 %v1502, %v1514
    %v1523 = vmul.f32 %v1504, %v1515
    %v1524 = vmul.f32 %v1506, %v1516
    %v1525 = vmul.f32 %v1508, %v1517
    %v1526 = vmul.f32 %v1510, %v1518
    %1527 = vst [vmem:[#allocation2 + $0x1] sm:$0x1] %v1519
    %1528 = vst [vmem:[#allocation2 + $0x9] sm:$0x1] %v1520
    %1529 = vst [vmem:[#allocation2 + $0x11] sm:$0x1] %v1521
    %1530 = vst [vmem:[#allocation2 + $0x19] sm:$0x1] %v1522
    %1531 = vst [vmem:[#allocation2 + $0x21] sm:$0x1] %v1523
    %1532 = vst [vmem:[#allocation2 + $0x29] sm:$0x1] %v1524
    %1533 = vst [vmem:[#allocation2 + $0x31] sm:$0x1] %v1525
    %1534 = vst [vmem:[#allocation2 + $0x39] sm:$0x1] %v1526
    %s1535 = scalar_lea.vmem [#allocation3], 2
    %v1536 = vld [vmem:[%s1535] ss:$8 sm:$0xf]
    %s1537 = scalar_lea.vmem [#allocation3], 34
    %v1538 = vld [vmem:[%s1537] ss:$8 sm:$0xf]
    %s1539 = scalar_lea.vmem [#allocation3], 66
    %v1540 = vld [vmem:[%s1539] ss:$8 sm:$0xf]
    %s1541 = scalar_lea.vmem [#allocation3], 98
    %v1542 = vld [vmem:[%s1541] ss:$8 sm:$0xf]
    %s1543 = scalar_lea.vmem [#allocation3], 130
    %v1544 = vld [vmem:[%s1543] ss:$8 sm:$0xf]
    %s1545 = scalar_lea.vmem [#allocation3], 162
    %v1546 = vld [vmem:[%s1545] ss:$8 sm:$0xf]
    %s1547 = scalar_lea.vmem [#allocation3], 194
    %v1548 = vld [vmem:[%s1547] ss:$8 sm:$0xf]
    %s1549 = scalar_lea.vmem [#allocation3], 226
    %v1550 = vld [vmem:[%s1549] ss:$8 sm:$0xf]
    %v1559 = vcombine.low %v1519, %v1520
    %v1560 = vcombine.low %v1521, %v1522
    %v1561 = vcombine.low %v1523, %v1524
    %v1562 = vcombine.low %v1525, %v1526
    %v1564 = vunpack.c.l.s4 1966171168
    %v1565 = vunpack.c.0.s8 %v1564
    %v1566 = vlaneseq
    %v1567 = vshrl.u32 %v1566, 7
    %v1568 = vsub.s32 %v1565, %v1567
    %v1569 = vrot.slane %v1559, %v1568
    %v1571 = vunpack.c.l.s4 1966171168
    %v1572 = vunpack.c.0.s8 %v1571
    %v1573 = vlaneseq
    %v1574 = vshrl.u32 %v1573, 7
    %v1575 = vsub.s32 %v1572, %v1574
    %v1576 = vrot.slane %v1560, %v1575
    %v1578 = vunpack.c.l.s4 1966171168
    %v1579 = vunpack.c.0.s8 %v1578
    %v1580 = vlaneseq
    %v1581 = vshrl.u32 %v1580, 7
    %v1582 = vsub.s32 %v1579, %v1581
    %v1583 = vrot.slane %v1561, %v1582
    %v1585 = vunpack.c.l.s4 1966171168
    %v1586 = vunpack.c.0.s8 %v1585
    %v1587 = vlaneseq
    %v1588 = vshrl.u32 %v1587, 7
    %v1589 = vsub.s32 %v1586, %v1588
    %v1590 = vrot.slane %v1562, %v1589
    %v1591 = vcombine.low %v1569, %v1576
    %v1592 = vcombine.low %v1583, %v1590
    %v1594 = vunpack.c.l.s4 1966171168
    %v1595 = vunpack.c.0.s8 %v1594
    %v1596 = vlaneseq
    %v1597 = vshrl.u32 %v1596, 7
    %v1598 = vsub.s32 %v1595, %v1597
    %v1599 = vrot.slane %v1591, %v1598
    %v1601 = vunpack.c.l.s4 1966171168
    %v1602 = vunpack.c.0.s8 %v1601
    %v1603 = vlaneseq
    %v1604 = vshrl.u32 %v1603, 7
    %v1605 = vsub.s32 %v1602, %v1604
    %v1606 = vrot.slane %v1592, %v1605
    %v1607 = vcombine.low %v1599, %v1606
    %1609 = vmatprep.subr.mxu0 %v98
    %1610 = vmatpush1.msra.mxu0 %v97
    %1611 = vmatprep.subr.mxu0 %v102
    %1612 = vmatpush1.msra.mxu0 %v101
    %1613 = vmatprep.subr.mxu0 %v106
    %1614 = vmatpush1.msra.mxu0 %v105
    %1615 = vmatprep.subr.mxu0 %v110
    %1616 = vmatpush1.msra.mxu0 %v109
    %1617 = vmatprep.subr.mxu0 %v114
    %1618 = vmatpush1.msra.mxu0 %v113
    %1619 = vmatprep.subr.mxu0 %v118
    %1620 = vmatpush1.msra.mxu0 %v117
    %1621 = vmatprep.subr.mxu0 %v122
    %1622 = vmatpush1.msra.mxu0 %v121
    %1623 = vmatprep.subr.mxu0 %v126
    %1624 = vmatpush1.msra.mxu0 %v125
    %1625 = vmatprep.subr.mxu0 %v130
    %1626 = vmatpush1.msra.mxu0 %v129
    %1627 = vmatprep.subr.mxu0 %v134
    %1628 = vmatpush1.msra.mxu0 %v133
    %1629 = vmatprep.subr.mxu0 %v138
    %1630 = vmatpush1.msra.mxu0 %v137
    %1631 = vmatprep.subr.mxu0 %v142
    %1632 = vmatpush1.msra.mxu0 %v141
    %1633 = vmatprep.subr.mxu0 %v146
    %1634 = vmatpush1.msra.mxu0 %v145
    %1635 = vmatprep.subr.mxu0 %v150
    %1636 = vmatpush1.msra.mxu0 %v149
    %1637 = vmatprep.subr.mxu0 %v154
    %1638 = vmatpush1.msra.mxu0 %v153
    %1639 = vmatprep.subr.mxu0 %v158
    %1640 = vmatpush1.msra.mxu0 %v157
    %1641 = vmatprep.subr.mxu0 0.0
    %1642 = vmatpush1.msra.mxu0 0.0
    %1643 = vmatprep.subr.mxu0 0.0
    %1644 = vmatpush1.msra.mxu0 0.0
    %1645 = vmatprep.subr.mxu0 0.0
    %1646 = vmatpush1.msra.mxu0 0.0
    %1647 = vmatprep.subr.mxu0 0.0
    %1648 = vmatpush1.msra.mxu0 0.0
    %1649 = vmatprep.subr.mxu0 0.0
    %1650 = vmatpush1.msra.mxu0 0.0
    %1651 = vmatprep.subr.mxu0 0.0
    %1652 = vmatpush1.msra.mxu0 0.0
    %1653 = vmatprep.subr.mxu0 0.0
    %1654 = vmatpush1.msra.mxu0 0.0
    %1655 = vmatprep.subr.mxu0 0.0
    %1656 = vmatpush1.msra.mxu0 0.0
    %1657 = vmatprep.subr.mxu0 0.0
    %1658 = vmatpush1.msra.mxu0 0.0
    %1659 = vmatprep.subr.mxu0 0.0
    %1660 = vmatpush1.msra.mxu0 0.0
    %1661 = vmatprep.subr.mxu0 0.0
    %1662 = vmatpush1.msra.mxu0 0.0
    %1663 = vmatprep.subr.mxu0 0.0
    %1664 = vmatpush1.msra.mxu0 0.0
    %1665 = vmatprep.subr.mxu0 0.0
    %1666 = vmatpush1.msra.mxu0 0.0
    %1667 = vmatprep.subr.mxu0 0.0
    %1668 = vmatpush1.msra.mxu0 0.0
    %1669 = vmatprep.subr.mxu0 0.0
    %1670 = vmatpush1.msra.mxu0 0.0
    %1671 = vmatprep.subr.mxu0 0.0
    %1672 = vmatpush1.msra.mxu0 0.0
    %1673 = vmatprep.mubr.f32.mxu0 0.0
    %1674 = vmatmul.mubr.f32.gmra.mrb[0].mxu0 %v1607
    %v1675 = vpop.f32.mrb[0].mxu0
    %v1676 = vadd.f32 0.0, %v1675
    %v1677 = vpop.f32.mrb[0].mxu0
    %v1678 = vadd.f32 0.0, %v1677
    %1679 = vdwg.mxu0
    %1680 = vmatprep.subr.mxu0 %v100
    %1681 = vmatpush1.msra.mxu0 %v99
    %1682 = vmatprep.subr.mxu0 %v104
    %1683 = vmatpush1.msra.mxu0 %v103
    %1684 = vmatprep.subr.mxu0 %v108
    %1685 = vmatpush1.msra.mxu0 %v107
    %1686 = vmatprep.subr.mxu0 %v112
    %1687 = vmatpush1.msra.mxu0 %v111
    %1688 = vmatprep.subr.mxu0 %v116
    %1689 = vmatpush1.msra.mxu0 %v115
    %1690 = vmatprep.subr.mxu0 %v120
    %1691 = vmatpush1.msra.mxu0 %v119
    %1692 = vmatprep.subr.mxu0 %v124
    %1693 = vmatpush1.msra.mxu0 %v123
    %1694 = vmatprep.subr.mxu0 %v128
    %1695 = vmatpush1.msra.mxu0 %v127
    %1696 = vmatprep.subr.mxu0 %v132
    %1697 = vmatpush1.msra.mxu0 %v131
    %1698 = vmatprep.subr.mxu0 %v136
    %1699 = vmatpush1.msra.mxu0 %v135
    %1700 = vmatprep.subr.mxu0 %v140
    %1701 = vmatpush1.msra.mxu0 %v139
    %1702 = vmatprep.subr.mxu0 %v144
    %1703 = vmatpush1.msra.mxu0 %v143
    %1704 = vmatprep.subr.mxu0 %v148
    %1705 = vmatpush1.msra.mxu0 %v147
    %1706 = vmatprep.subr.mxu0 %v152
    %1707 = vmatpush1.msra.mxu0 %v151
    %1708 = vmatprep.subr.mxu0 %v156
    %1709 = vmatpush1.msra.mxu0 %v155
    %1710 = vmatprep.subr.mxu0 %v160
    %1711 = vmatpush1.msra.mxu0 %v159
    %1712 = vmatprep.subr.mxu0 0.0
    %1713 = vmatpush1.msra.mxu0 0.0
    %1714 = vmatprep.subr.mxu0 0.0
    %1715 = vmatpush1.msra.mxu0 0.0
    %1716 = vmatprep.subr.mxu0 0.0
    %1717 = vmatpush1.msra.mxu0 0.0
    %1718 = vmatprep.subr.mxu0 0.0
    %1719 = vmatpush1.msra.mxu0 0.0
    %1720 = vmatprep.subr.mxu0 0.0
    %1721 = vmatpush1.msra.mxu0 0.0
    %1722 = vmatprep.subr.mxu0 0.0
    %1723 = vmatpush1.msra.mxu0 0.0
    %1724 = vmatprep.subr.mxu0 0.0
    %1725 = vmatpush1.msra.mxu0 0.0
    %1726 = vmatprep.subr.mxu0 0.0
    %1727 = vmatpush1.msra.mxu0 0.0
    %1728 = vmatprep.subr.mxu0 0.0
    %1729 = vmatpush1.msra.mxu0 0.0
    %1730 = vmatprep.subr.mxu0 0.0
    %1731 = vmatpush1.msra.mxu0 0.0
    %1732 = vmatprep.subr.mxu0 0.0
    %1733 = vmatpush1.msra.mxu0 0.0
    %1734 = vmatprep.subr.mxu0 0.0
    %1735 = vmatpush1.msra.mxu0 0.0
    %1736 = vmatprep.subr.mxu0 0.0
    %1737 = vmatpush1.msra.mxu0 0.0
    %1738 = vmatprep.subr.mxu0 0.0
    %1739 = vmatpush1.msra.mxu0 0.0
    %1740 = vmatprep.subr.mxu0 0.0
    %1741 = vmatpush1.msra.mxu0 0.0
    %1742 = vmatprep.subr.mxu0 0.0
    %1743 = vmatpush1.msra.mxu0 0.0
    %1744 = vmatprep.mubr.f32.mxu0 0.0
    %1745 = vmatmul.mubr.f32.gmra.mrb[0].mxu0 %v1607
    %v1746 = vpop.f32.mrb[0].mxu0
    %v1747 = vadd.f32 0.0, %v1746
    %v1748 = vpop.f32.mrb[0].mxu0
    %v1749 = vadd.f32 0.0, %v1748
    %1750 = vdwg.mxu0
    %v1755 = vcombine.low %v1676, %v1678
    %v1756 = vcombine.high %v1676, %v1678
    %v1757 = vcombine.low %v1747, %v1749
    %v1758 = vcombine.high %v1747, %v1749
    %v1760 = vunpack.c.l.s4 1966171168
    %v1761 = vunpack.c.0.s8 %v1760
    %v1762 = vlaneseq
    %v1763 = vshrl.u32 %v1762, 7
    %v1764 = vsub.s32 %v1761, %v1763
    %v1765 = vrot.slane %v1755, %v1764
    %v1767 = vunpack.c.l.s4 1966171168
    %v1768 = vunpack.c.0.s8 %v1767
    %v1769 = vlaneseq
    %v1770 = vshrl.u32 %v1769, 7
    %v1771 = vsub.s32 %v1768, %v1770
    %v1772 = vrot.slane %v1756, %v1771
    %v1774 = vunpack.c.l.s4 1966171168
    %v1775 = vunpack.c.0.s8 %v1774
    %v1776 = vlaneseq
    %v1777 = vshrl.u32 %v1776, 7
    %v1778 = vsub.s32 %v1775, %v1777
    %v1779 = vrot.slane %v1757, %v1778
    %v1781 = vunpack.c.l.s4 1966171168
    %v1782 = vunpack.c.0.s8 %v1781
    %v1783 = vlaneseq
    %v1784 = vshrl.u32 %v1783, 7
    %v1785 = vsub.s32 %v1782, %v1784
    %v1786 = vrot.slane %v1758, %v1785
    %v1787 = vcombine.low %v1765, %v1779
    %v1788 = vcombine.high %v1765, %v1779
    %v1789 = vcombine.low %v1772, %v1786
    %v1790 = vcombine.high %v1772, %v1786
    %v1792 = vunpack.c.l.s4 1966171168
    %v1793 = vunpack.c.0.s8 %v1792
    %v1794 = vlaneseq
    %v1795 = vshrl.u32 %v1794, 7
    %v1796 = vsub.s32 %v1793, %v1795
    %v1797 = vrot.slane %v1787, %v1796
    %v1799 = vunpack.c.l.s4 1966171168
    %v1800 = vunpack.c.0.s8 %v1799
    %v1801 = vlaneseq
    %v1802 = vshrl.u32 %v1801, 7
    %v1803 = vsub.s32 %v1800, %v1802
    %v1804 = vrot.slane %v1789, %v1803
    %v1806 = vunpack.c.l.s4 1966171168
    %v1807 = vunpack.c.0.s8 %v1806
    %v1808 = vlaneseq
    %v1809 = vshrl.u32 %v1808, 7
    %v1810 = vsub.s32 %v1807, %v1809
    %v1811 = vrot.slane %v1788, %v1810
    %v1813 = vunpack.c.l.s4 1966171168
    %v1814 = vunpack.c.0.s8 %v1813
    %v1815 = vlaneseq
    %v1816 = vshrl.u32 %v1815, 7
    %v1817 = vsub.s32 %v1814, %v1816
    %v1818 = vrot.slane %v1790, %v1817
    %v1819 = vcombine.high %v1797, %v1797
    %v1820 = vcombine.high %v1804, %v1804
    %v1821 = vcombine.high %v1811, %v1811
    %v1822 = vcombine.high %v1818, %v1818
    %v1831 = vadd.f32 %v1536, %v1797
    %v1832 = vadd.f32 %v1538, %v1811
    %v1833 = vadd.f32 %v1540, %v1819
    %v1834 = vadd.f32 %v1542, %v1821
    %v1835 = vadd.f32 %v1544, %v1804
    %v1836 = vadd.f32 %v1546, %v1818
    %v1837 = vadd.f32 %v1548, %v1820
    %v1838 = vadd.f32 %v1550, %v1822
    %v1847 = vrot.slane %v1831, 1
    %v1848 = vrot.slane %v1832, 1
    %v1849 = vrot.slane %v1833, 1
    %v1850 = vrot.slane %v1834, 1
    %v1851 = vrot.slane %v1835, 1
    %v1852 = vrot.slane %v1836, 1
    %v1853 = vrot.slane %v1837, 1
    %v1854 = vrot.slane %v1838, 1
    %v1863 = vxor.u32 %v1847, 2147483648
    %v1864 = vxor.u32 %v1848, 2147483648
    %v1865 = vxor.u32 %v1849, 2147483648
    %v1866 = vxor.u32 %v1850, 2147483648
    %v1867 = vxor.u32 %v1851, 2147483648
    %v1868 = vxor.u32 %v1852, 2147483648
    %v1869 = vxor.u32 %v1853, 2147483648
    %v1870 = vxor.u32 %v1854, 2147483648
    %v1871 = vmul.f32 %v1863, 1.442695
    %v1872 = vpow.pop %v1871
    %v1873 = vmul.f32 %v1864, 1.442695
    %v1874 = vpow.pop %v1873
    %v1875 = vmul.f32 %v1865, 1.442695
    %v1876 = vpow.pop %v1875
    %v1877 = vmul.f32 %v1866, 1.442695
    %v1878 = vpow.pop %v1877
    %v1879 = vmul.f32 %v1867, 1.442695
    %v1880 = vpow.pop %v1879
    %v1881 = vmul.f32 %v1868, 1.442695
    %v1882 = vpow.pop %v1881
    %v1883 = vmul.f32 %v1869, 1.442695
    %v1884 = vpow.pop %v1883
    %v1885 = vmul.f32 %v1870, 1.442695
    %v1886 = vpow.pop %v1885
    %v1887 = vadd.f32 %v1872, 1.0
    %v1888 = vadd.f32 %v1874, 1.0
    %v1889 = vadd.f32 %v1876, 1.0
    %v1890 = vadd.f32 %v1878, 1.0
    %v1891 = vadd.f32 %v1880, 1.0
    %v1892 = vadd.f32 %v1882, 1.0
    %v1893 = vadd.f32 %v1884, 1.0
    %v1894 = vadd.f32 %v1886, 1.0
    %v1895 = vrcp.pop %v1887
    %v1896 = vmul.f32 1.0, %v1895
    %v1897 = vrcp.pop %v1888
    %v1898 = vmul.f32 1.0, %v1897
    %v1899 = vrcp.pop %v1889
    %v1900 = vmul.f32 1.0, %v1899
    %v1901 = vrcp.pop %v1890
    %v1902 = vmul.f32 1.0, %v1901
    %v1903 = vrcp.pop %v1891
    %v1904 = vmul.f32 1.0, %v1903
    %v1905 = vrcp.pop %v1892
    %v1906 = vmul.f32 1.0, %v1905
    %v1907 = vrcp.pop %v1893
    %v1908 = vmul.f32 1.0, %v1907
    %v1909 = vrcp.pop %v1894
    %v1910 = vmul.f32 1.0, %v1909
    %v1911 = vmul.f32 %v1896, %v1439
    %v1912 = vmul.f32 %v1898, %v1440
    %v1913 = vmul.f32 %v1900, %v1441
    %v1914 = vmul.f32 %v1902, %v1442
    %v1915 = vmul.f32 %v1904, %v1443
    %v1916 = vmul.f32 %v1906, %v1444
    %v1917 = vmul.f32 %v1908, %v1445
    %v1918 = vmul.f32 %v1910, %v1446
    %v1919 = vxor.u32 %v1831, 2147483648
    %v1920 = vxor.u32 %v1832, 2147483648
    %v1921 = vxor.u32 %v1833, 2147483648
    %v1922 = vxor.u32 %v1834, 2147483648
    %v1923 = vxor.u32 %v1835, 2147483648
    %v1924 = vxor.u32 %v1836, 2147483648
    %v1925 = vxor.u32 %v1837, 2147483648
    %v1926 = vxor.u32 %v1838, 2147483648
    %v1927 = vmul.f32 %v1919, 1.442695
    %v1928 = vpow.pop %v1927
    %v1929 = vmul.f32 %v1920, 1.442695
    %v1930 = vpow.pop %v1929
    %v1931 = vmul.f32 %v1921, 1.442695
    %v1932 = vpow.pop %v1931
    %v1933 = vmul.f32 %v1922, 1.442695
    %v1934 = vpow.pop %v1933
    %v1935 = vmul.f32 %v1923, 1.442695
    %v1936 = vpow.pop %v1935
    %v1937 = vmul.f32 %v1924, 1.442695
    %v1938 = vpow.pop %v1937
    %v1939 = vmul.f32 %v1925, 1.442695
    %v1940 = vpow.pop %v1939
    %v1941 = vmul.f32 %v1926, 1.442695
    %v1942 = vpow.pop %v1941
    %v1943 = vadd.f32 %v1928, 1.0
    %v1944 = vadd.f32 %v1930, 1.0
    %v1945 = vadd.f32 %v1932, 1.0
    %v1946 = vadd.f32 %v1934, 1.0
    %v1947 = vadd.f32 %v1936, 1.0
    %v1948 = vadd.f32 %v1938, 1.0
    %v1949 = vadd.f32 %v1940, 1.0
    %v1950 = vadd.f32 %v1942, 1.0
    %v1951 = vrcp.pop %v1943
    %v1952 = vmul.f32 1.0, %v1951
    %v1953 = vrcp.pop %v1944
    %v1954 = vmul.f32 1.0, %v1953
    %v1955 = vrcp.pop %v1945
    %v1956 = vmul.f32 1.0, %v1955
    %v1957 = vrcp.pop %v1946
    %v1958 = vmul.f32 1.0, %v1957
    %v1959 = vrcp.pop %v1947
    %v1960 = vmul.f32 1.0, %v1959
    %v1961 = vrcp.pop %v1948
    %v1962 = vmul.f32 1.0, %v1961
    %v1963 = vrcp.pop %v1949
    %v1964 = vmul.f32 1.0, %v1963
    %v1965 = vrcp.pop %v1950
    %v1966 = vmul.f32 1.0, %v1965
    %v1967 = vrot.slane %v1831, 2
    %v1968 = vrot.slane %v1832, 2
    %v1969 = vrot.slane %v1833, 2
    %v1970 = vrot.slane %v1834, 2
    %v1971 = vrot.slane %v1835, 2
    %v1972 = vrot.slane %v1836, 2
    %v1973 = vrot.slane %v1837, 2
    %v1974 = vrot.slane %v1838, 2
    %v1983 = vtanh.pop %v1967
    %v1984 = vtanh.pop %v1968
    %v1985 = vtanh.pop %v1969
    %v1986 = vtanh.pop %v1970
    %v1987 = vtanh.pop %v1971
    %v1988 = vtanh.pop %v1972
    %v1989 = vtanh.pop %v1973
    %v1990 = vtanh.pop %v1974
    %v1991 = vmul.f32 %v1952, %v1983
    %v1992 = vmul.f32 %v1954, %v1984
    %v1993 = vmul.f32 %v1956, %v1985
    %v1994 = vmul.f32 %v1958, %v1986
    %v1995 = vmul.f32 %v1960, %v1987
    %v1996 = vmul.f32 %v1962, %v1988
    %v1997 = vmul.f32 %v1964, %v1989
    %v1998 = vmul.f32 %v1966, %v1990
    %v1999 = vadd.f32 %v1911, %v1991
    %v2000 = vadd.f32 %v1912, %v1992
    %v2001 = vadd.f32 %v1913, %v1993
    %v2002 = vadd.f32 %v1914, %v1994
    %v2003 = vadd.f32 %v1915, %v1995
    %v2004 = vadd.f32 %v1916, %v1996
    %v2005 = vadd.f32 %v1917, %v1997
    %v2006 = vadd.f32 %v1918, %v1998
    %v2007 = vrot.slane %v1831, 3
    %v2008 = vrot.slane %v1832, 3
    %v2009 = vrot.slane %v1833, 3
    %v2010 = vrot.slane %v1834, 3
    %v2011 = vrot.slane %v1835, 3
    %v2012 = vrot.slane %v1836, 3
    %v2013 = vrot.slane %v1837, 3
    %v2014 = vrot.slane %v1838, 3
    %v2023 = vxor.u32 %v2007, 2147483648
    %v2024 = vxor.u32 %v2008, 2147483648
    %v2025 = vxor.u32 %v2009, 2147483648
    %v2026 = vxor.u32 %v2010, 2147483648
    %v2027 = vxor.u32 %v2011, 2147483648
    %v2028 = vxor.u32 %v2012, 2147483648
    %v2029 = vxor.u32 %v2013, 2147483648
    %v2030 = vxor.u32 %v2014, 2147483648
    %v2031 = vmul.f32 %v2023, 1.442695
    %v2032 = vpow.pop %v2031
    %v2033 = vmul.f32 %v2024, 1.442695
    %v2034 = vpow.pop %v2033
    %v2035 = vmul.f32 %v2025, 1.442695
    %v2036 = vpow.pop %v2035
    %v2037 = vmul.f32 %v2026, 1.442695
    %v2038 = vpow.pop %v2037
    %v2039 = vmul.f32 %v2027, 1.442695
    %v2040 = vpow.pop %v2039
    %v2041 = vmul.f32 %v2028, 1.442695
    %v2042 = vpow.pop %v2041
    %v2043 = vmul.f32 %v2029, 1.442695
    %v2044 = vpow.pop %v2043
    %v2045 = vmul.f32 %v2030, 1.442695
    %v2046 = vpow.pop %v2045
    %v2047 = vadd.f32 %v2032, 1.0
    %v2048 = vadd.f32 %v2034, 1.0
    %v2049 = vadd.f32 %v2036, 1.0
    %v2050 = vadd.f32 %v2038, 1.0
    %v2051 = vadd.f32 %v2040, 1.0
    %v2052 = vadd.f32 %v2042, 1.0
    %v2053 = vadd.f32 %v2044, 1.0
    %v2054 = vadd.f32 %v2046, 1.0
    %v2055 = vrcp.pop %v2047
    %v2056 = vmul.f32 1.0, %v2055
    %v2057 = vrcp.pop %v2048
    %v2058 = vmul.f32 1.0, %v2057
    %v2059 = vrcp.pop %v2049
    %v2060 = vmul.f32 1.0, %v2059
    %v2061 = vrcp.pop %v2050
    %v2062 = vmul.f32 1.0, %v2061
    %v2063 = vrcp.pop %v2051
    %v2064 = vmul.f32 1.0, %v2063
    %v2065 = vrcp.pop %v2052
    %v2066 = vmul.f32 1.0, %v2065
    %v2067 = vrcp.pop %v2053
    %v2068 = vmul.f32 1.0, %v2067
    %v2069 = vrcp.pop %v2054
    %v2070 = vmul.f32 1.0, %v2069
    %v2071 = vtanh.pop %v1999
    %v2072 = vtanh.pop %v2000
    %v2073 = vtanh.pop %v2001
    %v2074 = vtanh.pop %v2002
    %v2075 = vtanh.pop %v2003
    %v2076 = vtanh.pop %v2004
    %v2077 = vtanh.pop %v2005
    %v2078 = vtanh.pop %v2006
    %v2079 = vmul.f32 %v2056, %v2071
    %v2080 = vmul.f32 %v2058, %v2072
    %v2081 = vmul.f32 %v2060, %v2073
    %v2082 = vmul.f32 %v2062, %v2074
    %v2083 = vmul.f32 %v2064, %v2075
    %v2084 = vmul.f32 %v2066, %v2076
    %v2085 = vmul.f32 %v2068, %v2077
    %v2086 = vmul.f32 %v2070, %v2078
    %2087 = vst [vmem:[#allocation2 + $0x2] sm:$0x1] %v2079
    %2088 = vst [vmem:[#allocation2 + $0xa] sm:$0x1] %v2080
    %2089 = vst [vmem:[#allocation2 + $0x12] sm:$0x1] %v2081
    %2090 = vst [vmem:[#allocation2 + $0x1a] sm:$0x1] %v2082
    %2091 = vst [vmem:[#allocation2 + $0x22] sm:$0x1] %v2083
    %2092 = vst [vmem:[#allocation2 + $0x2a] sm:$0x1] %v2084
    %2093 = vst [vmem:[#allocation2 + $0x32] sm:$0x1] %v2085
    %2094 = vst [vmem:[#allocation2 + $0x3a] sm:$0x1] %v2086
    %s2095 = scalar_lea.vmem [#allocation3], 3
    %v2096 = vld [vmem:[%s2095] ss:$8 sm:$0xf]
    %s2097 = scalar_lea.vmem [#allocation3], 35
    %v2098 = vld [vmem:[%s2097] ss:$8 sm:$0xf]
    %s2099 = scalar_lea.vmem [#allocation3], 67
    %v2100 = vld [vmem:[%s2099] ss:$8 sm:$0xf]
    %s2101 = scalar_lea.vmem [#allocation3], 99
    %v2102 = vld [vmem:[%s2101] ss:$8 sm:$0xf]
    %s2103 = scalar_lea.vmem [#allocation3], 131
    %v2104 = vld [vmem:[%s2103] ss:$8 sm:$0xf]
    %s2105 = scalar_lea.vmem [#allocation3], 163
    %v2106 = vld [vmem:[%s2105] ss:$8 sm:$0xf]
    %s2107 = scalar_lea.vmem [#allocation3], 195
    %v2108 = vld [vmem:[%s2107] ss:$8 sm:$0xf]
    %s2109 = scalar_lea.vmem [#allocation3], 227
    %v2110 = vld [vmem:[%s2109] ss:$8 sm:$0xf]
    %v2119 = vcombine.low %v2079, %v2080
    %v2120 = vcombine.low %v2081, %v2082
    %v2121 = vcombine.low %v2083, %v2084
    %v2122 = vcombine.low %v2085, %v2086
    %v2124 = vunpack.c.l.s4 1966171168
    %v2125 = vunpack.c.0.s8 %v2124
    %v2126 = vlaneseq
    %v2127 = vshrl.u32 %v2126, 7
    %v2128 = vsub.s32 %v2125, %v2127
    %v2129 = vrot.slane %v2119, %v2128
    %v2131 = vunpack.c.l.s4 1966171168
    %v2132 = vunpack.c.0.s8 %v2131
    %v2133 = vlaneseq
    %v2134 = vshrl.u32 %v2133, 7
    %v2135 = vsub.s32 %v2132, %v2134
    %v2136 = vrot.slane %v2120, %v2135
    %v2138 = vunpack.c.l.s4 1966171168
    %v2139 = vunpack.c.0.s8 %v2138
    %v2140 = vlaneseq
    %v2141 = vshrl.u32 %v2140, 7
    %v2142 = vsub.s32 %v2139, %v2141
    %v2143 = vrot.slane %v2121, %v2142
    %v2145 = vunpack.c.l.s4 1966171168
    %v2146 = vunpack.c.0.s8 %v2145
    %v2147 = vlaneseq
    %v2148 = vshrl.u32 %v2147, 7
    %v2149 = vsub.s32 %v2146, %v2148
    %v2150 = vrot.slane %v2122, %v2149
    %v2151 = vcombine.low %v2129, %v2136
    %v2152 = vcombine.low %v2143, %v2150
    %v2154 = vunpack.c.l.s4 1966171168
    %v2155 = vunpack.c.0.s8 %v2154
    %v2156 = vlaneseq
    %v2157 = vshrl.u32 %v2156, 7
    %v2158 = vsub.s32 %v2155, %v2157
    %v2159 = vrot.slane %v2151, %v2158
    %v2161 = vunpack.c.l.s4 1966171168
    %v2162 = vunpack.c.0.s8 %v2161
    %v2163 = vlaneseq
    %v2164 = vshrl.u32 %v2163, 7
    %v2165 = vsub.s32 %v2162, %v2164
    %v2166 = vrot.slane %v2152, %v2165
    %v2167 = vcombine.low %v2159, %v2166
    %2169 = vmatprep.subr.mxu0 %v98
    %2170 = vmatpush1.msra.mxu0 %v97
    %2171 = vmatprep.subr.mxu0 %v102
    %2172 = vmatpush1.msra.mxu0 %v101
    %2173 = vmatprep.subr.mxu0 %v106
    %2174 = vmatpush1.msra.mxu0 %v105
    %2175 = vmatprep.subr.mxu0 %v110
    %2176 = vmatpush1.msra.mxu0 %v109
    %2177 = vmatprep.subr.mxu0 %v114
    %2178 = vmatpush1.msra.mxu0 %v113
    %2179 = vmatprep.subr.mxu0 %v118
    %2180 = vmatpush1.msra.mxu0 %v117
    %2181 = vmatprep.subr.mxu0 %v122
    %2182 = vmatpush1.msra.mxu0 %v121
    %2183 = vmatprep.subr.mxu0 %v126
    %2184 = vmatpush1.msra.mxu0 %v125
    %2185 = vmatprep.subr.mxu0 %v130
    %2186 = vmatpush1.msra.mxu0 %v129
    %2187 = vmatprep.subr.mxu0 %v134
    %2188 = vmatpush1.msra.mxu0 %v133
    %2189 = vmatprep.subr.mxu0 %v138
    %2190 = vmatpush1.msra.mxu0 %v137
    %2191 = vmatprep.subr.mxu0 %v142
    %2192 = vmatpush1.msra.mxu0 %v141
    %2193 = vmatprep.subr.mxu0 %v146
    %2194 = vmatpush1.msra.mxu0 %v145
    %2195 = vmatprep.subr.mxu0 %v150
    %2196 = vmatpush1.msra.mxu0 %v149
    %2197 = vmatprep.subr.mxu0 %v154
    %2198 = vmatpush1.msra.mxu0 %v153
    %2199 = vmatprep.subr.mxu0 %v158
    %2200 = vmatpush1.msra.mxu0 %v157
    %2201 = vmatprep.subr.mxu0 0.0
    %2202 = vmatpush1.msra.mxu0 0.0
    %2203 = vmatprep.subr.mxu0 0.0
    %2204 = vmatpush1.msra.mxu0 0.0
    %2205 = vmatprep.subr.mxu0 0.0
    %2206 = vmatpush1.msra.mxu0 0.0
    %2207 = vmatprep.subr.mxu0 0.0
    %2208 = vmatpush1.msra.mxu0 0.0
    %2209 = vmatprep.subr.mxu0 0.0
    %2210 = vmatpush1.msra.mxu0 0.0
    %2211 = vmatprep.subr.mxu0 0.0
    %2212 = vmatpush1.msra.mxu0 0.0
    %2213 = vmatprep.subr.mxu0 0.0
    %2214 = vmatpush1.msra.mxu0 0.0
    %2215 = vmatprep.subr.mxu0 0.0
    %2216 = vmatpush1.msra.mxu0 0.0
    %2217 = vmatprep.subr.mxu0 0.0
    %2218 = vmatpush1.msra.mxu0 0.0
    %2219 = vmatprep.subr.mxu0 0.0
    %2220 = vmatpush1.msra.mxu0 0.0
    %2221 = vmatprep.subr.mxu0 0.0
    %2222 = vmatpush1.msra.mxu0 0.0
    %2223 = vmatprep.subr.mxu0 0.0
    %2224 = vmatpush1.msra.mxu0 0.0
    %2225 = vmatprep.subr.mxu0 0.0
    %2226 = vmatpush1.msra.mxu0 0.0
    %2227 = vmatprep.subr.mxu0 0.0
    %2228 = vmatpush1.msra.mxu0 0.0
    %2229 = vmatprep.subr.mxu0 0.0
    %2230 = vmatpush1.msra.mxu0 0.0
    %2231 = vmatprep.subr.mxu0 0.0
    %2232 = vmatpush1.msra.mxu0 0.0
    %2233 = vmatprep.mubr.f32.mxu0 0.0
    %2234 = vmatmul.mubr.f32.gmra.mrb[0].mxu0 %v2167
    %v2235 = vpop.f32.mrb[0].mxu0
    %v2236 = vadd.f32 0.0, %v2235
    %v2237 = vpop.f32.mrb[0].mxu0
    %v2238 = vadd.f32 0.0, %v2237
    %2239 = vdwg.mxu0
    %2240 = vmatprep.subr.mxu0 %v100
    %2241 = vmatpush1.msra.mxu0 %v99
    %2242 = vmatprep.subr.mxu0 %v104
    %2243 = vmatpush1.msra.mxu0 %v103
    %2244 = vmatprep.subr.mxu0 %v108
    %2245 = vmatpush1.msra.mxu0 %v107
    %2246 = vmatprep.subr.mxu0 %v112
    %2247 = vmatpush1.msra.mxu0 %v111
    %2248 = vmatprep.subr.mxu0 %v116
    %2249 = vmatpush1.msra.mxu0 %v115
    %2250 = vmatprep.subr.mxu0 %v120
    %2251 = vmatpush1.msra.mxu0 %v119
    %2252 = vmatprep.subr.mxu0 %v124
    %2253 = vmatpush1.msra.mxu0 %v123
    %2254 = vmatprep.subr.mxu0 %v128
    %2255 = vmatpush1.msra.mxu0 %v127
    %2256 = vmatprep.subr.mxu0 %v132
    %2257 = vmatpush1.msra.mxu0 %v131
    %2258 = vmatprep.subr.mxu0 %v136
    %2259 = vmatpush1.msra.mxu0 %v135
    %2260 = vmatprep.subr.mxu0 %v140
    %2261 = vmatpush1.msra.mxu0 %v139
    %2262 = vmatprep.subr.mxu0 %v144
    %2263 = vmatpush1.msra.mxu0 %v143
    %2264 = vmatprep.subr.mxu0 %v148
    %2265 = vmatpush1.msra.mxu0 %v147
    %2266 = vmatprep.subr.mxu0 %v152
    %2267 = vmatpush1.msra.mxu0 %v151
    %2268 = vmatprep.subr.mxu0 %v156
    %2269 = vmatpush1.msra.mxu0 %v155
    %2270 = vmatprep.subr.mxu0 %v160
    %2271 = vmatpush1.msra.mxu0 %v159
    %2272 = vmatprep.subr.mxu0 0.0
    %2273 = vmatpush1.msra.mxu0 0.0
    %2274 = vmatprep.subr.mxu0 0.0
    %2275 = vmatpush1.msra.mxu0 0.0
    %2276 = vmatprep.subr.mxu0 0.0
    %2277 = vmatpush1.msra.mxu0 0.0
    %2278 = vmatprep.subr.mxu0 0.0
    %2279 = vmatpush1.msra.mxu0 0.0
    %2280 = vmatprep.subr.mxu0 0.0
    %2281 = vmatpush1.msra.mxu0 0.0
    %2282 = vmatprep.subr.mxu0 0.0
    %2283 = vmatpush1.msra.mxu0 0.0
    %2284 = vmatprep.subr.mxu0 0.0
    %2285 = vmatpush1.msra.mxu0 0.0
    %2286 = vmatprep.subr.mxu0 0.0
    %2287 = vmatpush1.msra.mxu0 0.0
    %2288 = vmatprep.subr.mxu0 0.0
    %2289 = vmatpush1.msra.mxu0 0.0
    %2290 = vmatprep.subr.mxu0 0.0
    %2291 = vmatpush1.msra.mxu0 0.0
    %2292 = vmatprep.subr.mxu0 0.0
    %2293 = vmatpush1.msra.mxu0 0.0
    %2294 = vmatprep.subr.mxu0 0.0
    %2295 = vmatpush1.msra.mxu0 0.0
    %2296 = vmatprep.subr.mxu0 0.0
    %2297 = vmatpush1.msra.mxu0 0.0
    %2298 = vmatprep.subr.mxu0 0.0
    %2299 = vmatpush1.msra.mxu0 0.0
    %2300 = vmatprep.subr.mxu0 0.0
    %2301 = vmatpush1.msra.mxu0 0.0
    %2302 = vmatprep.subr.mxu0 0.0
    %2303 = vmatpush1.msra.mxu0 0.0
    %2304 = vmatprep.mubr.f32.mxu0 0.0
    %2305 = vmatmul.mubr.f32.gmra.mrb[0].mxu0 %v2167
    %v2306 = vpop.f32.mrb[0].mxu0
    %v2307 = vadd.f32 0.0, %v2306
    %v2308 = vpop.f32.mrb[0].mxu0
    %v2309 = vadd.f32 0.0, %v2308
    %2310 = vdwg.mxu0
    %v2315 = vcombine.low %v2236, %v2238
    %v2316 = vcombine.high %v2236, %v2238
    %v2317 = vcombine.low %v2307, %v2309
    %v2318 = vcombine.high %v2307, %v2309
    %v2320 = vunpack.c.l.s4 1966171168
    %v2321 = vunpack.c.0.s8 %v2320
    %v2322 = vlaneseq
    %v2323 = vshrl.u32 %v2322, 7
    %v2324 = vsub.s32 %v2321, %v2323
    %v2325 = vrot.slane %v2315, %v2324
    %v2327 = vunpack.c.l.s4 1966171168
    %v2328 = vunpack.c.0.s8 %v2327
    %v2329 = vlaneseq
    %v2330 = vshrl.u32 %v2329, 7
    %v2331 = vsub.s32 %v2328, %v2330
    %v2332 = vrot.slane %v2316, %v2331
    %v2334 = vunpack.c.l.s4 1966171168
    %v2335 = vunpack.c.0.s8 %v2334
    %v2336 = vlaneseq
    %v2337 = vshrl.u32 %v2336, 7
    %v2338 = vsub.s32 %v2335, %v2337
    %v2339 = vrot.slane %v2317, %v2338
    %v2341 = vunpack.c.l.s4 1966171168
    %v2342 = vunpack.c.0.s8 %v2341
    %v2343 = vlaneseq
    %v2344 = vshrl.u32 %v2343, 7
    %v2345 = vsub.s32 %v2342, %v2344
    %v2346 = vrot.slane %v2318, %v2345
    %v2347 = vcombine.low %v2325, %v2339
    %v2348 = vcombine.high %v2325, %v2339
    %v2349 = vcombine.low %v2332, %v2346
    %v2350 = vcombine.high %v2332, %v2346
    %v2352 = vunpack.c.l.s4 1966171168
    %v2353 = vunpack.c.0.s8 %v2352
    %v2354 = vlaneseq
    %v2355 = vshrl.u32 %v2354, 7
    %v2356 = vsub.s32 %v2353, %v2355
    %v2357 = vrot.slane %v2347, %v2356
    %v2359 = vunpack.c.l.s4 1966171168
    %v2360 = vunpack.c.0.s8 %v2359
    %v2361 = vlaneseq
    %v2362 = vshrl.u32 %v2361, 7
    %v2363 = vsub.s32 %v2360, %v2362
    %v2364 = vrot.slane %v2349, %v2363
    %v2366 = vunpack.c.l.s4 1966171168
    %v2367 = vunpack.c.0.s8 %v2366
    %v2368 = vlaneseq
    %v2369 = vshrl.u32 %v2368, 7
    %v2370 = vsub.s32 %v2367, %v2369
    %v2371 = vrot.slane %v2348, %v2370
    %v2373 = vunpack.c.l.s4 1966171168
    %v2374 = vunpack.c.0.s8 %v2373
    %v2375 = vlaneseq
    %v2376 = vshrl.u32 %v2375, 7
    %v2377 = vsub.s32 %v2374, %v2376
    %v2378 = vrot.slane %v2350, %v2377
    %v2379 = vcombine.high %v2357, %v2357
    %v2380 = vcombine.high %v2364, %v2364
    %v2381 = vcombine.high %v2371, %v2371
    %v2382 = vcombine.high %v2378, %v2378
    %v2391 = vadd.f32 %v2096, %v2357
    %v2392 = vadd.f32 %v2098, %v2371
    %v2393 = vadd.f32 %v2100, %v2379
    %v2394 = vadd.f32 %v2102, %v2381
    %v2395 = vadd.f32 %v2104, %v2364
    %v2396 = vadd.f32 %v2106, %v2378
    %v2397 = vadd.f32 %v2108, %v2380
    %v2398 = vadd.f32 %v2110, %v2382
    %v2407 = vrot.slane %v2391, 1
    %v2408 = vrot.slane %v2392, 1
    %v2409 = vrot.slane %v2393, 1
    %v2410 = vrot.slane %v2394, 1
    %v2411 = vrot.slane %v2395, 1
    %v2412 = vrot.slane %v2396, 1
    %v2413 = vrot.slane %v2397, 1
    %v2414 = vrot.slane %v2398, 1
    %v2423 = vxor.u32 %v2407, 2147483648
    %v2424 = vxor.u32 %v2408, 2147483648
    %v2425 = vxor.u32 %v2409, 2147483648
    %v2426 = vxor.u32 %v2410, 2147483648
    %v2427 = vxor.u32 %v2411, 2147483648
    %v2428 = vxor.u32 %v2412, 2147483648
    %v2429 = vxor.u32 %v2413, 2147483648
    %v2430 = vxor.u32 %v2414, 2147483648
    %v2431 = vmul.f32 %v2423, 1.442695
    %v2432 = vpow.pop %v2431
    %v2433 = vmul.f32 %v2424, 1.442695
    %v2434 = vpow.pop %v2433
    %v2435 = vmul.f32 %v2425, 1.442695
    %v2436 = vpow.pop %v2435
    %v2437 = vmul.f32 %v2426, 1.442695
    %v2438 = vpow.pop %v2437
    %v2439 = vmul.f32 %v2427, 1.442695
    %v2440 = vpow.pop %v2439
    %v2441 = vmul.f32 %v2428, 1.442695
    %v2442 = vpow.pop %v2441
    %v2443 = vmul.f32 %v2429, 1.442695
    %v2444 = vpow.pop %v2443
    %v2445 = vmul.f32 %v2430, 1.442695
    %v2446 = vpow.pop %v2445
    %v2447 = vadd.f32 %v2432, 1.0
    %v2448 = vadd.f32 %v2434, 1.0
    %v2449 = vadd.f32 %v2436, 1.0
    %v2450 = vadd.f32 %v2438, 1.0
    %v2451 = vadd.f32 %v2440, 1.0
    %v2452 = vadd.f32 %v2442, 1.0
    %v2453 = vadd.f32 %v2444, 1.0
    %v2454 = vadd.f32 %v2446, 1.0
    %v2455 = vrcp.pop %v2447
    %v2456 = vmul.f32 1.0, %v2455
    %v2457 = vrcp.pop %v2448
    %v2458 = vmul.f32 1.0, %v2457
    %v2459 = vrcp.pop %v2449
    %v2460 = vmul.f32 1.0, %v2459
    %v2461 = vrcp.pop %v2450
    %v2462 = vmul.f32 1.0, %v2461
    %v2463 = vrcp.pop %v2451
    %v2464 = vmul.f32 1.0, %v2463
    %v2465 = vrcp.pop %v2452
    %v2466 = vmul.f32 1.0, %v2465
    %v2467 = vrcp.pop %v2453
    %v2468 = vmul.f32 1.0, %v2467
    %v2469 = vrcp.pop %v2454
    %v2470 = vmul.f32 1.0, %v2469
    %v2471 = vmul.f32 %v2456, %v1999
    %v2472 = vmul.f32 %v2458, %v2000
    %v2473 = vmul.f32 %v2460, %v2001
    %v2474 = vmul.f32 %v2462, %v2002
    %v2475 = vmul.f32 %v2464, %v2003
    %v2476 = vmul.f32 %v2466, %v2004
    %v2477 = vmul.f32 %v2468, %v2005
    %v2478 = vmul.f32 %v2470, %v2006
    %v2479 = vxor.u32 %v2391, 2147483648
    %v2480 = vxor.u32 %v2392, 2147483648
    %v2481 = vxor.u32 %v2393, 2147483648
    %v2482 = vxor.u32 %v2394, 2147483648
    %v2483 = vxor.u32 %v2395, 2147483648
    %v2484 = vxor.u32 %v2396, 2147483648
    %v2485 = vxor.u32 %v2397, 2147483648
    %v2486 = vxor.u32 %v2398, 2147483648
    %v2487 = vmul.f32 %v2479, 1.442695
    %v2488 = vpow.pop %v2487
    %v2489 = vmul.f32 %v2480, 1.442695
    %v2490 = vpow.pop %v2489
    %v2491 = vmul.f32 %v2481, 1.442695
    %v2492 = vpow.pop %v2491
    %v2493 = vmul.f32 %v2482, 1.442695
    %v2494 = vpow.pop %v2493
    %v2495 = vmul.f32 %v2483, 1.442695
    %v2496 = vpow.pop %v2495
    %v2497 = vmul.f32 %v2484, 1.442695
    %v2498 = vpow.pop %v2497
    %v2499 = vmul.f32 %v2485, 1.442695
    %v2500 = vpow.pop %v2499
    %v2501 = vmul.f32 %v2486, 1.442695
    %v2502 = vpow.pop %v2501
    %v2503 = vadd.f32 %v2488, 1.0
    %v2504 = vadd.f32 %v2490, 1.0
    %v2505 = vadd.f32 %v2492, 1.0
    %v2506 = vadd.f32 %v2494, 1.0
    %v2507 = vadd.f32 %v2496, 1.0
    %v2508 = vadd.f32 %v2498, 1.0
    %v2509 = vadd.f32 %v2500, 1.0
    %v2510 = vadd.f32 %v2502, 1.0
    %v2511 = vrcp.pop %v2503
    %v2512 = vmul.f32 1.0, %v2511
    %v2513 = vrcp.pop %v2504
    %v2514 = vmul.f32 1.0, %v2513
    %v2515 = vrcp.pop %v2505
    %v2516 = vmul.f32 1.0, %v2515
    %v2517 = vrcp.pop %v2506
    %v2518 = vmul.f32 1.0, %v2517
    %v2519 = vrcp.pop %v2507
    %v2520 = vmul.f32 1.0, %v2519
    %v2521 = vrcp.pop %v2508
    %v2522 = vmul.f32 1.0, %v2521
    %v2523 = vrcp.pop %v2509
    %v2524 = vmul.f32 1.0, %v2523
    %v2525 = vrcp.pop %v2510
    %v2526 = vmul.f32 1.0, %v2525
    %v2527 = vrot.slane %v2391, 2
    %v2528 = vrot.slane %v2392, 2
    %v2529 = vrot.slane %v2393, 2
    %v2530 = vrot.slane %v2394, 2
    %v2531 = vrot.slane %v2395, 2
    %v2532 = vrot.slane %v2396, 2
    %v2533 = vrot.slane %v2397, 2
    %v2534 = vrot.slane %v2398, 2
    %v2543 = vtanh.pop %v2527
    %v2544 = vtanh.pop %v2528
    %v2545 = vtanh.pop %v2529
    %v2546 = vtanh.pop %v2530
    %v2547 = vtanh.pop %v2531
    %v2548 = vtanh.pop %v2532
    %v2549 = vtanh.pop %v2533
    %v2550 = vtanh.pop %v2534
    %v2551 = vmul.f32 %v2512, %v2543
    %v2552 = vmul.f32 %v2514, %v2544
    %v2553 = vmul.f32 %v2516, %v2545
    %v2554 = vmul.f32 %v2518, %v2546
    %v2555 = vmul.f32 %v2520, %v2547
    %v2556 = vmul.f32 %v2522, %v2548
    %v2557 = vmul.f32 %v2524, %v2549
    %v2558 = vmul.f32 %v2526, %v2550
    %v2559 = vadd.f32 %v2471, %v2551
    %v2560 = vadd.f32 %v2472, %v2552
    %v2561 = vadd.f32 %v2473, %v2553
    %v2562 = vadd.f32 %v2474, %v2554
    %v2563 = vadd.f32 %v2475, %v2555
    %v2564 = vadd.f32 %v2476, %v2556
    %v2565 = vadd.f32 %v2477, %v2557
    %v2566 = vadd.f32 %v2478, %v2558
    %v2567 = vrot.slane %v2391, 3
    %v2568 = vrot.slane %v2392, 3
    %v2569 = vrot.slane %v2393, 3
    %v2570 = vrot.slane %v2394, 3
    %v2571 = vrot.slane %v2395, 3
    %v2572 = vrot.slane %v2396, 3
    %v2573 = vrot.slane %v2397, 3
    %v2574 = vrot.slane %v2398, 3
    %v2583 = vxor.u32 %v2567, 2147483648
    %v2584 = vxor.u32 %v2568, 2147483648
    %v2585 = vxor.u32 %v2569, 2147483648
    %v2586 = vxor.u32 %v2570, 2147483648
    %v2587 = vxor.u32 %v2571, 2147483648
    %v2588 = vxor.u32 %v2572, 2147483648
    %v2589 = vxor.u32 %v2573, 2147483648
    %v2590 = vxor.u32 %v2574, 2147483648
    %v2591 = vmul.f32 %v2583, 1.442695
    %v2592 = vpow.pop %v2591
    %v2593 = vmul.f32 %v2584, 1.442695
    %v2594 = vpow.pop %v2593
    %v2595 = vmul.f32 %v2585, 1.442695
    %v2596 = vpow.pop %v2595
    %v2597 = vmul.f32 %v2586, 1.442695
    %v2598 = vpow.pop %v2597
    %v2599 = vmul.f32 %v2587, 1.442695
    %v2600 = vpow.pop %v2599
    %v2601 = vmul.f32 %v2588, 1.442695
    %v2602 = vpow.pop %v2601
    %v2603 = vmul.f32 %v2589, 1.442695
    %v2604 = vpow.pop %v2603
    %v2605 = vmul.f32 %v2590, 1.442695
    %v2606 = vpow.pop %v2605
    %v2607 = vadd.f32 %v2592, 1.0
    %v2608 = vadd.f32 %v2594, 1.0
    %v2609 = vadd.f32 %v2596, 1.0
    %v2610 = vadd.f32 %v2598, 1.0
    %v2611 = vadd.f32 %v2600, 1.0
    %v2612 = vadd.f32 %v2602, 1.0
    %v2613 = vadd.f32 %v2604, 1.0
    %v2614 = vadd.f32 %v2606, 1.0
    %v2615 = vrcp.pop %v2607
    %v2616 = vmul.f32 1.0, %v2615
    %v2617 = vrcp.pop %v2608
    %v2618 = vmul.f32 1.0, %v2617
    %v2619 = vrcp.pop %v2609
    %v2620 = vmul.f32 1.0, %v2619
    %v2621 = vrcp.pop %v2610
    %v2622 = vmul.f32 1.0, %v2621
    %v2623 = vrcp.pop %v2611
    %v2624 = vmul.f32 1.0, %v2623
    %v2625 = vrcp.pop %v2612
    %v2626 = vmul.f32 1.0, %v2625
    %v2627 = vrcp.pop %v2613
    %v2628 = vmul.f32 1.0, %v2627
    %v2629 = vrcp.pop %v2614
    %v2630 = vmul.f32 1.0, %v2629
    %v2631 = vtanh.pop %v2559
    %v2632 = vtanh.pop %v2560
    %v2633 = vtanh.pop %v2561
    %v2634 = vtanh.pop %v2562
    %v2635 = vtanh.pop %v2563
    %v2636 = vtanh.pop %v2564
    %v2637 = vtanh.pop %v2565
    %v2638 = vtanh.pop %v2566
    %v2639 = vmul.f32 %v2616, %v2631
    %v2640 = vmul.f32 %v2618, %v2632
    %v2641 = vmul.f32 %v2620, %v2633
    %v2642 = vmul.f32 %v2622, %v2634
    %v2643 = vmul.f32 %v2624, %v2635
    %v2644 = vmul.f32 %v2626, %v2636
    %v2645 = vmul.f32 %v2628, %v2637
    %v2646 = vmul.f32 %v2630, %v2638
    %2647 = vst [vmem:[#allocation2 + $0x3] sm:$0x1] %v2639
    %2648 = vst [vmem:[#allocation2 + $0xb] sm:$0x1] %v2640
    %2649 = vst [vmem:[#allocation2 + $0x13] sm:$0x1] %v2641
    %2650 = vst [vmem:[#allocation2 + $0x1b] sm:$0x1] %v2642
    %2651 = vst [vmem:[#allocation2 + $0x23] sm:$0x1] %v2643
    %2652 = vst [vmem:[#allocation2 + $0x2b] sm:$0x1] %v2644
    %2653 = vst [vmem:[#allocation2 + $0x33] sm:$0x1] %v2645
    %2654 = vst [vmem:[#allocation2 + $0x3b] sm:$0x1] %v2646
    %s2655 = scalar_lea.vmem [#allocation3], 4
    %v2656 = vld [vmem:[%s2655] ss:$8 sm:$0xf]
    %s2657 = scalar_lea.vmem [#allocation3], 36
    %v2658 = vld [vmem:[%s2657] ss:$8 sm:$0xf]
    %s2659 = scalar_lea.vmem [#allocation3], 68
    %v2660 = vld [vmem:[%s2659] ss:$8 sm:$0xf]
    %s2661 = scalar_lea.vmem [#allocation3], 100
    %v2662 = vld [vmem:[%s2661] ss:$8 sm:$0xf]
    %s2663 = scalar_lea.vmem [#allocation3], 132
    %v2664 = vld [vmem:[%s2663] ss:$8 sm:$0xf]
    %s2665 = scalar_lea.vmem [#allocation3], 164
    %v2666 = vld [vmem:[%s2665] ss:$8 sm:$0xf]
    %s2667 = scalar_lea.vmem [#allocation3], 196
    %v2668 = vld [vmem:[%s2667] ss:$8 sm:$0xf]
    %s2669 = scalar_lea.vmem [#allocation3], 228
    %v2670 = vld [vmem:[%s2669] ss:$8 sm:$0xf]
    %v2679 = vcombine.low %v2639, %v2640
    %v2680 = vcombine.low %v2641, %v2642
    %v2681 = vcombine.low %v2643, %v2644
    %v2682 = vcombine.low %v2645, %v2646
    %v2684 = vunpack.c.l.s4 1966171168
    %v2685 = vunpack.c.0.s8 %v2684
    %v2686 = vlaneseq
    %v2687 = vshrl.u32 %v2686, 7
    %v2688 = vsub.s32 %v2685, %v2687
    %v2689 = vrot.slane %v2679, %v2688
    %v2691 = vunpack.c.l.s4 1966171168
    %v2692 = vunpack.c.0.s8 %v2691
    %v2693 = vlaneseq
    %v2694 = vshrl.u32 %v2693, 7
    %v2695 = vsub.s32 %v2692, %v2694
    %v2696 = vrot.slane %v2680, %v2695
    %v2698 = vunpack.c.l.s4 1966171168
    %v2699 = vunpack.c.0.s8 %v2698
    %v2700 = vlaneseq
    %v2701 = vshrl.u32 %v2700, 7
    %v2702 = vsub.s32 %v2699, %v2701
    %v2703 = vrot.slane %v2681, %v2702
    %v2705 = vunpack.c.l.s4 1966171168
    %v2706 = vunpack.c.0.s8 %v2705
    %v2707 = vlaneseq
    %v2708 = vshrl.u32 %v2707, 7
    %v2709 = vsub.s32 %v2706, %v2708
    %v2710 = vrot.slane %v2682, %v2709
    %v2711 = vcombine.low %v2689, %v2696
    %v2712 = vcombine.low %v2703, %v2710
    %v2714 = vunpack.c.l.s4 1966171168
    %v2715 = vunpack.c.0.s8 %v2714
    %v2716 = vlaneseq
    %v2717 = vshrl.u32 %v2716, 7
    %v2718 = vsub.s32 %v2715, %v2717
    %v2719 = vrot.slane %v2711, %v2718
    %v2721 = vunpack.c.l.s4 1966171168
    %v2722 = vunpack.c.0.s8 %v2721
    %v2723 = vlaneseq
    %v2724 = vshrl.u32 %v2723, 7
    %v2725 = vsub.s32 %v2722, %v2724
    %v2726 = vrot.slane %v2712, %v2725
    %v2727 = vcombine.low %v2719, %v2726
    %2729 = vmatprep.subr.mxu0 %v98
    %2730 = vmatpush1.msra.mxu0 %v97
    %2731 = vmatprep.subr.mxu0 %v102
    %2732 = vmatpush1.msra.mxu0 %v101
    %2733 = vmatprep.subr.mxu0 %v106
    %2734 = vmatpush1.msra.mxu0 %v105
    %2735 = vmatprep.subr.mxu0 %v110
    %2736 = vmatpush1.msra.mxu0 %v109
    %2737 = vmatprep.subr.mxu0 %v114
    %2738 = vmatpush1.msra.mxu0 %v113
    %2739 = vmatprep.subr.mxu0 %v118
    %2740 = vmatpush1.msra.mxu0 %v117
    %2741 = vmatprep.subr.mxu0 %v122
    %2742 = vmatpush1.msra.mxu0 %v121
    %2743 = vmatprep.subr.mxu0 %v126
    %2744 = vmatpush1.msra.mxu0 %v125
    %2745 = vmatprep.subr.mxu0 %v130
    %2746 = vmatpush1.msra.mxu0 %v129
    %2747 = vmatprep.subr.mxu0 %v134
    %2748 = vmatpush1.msra.mxu0 %v133
    %2749 = vmatprep.subr.mxu0 %v138
    %2750 = vmatpush1.msra.mxu0 %v137
    %2751 = vmatprep.subr.mxu0 %v142
    %2752 = vmatpush1.msra.mxu0 %v141
    %2753 = vmatprep.subr.mxu0 %v146
    %2754 = vmatpush1.msra.mxu0 %v145
    %2755 = vmatprep.subr.mxu0 %v150
    %2756 = vmatpush1.msra.mxu0 %v149
    %2757 = vmatprep.subr.mxu0 %v154
    %2758 = vmatpush1.msra.mxu0 %v153
    %2759 = vmatprep.subr.mxu0 %v158
    %2760 = vmatpush1.msra.mxu0 %v157
    %2761 = vmatprep.subr.mxu0 0.0
    %2762 = vmatpush1.msra.mxu0 0.0
    %2763 = vmatprep.subr.mxu0 0.0
    %2764 = vmatpush1.msra.mxu0 0.0
    %2765 = vmatprep.subr.mxu0 0.0
    %2766 = vmatpush1.msra.mxu0 0.0
    %2767 = vmatprep.subr.mxu0 0.0
    %2768 = vmatpush1.msra.mxu0 0.0
    %2769 = vmatprep.subr.mxu0 0.0
    %2770 = vmatpush1.msra.mxu0 0.0
    %2771 = vmatprep.subr.mxu0 0.0
    %2772 = vmatpush1.msra.mxu0 0.0
    %2773 = vmatprep.subr.mxu0 0.0
    %2774 = vmatpush1.msra.mxu0 0.0
    %2775 = vmatprep.subr.mxu0 0.0
    %2776 = vmatpush1.msra.mxu0 0.0
    %2777 = vmatprep.subr.mxu0 0.0
    %2778 = vmatpush1.msra.mxu0 0.0
    %2779 = vmatprep.subr.mxu0 0.0
    %2780 = vmatpush1.msra.mxu0 0.0
    %2781 = vmatprep.subr.mxu0 0.0
    %2782 = vmatpush1.msra.mxu0 0.0
    %2783 = vmatprep.subr.mxu0 0.0
    %2784 = vmatpush1.msra.mxu0 0.0
    %2785 = vmatprep.subr.mxu0 0.0
    %2786 = vmatpush1.msra.mxu0 0.0
    %2787 = vmatprep.subr.mxu0 0.0
    %2788 = vmatpush1.msra.mxu0 0.0
    %2789 = vmatprep.subr.mxu0 0.0
    %2790 = vmatpush1.msra.mxu0 0.0
    %2791 = vmatprep.subr.mxu0 0.0
    %2792 = vmatpush1.msra.mxu0 0.0
    %2793 = vmatprep.mubr.f32.mxu0 0.0
    %2794 = vmatmul.mubr.f32.gmra.mrb[0].mxu0 %v2727
    %v2795 = vpop.f32.mrb[0].mxu0
    %v2796 = vadd.f32 0.0, %v2795
    %v2797 = vpop.f32.mrb[0].mxu0
    %v2798 = vadd.f32 0.0, %v2797
    %2799 = vdwg.mxu0
    %2800 = vmatprep.subr.mxu0 %v100
    %2801 = vmatpush1.msra.mxu0 %v99
    %2802 = vmatprep.subr.mxu0 %v104
    %2803 = vmatpush1.msra.mxu0 %v103
    %2804 = vmatprep.subr.mxu0 %v108
    %2805 = vmatpush1.msra.mxu0 %v107
    %2806 = vmatprep.subr.mxu0 %v112
    %2807 = vmatpush1.msra.mxu0 %v111
    %2808 = vmatprep.subr.mxu0 %v116
    %2809 = vmatpush1.msra.mxu0 %v115
    %2810 = vmatprep.subr.mxu0 %v120
    %2811 = vmatpush1.msra.mxu0 %v119
    %2812 = vmatprep.subr.mxu0 %v124
    %2813 = vmatpush1.msra.mxu0 %v123
    %2814 = vmatprep.subr.mxu0 %v128
    %2815 = vmatpush1.msra.mxu0 %v127
    %2816 = vmatprep.subr.mxu0 %v132
    %2817 = vmatpush1.msra.mxu0 %v131
    %2818 = vmatprep.subr.mxu0 %v136
    %2819 = vmatpush1.msra.mxu0 %v135
    %2820 = vmatprep.subr.mxu0 %v140
    %2821 = vmatpush1.msra.mxu0 %v139
    %2822 = vmatprep.subr.mxu0 %v144
    %2823 = vmatpush1.msra.mxu0 %v143
    %2824 = vmatprep.subr.mxu0 %v148
    %2825 = vmatpush1.msra.mxu0 %v147
    %2826 = vmatprep.subr.mxu0 %v152
    %2827 = vmatpush1.msra.mxu0 %v151
    %2828 = vmatprep.subr.mxu0 %v156
    %2829 = vmatpush1.msra.mxu0 %v155
    %2830 = vmatprep.subr.mxu0 %v160
    %2831 = vmatpush1.msra.mxu0 %v159
    %2832 = vmatprep.subr.mxu0 0.0
    %2833 = vmatpush1.msra.mxu0 0.0
    %2834 = vmatprep.subr.mxu0 0.0
    %2835 = vmatpush1.msra.mxu0 0.0
    %2836 = vmatprep.subr.mxu0 0.0
    %2837 = vmatpush1.msra.mxu0 0.0
    %2838 = vmatprep.subr.mxu0 0.0
    %2839 = vmatpush1.msra.mxu0 0.0
    %2840 = vmatprep.subr.mxu0 0.0
    %2841 = vmatpush1.msra.mxu0 0.0
    %2842 = vmatprep.subr.mxu0 0.0
    %2843 = vmatpush1.msra.mxu0 0.0
    %2844 = vmatprep.subr.mxu0 0.0
    %2845 = vmatpush1.msra.mxu0 0.0
    %2846 = vmatprep.subr.mxu0 0.0
    %2847 = vmatpush1.msra.mxu0 0.0
    %2848 = vmatprep.subr.mxu0 0.0
    %2849 = vmatpush1.msra.mxu0 0.0
    %2850 = vmatprep.subr.mxu0 0.0
    %2851 = vmatpush1.msra.mxu0 0.0
    %2852 = vmatprep.subr.mxu0 0.0
    %2853 = vmatpush1.msra.mxu0 0.0
    %2854 = vmatprep.subr.mxu0 0.0
    %2855 = vmatpush1.msra.mxu0 0.0
    %2856 = vmatprep.subr.mxu0 0.0
    %2857 = vmatpush1.msra.mxu0 0.0
    %2858 = vmatprep.subr.mxu0 0.0
    %2859 = vmatpush1.msra.mxu0 0.0
    %2860 = vmatprep.subr.mxu0 0.0
    %2861 = vmatpush1.msra.mxu0 0.0
    %2862 = vmatprep.subr.mxu0 0.0
    %2863 = vmatpush1.msra.mxu0 0.0
    %2864 = vmatprep.mubr.f32.mxu0 0.0
    %2865 = vmatmul.mubr.f32.gmra.mrb[0].mxu0 %v2727
    %v2866 = vpop.f32.mrb[0].mxu0
    %v2867 = vadd.f32 0.0, %v2866
    %v2868 = vpop.f32.mrb[0].mxu0
    %v2869 = vadd.f32 0.0, %v2868
    %2870 = vdwg.mxu0
    %v2875 = vcombine.low %v2796, %v2798
    %v2876 = vcombine.high %v2796, %v2798
    %v2877 = vcombine.low %v2867, %v2869
    %v2878 = vcombine.high %v2867, %v2869
    %v2880 = vunpack.c.l.s4 1966171168
    %v2881 = vunpack.c.0.s8 %v2880
    %v2882 = vlaneseq
    %v2883 = vshrl.u32 %v2882, 7
    %v2884 = vsub.s32 %v2881, %v2883
    %v2885 = vrot.slane %v2875, %v2884
    %v2887 = vunpack.c.l.s4 1966171168
    %v2888 = vunpack.c.0.s8 %v2887
    %v2889 = vlaneseq
    %v2890 = vshrl.u32 %v2889, 7
    %v2891 = vsub.s32 %v2888, %v2890
    %v2892 = vrot.slane %v2876, %v2891
    %v2894 = vunpack.c.l.s4 1966171168
    %v2895 = vunpack.c.0.s8 %v2894
    %v2896 = vlaneseq
    %v2897 = vshrl.u32 %v2896, 7
    %v2898 = vsub.s32 %v2895, %v2897
    %v2899 = vrot.slane %v2877, %v2898
    %v2901 = vunpack.c.l.s4 1966171168
    %v2902 = vunpack.c.0.s8 %v2901
    %v2903 = vlaneseq
    %v2904 = vshrl.u32 %v2903, 7
    %v2905 = vsub.s32 %v2902, %v2904
    %v2906 = vrot.slane %v2878, %v2905
    %v2907 = vcombine.low %v2885, %v2899
    %v2908 = vcombine.high %v2885, %v2899
    %v2909 = vcombine.low %v2892, %v2906
    %v2910 = vcombine.high %v2892, %v2906
    %v2912 = vunpack.c.l.s4 1966171168
    %v2913 = vunpack.c.0.s8 %v2912
    %v2914 = vlaneseq
    %v2915 = vshrl.u32 %v2914, 7
    %v2916 = vsub.s32 %v2913, %v2915
    %v2917 = vrot.slane %v2907, %v2916
    %v2919 = vunpack.c.l.s4 1966171168
    %v2920 = vunpack.c.0.s8 %v2919
    %v2921 = vlaneseq
    %v2922 = vshrl.u32 %v2921, 7
    %v2923 = vsub.s32 %v2920, %v2922
    %v2924 = vrot.slane %v2909, %v2923
    %v2926 = vunpack.c.l.s4 1966171168
    %v2927 = vunpack.c.0.s8 %v2926
    %v2928 = vlaneseq
    %v2929 = vshrl.u32 %v2928, 7
    %v2930 = vsub.s32 %v2927, %v2929
    %v2931 = vrot.slane %v2908, %v2930
    %v2933 = vunpack.c.l.s4 1966171168
    %v2934 = vunpack.c.0.s8 %v2933
    %v2935 = vlaneseq
    %v2936 = vshrl.u32 %v2935, 7
    %v2937 = vsub.s32 %v2934, %v2936
    %v2938 = vrot.slane %v2910, %v2937
    %v2939 = vcombine.high %v2917, %v2917
    %v2940 = vcombine.high %v2924, %v2924
    %v2941 = vcombine.high %v2931, %v2931
    %v2942 = vcombine.high %v2938, %v2938
    %v2951 = vadd.f32 %v2656, %v2917
    %v2952 = vadd.f32 %v2658, %v2931
    %v2953 = vadd.f32 %v2660, %v2939
    %v2954 = vadd.f32 %v2662, %v2941
    %v2955 = vadd.f32 %v2664, %v2924
    %v2956 = vadd.f32 %v2666, %v2938
    %v2957 = vadd.f32 %v2668, %v2940
    %v2958 = vadd.f32 %v2670, %v2942
    %v2967 = vrot.slane %v2951, 1
    %v2968 = vrot.slane %v2952, 1
    %v2969 = vrot.slane %v2953, 1
    %v2970 = vrot.slane %v2954, 1
    %v2971 = vrot.slane %v2955, 1
    %v2972 = vrot.slane %v2956, 1
    %v2973 = vrot.slane %v2957, 1
    %v2974 = vrot.slane %v2958, 1
    %v2983 = vxor.u32 %v2967, 2147483648
    %v2984 = vxor.u32 %v2968, 2147483648
    %v2985 = vxor.u32 %v2969, 2147483648
    %v2986 = vxor.u32 %v2970, 2147483648
    %v2987 = vxor.u32 %v2971, 2147483648
    %v2988 = vxor.u32 %v2972, 2147483648
    %v2989 = vxor.u32 %v2973, 2147483648
    %v2990 = vxor.u32 %v2974, 2147483648
    %v2991 = vmul.f32 %v2983, 1.442695
    %v2992 = vpow.pop %v2991
    %v2993 = vmul.f32 %v2984, 1.442695
    %v2994 = vpow.pop %v2993
    %v2995 = vmul.f32 %v2985, 1.442695
    %v2996 = vpow.pop %v2995
    %v2997 = vmul.f32 %v2986, 1.442695
    %v2998 = vpow.pop %v2997
    %v2999 = vmul.f32 %v2987, 1.442695
    %v3000 = vpow.pop %v2999
    %v3001 = vmul.f32 %v2988, 1.442695
    %v3002 = vpow.pop %v3001
    %v3003 = vmul.f32 %v2989, 1.442695
    %v3004 = vpow.pop %v3003
    %v3005 = vmul.f32 %v2990, 1.442695
    %v3006 = vpow.pop %v3005
    %v3007 = vadd.f32 %v2992, 1.0
    %v3008 = vadd.f32 %v2994, 1.0
    %v3009 = vadd.f32 %v2996, 1.0
    %v3010 = vadd.f32 %v2998, 1.0
    %v3011 = vadd.f32 %v3000, 1.0
    %v3012 = vadd.f32 %v3002, 1.0
    %v3013 = vadd.f32 %v3004, 1.0
    %v3014 = vadd.f32 %v3006, 1.0
    %v3015 = vrcp.pop %v3007
    %v3016 = vmul.f32 1.0, %v3015
    %v3017 = vrcp.pop %v3008
    %v3018 = vmul.f32 1.0, %v3017
    %v3019 = vrcp.pop %v3009
    %v3020 = vmul.f32 1.0, %v3019
    %v3021 = vrcp.pop %v3010
    %v3022 = vmul.f32 1.0, %v3021
    %v3023 = vrcp.pop %v3011
    %v3024 = vmul.f32 1.0, %v3023
    %v3025 = vrcp.pop %v3012
    %v3026 = vmul.f32 1.0, %v3025
    %v3027 = vrcp.pop %v3013
    %v3028 = vmul.f32 1.0, %v3027
    %v3029 = vrcp.pop %v3014
    %v3030 = vmul.f32 1.0, %v3029
    %v3031 = vmul.f32 %v3016, %v2559
    %v3032 = vmul.f32 %v3018, %v2560
    %v3033 = vmul.f32 %v3020, %v2561
    %v3034 = vmul.f32 %v3022, %v2562
    %v3035 = vmul.f32 %v3024, %v2563
    %v3036 = vmul.f32 %v3026, %v2564
    %v3037 = vmul.f32 %v3028, %v2565
    %v3038 = vmul.f32 %v3030, %v2566
    %v3039 = vxor.u32 %v2951, 2147483648
    %v3040 = vxor.u32 %v2952, 2147483648
    %v3041 = vxor.u32 %v2953, 2147483648
    %v3042 = vxor.u32 %v2954, 2147483648
    %v3043 = vxor.u32 %v2955, 2147483648
    %v3044 = vxor.u32 %v2956, 2147483648
    %v3045 = vxor.u32 %v2957, 2147483648
    %v3046 = vxor.u32 %v2958, 2147483648
    %v3047 = vmul.f32 %v3039, 1.442695
    %v3048 = vpow.pop %v3047
    %v3049 = vmul.f32 %v3040, 1.442695
    %v3050 = vpow.pop %v3049
    %v3051 = vmul.f32 %v3041, 1.442695
    %v3052 = vpow.pop %v3051
    %v3053 = vmul.f32 %v3042, 1.442695
    %v3054 = vpow.pop %v3053
    %v3055 = vmul.f32 %v3043, 1.442695
    %v3056 = vpow.pop %v3055
    %v3057 = vmul.f32 %v3044, 1.442695
    %v3058 = vpow.pop %v3057
    %v3059 = vmul.f32 %v3045, 1.442695
    %v3060 = vpow.pop %v3059
    %v3061 = vmul.f32 %v3046, 1.442695
    %v3062 = vpow.pop %v3061
    %v3063 = vadd.f32 %v3048, 1.0
    %v3064 = vadd.f32 %v3050, 1.0
    %v3065 = vadd.f32 %v3052, 1.0
    %v3066 = vadd.f32 %v3054, 1.0
    %v3067 = vadd.f32 %v3056, 1.0
    %v3068 = vadd.f32 %v3058, 1.0
    %v3069 = vadd.f32 %v3060, 1.0
    %v3070 = vadd.f32 %v3062, 1.0
    %v3071 = vrcp.pop %v3063
    %v3072 = vmul.f32 1.0, %v3071
    %v3073 = vrcp.pop %v3064
    %v3074 = vmul.f32 1.0, %v3073
    %v3075 = vrcp.pop %v3065
    %v3076 = vmul.f32 1.0, %v3075
    %v3077 = vrcp.pop %v3066
    %v3078 = vmul.f32 1.0, %v3077
    %v3079 = vrcp.pop %v3067
    %v3080 = vmul.f32 1.0, %v3079
    %v3081 = vrcp.pop %v3068
    %v3082 = vmul.f32 1.0, %v3081
    %v3083 = vrcp.pop %v3069
    %v3084 = vmul.f32 1.0, %v3083
    %v3085 = vrcp.pop %v3070
    %v3086 = vmul.f32 1.0, %v3085
    %v3087 = vrot.slane %v2951, 2
    %v3088 = vrot.slane %v2952, 2
    %v3089 = vrot.slane %v2953, 2
    %v3090 = vrot.slane %v2954, 2
    %v3091 = vrot.slane %v2955, 2
    %v3092 = vrot.slane %v2956, 2
    %v3093 = vrot.slane %v2957, 2
    %v3094 = vrot.slane %v2958, 2
    %v3103 = vtanh.pop %v3087
    %v3104 = vtanh.pop %v3088
    %v3105 = vtanh.pop %v3089
    %v3106 = vtanh.pop %v3090
    %v3107 = vtanh.pop %v3091
    %v3108 = vtanh.pop %v3092
    %v3109 = vtanh.pop %v3093
    %v3110 = vtanh.pop %v3094
    %v3111 = vmul.f32 %v3072, %v3103
    %v3112 = vmul.f32 %v3074, %v3104
    %v3113 = vmul.f32 %v3076, %v3105
    %v3114 = vmul.f32 %v3078, %v3106
    %v3115 = vmul.f32 %v3080, %v3107
    %v3116 = vmul.f32 %v3082, %v3108
    %v3117 = vmul.f32 %v3084, %v3109
    %v3118 = vmul.f32 %v3086, %v3110
    %v3119 = vadd.f32 %v3031, %v3111
    %v3120 = vadd.f32 %v3032, %v3112
    %v3121 = vadd.f32 %v3033, %v3113
    %v3122 = vadd.f32 %v3034, %v3114
    %v3123 = vadd.f32 %v3035, %v3115
    %v3124 = vadd.f32 %v3036, %v3116
    %v3125 = vadd.f32 %v3037, %v3117
    %v3126 = vadd.f32 %v3038, %v3118
    %v3127 = vrot.slane %v2951, 3
    %v3128 = vrot.slane %v2952, 3
    %v3129 = vrot.slane %v2953, 3
    %v3130 = vrot.slane %v2954, 3
    %v3131 = vrot.slane %v2955, 3
    %v3132 = vrot.slane %v2956, 3
    %v3133 = vrot.slane %v2957, 3
    %v3134 = vrot.slane %v2958, 3
    %v3143 = vxor.u32 %v3127, 2147483648
    %v3144 = vxor.u32 %v3128, 2147483648
    %v3145 = vxor.u32 %v3129, 2147483648
    %v3146 = vxor.u32 %v3130, 2147483648
    %v3147 = vxor.u32 %v3131, 2147483648
    %v3148 = vxor.u32 %v3132, 2147483648
    %v3149 = vxor.u32 %v3133, 2147483648
    %v3150 = vxor.u32 %v3134, 2147483648
    %v3151 = vmul.f32 %v3143, 1.442695
    %v3152 = vpow.pop %v3151
    %v3153 = vmul.f32 %v3144, 1.442695
    %v3154 = vpow.pop %v3153
    %v3155 = vmul.f32 %v3145, 1.442695
    %v3156 = vpow.pop %v3155
    %v3157 = vmul.f32 %v3146, 1.442695
    %v3158 = vpow.pop %v3157
    %v3159 = vmul.f32 %v3147, 1.442695
    %v3160 = vpow.pop %v3159
    %v3161 = vmul.f32 %v3148, 1.442695
    %v3162 = vpow.pop %v3161
    %v3163 = vmul.f32 %v3149, 1.442695
    %v3164 = vpow.pop %v3163
    %v3165 = vmul.f32 %v3150, 1.442695
    %v3166 = vpow.pop %v3165
    %v3167 = vadd.f32 %v3152, 1.0
    %v3168 = vadd.f32 %v3154, 1.0
    %v3169 = vadd.f32 %v3156, 1.0
    %v3170 = vadd.f32 %v3158, 1.0
    %v3171 = vadd.f32 %v3160, 1.0
    %v3172 = vadd.f32 %v3162, 1.0
    %v3173 = vadd.f32 %v3164, 1.0
    %v3174 = vadd.f32 %v3166, 1.0
    %v3175 = vrcp.pop %v3167
    %v3176 = vmul.f32 1.0, %v3175
    %v3177 = vrcp.pop %v3168
    %v3178 = vmul.f32 1.0, %v3177
    %v3179 = vrcp.pop %v3169
    %v3180 = vmul.f32 1.0, %v3179
    %v3181 = vrcp.pop %v3170
    %v3182 = vmul.f32 1.0, %v3181
    %v3183 = vrcp.pop %v3171
    %v3184 = vmul.f32 1.0, %v3183
    %v3185 = vrcp.pop %v3172
    %v3186 = vmul.f32 1.0, %v3185
    %v3187 = vrcp.pop %v3173
    %v3188 = vmul.f32 1.0, %v3187
    %v3189 = vrcp.pop %v3174
    %v3190 = vmul.f32 1.0, %v3189
    %v3191 = vtanh.pop %v3119
    %v3192 = vtanh.pop %v3120
    %v3193 = vtanh.pop %v3121
    %v3194 = vtanh.pop %v3122
    %v3195 = vtanh.pop %v3123
    %v3196 = vtanh.pop %v3124
    %v3197 = vtanh.pop %v3125
    %v3198 = vtanh.pop %v3126
    %v3199 = vmul.f32 %v3176, %v3191
    %v3200 = vmul.f32 %v3178, %v3192
    %v3201 = vmul.f32 %v3180, %v3193
    %v3202 = vmul.f32 %v3182, %v3194
    %v3203 = vmul.f32 %v3184, %v3195
    %v3204 = vmul.f32 %v3186, %v3196
    %v3205 = vmul.f32 %v3188, %v3197
    %v3206 = vmul.f32 %v3190, %v3198
    %3207 = vst [vmem:[#allocation2 + $0x4] sm:$0x1] %v3199
    %3208 = vst [vmem:[#allocation2 + $0xc] sm:$0x1] %v3200
    %3209 = vst [vmem:[#allocation2 + $0x14] sm:$0x1] %v3201
    %3210 = vst [vmem:[#allocation2 + $0x1c] sm:$0x1] %v3202
    %3211 = vst [vmem:[#allocation2 + $0x24] sm:$0x1] %v3203
    %3212 = vst [vmem:[#allocation2 + $0x2c] sm:$0x1] %v3204
    %3213 = vst [vmem:[#allocation2 + $0x34] sm:$0x1] %v3205
    %3214 = vst [vmem:[#allocation2 + $0x3c] sm:$0x1] %v3206
    %s3215 = scalar_lea.vmem [#allocation3], 5
    %v3216 = vld [vmem:[%s3215] ss:$8 sm:$0xf]
    %s3217 = scalar_lea.vmem [#allocation3], 37
    %v3218 = vld [vmem:[%s3217] ss:$8 sm:$0xf]
    %s3219 = scalar_lea.vmem [#allocation3], 69
    %v3220 = vld [vmem:[%s3219] ss:$8 sm:$0xf]
    %s3221 = scalar_lea.vmem [#allocation3], 101
    %v3222 = vld [vmem:[%s3221] ss:$8 sm:$0xf]
    %s3223 = scalar_lea.vmem [#allocation3], 133
    %v3224 = vld [vmem:[%s3223] ss:$8 sm:$0xf]
    %s3225 = scalar_lea.vmem [#allocation3], 165
    %v3226 = vld [vmem:[%s3225] ss:$8 sm:$0xf]
    %s3227 = scalar_lea.vmem [#allocation3], 197
    %v3228 = vld [vmem:[%s3227] ss:$8 sm:$0xf]
    %s3229 = scalar_lea.vmem [#allocation3], 229
    %v3230 = vld [vmem:[%s3229] ss:$8 sm:$0xf]
    %v3239 = vcombine.low %v3199, %v3200
    %v3240 = vcombine.low %v3201, %v3202
    %v3241 = vcombine.low %v3203, %v3204
    %v3242 = vcombine.low %v3205, %v3206
    %v3244 = vunpack.c.l.s4 1966171168
    %v3245 = vunpack.c.0.s8 %v3244
    %v3246 = vlaneseq
    %v3247 = vshrl.u32 %v3246, 7
    %v3248 = vsub.s32 %v3245, %v3247
    %v3249 = vrot.slane %v3239, %v3248
    %v3251 = vunpack.c.l.s4 1966171168
    %v3252 = vunpack.c.0.s8 %v3251
    %v3253 = vlaneseq
    %v3254 = vshrl.u32 %v3253, 7
    %v3255 = vsub.s32 %v3252, %v3254
    %v3256 = vrot.slane %v3240, %v3255
    %v3258 = vunpack.c.l.s4 1966171168
    %v3259 = vunpack.c.0.s8 %v3258
    %v3260 = vlaneseq
    %v3261 = vshrl.u32 %v3260, 7
    %v3262 = vsub.s32 %v3259, %v3261
    %v3263 = vrot.slane %v3241, %v3262
    %v3265 = vunpack.c.l.s4 1966171168
    %v3266 = vunpack.c.0.s8 %v3265
    %v3267 = vlaneseq
    %v3268 = vshrl.u32 %v3267, 7
    %v3269 = vsub.s32 %v3266, %v3268
    %v3270 = vrot.slane %v3242, %v3269
    %v3271 = vcombine.low %v3249, %v3256
    %v3272 = vcombine.low %v3263, %v3270
    %v3274 = vunpack.c.l.s4 1966171168
    %v3275 = vunpack.c.0.s8 %v3274
    %v3276 = vlaneseq
    %v3277 = vshrl.u32 %v3276, 7
    %v3278 = vsub.s32 %v3275, %v3277
    %v3279 = vrot.slane %v3271, %v3278
    %v3281 = vunpack.c.l.s4 1966171168
    %v3282 = vunpack.c.0.s8 %v3281
    %v3283 = vlaneseq
    %v3284 = vshrl.u32 %v3283, 7
    %v3285 = vsub.s32 %v3282, %v3284
    %v3286 = vrot.slane %v3272, %v3285
    %v3287 = vcombine.low %v3279, %v3286
    %3289 = vmatprep.subr.mxu0 %v98
    %3290 = vmatpush1.msra.mxu0 %v97
    %3291 = vmatprep.subr.mxu0 %v102
    %3292 = vmatpush1.msra.mxu0 %v101
    %3293 = vmatprep.subr.mxu0 %v106
    %3294 = vmatpush1.msra.mxu0 %v105
    %3295 = vmatprep.subr.mxu0 %v110
    %3296 = vmatpush1.msra.mxu0 %v109
    %3297 = vmatprep.subr.mxu0 %v114
    %3298 = vmatpush1.msra.mxu0 %v113
    %3299 = vmatprep.subr.mxu0 %v118
    %3300 = vmatpush1.msra.mxu0 %v117
    %3301 = vmatprep.subr.mxu0 %v122
    %3302 = vmatpush1.msra.mxu0 %v121
    %3303 = vmatprep.subr.mxu0 %v126
    %3304 = vmatpush1.msra.mxu0 %v125
    %3305 = vmatprep.subr.mxu0 %v130
    %3306 = vmatpush1.msra.mxu0 %v129
    %3307 = vmatprep.subr.mxu0 %v134
    %3308 = vmatpush1.msra.mxu0 %v133
    %3309 = vmatprep.subr.mxu0 %v138
    %3310 = vmatpush1.msra.mxu0 %v137
    %3311 = vmatprep.subr.mxu0 %v142
    %3312 = vmatpush1.msra.mxu0 %v141
    %3313 = vmatprep.subr.mxu0 %v146
    %3314 = vmatpush1.msra.mxu0 %v145
    %3315 = vmatprep.subr.mxu0 %v150
    %3316 = vmatpush1.msra.mxu0 %v149
    %3317 = vmatprep.subr.mxu0 %v154
    %3318 = vmatpush1.msra.mxu0 %v153
    %3319 = vmatprep.subr.mxu0 %v158
    %3320 = vmatpush1.msra.mxu0 %v157
    %3321 = vmatprep.subr.mxu0 0.0
    %3322 = vmatpush1.msra.mxu0 0.0
    %3323 = vmatprep.subr.mxu0 0.0
    %3324 = vmatpush1.msra.mxu0 0.0
    %3325 = vmatprep.subr.mxu0 0.0
    %3326 = vmatpush1.msra.mxu0 0.0
    %3327 = vmatprep.subr.mxu0 0.0
    %3328 = vmatpush1.msra.mxu0 0.0
    %3329 = vmatprep.subr.mxu0 0.0
    %3330 = vmatpush1.msra.mxu0 0.0
    %3331 = vmatprep.subr.mxu0 0.0
    %3332 = vmatpush1.msra.mxu0 0.0
    %3333 = vmatprep.subr.mxu0 0.0
    %3334 = vmatpush1.msra.mxu0 0.0
    %3335 = vmatprep.subr.mxu0 0.0
    %3336 = vmatpush1.msra.mxu0 0.0
    %3337 = vmatprep.subr.mxu0 0.0
    %3338 = vmatpush1.msra.mxu0 0.0
    %3339 = vmatprep.subr.mxu0 0.0
    %3340 = vmatpush1.msra.mxu0 0.0
    %3341 = vmatprep.subr.mxu0 0.0
    %3342 = vmatpush1.msra.mxu0 0.0
    %3343 = vmatprep.subr.mxu0 0.0
    %3344 = vmatpush1.msra.mxu0 0.0
    %3345 = vmatprep.subr.mxu0 0.0
    %3346 = vmatpush1.msra.mxu0 0.0
    %3347 = vmatprep.subr.mxu0 0.0
    %3348 = vmatpush1.msra.mxu0 0.0
    %3349 = vmatprep.subr.mxu0 0.0
    %3350 = vmatpush1.msra.mxu0 0.0
    %3351 = vmatprep.subr.mxu0 0.0
    %3352 = vmatpush1.msra.mxu0 0.0
    %3353 = vmatprep.mubr.f32.mxu0 0.0
    %3354 = vmatmul.mubr.f32.gmra.mrb[0].mxu0 %v3287
    %v3355 = vpop.f32.mrb[0].mxu0
    %v3356 = vadd.f32 0.0, %v3355
    %v3357 = vpop.f32.mrb[0].mxu0
    %v3358 = vadd.f32 0.0, %v3357
    %3359 = vdwg.mxu0
    %3360 = vmatprep.subr.mxu0 %v100
    %3361 = vmatpush1.msra.mxu0 %v99
    %3362 = vmatprep.subr.mxu0 %v104
    %3363 = vmatpush1.msra.mxu0 %v103
    %3364 = vmatprep.subr.mxu0 %v108
    %3365 = vmatpush1.msra.mxu0 %v107
    %3366 = vmatprep.subr.mxu0 %v112
    %3367 = vmatpush1.msra.mxu0 %v111
    %3368 = vmatprep.subr.mxu0 %v116
    %3369 = vmatpush1.msra.mxu0 %v115
    %3370 = vmatprep.subr.mxu0 %v120
    %3371 = vmatpush1.msra.mxu0 %v119
    %3372 = vmatprep.subr.mxu0 %v124
    %3373 = vmatpush1.msra.mxu0 %v123
    %3374 = vmatprep.subr.mxu0 %v128
    %3375 = vmatpush1.msra.mxu0 %v127
    %3376 = vmatprep.subr.mxu0 %v132
    %3377 = vmatpush1.msra.mxu0 %v131
    %3378 = vmatprep.subr.mxu0 %v136
    %3379 = vmatpush1.msra.mxu0 %v135
    %3380 = vmatprep.subr.mxu0 %v140
    %3381 = vmatpush1.msra.mxu0 %v139
    %3382 = vmatprep.subr.mxu0 %v144
    %3383 = vmatpush1.msra.mxu0 %v143
    %3384 = vmatprep.subr.mxu0 %v148
    %3385 = vmatpush1.msra.mxu0 %v147
    %3386 = vmatprep.subr.mxu0 %v152
    %3387 = vmatpush1.msra.mxu0 %v151
    %3388 = vmatprep.subr.mxu0 %v156
    %3389 = vmatpush1.msra.mxu0 %v155
    %3390 = vmatprep.subr.mxu0 %v160
    %3391 = vmatpush1.msra.mxu0 %v159
    %3392 = vmatprep.subr.mxu0 0.0
    %3393 = vmatpush1.msra.mxu0 0.0
    %3394 = vmatprep.subr.mxu0 0.0
    %3395 = vmatpush1.msra.mxu0 0.0
    %3396 = vmatprep.subr.mxu0 0.0
    %3397 = vmatpush1.msra.mxu0 0.0
    %3398 = vmatprep.subr.mxu0 0.0
    %3399 = vmatpush1.msra.mxu0 0.0
    %3400 = vmatprep.subr.mxu0 0.0
    %3401 = vmatpush1.msra.mxu0 0.0
    %3402 = vmatprep.subr.mxu0 0.0
    %3403 = vmatpush1.msra.mxu0 0.0
    %3404 = vmatprep.subr.mxu0 0.0
    %3405 = vmatpush1.msra.mxu0 0.0
    %3406 = vmatprep.subr.mxu0 0.0
    %3407 = vmatpush1.msra.mxu0 0.0
    %3408 = vmatprep.subr.mxu0 0.0
    %3409 = vmatpush1.msra.mxu0 0.0
    %3410 = vmatprep.subr.mxu0 0.0
    %3411 = vmatpush1.msra.mxu0 0.0
    %3412 = vmatprep.subr.mxu0 0.0
    %3413 = vmatpush1.msra.mxu0 0.0
    %3414 = vmatprep.subr.mxu0 0.0
    %3415 = vmatpush1.msra.mxu0 0.0
    %3416 = vmatprep.subr.mxu0 0.0
    %3417 = vmatpush1.msra.mxu0 0.0
    %3418 = vmatprep.subr.mxu0 0.0
    %3419 = vmatpush1.msra.mxu0 0.0
    %3420 = vmatprep.subr.mxu0 0.0
    %3421 = vmatpush1.msra.mxu0 0.0
    %3422 = vmatprep.subr.mxu0 0.0
    %3423 = vmatpush1.msra.mxu0 0.0
    %3424 = vmatprep.mubr.f32.mxu0 0.0
    %3425 = vmatmul.mubr.f32.gmra.mrb[0].mxu0 %v3287
    %v3426 = vpop.f32.mrb[0].mxu0
    %v3427 = vadd.f32 0.0, %v3426
    %v3428 = vpop.f32.mrb[0].mxu0
    %v3429 = vadd.f32 0.0, %v3428
    %3430 = vdwg.mxu0
    %v3435 = vcombine.low %v3356, %v3358
    %v3436 = vcombine.high %v3356, %v3358
    %v3437 = vcombine.low %v3427, %v3429
    %v3438 = vcombine.high %v3427, %v3429
    %v3440 = vunpack.c.l.s4 1966171168
    %v3441 = vunpack.c.0.s8 %v3440
    %v3442 = vlaneseq
    %v3443 = vshrl.u32 %v3442, 7
    %v3444 = vsub.s32 %v3441, %v3443
    %v3445 = vrot.slane %v3435, %v3444
    %v3447 = vunpack.c.l.s4 1966171168
    %v3448 = vunpack.c.0.s8 %v3447
    %v3449 = vlaneseq
    %v3450 = vshrl.u32 %v3449, 7
    %v3451 = vsub.s32 %v3448, %v3450
    %v3452 = vrot.slane %v3436, %v3451
    %v3454 = vunpack.c.l.s4 1966171168
    %v3455 = vunpack.c.0.s8 %v3454
    %v3456 = vlaneseq
    %v3457 = vshrl.u32 %v3456, 7
    %v3458 = vsub.s32 %v3455, %v3457
    %v3459 = vrot.slane %v3437, %v3458
    %v3461 = vunpack.c.l.s4 1966171168
    %v3462 = vunpack.c.0.s8 %v3461
    %v3463 = vlaneseq
    %v3464 = vshrl.u32 %v3463, 7
    %v3465 = vsub.s32 %v3462, %v3464
    %v3466 = vrot.slane %v3438, %v3465
    %v3467 = vcombine.low %v3445, %v3459
    %v3468 = vcombine.high %v3445, %v3459
    %v3469 = vcombine.low %v3452, %v3466
    %v3470 = vcombine.high %v3452, %v3466
    %v3472 = vunpack.c.l.s4 1966171168
    %v3473 = vunpack.c.0.s8 %v3472
    %v3474 = vlaneseq
    %v3475 = vshrl.u32 %v3474, 7
    %v3476 = vsub.s32 %v3473, %v3475
    %v3477 = vrot.slane %v3467, %v3476
    %v3479 = vunpack.c.l.s4 1966171168
    %v3480 = vunpack.c.0.s8 %v3479
    %v3481 = vlaneseq
    %v3482 = vshrl.u32 %v3481, 7
    %v3483 = vsub.s32 %v3480, %v3482
    %v3484 = vrot.slane %v3469, %v3483
    %v3486 = vunpack.c.l.s4 1966171168
    %v3487 = vunpack.c.0.s8 %v3486
    %v3488 = vlaneseq
    %v3489 = vshrl.u32 %v3488, 7
    %v3490 = vsub.s32 %v3487, %v3489
    %v3491 = vrot.slane %v3468, %v3490
    %v3493 = vunpack.c.l.s4 1966171168
    %v3494 = vunpack.c.0.s8 %v3493
    %v3495 = vlaneseq
    %v3496 = vshrl.u32 %v3495, 7
    %v3497 = vsub.s32 %v3494, %v3496
    %v3498 = vrot.slane %v3470, %v3497
    %v3499 = vcombine.high %v3477, %v3477
    %v3500 = vcombine.high %v3484, %v3484
    %v3501 = vcombine.high %v3491, %v3491
    %v3502 = vcombine.high %v3498, %v3498
    %v3511 = vadd.f32 %v3216, %v3477
    %v3512 = vadd.f32 %v3218, %v3491
    %v3513 = vadd.f32 %v3220, %v3499
    %v3514 = vadd.f32 %v3222, %v3501
    %v3515 = vadd.f32 %v3224, %v3484
    %v3516 = vadd.f32 %v3226, %v3498
    %v3517 = vadd.f32 %v3228, %v3500
    %v3518 = vadd.f32 %v3230, %v3502
    %v3527 = vrot.slane %v3511, 1
    %v3528 = vrot.slane %v3512, 1
    %v3529 = vrot.slane %v3513, 1
    %v3530 = vrot.slane %v3514, 1
    %v3531 = vrot.slane %v3515, 1
    %v3532 = vrot.slane %v3516, 1
    %v3533 = vrot.slane %v3517, 1
    %v3534 = vrot.slane %v3518, 1
    %v3543 = vxor.u32 %v3527, 2147483648
    %v3544 = vxor.u32 %v3528, 2147483648
    %v3545 = vxor.u32 %v3529, 2147483648
    %v3546 = vxor.u32 %v3530, 2147483648
    %v3547 = vxor.u32 %v3531, 2147483648
    %v3548 = vxor.u32 %v3532, 2147483648
    %v3549 = vxor.u32 %v3533, 2147483648
    %v3550 = vxor.u32 %v3534, 2147483648
    %v3551 = vmul.f32 %v3543, 1.442695
    %v3552 = vpow.pop %v3551
    %v3553 = vmul.f32 %v3544, 1.442695
    %v3554 = vpow.pop %v3553
    %v3555 = vmul.f32 %v3545, 1.442695
    %v3556 = vpow.pop %v3555
    %v3557 = vmul.f32 %v3546, 1.442695
    %v3558 = vpow.pop %v3557
    %v3559 = vmul.f32 %v3547, 1.442695
    %v3560 = vpow.pop %v3559
    %v3561 = vmul.f32 %v3548, 1.442695
    %v3562 = vpow.pop %v3561
    %v3563 = vmul.f32 %v3549, 1.442695
    %v3564 = vpow.pop %v3563
    %v3565 = vmul.f32 %v3550, 1.442695
    %v3566 = vpow.pop %v3565
    %v3567 = vadd.f32 %v3552, 1.0
    %v3568 = vadd.f32 %v3554, 1.0
    %v3569 = vadd.f32 %v3556, 1.0
    %v3570 = vadd.f32 %v3558, 1.0
    %v3571 = vadd.f32 %v3560, 1.0
    %v3572 = vadd.f32 %v3562, 1.0
    %v3573 = vadd.f32 %v3564, 1.0
    %v3574 = vadd.f32 %v3566, 1.0
    %v3575 = vrcp.pop %v3567
    %v3576 = vmul.f32 1.0, %v3575
    %v3577 = vrcp.pop %v3568
    %v3578 = vmul.f32 1.0, %v3577
    %v3579 = vrcp.pop %v3569
    %v3580 = vmul.f32 1.0, %v3579
    %v3581 = vrcp.pop %v3570
    %v3582 = vmul.f32 1.0, %v3581
    %v3583 = vrcp.pop %v3571
    %v3584 = vmul.f32 1.0, %v3583
    %v3585 = vrcp.pop %v3572
    %v3586 = vmul.f32 1.0, %v3585
    %v3587 = vrcp.pop %v3573
    %v3588 = vmul.f32 1.0, %v3587
    %v3589 = vrcp.pop %v3574
    %v3590 = vmul.f32 1.0, %v3589
    %v3591 = vmul.f32 %v3576, %v3119
    %v3592 = vmul.f32 %v3578, %v3120
    %v3593 = vmul.f32 %v3580, %v3121
    %v3594 = vmul.f32 %v3582, %v3122
    %v3595 = vmul.f32 %v3584, %v3123
    %v3596 = vmul.f32 %v3586, %v3124
    %v3597 = vmul.f32 %v3588, %v3125
    %v3598 = vmul.f32 %v3590, %v3126
    %v3599 = vxor.u32 %v3511, 2147483648
    %v3600 = vxor.u32 %v3512, 2147483648
    %v3601 = vxor.u32 %v3513, 2147483648
    %v3602 = vxor.u32 %v3514, 2147483648
    %v3603 = vxor.u32 %v3515, 2147483648
    %v3604 = vxor.u32 %v3516, 2147483648
    %v3605 = vxor.u32 %v3517, 2147483648
    %v3606 = vxor.u32 %v3518, 2147483648
    %v3607 = vmul.f32 %v3599, 1.442695
    %v3608 = vpow.pop %v3607
    %v3609 = vmul.f32 %v3600, 1.442695
    %v3610 = vpow.pop %v3609
    %v3611 = vmul.f32 %v3601, 1.442695
    %v3612 = vpow.pop %v3611
    %v3613 = vmul.f32 %v3602, 1.442695
    %v3614 = vpow.pop %v3613
    %v3615 = vmul.f32 %v3603, 1.442695
    %v3616 = vpow.pop %v3615
    %v3617 = vmul.f32 %v3604, 1.442695
    %v3618 = vpow.pop %v3617
    %v3619 = vmul.f32 %v3605, 1.442695
    %v3620 = vpow.pop %v3619
    %v3621 = vmul.f32 %v3606, 1.442695
    %v3622 = vpow.pop %v3621
    %v3623 = vadd.f32 %v3608, 1.0
    %v3624 = vadd.f32 %v3610, 1.0
    %v3625 = vadd.f32 %v3612, 1.0
    %v3626 = vadd.f32 %v3614, 1.0
    %v3627 = vadd.f32 %v3616, 1.0
    %v3628 = vadd.f32 %v3618, 1.0
    %v3629 = vadd.f32 %v3620, 1.0
    %v3630 = vadd.f32 %v3622, 1.0
    %v3631 = vrcp.pop %v3623
    %v3632 = vmul.f32 1.0, %v3631
    %v3633 = vrcp.pop %v3624
    %v3634 = vmul.f32 1.0, %v3633
    %v3635 = vrcp.pop %v3625
    %v3636 = vmul.f32 1.0, %v3635
    %v3637 = vrcp.pop %v3626
    %v3638 = vmul.f32 1.0, %v3637
    %v3639 = vrcp.pop %v3627
    %v3640 = vmul.f32 1.0, %v3639
    %v3641 = vrcp.pop %v3628
    %v3642 = vmul.f32 1.0, %v3641
    %v3643 = vrcp.pop %v3629
    %v3644 = vmul.f32 1.0, %v3643
    %v3645 = vrcp.pop %v3630
    %v3646 = vmul.f32 1.0, %v3645
    %v3647 = vrot.slane %v3511, 2
    %v3648 = vrot.slane %v3512, 2
    %v3649 = vrot.slane %v3513, 2
    %v3650 = vrot.slane %v3514, 2
    %v3651 = vrot.slane %v3515, 2
    %v3652 = vrot.slane %v3516, 2
    %v3653 = vrot.slane %v3517, 2
    %v3654 = vrot.slane %v3518, 2
    %v3663 = vtanh.pop %v3647
    %v3664 = vtanh.pop %v3648
    %v3665 = vtanh.pop %v3649
    %v3666 = vtanh.pop %v3650
    %v3667 = vtanh.pop %v3651
    %v3668 = vtanh.pop %v3652
    %v3669 = vtanh.pop %v3653
    %v3670 = vtanh.pop %v3654
    %v3671 = vmul.f32 %v3632, %v3663
    %v3672 = vmul.f32 %v3634, %v3664
    %v3673 = vmul.f32 %v3636, %v3665
    %v3674 = vmul.f32 %v3638, %v3666
    %v3675 = vmul.f32 %v3640, %v3667
    %v3676 = vmul.f32 %v3642, %v3668
    %v3677 = vmul.f32 %v3644, %v3669
    %v3678 = vmul.f32 %v3646, %v3670
    %v3679 = vadd.f32 %v3591, %v3671
    %v3680 = vadd.f32 %v3592, %v3672
    %v3681 = vadd.f32 %v3593, %v3673
    %v3682 = vadd.f32 %v3594, %v3674
    %v3683 = vadd.f32 %v3595, %v3675
    %v3684 = vadd.f32 %v3596, %v3676
    %v3685 = vadd.f32 %v3597, %v3677
    %v3686 = vadd.f32 %v3598, %v3678
    %v3687 = vrot.slane %v3511, 3
    %v3688 = vrot.slane %v3512, 3
    %v3689 = vrot.slane %v3513, 3
    %v3690 = vrot.slane %v3514, 3
    %v3691 = vrot.slane %v3515, 3
    %v3692 = vrot.slane %v3516, 3
    %v3693 = vrot.slane %v3517, 3
    %v3694 = vrot.slane %v3518, 3
    %v3703 = vxor.u32 %v3687, 2147483648
    %v3704 = vxor.u32 %v3688, 2147483648
    %v3705 = vxor.u32 %v3689, 2147483648
    %v3706 = vxor.u32 %v3690, 2147483648
    %v3707 = vxor.u32 %v3691, 2147483648
    %v3708 = vxor.u32 %v3692, 2147483648
    %v3709 = vxor.u32 %v3693, 2147483648
    %v3710 = vxor.u32 %v3694, 2147483648
    %v3711 = vmul.f32 %v3703, 1.442695
    %v3712 = vpow.pop %v3711
    %v3713 = vmul.f32 %v3704, 1.442695
    %v3714 = vpow.pop %v3713
    %v3715 = vmul.f32 %v3705, 1.442695
    %v3716 = vpow.pop %v3715
    %v3717 = vmul.f32 %v3706, 1.442695
    %v3718 = vpow.pop %v3717
    %v3719 = vmul.f32 %v3707, 1.442695
    %v3720 = vpow.pop %v3719
    %v3721 = vmul.f32 %v3708, 1.442695
    %v3722 = vpow.pop %v3721
    %v3723 = vmul.f32 %v3709, 1.442695
    %v3724 = vpow.pop %v3723
    %v3725 = vmul.f32 %v3710, 1.442695
    %v3726 = vpow.pop %v3725
    %v3727 = vadd.f32 %v3712, 1.0
    %v3728 = vadd.f32 %v3714, 1.0
    %v3729 = vadd.f32 %v3716, 1.0
    %v3730 = vadd.f32 %v3718, 1.0
    %v3731 = vadd.f32 %v3720, 1.0
    %v3732 = vadd.f32 %v3722, 1.0
    %v3733 = vadd.f32 %v3724, 1.0
    %v3734 = vadd.f32 %v3726, 1.0
    %v3735 = vrcp.pop %v3727
    %v3736 = vmul.f32 1.0, %v3735
    %v3737 = vrcp.pop %v3728
    %v3738 = vmul.f32 1.0, %v3737
    %v3739 = vrcp.pop %v3729
    %v3740 = vmul.f32 1.0, %v3739
    %v3741 = vrcp.pop %v3730
    %v3742 = vmul.f32 1.0, %v3741
    %v3743 = vrcp.pop %v3731
    %v3744 = vmul.f32 1.0, %v3743
    %v3745 = vrcp.pop %v3732
    %v3746 = vmul.f32 1.0, %v3745
    %v3747 = vrcp.pop %v3733
    %v3748 = vmul.f32 1.0, %v3747
    %v3749 = vrcp.pop %v3734
    %v3750 = vmul.f32 1.0, %v3749
    %v3751 = vtanh.pop %v3679
    %v3752 = vtanh.pop %v3680
    %v3753 = vtanh.pop %v3681
    %v3754 = vtanh.pop %v3682
    %v3755 = vtanh.pop %v3683
    %v3756 = vtanh.pop %v3684
    %v3757 = vtanh.pop %v3685
    %v3758 = vtanh.pop %v3686
    %v3759 = vmul.f32 %v3736, %v3751
    %v3760 = vmul.f32 %v3738, %v3752
    %v3761 = vmul.f32 %v3740, %v3753
    %v3762 = vmul.f32 %v3742, %v3754
    %v3763 = vmul.f32 %v3744, %v3755
    %v3764 = vmul.f32 %v3746, %v3756
    %v3765 = vmul.f32 %v3748, %v3757
    %v3766 = vmul.f32 %v3750, %v3758
    %3767 = vst [vmem:[#allocation2 + $0x5] sm:$0x1] %v3759
    %3768 = vst [vmem:[#allocation2 + $0xd] sm:$0x1] %v3760
    %3769 = vst [vmem:[#allocation2 + $0x15] sm:$0x1] %v3761
    %3770 = vst [vmem:[#allocation2 + $0x1d] sm:$0x1] %v3762
    %3771 = vst [vmem:[#allocation2 + $0x25] sm:$0x1] %v3763
    %3772 = vst [vmem:[#allocation2 + $0x2d] sm:$0x1] %v3764
    %3773 = vst [vmem:[#allocation2 + $0x35] sm:$0x1] %v3765
    %3774 = vst [vmem:[#allocation2 + $0x3d] sm:$0x1] %v3766
    %s3775 = scalar_lea.vmem [#allocation3], 6
    %v3776 = vld [vmem:[%s3775] ss:$8 sm:$0xf]
    %s3777 = scalar_lea.vmem [#allocation3], 38
    %v3778 = vld [vmem:[%s3777] ss:$8 sm:$0xf]
    %s3779 = scalar_lea.vmem [#allocation3], 70
    %v3780 = vld [vmem:[%s3779] ss:$8 sm:$0xf]
    %s3781 = scalar_lea.vmem [#allocation3], 102
    %v3782 = vld [vmem:[%s3781] ss:$8 sm:$0xf]
    %s3783 = scalar_lea.vmem [#allocation3], 134
    %v3784 = vld [vmem:[%s3783] ss:$8 sm:$0xf]
    %s3785 = scalar_lea.vmem [#allocation3], 166
    %v3786 = vld [vmem:[%s3785] ss:$8 sm:$0xf]
    %s3787 = scalar_lea.vmem [#allocation3], 198
    %v3788 = vld [vmem:[%s3787] ss:$8 sm:$0xf]
    %s3789 = scalar_lea.vmem [#allocation3], 230
    %v3790 = vld [vmem:[%s3789] ss:$8 sm:$0xf]
    %v3799 = vcombine.low %v3759, %v3760
    %v3800 = vcombine.low %v3761, %v3762
    %v3801 = vcombine.low %v3763, %v3764
    %v3802 = vcombine.low %v3765, %v3766
    %v3804 = vunpack.c.l.s4 1966171168
    %v3805 = vunpack.c.0.s8 %v3804
    %v3806 = vlaneseq
    %v3807 = vshrl.u32 %v3806, 7
    %v3808 = vsub.s32 %v3805, %v3807
    %v3809 = vrot.slane %v3799, %v3808
    %v3811 = vunpack.c.l.s4 1966171168
    %v3812 = vunpack.c.0.s8 %v3811
    %v3813 = vlaneseq
    %v3814 = vshrl.u32 %v3813, 7
    %v3815 = vsub.s32 %v3812, %v3814
    %v3816 = vrot.slane %v3800, %v3815
    %v3818 = vunpack.c.l.s4 1966171168
    %v3819 = vunpack.c.0.s8 %v3818
    %v3820 = vlaneseq
    %v3821 = vshrl.u32 %v3820, 7
    %v3822 = vsub.s32 %v3819, %v3821
    %v3823 = vrot.slane %v3801, %v3822
    %v3825 = vunpack.c.l.s4 1966171168
    %v3826 = vunpack.c.0.s8 %v3825
    %v3827 = vlaneseq
    %v3828 = vshrl.u32 %v3827, 7
    %v3829 = vsub.s32 %v3826, %v3828
    %v3830 = vrot.slane %v3802, %v3829
    %v3831 = vcombine.low %v3809, %v3816
    %v3832 = vcombine.low %v3823, %v3830
    %v3834 = vunpack.c.l.s4 1966171168
    %v3835 = vunpack.c.0.s8 %v3834
    %v3836 = vlaneseq
    %v3837 = vshrl.u32 %v3836, 7
    %v3838 = vsub.s32 %v3835, %v3837
    %v3839 = vrot.slane %v3831, %v3838
    %v3841 = vunpack.c.l.s4 1966171168
    %v3842 = vunpack.c.0.s8 %v3841
    %v3843 = vlaneseq
    %v3844 = vshrl.u32 %v3843, 7
    %v3845 = vsub.s32 %v3842, %v3844
    %v3846 = vrot.slane %v3832, %v3845
    %v3847 = vcombine.low %v3839, %v3846
    %3849 = vmatprep.subr.mxu0 %v98
    %3850 = vmatpush1.msra.mxu0 %v97
    %3851 = vmatprep.subr.mxu0 %v102
    %3852 = vmatpush1.msra.mxu0 %v101
    %3853 = vmatprep.subr.mxu0 %v106
    %3854 = vmatpush1.msra.mxu0 %v105
    %3855 = vmatprep.subr.mxu0 %v110
    %3856 = vmatpush1.msra.mxu0 %v109
    %3857 = vmatprep.subr.mxu0 %v114
    %3858 = vmatpush1.msra.mxu0 %v113
    %3859 = vmatprep.subr.mxu0 %v118
    %3860 = vmatpush1.msra.mxu0 %v117
    %3861 = vmatprep.subr.mxu0 %v122
    %3862 = vmatpush1.msra.mxu0 %v121
    %3863 = vmatprep.subr.mxu0 %v126
    %3864 = vmatpush1.msra.mxu0 %v125
    %3865 = vmatprep.subr.mxu0 %v130
    %3866 = vmatpush1.msra.mxu0 %v129
    %3867 = vmatprep.subr.mxu0 %v134
    %3868 = vmatpush1.msra.mxu0 %v133
    %3869 = vmatprep.subr.mxu0 %v138
    %3870 = vmatpush1.msra.mxu0 %v137
    %3871 = vmatprep.subr.mxu0 %v142
    %3872 = vmatpush1.msra.mxu0 %v141
    %3873 = vmatprep.subr.mxu0 %v146
    %3874 = vmatpush1.msra.mxu0 %v145
    %3875 = vmatprep.subr.mxu0 %v150
    %3876 = vmatpush1.msra.mxu0 %v149
    %3877 = vmatprep.subr.mxu0 %v154
    %3878 = vmatpush1.msra.mxu0 %v153
    %3879 = vmatprep.subr.mxu0 %v158
    %3880 = vmatpush1.msra.mxu0 %v157
    %3881 = vmatprep.subr.mxu0 0.0
    %3882 = vmatpush1.msra.mxu0 0.0
    %3883 = vmatprep.subr.mxu0 0.0
    %3884 = vmatpush1.msra.mxu0 0.0
    %3885 = vmatprep.subr.mxu0 0.0
    %3886 = vmatpush1.msra.mxu0 0.0
    %3887 = vmatprep.subr.mxu0 0.0
    %3888 = vmatpush1.msra.mxu0 0.0
    %3889 = vmatprep.subr.mxu0 0.0
    %3890 = vmatpush1.msra.mxu0 0.0
    %3891 = vmatprep.subr.mxu0 0.0
    %3892 = vmatpush1.msra.mxu0 0.0
    %3893 = vmatprep.subr.mxu0 0.0
    %3894 = vmatpush1.msra.mxu0 0.0
    %3895 = vmatprep.subr.mxu0 0.0
    %3896 = vmatpush1.msra.mxu0 0.0
    %3897 = vmatprep.subr.mxu0 0.0
    %3898 = vmatpush1.msra.mxu0 0.0
    %3899 = vmatprep.subr.mxu0 0.0
    %3900 = vmatpush1.msra.mxu0 0.0
    %3901 = vmatprep.subr.mxu0 0.0
    %3902 = vmatpush1.msra.mxu0 0.0
    %3903 = vmatprep.subr.mxu0 0.0
    %3904 = vmatpush1.msra.mxu0 0.0
    %3905 = vmatprep.subr.mxu0 0.0
    %3906 = vmatpush1.msra.mxu0 0.0
    %3907 = vmatprep.subr.mxu0 0.0
    %3908 = vmatpush1.msra.mxu0 0.0
    %3909 = vmatprep.subr.mxu0 0.0
    %3910 = vmatpush1.msra.mxu0 0.0
    %3911 = vmatprep.subr.mxu0 0.0
    %3912 = vmatpush1.msra.mxu0 0.0
    %3913 = vmatprep.mubr.f32.mxu0 0.0
    %3914 = vmatmul.mubr.f32.gmra.mrb[0].mxu0 %v3847
    %v3915 = vpop.f32.mrb[0].mxu0
    %v3916 = vadd.f32 0.0, %v3915
    %v3917 = vpop.f32.mrb[0].mxu0
    %v3918 = vadd.f32 0.0, %v3917
    %3919 = vdwg.mxu0
    %3920 = vmatprep.subr.mxu0 %v100
    %3921 = vmatpush1.msra.mxu0 %v99
    %3922 = vmatprep.subr.mxu0 %v104
    %3923 = vmatpush1.msra.mxu0 %v103
    %3924 = vmatprep.subr.mxu0 %v108
    %3925 = vmatpush1.msra.mxu0 %v107
    %3926 = vmatprep.subr.mxu0 %v112
    %3927 = vmatpush1.msra.mxu0 %v111
    %3928 = vmatprep.subr.mxu0 %v116
    %3929 = vmatpush1.msra.mxu0 %v115
    %3930 = vmatprep.subr.mxu0 %v120
    %3931 = vmatpush1.msra.mxu0 %v119
    %3932 = vmatprep.subr.mxu0 %v124
    %3933 = vmatpush1.msra.mxu0 %v123
    %3934 = vmatprep.subr.mxu0 %v128
    %3935 = vmatpush1.msra.mxu0 %v127
    %3936 = vmatprep.subr.mxu0 %v132
    %3937 = vmatpush1.msra.mxu0 %v131
    %3938 = vmatprep.subr.mxu0 %v136
    %3939 = vmatpush1.msra.mxu0 %v135
    %3940 = vmatprep.subr.mxu0 %v140
    %3941 = vmatpush1.msra.mxu0 %v139
    %3942 = vmatprep.subr.mxu0 %v144
    %3943 = vmatpush1.msra.mxu0 %v143
    %3944 = vmatprep.subr.mxu0 %v148
    %3945 = vmatpush1.msra.mxu0 %v147
    %3946 = vmatprep.subr.mxu0 %v152
    %3947 = vmatpush1.msra.mxu0 %v151
    %3948 = vmatprep.subr.mxu0 %v156
    %3949 = vmatpush1.msra.mxu0 %v155
    %3950 = vmatprep.subr.mxu0 %v160
    %3951 = vmatpush1.msra.mxu0 %v159
    %3952 = vmatprep.subr.mxu0 0.0
    %3953 = vmatpush1.msra.mxu0 0.0
    %3954 = vmatprep.subr.mxu0 0.0
    %3955 = vmatpush1.msra.mxu0 0.0
    %3956 = vmatprep.subr.mxu0 0.0
    %3957 = vmatpush1.msra.mxu0 0.0
    %3958 = vmatprep.subr.mxu0 0.0
    %3959 = vmatpush1.msra.mxu0 0.0
    %3960 = vmatprep.subr.mxu0 0.0
    %3961 = vmatpush1.msra.mxu0 0.0
    %3962 = vmatprep.subr.mxu0 0.0
    %3963 = vmatpush1.msra.mxu0 0.0
    %3964 = vmatprep.subr.mxu0 0.0
    %3965 = vmatpush1.msra.mxu0 0.0
    %3966 = vmatprep.subr.mxu0 0.0
    %3967 = vmatpush1.msra.mxu0 0.0
    %3968 = vmatprep.subr.mxu0 0.0
    %3969 = vmatpush1.msra.mxu0 0.0
    %3970 = vmatprep.subr.mxu0 0.0
    %3971 = vmatpush1.msra.mxu0 0.0
    %3972 = vmatprep.subr.mxu0 0.0
    %3973 = vmatpush1.msra.mxu0 0.0
    %3974 = vmatprep.subr.mxu0 0.0
    %3975 = vmatpush1.msra.mxu0 0.0
    %3976 = vmatprep.subr.mxu0 0.0
    %3977 = vmatpush1.msra.mxu0 0.0
    %3978 = vmatprep.subr.mxu0 0.0
    %3979 = vmatpush1.msra.mxu0 0.0
    %3980 = vmatprep.subr.mxu0 0.0
    %3981 = vmatpush1.msra.mxu0 0.0
    %3982 = vmatprep.subr.mxu0 0.0
    %3983 = vmatpush1.msra.mxu0 0.0
    %3984 = vmatprep.mubr.f32.mxu0 0.0
    %3985 = vmatmul.mubr.f32.gmra.mrb[0].mxu0 %v3847
    %v3986 = vpop.f32.mrb[0].mxu0
    %v3987 = vadd.f32 0.0, %v3986
    %v3988 = vpop.f32.mrb[0].mxu0
    %v3989 = vadd.f32 0.0, %v3988
    %3990 = vdwg.mxu0
    %v3995 = vcombine.low %v3916, %v3918
    %v3996 = vcombine.high %v3916, %v3918
    %v3997 = vcombine.low %v3987, %v3989
    %v3998 = vcombine.high %v3987, %v3989
    %v4000 = vunpack.c.l.s4 1966171168
    %v4001 = vunpack.c.0.s8 %v4000
    %v4002 = vlaneseq
    %v4003 = vshrl.u32 %v4002, 7
    %v4004 = vsub.s32 %v4001, %v4003
    %v4005 = vrot.slane %v3995, %v4004
    %v4007 = vunpack.c.l.s4 1966171168
    %v4008 = vunpack.c.0.s8 %v4007
    %v4009 = vlaneseq
    %v4010 = vshrl.u32 %v4009, 7
    %v4011 = vsub.s32 %v4008, %v4010
    %v4012 = vrot.slane %v3996, %v4011
    %v4014 = vunpack.c.l.s4 1966171168
    %v4015 = vunpack.c.0.s8 %v4014
    %v4016 = vlaneseq
    %v4017 = vshrl.u32 %v4016, 7
    %v4018 = vsub.s32 %v4015, %v4017
    %v4019 = vrot.slane %v3997, %v4018
    %v4021 = vunpack.c.l.s4 1966171168
    %v4022 = vunpack.c.0.s8 %v4021
    %v4023 = vlaneseq
    %v4024 = vshrl.u32 %v4023, 7
    %v4025 = vsub.s32 %v4022, %v4024
    %v4026 = vrot.slane %v3998, %v4025
    %v4027 = vcombine.low %v4005, %v4019
    %v4028 = vcombine.high %v4005, %v4019
    %v4029 = vcombine.low %v4012, %v4026
    %v4030 = vcombine.high %v4012, %v4026
    %v4032 = vunpack.c.l.s4 1966171168
    %v4033 = vunpack.c.0.s8 %v4032
    %v4034 = vlaneseq
    %v4035 = vshrl.u32 %v4034, 7
    %v4036 = vsub.s32 %v4033, %v4035
    %v4037 = vrot.slane %v4027, %v4036
    %v4039 = vunpack.c.l.s4 1966171168
    %v4040 = vunpack.c.0.s8 %v4039
    %v4041 = vlaneseq
    %v4042 = vshrl.u32 %v4041, 7
    %v4043 = vsub.s32 %v4040, %v4042
    %v4044 = vrot.slane %v4029, %v4043
    %v4046 = vunpack.c.l.s4 1966171168
    %v4047 = vunpack.c.0.s8 %v4046
    %v4048 = vlaneseq
    %v4049 = vshrl.u32 %v4048, 7
    %v4050 = vsub.s32 %v4047, %v4049
    %v4051 = vrot.slane %v4028, %v4050
    %v4053 = vunpack.c.l.s4 1966171168
    %v4054 = vunpack.c.0.s8 %v4053
    %v4055 = vlaneseq
    %v4056 = vshrl.u32 %v4055, 7
    %v4057 = vsub.s32 %v4054, %v4056
    %v4058 = vrot.slane %v4030, %v4057
    %v4059 = vcombine.high %v4037, %v4037
    %v4060 = vcombine.high %v4044, %v4044
    %v4061 = vcombine.high %v4051, %v4051
    %v4062 = vcombine.high %v4058, %v4058
    %v4071 = vadd.f32 %v3776, %v4037
    %v4072 = vadd.f32 %v3778, %v4051
    %v4073 = vadd.f32 %v3780, %v4059
    %v4074 = vadd.f32 %v3782, %v4061
    %v4075 = vadd.f32 %v3784, %v4044
    %v4076 = vadd.f32 %v3786, %v4058
    %v4077 = vadd.f32 %v3788, %v4060
    %v4078 = vadd.f32 %v3790, %v4062
    %v4087 = vrot.slane %v4071, 1
    %v4088 = vrot.slane %v4072, 1
    %v4089 = vrot.slane %v4073, 1
    %v4090 = vrot.slane %v4074, 1
    %v4091 = vrot.slane %v4075, 1
    %v4092 = vrot.slane %v4076, 1
    %v4093 = vrot.slane %v4077, 1
    %v4094 = vrot.slane %v4078, 1
    %v4103 = vxor.u32 %v4087, 2147483648
    %v4104 = vxor.u32 %v4088, 2147483648
    %v4105 = vxor.u32 %v4089, 2147483648
    %v4106 = vxor.u32 %v4090, 2147483648
    %v4107 = vxor.u32 %v4091, 2147483648
    %v4108 = vxor.u32 %v4092, 2147483648
    %v4109 = vxor.u32 %v4093, 2147483648
    %v4110 = vxor.u32 %v4094, 2147483648
    %v4111 = vmul.f32 %v4103, 1.442695
    %v4112 = vpow.pop %v4111
    %v4113 = vmul.f32 %v4104, 1.442695
    %v4114 = vpow.pop %v4113
    %v4115 = vmul.f32 %v4105, 1.442695
    %v4116 = vpow.pop %v4115
    %v4117 = vmul.f32 %v4106, 1.442695
    %v4118 = vpow.pop %v4117
    %v4119 = vmul.f32 %v4107, 1.442695
    %v4120 = vpow.pop %v4119
    %v4121 = vmul.f32 %v4108, 1.442695
    %v4122 = vpow.pop %v4121
    %v4123 = vmul.f32 %v4109, 1.442695
    %v4124 = vpow.pop %v4123
    %v4125 = vmul.f32 %v4110, 1.442695
    %v4126 = vpow.pop %v4125
    %v4127 = vadd.f32 %v4112, 1.0
    %v4128 = vadd.f32 %v4114, 1.0
    %v4129 = vadd.f32 %v4116, 1.0
    %v4130 = vadd.f32 %v4118, 1.0
    %v4131 = vadd.f32 %v4120, 1.0
    %v4132 = vadd.f32 %v4122, 1.0
    %v4133 = vadd.f32 %v4124, 1.0
    %v4134 = vadd.f32 %v4126, 1.0
    %v4135 = vrcp.pop %v4127
    %v4136 = vmul.f32 1.0, %v4135
    %v4137 = vrcp.pop %v4128
    %v4138 = vmul.f32 1.0, %v4137
    %v4139 = vrcp.pop %v4129
    %v4140 = vmul.f32 1.0, %v4139
    %v4141 = vrcp.pop %v4130
    %v4142 = vmul.f32 1.0, %v4141
    %v4143 = vrcp.pop %v4131
    %v4144 = vmul.f32 1.0, %v4143
    %v4145 = vrcp.pop %v4132
    %v4146 = vmul.f32 1.0, %v4145
    %v4147 = vrcp.pop %v4133
    %v4148 = vmul.f32 1.0, %v4147
    %v4149 = vrcp.pop %v4134
    %v4150 = vmul.f32 1.0, %v4149
    %v4151 = vmul.f32 %v4136, %v3679
    %v4152 = vmul.f32 %v4138, %v3680
    %v4153 = vmul.f32 %v4140, %v3681
    %v4154 = vmul.f32 %v4142, %v3682
    %v4155 = vmul.f32 %v4144, %v3683
    %v4156 = vmul.f32 %v4146, %v3684
    %v4157 = vmul.f32 %v4148, %v3685
    %v4158 = vmul.f32 %v4150, %v3686
    %v4159 = vxor.u32 %v4071, 2147483648
    %v4160 = vxor.u32 %v4072, 2147483648
    %v4161 = vxor.u32 %v4073, 2147483648
    %v4162 = vxor.u32 %v4074, 2147483648
    %v4163 = vxor.u32 %v4075, 2147483648
    %v4164 = vxor.u32 %v4076, 2147483648
    %v4165 = vxor.u32 %v4077, 2147483648
    %v4166 = vxor.u32 %v4078, 2147483648
    %v4167 = vmul.f32 %v4159, 1.442695
    %v4168 = vpow.pop %v4167
    %v4169 = vmul.f32 %v4160, 1.442695
    %v4170 = vpow.pop %v4169
    %v4171 = vmul.f32 %v4161, 1.442695
    %v4172 = vpow.pop %v4171
    %v4173 = vmul.f32 %v4162, 1.442695
    %v4174 = vpow.pop %v4173
    %v4175 = vmul.f32 %v4163, 1.442695
    %v4176 = vpow.pop %v4175
    %v4177 = vmul.f32 %v4164, 1.442695
    %v4178 = vpow.pop %v4177
    %v4179 = vmul.f32 %v4165, 1.442695
    %v4180 = vpow.pop %v4179
    %v4181 = vmul.f32 %v4166, 1.442695
    %v4182 = vpow.pop %v4181
    %v4183 = vadd.f32 %v4168, 1.0
    %v4184 = vadd.f32 %v4170, 1.0
    %v4185 = vadd.f32 %v4172, 1.0
    %v4186 = vadd.f32 %v4174, 1.0
    %v4187 = vadd.f32 %v4176, 1.0
    %v4188 = vadd.f32 %v4178, 1.0
    %v4189 = vadd.f32 %v4180, 1.0
    %v4190 = vadd.f32 %v4182, 1.0
    %v4191 = vrcp.pop %v4183
    %v4192 = vmul.f32 1.0, %v4191
    %v4193 = vrcp.pop %v4184
    %v4194 = vmul.f32 1.0, %v4193
    %v4195 = vrcp.pop %v4185
    %v4196 = vmul.f32 1.0, %v4195
    %v4197 = vrcp.pop %v4186
    %v4198 = vmul.f32 1.0, %v4197
    %v4199 = vrcp.pop %v4187
    %v4200 = vmul.f32 1.0, %v4199
    %v4201 = vrcp.pop %v4188
    %v4202 = vmul.f32 1.0, %v4201
    %v4203 = vrcp.pop %v4189
    %v4204 = vmul.f32 1.0, %v4203
    %v4205 = vrcp.pop %v4190
    %v4206 = vmul.f32 1.0, %v4205
    %v4207 = vrot.slane %v4071, 2
    %v4208 = vrot.slane %v4072, 2
    %v4209 = vrot.slane %v4073, 2
    %v4210 = vrot.slane %v4074, 2
    %v4211 = vrot.slane %v4075, 2
    %v4212 = vrot.slane %v4076, 2
    %v4213 = vrot.slane %v4077, 2
    %v4214 = vrot.slane %v4078, 2
    %v4223 = vtanh.pop %v4207
    %v4224 = vtanh.pop %v4208
    %v4225 = vtanh.pop %v4209
    %v4226 = vtanh.pop %v4210
    %v4227 = vtanh.pop %v4211
    %v4228 = vtanh.pop %v4212
    %v4229 = vtanh.pop %v4213
    %v4230 = vtanh.pop %v4214
    %v4231 = vmul.f32 %v4192, %v4223
    %v4232 = vmul.f32 %v4194, %v4224
    %v4233 = vmul.f32 %v4196, %v4225
    %v4234 = vmul.f32 %v4198, %v4226
    %v4235 = vmul.f32 %v4200, %v4227
    %v4236 = vmul.f32 %v4202, %v4228
    %v4237 = vmul.f32 %v4204, %v4229
    %v4238 = vmul.f32 %v4206, %v4230
    %v4239 = vadd.f32 %v4151, %v4231
    %v4240 = vadd.f32 %v4152, %v4232
    %v4241 = vadd.f32 %v4153, %v4233
    %v4242 = vadd.f32 %v4154, %v4234
    %v4243 = vadd.f32 %v4155, %v4235
    %v4244 = vadd.f32 %v4156, %v4236
    %v4245 = vadd.f32 %v4157, %v4237
    %v4246 = vadd.f32 %v4158, %v4238
    %v4247 = vrot.slane %v4071, 3
    %v4248 = vrot.slane %v4072, 3
    %v4249 = vrot.slane %v4073, 3
    %v4250 = vrot.slane %v4074, 3
    %v4251 = vrot.slane %v4075, 3
    %v4252 = vrot.slane %v4076, 3
    %v4253 = vrot.slane %v4077, 3
    %v4254 = vrot.slane %v4078, 3
    %v4263 = vxor.u32 %v4247, 2147483648
    %v4264 = vxor.u32 %v4248, 2147483648
    %v4265 = vxor.u32 %v4249, 2147483648
    %v4266 = vxor.u32 %v4250, 2147483648
    %v4267 = vxor.u32 %v4251, 2147483648
    %v4268 = vxor.u32 %v4252, 2147483648
    %v4269 = vxor.u32 %v4253, 2147483648
    %v4270 = vxor.u32 %v4254, 2147483648
    %v4271 = vmul.f32 %v4263, 1.442695
    %v4272 = vpow.pop %v4271
    %v4273 = vmul.f32 %v4264, 1.442695
    %v4274 = vpow.pop %v4273
    %v4275 = vmul.f32 %v4265, 1.442695
    %v4276 = vpow.pop %v4275
    %v4277 = vmul.f32 %v4266, 1.442695
    %v4278 = vpow.pop %v4277
    %v4279 = vmul.f32 %v4267, 1.442695
    %v4280 = vpow.pop %v4279
    %v4281 = vmul.f32 %v4268, 1.442695
    %v4282 = vpow.pop %v4281
    %v4283 = vmul.f32 %v4269, 1.442695
    %v4284 = vpow.pop %v4283
    %v4285 = vmul.f32 %v4270, 1.442695
    %v4286 = vpow.pop %v4285
    %v4287 = vadd.f32 %v4272, 1.0
    %v4288 = vadd.f32 %v4274, 1.0
    %v4289 = vadd.f32 %v4276, 1.0
    %v4290 = vadd.f32 %v4278, 1.0
    %v4291 = vadd.f32 %v4280, 1.0
    %v4292 = vadd.f32 %v4282, 1.0
    %v4293 = vadd.f32 %v4284, 1.0
    %v4294 = vadd.f32 %v4286, 1.0
    %v4295 = vrcp.pop %v4287
    %v4296 = vmul.f32 1.0, %v4295
    %v4297 = vrcp.pop %v4288
    %v4298 = vmul.f32 1.0, %v4297
    %v4299 = vrcp.pop %v4289
    %v4300 = vmul.f32 1.0, %v4299
    %v4301 = vrcp.pop %v4290
    %v4302 = vmul.f32 1.0, %v4301
    %v4303 = vrcp.pop %v4291
    %v4304 = vmul.f32 1.0, %v4303
    %v4305 = vrcp.pop %v4292
    %v4306 = vmul.f32 1.0, %v4305
    %v4307 = vrcp.pop %v4293
    %v4308 = vmul.f32 1.0, %v4307
    %v4309 = vrcp.pop %v4294
    %v4310 = vmul.f32 1.0, %v4309
    %v4311 = vtanh.pop %v4239
    %v4312 = vtanh.pop %v4240
    %v4313 = vtanh.pop %v4241
    %v4314 = vtanh.pop %v4242
    %v4315 = vtanh.pop %v4243
    %v4316 = vtanh.pop %v4244
    %v4317 = vtanh.pop %v4245
    %v4318 = vtanh.pop %v4246
    %v4319 = vmul.f32 %v4296, %v4311
    %v4320 = vmul.f32 %v4298, %v4312
    %v4321 = vmul.f32 %v4300, %v4313
    %v4322 = vmul.f32 %v4302, %v4314
    %v4323 = vmul.f32 %v4304, %v4315
    %v4324 = vmul.f32 %v4306, %v4316
    %v4325 = vmul.f32 %v4308, %v4317
    %v4326 = vmul.f32 %v4310, %v4318
    %4327 = vst [vmem:[#allocation2 + $0x6] sm:$0x1] %v4319
    %4328 = vst [vmem:[#allocation2 + $0xe] sm:$0x1] %v4320
    %4329 = vst [vmem:[#allocation2 + $0x16] sm:$0x1] %v4321
    %4330 = vst [vmem:[#allocation2 + $0x1e] sm:$0x1] %v4322
    %4331 = vst [vmem:[#allocation2 + $0x26] sm:$0x1] %v4323
    %4332 = vst [vmem:[#allocation2 + $0x2e] sm:$0x1] %v4324
    %4333 = vst [vmem:[#allocation2 + $0x36] sm:$0x1] %v4325
    %4334 = vst [vmem:[#allocation2 + $0x3e] sm:$0x1] %v4326
    %s4335 = scalar_lea.vmem [#allocation3], 7
    %v4336 = vld [vmem:[%s4335] ss:$8 sm:$0xf]
    %s4337 = scalar_lea.vmem [#allocation3], 39
    %v4338 = vld [vmem:[%s4337] ss:$8 sm:$0xf]
    %s4339 = scalar_lea.vmem [#allocation3], 71
    %v4340 = vld [vmem:[%s4339] ss:$8 sm:$0xf]
    %s4341 = scalar_lea.vmem [#allocation3], 103
    %v4342 = vld [vmem:[%s4341] ss:$8 sm:$0xf]
    %s4343 = scalar_lea.vmem [#allocation3], 135
    %v4344 = vld [vmem:[%s4343] ss:$8 sm:$0xf]
    %s4345 = scalar_lea.vmem [#allocation3], 167
    %v4346 = vld [vmem:[%s4345] ss:$8 sm:$0xf]
    %s4347 = scalar_lea.vmem [#allocation3], 199
    %v4348 = vld [vmem:[%s4347] ss:$8 sm:$0xf]
    %s4349 = scalar_lea.vmem [#allocation3], 231
    %v4350 = vld [vmem:[%s4349] ss:$8 sm:$0xf]
    %v4359 = vcombine.low %v4319, %v4320
    %v4360 = vcombine.low %v4321, %v4322
    %v4361 = vcombine.low %v4323, %v4324
    %v4362 = vcombine.low %v4325, %v4326
    %v4364 = vunpack.c.l.s4 1966171168
    %v4365 = vunpack.c.0.s8 %v4364
    %v4366 = vlaneseq
    %v4367 = vshrl.u32 %v4366, 7
    %v4368 = vsub.s32 %v4365, %v4367
    %v4369 = vrot.slane %v4359, %v4368
    %v4371 = vunpack.c.l.s4 1966171168
    %v4372 = vunpack.c.0.s8 %v4371
    %v4373 = vlaneseq
    %v4374 = vshrl.u32 %v4373, 7
    %v4375 = vsub.s32 %v4372, %v4374
    %v4376 = vrot.slane %v4360, %v4375
    %v4378 = vunpack.c.l.s4 1966171168
    %v4379 = vunpack.c.0.s8 %v4378
    %v4380 = vlaneseq
    %v4381 = vshrl.u32 %v4380, 7
    %v4382 = vsub.s32 %v4379, %v4381
    %v4383 = vrot.slane %v4361, %v4382
    %v4385 = vunpack.c.l.s4 1966171168
    %v4386 = vunpack.c.0.s8 %v4385
    %v4387 = vlaneseq
    %v4388 = vshrl.u32 %v4387, 7
    %v4389 = vsub.s32 %v4386, %v4388
    %v4390 = vrot.slane %v4362, %v4389
    %v4391 = vcombine.low %v4369, %v4376
    %v4392 = vcombine.low %v4383, %v4390
    %v4394 = vunpack.c.l.s4 1966171168
    %v4395 = vunpack.c.0.s8 %v4394
    %v4396 = vlaneseq
    %v4397 = vshrl.u32 %v4396, 7
    %v4398 = vsub.s32 %v4395, %v4397
    %v4399 = vrot.slane %v4391, %v4398
    %v4401 = vunpack.c.l.s4 1966171168
    %v4402 = vunpack.c.0.s8 %v4401
    %v4403 = vlaneseq
    %v4404 = vshrl.u32 %v4403, 7
    %v4405 = vsub.s32 %v4402, %v4404
    %v4406 = vrot.slane %v4392, %v4405
    %v4407 = vcombine.low %v4399, %v4406
    %4409 = vmatprep.subr.mxu0 %v98
    %4410 = vmatpush1.msra.mxu0 %v97
    %4411 = vmatprep.subr.mxu0 %v102
    %4412 = vmatpush1.msra.mxu0 %v101
    %4413 = vmatprep.subr.mxu0 %v106
    %4414 = vmatpush1.msra.mxu0 %v105
    %4415 = vmatprep.subr.mxu0 %v110
    %4416 = vmatpush1.msra.mxu0 %v109
    %4417 = vmatprep.subr.mxu0 %v114
    %4418 = vmatpush1.msra.mxu0 %v113
    %4419 = vmatprep.subr.mxu0 %v118
    %4420 = vmatpush1.msra.mxu0 %v117
    %4421 = vmatprep.subr.mxu0 %v122
    %4422 = vmatpush1.msra.mxu0 %v121
    %4423 = vmatprep.subr.mxu0 %v126
    %4424 = vmatpush1.msra.mxu0 %v125
    %4425 = vmatprep.subr.mxu0 %v130
    %4426 = vmatpush1.msra.mxu0 %v129
    %4427 = vmatprep.subr.mxu0 %v134
    %4428 = vmatpush1.msra.mxu0 %v133
    %4429 = vmatprep.subr.mxu0 %v138
    %4430 = vmatpush1.msra.mxu0 %v137
    %4431 = vmatprep.subr.mxu0 %v142
    %4432 = vmatpush1.msra.mxu0 %v141
    %4433 = vmatprep.subr.mxu0 %v146
    %4434 = vmatpush1.msra.mxu0 %v145
    %4435 = vmatprep.subr.mxu0 %v150
    %4436 = vmatpush1.msra.mxu0 %v149
    %4437 = vmatprep.subr.mxu0 %v154
    %4438 = vmatpush1.msra.mxu0 %v153
    %4439 = vmatprep.subr.mxu0 %v158
    %4440 = vmatpush1.msra.mxu0 %v157
    %4441 = vmatprep.subr.mxu0 0.0
    %4442 = vmatpush1.msra.mxu0 0.0
    %4443 = vmatprep.subr.mxu0 0.0
    %4444 = vmatpush1.msra.mxu0 0.0
    %4445 = vmatprep.subr.mxu0 0.0
    %4446 = vmatpush1.msra.mxu0 0.0
    %4447 = vmatprep.subr.mxu0 0.0
    %4448 = vmatpush1.msra.mxu0 0.0
    %4449 = vmatprep.subr.mxu0 0.0
    %4450 = vmatpush1.msra.mxu0 0.0
    %4451 = vmatprep.subr.mxu0 0.0
    %4452 = vmatpush1.msra.mxu0 0.0
    %4453 = vmatprep.subr.mxu0 0.0
    %4454 = vmatpush1.msra.mxu0 0.0
    %4455 = vmatprep.subr.mxu0 0.0
    %4456 = vmatpush1.msra.mxu0 0.0
    %4457 = vmatprep.subr.mxu0 0.0
    %4458 = vmatpush1.msra.mxu0 0.0
    %4459 = vmatprep.subr.mxu0 0.0
    %4460 = vmatpush1.msra.mxu0 0.0
    %4461 = vmatprep.subr.mxu0 0.0
    %4462 = vmatpush1.msra.mxu0 0.0
    %4463 = vmatprep.subr.mxu0 0.0
    %4464 = vmatpush1.msra.mxu0 0.0
    %4465 = vmatprep.subr.mxu0 0.0
    %4466 = vmatpush1.msra.mxu0 0.0
    %4467 = vmatprep.subr.mxu0 0.0
    %4468 = vmatpush1.msra.mxu0 0.0
    %4469 = vmatprep.subr.mxu0 0.0
    %4470 = vmatpush1.msra.mxu0 0.0
    %4471 = vmatprep.subr.mxu0 0.0
    %4472 = vmatpush1.msra.mxu0 0.0
    %4473 = vmatprep.mubr.f32.mxu0 0.0
    %4474 = vmatmul.mubr.f32.gmra.mrb[0].mxu0 %v4407
    %v4475 = vpop.f32.mrb[0].mxu0
    %v4476 = vadd.f32 0.0, %v4475
    %v4477 = vpop.f32.mrb[0].mxu0
    %v4478 = vadd.f32 0.0, %v4477
    %4479 = vdwg.mxu0
    %4480 = vmatprep.subr.mxu0 %v100
    %4481 = vmatpush1.msra.mxu0 %v99
    %4482 = vmatprep.subr.mxu0 %v104
    %4483 = vmatpush1.msra.mxu0 %v103
    %4484 = vmatprep.subr.mxu0 %v108
    %4485 = vmatpush1.msra.mxu0 %v107
    %4486 = vmatprep.subr.mxu0 %v112
    %4487 = vmatpush1.msra.mxu0 %v111
    %4488 = vmatprep.subr.mxu0 %v116
    %4489 = vmatpush1.msra.mxu0 %v115
    %4490 = vmatprep.subr.mxu0 %v120
    %4491 = vmatpush1.msra.mxu0 %v119
    %4492 = vmatprep.subr.mxu0 %v124
    %4493 = vmatpush1.msra.mxu0 %v123
    %4494 = vmatprep.subr.mxu0 %v128
    %4495 = vmatpush1.msra.mxu0 %v127
    %4496 = vmatprep.subr.mxu0 %v132
    %4497 = vmatpush1.msra.mxu0 %v131
    %4498 = vmatprep.subr.mxu0 %v136
    %4499 = vmatpush1.msra.mxu0 %v135
    %4500 = vmatprep.subr.mxu0 %v140
    %4501 = vmatpush1.msra.mxu0 %v139
    %4502 = vmatprep.subr.mxu0 %v144
    %4503 = vmatpush1.msra.mxu0 %v143
    %4504 = vmatprep.subr.mxu0 %v148
    %4505 = vmatpush1.msra.mxu0 %v147
    %4506 = vmatprep.subr.mxu0 %v152
    %4507 = vmatpush1.msra.mxu0 %v151
    %4508 = vmatprep.subr.mxu0 %v156
    %4509 = vmatpush1.msra.mxu0 %v155
    %4510 = vmatprep.subr.mxu0 %v160
    %4511 = vmatpush1.msra.mxu0 %v159
    %4512 = vmatprep.subr.mxu0 0.0
    %4513 = vmatpush1.msra.mxu0 0.0
    %4514 = vmatprep.subr.mxu0 0.0
    %4515 = vmatpush1.msra.mxu0 0.0
    %4516 = vmatprep.subr.mxu0 0.0
    %4517 = vmatpush1.msra.mxu0 0.0
    %4518 = vmatprep.subr.mxu0 0.0
    %4519 = vmatpush1.msra.mxu0 0.0
    %4520 = vmatprep.subr.mxu0 0.0
    %4521 = vmatpush1.msra.mxu0 0.0
    %4522 = vmatprep.subr.mxu0 0.0
    %4523 = vmatpush1.msra.mxu0 0.0
    %4524 = vmatprep.subr.mxu0 0.0
    %4525 = vmatpush1.msra.mxu0 0.0
    %4526 = vmatprep.subr.mxu0 0.0
    %4527 = vmatpush1.msra.mxu0 0.0
    %4528 = vmatprep.subr.mxu0 0.0
    %4529 = vmatpush1.msra.mxu0 0.0
    %4530 = vmatprep.subr.mxu0 0.0
    %4531 = vmatpush1.msra.mxu0 0.0
    %4532 = vmatprep.subr.mxu0 0.0
    %4533 = vmatpush1.msra.mxu0 0.0
    %4534 = vmatprep.subr.mxu0 0.0
    %4535 = vmatpush1.msra.mxu0 0.0
    %4536 = vmatprep.subr.mxu0 0.0
    %4537 = vmatpush1.msra.mxu0 0.0
    %4538 = vmatprep.subr.mxu0 0.0
    %4539 = vmatpush1.msra.mxu0 0.0
    %4540 = vmatprep.subr.mxu0 0.0
    %4541 = vmatpush1.msra.mxu0 0.0
    %4542 = vmatprep.subr.mxu0 0.0
    %4543 = vmatpush1.msra.mxu0 0.0
    %4544 = vmatprep.mubr.f32.mxu0 0.0
    %4545 = vmatmul.mubr.f32.gmra.mrb[0].mxu0 %v4407
    %v4546 = vpop.f32.mrb[0].mxu0
    %v4547 = vadd.f32 0.0, %v4546
    %v4548 = vpop.f32.mrb[0].mxu0
    %v4549 = vadd.f32 0.0, %v4548
    %4550 = vdwg.mxu0
    %v4555 = vcombine.low %v4476, %v4478
    %v4556 = vcombine.high %v4476, %v4478
    %v4557 = vcombine.low %v4547, %v4549
    %v4558 = vcombine.high %v4547, %v4549
    %v4560 = vunpack.c.l.s4 1966171168
    %v4561 = vunpack.c.0.s8 %v4560
    %v4562 = vlaneseq
    %v4563 = vshrl.u32 %v4562, 7
    %v4564 = vsub.s32 %v4561, %v4563
    %v4565 = vrot.slane %v4555, %v4564
    %v4567 = vunpack.c.l.s4 1966171168
    %v4568 = vunpack.c.0.s8 %v4567
    %v4569 = vlaneseq
    %v4570 = vshrl.u32 %v4569, 7
    %v4571 = vsub.s32 %v4568, %v4570
    %v4572 = vrot.slane %v4556, %v4571
    %v4574 = vunpack.c.l.s4 1966171168
    %v4575 = vunpack.c.0.s8 %v4574
    %v4576 = vlaneseq
    %v4577 = vshrl.u32 %v4576, 7
    %v4578 = vsub.s32 %v4575, %v4577
    %v4579 = vrot.slane %v4557, %v4578
    %v4581 = vunpack.c.l.s4 1966171168
    %v4582 = vunpack.c.0.s8 %v4581
    %v4583 = vlaneseq
    %v4584 = vshrl.u32 %v4583, 7
    %v4585 = vsub.s32 %v4582, %v4584
    %v4586 = vrot.slane %v4558, %v4585
    %v4587 = vcombine.low %v4565, %v4579
    %v4588 = vcombine.high %v4565, %v4579
    %v4589 = vcombine.low %v4572, %v4586
    %v4590 = vcombine.high %v4572, %v4586
    %v4592 = vunpack.c.l.s4 1966171168
    %v4593 = vunpack.c.0.s8 %v4592
    %v4594 = vlaneseq
    %v4595 = vshrl.u32 %v4594, 7
    %v4596 = vsub.s32 %v4593, %v4595
    %v4597 = vrot.slane %v4587, %v4596
    %v4599 = vunpack.c.l.s4 1966171168
    %v4600 = vunpack.c.0.s8 %v4599
    %v4601 = vlaneseq
    %v4602 = vshrl.u32 %v4601, 7
    %v4603 = vsub.s32 %v4600, %v4602
    %v4604 = vrot.slane %v4589, %v4603
    %v4606 = vunpack.c.l.s4 1966171168
    %v4607 = vunpack.c.0.s8 %v4606
    %v4608 = vlaneseq
    %v4609 = vshrl.u32 %v4608, 7
    %v4610 = vsub.s32 %v4607, %v4609
    %v4611 = vrot.slane %v4588, %v4610
    %v4613 = vunpack.c.l.s4 1966171168
    %v4614 = vunpack.c.0.s8 %v4613
    %v4615 = vlaneseq
    %v4616 = vshrl.u32 %v4615, 7
    %v4617 = vsub.s32 %v4614, %v4616
    %v4618 = vrot.slane %v4590, %v4617
    %v4619 = vcombine.high %v4597, %v4597
    %v4620 = vcombine.high %v4604, %v4604
    %v4621 = vcombine.high %v4611, %v4611
    %v4622 = vcombine.high %v4618, %v4618
    %v4631 = vadd.f32 %v4336, %v4597
    %v4632 = vadd.f32 %v4338, %v4611
    %v4633 = vadd.f32 %v4340, %v4619
    %v4634 = vadd.f32 %v4342, %v4621
    %v4635 = vadd.f32 %v4344, %v4604
    %v4636 = vadd.f32 %v4346, %v4618
    %v4637 = vadd.f32 %v4348, %v4620
    %v4638 = vadd.f32 %v4350, %v4622
    %v4647 = vrot.slane %v4631, 1
    %v4648 = vrot.slane %v4632, 1
    %v4649 = vrot.slane %v4633, 1
    %v4650 = vrot.slane %v4634, 1
    %v4651 = vrot.slane %v4635, 1
    %v4652 = vrot.slane %v4636, 1
    %v4653 = vrot.slane %v4637, 1
    %v4654 = vrot.slane %v4638, 1
    %v4663 = vxor.u32 %v4647, 2147483648
    %v4664 = vxor.u32 %v4648, 2147483648
    %v4665 = vxor.u32 %v4649, 2147483648
    %v4666 = vxor.u32 %v4650, 2147483648
    %v4667 = vxor.u32 %v4651, 2147483648
    %v4668 = vxor.u32 %v4652, 2147483648
    %v4669 = vxor.u32 %v4653, 2147483648
    %v4670 = vxor.u32 %v4654, 2147483648
    %v4671 = vmul.f32 %v4663, 1.442695
    %v4672 = vpow.pop %v4671
    %v4673 = vmul.f32 %v4664, 1.442695
    %v4674 = vpow.pop %v4673
    %v4675 = vmul.f32 %v4665, 1.442695
    %v4676 = vpow.pop %v4675
    %v4677 = vmul.f32 %v4666, 1.442695
    %v4678 = vpow.pop %v4677
    %v4679 = vmul.f32 %v4667, 1.442695
    %v4680 = vpow.pop %v4679
    %v4681 = vmul.f32 %v4668, 1.442695
    %v4682 = vpow.pop %v4681
    %v4683 = vmul.f32 %v4669, 1.442695
    %v4684 = vpow.pop %v4683
    %v4685 = vmul.f32 %v4670, 1.442695
    %v4686 = vpow.pop %v4685
    %v4687 = vadd.f32 %v4672, 1.0
    %v4688 = vadd.f32 %v4674, 1.0
    %v4689 = vadd.f32 %v4676, 1.0
    %v4690 = vadd.f32 %v4678, 1.0
    %v4691 = vadd.f32 %v4680, 1.0
    %v4692 = vadd.f32 %v4682, 1.0
    %v4693 = vadd.f32 %v4684, 1.0
    %v4694 = vadd.f32 %v4686, 1.0
    %v4695 = vrcp.pop %v4687
    %v4696 = vmul.f32 1.0, %v4695
    %v4697 = vrcp.pop %v4688
    %v4698 = vmul.f32 1.0, %v4697
    %v4699 = vrcp.pop %v4689
    %v4700 = vmul.f32 1.0, %v4699
    %v4701 = vrcp.pop %v4690
    %v4702 = vmul.f32 1.0, %v4701
    %v4703 = vrcp.pop %v4691
    %v4704 = vmul.f32 1.0, %v4703
    %v4705 = vrcp.pop %v4692
    %v4706 = vmul.f32 1.0, %v4705
    %v4707 = vrcp.pop %v4693
    %v4708 = vmul.f32 1.0, %v4707
    %v4709 = vrcp.pop %v4694
    %v4710 = vmul.f32 1.0, %v4709
    %v4711 = vmul.f32 %v4696, %v4239
    %v4712 = vmul.f32 %v4698, %v4240
    %v4713 = vmul.f32 %v4700, %v4241
    %v4714 = vmul.f32 %v4702, %v4242
    %v4715 = vmul.f32 %v4704, %v4243
    %v4716 = vmul.f32 %v4706, %v4244
    %v4717 = vmul.f32 %v4708, %v4245
    %v4718 = vmul.f32 %v4710, %v4246
    %v4719 = vxor.u32 %v4631, 2147483648
    %v4720 = vxor.u32 %v4632, 2147483648
    %v4721 = vxor.u32 %v4633, 2147483648
    %v4722 = vxor.u32 %v4634, 2147483648
    %v4723 = vxor.u32 %v4635, 2147483648
    %v4724 = vxor.u32 %v4636, 2147483648
    %v4725 = vxor.u32 %v4637, 2147483648
    %v4726 = vxor.u32 %v4638, 2147483648
    %v4727 = vmul.f32 %v4719, 1.442695
    %v4728 = vpow.pop %v4727
    %v4729 = vmul.f32 %v4720, 1.442695
    %v4730 = vpow.pop %v4729
    %v4731 = vmul.f32 %v4721, 1.442695
    %v4732 = vpow.pop %v4731
    %v4733 = vmul.f32 %v4722, 1.442695
    %v4734 = vpow.pop %v4733
    %v4735 = vmul.f32 %v4723, 1.442695
    %v4736 = vpow.pop %v4735
    %v4737 = vmul.f32 %v4724, 1.442695
    %v4738 = vpow.pop %v4737
    %v4739 = vmul.f32 %v4725, 1.442695
    %v4740 = vpow.pop %v4739
    %v4741 = vmul.f32 %v4726, 1.442695
    %v4742 = vpow.pop %v4741
    %v4743 = vadd.f32 %v4728, 1.0
    %v4744 = vadd.f32 %v4730, 1.0
    %v4745 = vadd.f32 %v4732, 1.0
    %v4746 = vadd.f32 %v4734, 1.0
    %v4747 = vadd.f32 %v4736, 1.0
    %v4748 = vadd.f32 %v4738, 1.0
    %v4749 = vadd.f32 %v4740, 1.0
    %v4750 = vadd.f32 %v4742, 1.0
    %v4751 = vrcp.pop %v4743
    %v4752 = vmul.f32 1.0, %v4751
    %v4753 = vrcp.pop %v4744
    %v4754 = vmul.f32 1.0, %v4753
    %v4755 = vrcp.pop %v4745
    %v4756 = vmul.f32 1.0, %v4755
    %v4757 = vrcp.pop %v4746
    %v4758 = vmul.f32 1.0, %v4757
    %v4759 = vrcp.pop %v4747
    %v4760 = vmul.f32 1.0, %v4759
    %v4761 = vrcp.pop %v4748
    %v4762 = vmul.f32 1.0, %v4761
    %v4763 = vrcp.pop %v4749
    %v4764 = vmul.f32 1.0, %v4763
    %v4765 = vrcp.pop %v4750
    %v4766 = vmul.f32 1.0, %v4765
    %v4767 = vrot.slane %v4631, 2
    %v4768 = vrot.slane %v4632, 2
    %v4769 = vrot.slane %v4633, 2
    %v4770 = vrot.slane %v4634, 2
    %v4771 = vrot.slane %v4635, 2
    %v4772 = vrot.slane %v4636, 2
    %v4773 = vrot.slane %v4637, 2
    %v4774 = vrot.slane %v4638, 2
    %v4783 = vtanh.pop %v4767
    %v4784 = vtanh.pop %v4768
    %v4785 = vtanh.pop %v4769
    %v4786 = vtanh.pop %v4770
    %v4787 = vtanh.pop %v4771
    %v4788 = vtanh.pop %v4772
    %v4789 = vtanh.pop %v4773
    %v4790 = vtanh.pop %v4774
    %v4791 = vmul.f32 %v4752, %v4783
    %v4792 = vmul.f32 %v4754, %v4784
    %v4793 = vmul.f32 %v4756, %v4785
    %v4794 = vmul.f32 %v4758, %v4786
    %v4795 = vmul.f32 %v4760, %v4787
    %v4796 = vmul.f32 %v4762, %v4788
    %v4797 = vmul.f32 %v4764, %v4789
    %v4798 = vmul.f32 %v4766, %v4790
    %v4799 = vadd.f32 %v4711, %v4791
    %v4800 = vadd.f32 %v4712, %v4792
    %v4801 = vadd.f32 %v4713, %v4793
    %v4802 = vadd.f32 %v4714, %v4794
    %v4803 = vadd.f32 %v4715, %v4795
    %v4804 = vadd.f32 %v4716, %v4796
    %v4805 = vadd.f32 %v4717, %v4797
    %v4806 = vadd.f32 %v4718, %v4798
    %v4807 = vrot.slane %v4631, 3
    %v4808 = vrot.slane %v4632, 3
    %v4809 = vrot.slane %v4633, 3
    %v4810 = vrot.slane %v4634, 3
    %v4811 = vrot.slane %v4635, 3
    %v4812 = vrot.slane %v4636, 3
    %v4813 = vrot.slane %v4637, 3
    %v4814 = vrot.slane %v4638, 3
    %v4823 = vxor.u32 %v4807, 2147483648
    %v4824 = vxor.u32 %v4808, 2147483648
    %v4825 = vxor.u32 %v4809, 2147483648
    %v4826 = vxor.u32 %v4810, 2147483648
    %v4827 = vxor.u32 %v4811, 2147483648
    %v4828 = vxor.u32 %v4812, 2147483648
    %v4829 = vxor.u32 %v4813, 2147483648
    %v4830 = vxor.u32 %v4814, 2147483648
    %v4831 = vmul.f32 %v4823, 1.442695
    %v4832 = vpow.pop %v4831
    %v4833 = vmul.f32 %v4824, 1.442695
    %v4834 = vpow.pop %v4833
    %v4835 = vmul.f32 %v4825, 1.442695
    %v4836 = vpow.pop %v4835
    %v4837 = vmul.f32 %v4826, 1.442695
    %v4838 = vpow.pop %v4837
    %v4839 = vmul.f32 %v4827, 1.442695
    %v4840 = vpow.pop %v4839
    %v4841 = vmul.f32 %v4828, 1.442695
    %v4842 = vpow.pop %v4841
    %v4843 = vmul.f32 %v4829, 1.442695
    %v4844 = vpow.pop %v4843
    %v4845 = vmul.f32 %v4830, 1.442695
    %v4846 = vpow.pop %v4845
    %v4847 = vadd.f32 %v4832, 1.0
    %v4848 = vadd.f32 %v4834, 1.0
    %v4849 = vadd.f32 %v4836, 1.0
    %v4850 = vadd.f32 %v4838, 1.0
    %v4851 = vadd.f32 %v4840, 1.0
    %v4852 = vadd.f32 %v4842, 1.0
    %v4853 = vadd.f32 %v4844, 1.0
    %v4854 = vadd.f32 %v4846, 1.0
    %v4855 = vrcp.pop %v4847
    %v4856 = vmul.f32 1.0, %v4855
    %v4857 = vrcp.pop %v4848
    %v4858 = vmul.f32 1.0, %v4857
    %v4859 = vrcp.pop %v4849
    %v4860 = vmul.f32 1.0, %v4859
    %v4861 = vrcp.pop %v4850
    %v4862 = vmul.f32 1.0, %v4861
    %v4863 = vrcp.pop %v4851
    %v4864 = vmul.f32 1.0, %v4863
    %v4865 = vrcp.pop %v4852
    %v4866 = vmul.f32 1.0, %v4865
    %v4867 = vrcp.pop %v4853
    %v4868 = vmul.f32 1.0, %v4867
    %v4869 = vrcp.pop %v4854
    %v4870 = vmul.f32 1.0, %v4869
    %v4871 = vtanh.pop %v4799
    %v4872 = vtanh.pop %v4800
    %v4873 = vtanh.pop %v4801
    %v4874 = vtanh.pop %v4802
    %v4875 = vtanh.pop %v4803
    %v4876 = vtanh.pop %v4804
    %v4877 = vtanh.pop %v4805
    %v4878 = vtanh.pop %v4806
    %v4879 = vmul.f32 %v4856, %v4871
    %v4880 = vmul.f32 %v4858, %v4872
    %v4881 = vmul.f32 %v4860, %v4873
    %v4882 = vmul.f32 %v4862, %v4874
    %v4883 = vmul.f32 %v4864, %v4875
    %v4884 = vmul.f32 %v4866, %v4876
    %v4885 = vmul.f32 %v4868, %v4877
    %v4886 = vmul.f32 %v4870, %v4878
    %4887 = vst [vmem:[#allocation2 + $0x7] sm:$0x1] %v4879
    %4888 = vst [vmem:[#allocation2 + $0xf] sm:$0x1] %v4880
    %4889 = vst [vmem:[#allocation2 + $0x17] sm:$0x1] %v4881
    %4890 = vst [vmem:[#allocation2 + $0x1f] sm:$0x1] %v4882
    %4891 = vst [vmem:[#allocation2 + $0x27] sm:$0x1] %v4883
    %4892 = vst [vmem:[#allocation2 + $0x2f] sm:$0x1] %v4884
    %4893 = vst [vmem:[#allocation2 + $0x37] sm:$0x1] %v4885
    %4894 = vst [vmem:[#allocation2 + $0x3f] sm:$0x1] %v4886
    %v4895 = vld [vmem:[#allocation6] sm:$0xff]
    %v4896 = vld [vmem:[#allocation6 + $0x8] sm:$0xff]
    %v4897 = vld [vmem:[#allocation6 + $0x10] sm:$0xff]
    %v4898 = vld [vmem:[#allocation6 + $0x18] sm:$0xff]
    %v4899 = vld [vmem:[#allocation6 + $0x20] sm:$0xff]
    %v4900 = vld [vmem:[#allocation6 + $0x28] sm:$0xff]
    %v4901 = vld [vmem:[#allocation6 + $0x30] sm:$0xff]
    %v4902 = vld [vmem:[#allocation6 + $0x38] sm:$0xff]
    %v4903 = vld [vmem:[#allocation6 + $0x40] sm:$0xff]
    %v4904 = vld [vmem:[#allocation6 + $0x48] sm:$0xff]
    %v4905 = vld [vmem:[#allocation6 + $0x50] sm:$0xff]
    %v4906 = vld [vmem:[#allocation6 + $0x58] sm:$0xff]
    %v4907 = vld [vmem:[#allocation6 + $0x60] sm:$0xff]
    %v4908 = vld [vmem:[#allocation6 + $0x68] sm:$0xff]
    %v4909 = vld [vmem:[#allocation6 + $0x70] sm:$0xff]
    %v4910 = vld [vmem:[#allocation6 + $0x78] sm:$0xff]
    %v4911 = vld [vmem:[#allocation6 + $0x80] sm:$0xff]
    %v4912 = vld [vmem:[#allocation6 + $0x88] sm:$0xff]
    %v4913 = vld [vmem:[#allocation6 + $0x90] sm:$0xff]
    %v4914 = vld [vmem:[#allocation6 + $0x98] sm:$0xff]
    %v4915 = vld [vmem:[#allocation6 + $0xa0] sm:$0xff]
    %v4916 = vld [vmem:[#allocation6 + $0xa8] sm:$0xff]
    %v4917 = vld [vmem:[#allocation6 + $0xb0] sm:$0xff]
    %v4918 = vld [vmem:[#allocation6 + $0xb8] sm:$0xff]
    %v4919 = vld [vmem:[#allocation6 + $0xc0] sm:$0xff]
    %v4920 = vld [vmem:[#allocation6 + $0xc8] sm:$0xff]
    %v4921 = vld [vmem:[#allocation6 + $0xd0] sm:$0xff]
    %v4922 = vld [vmem:[#allocation6 + $0xd8] sm:$0xff]
    %v4923 = vld [vmem:[#allocation6 + $0xe0] sm:$0xff]
    %v4924 = vld [vmem:[#allocation6 + $0xe8] sm:$0xff]
    %v4925 = vld [vmem:[#allocation6 + $0xf0] sm:$0xff]
    %v4926 = vld [vmem:[#allocation6 + $0xf8] sm:$0xff]
    %v4927 = vld [vmem:[#allocation6 + $0x100] sm:$0xff]
    %v4928 = vld [vmem:[#allocation6 + $0x108] sm:$0xff]
    %v4929 = vld [vmem:[#allocation6 + $0x110] sm:$0xff]
    %v4930 = vld [vmem:[#allocation6 + $0x118] sm:$0xff]
    %v4931 = vld [vmem:[#allocation6 + $0x120] sm:$0xff]
    %v4932 = vld [vmem:[#allocation6 + $0x128] sm:$0xff]
    %v4933 = vld [vmem:[#allocation6 + $0x130] sm:$0xff]
    %v4934 = vld [vmem:[#allocation6 + $0x138] sm:$0xff]
    %v4935 = vld [vmem:[#allocation6 + $0x140] sm:$0xff]
    %v4936 = vld [vmem:[#allocation6 + $0x148] sm:$0xff]
    %v4937 = vld [vmem:[#allocation6 + $0x150] sm:$0xff]
    %v4938 = vld [vmem:[#allocation6 + $0x158] sm:$0xff]
    %v4939 = vld [vmem:[#allocation6 + $0x160] sm:$0xff]
    %v4940 = vld [vmem:[#allocation6 + $0x168] sm:$0xff]
    %v4941 = vld [vmem:[#allocation6 + $0x170] sm:$0xff]
    %v4942 = vld [vmem:[#allocation6 + $0x178] sm:$0xff]
    %v4943 = vld [vmem:[#allocation6 + $0x180] sm:$0xff]
    %v4944 = vld [vmem:[#allocation6 + $0x188] sm:$0xff]
    %v4945 = vld [vmem:[#allocation6 + $0x190] sm:$0xff]
    %v4946 = vld [vmem:[#allocation6 + $0x198] sm:$0xff]
    %v4947 = vld [vmem:[#allocation6 + $0x1a0] sm:$0xff]
    %v4948 = vld [vmem:[#allocation6 + $0x1a8] sm:$0xff]
    %v4949 = vld [vmem:[#allocation6 + $0x1b0] sm:$0xff]
    %v4950 = vld [vmem:[#allocation6 + $0x1b8] sm:$0xff]
    %v4951 = vld [vmem:[#allocation6 + $0x1c0] sm:$0xff]
    %v4952 = vld [vmem:[#allocation6 + $0x1c8] sm:$0xff]
    %v4953 = vld [vmem:[#allocation6 + $0x1d0] sm:$0xff]
    %v4954 = vld [vmem:[#allocation6 + $0x1d8] sm:$0xff]
    %v4955 = vld [vmem:[#allocation6 + $0x1e0] sm:$0xff]
    %v4956 = vld [vmem:[#allocation6 + $0x1e8] sm:$0xff]
    %v4957 = vld [vmem:[#allocation6 + $0x1f0] sm:$0xff]
    %v4958 = vld [vmem:[#allocation6 + $0x1f8] sm:$0xff]
    %v4959 = vld [vmem:[#allocation8] sm:$0xff]
    %v4960 = vld [vmem:[#allocation8 + $0x8] sm:$0xff]
    %v4961 = vld [vmem:[#allocation8 + $0x10] sm:$0xff]
    %v4962 = vld [vmem:[#allocation8 + $0x18] sm:$0xff]
    %v4963 = vld [vmem:[#allocation8 + $0x20] sm:$0xff]
    %v4964 = vld [vmem:[#allocation8 + $0x28] sm:$0xff]
    %v4965 = vld [vmem:[#allocation8 + $0x30] sm:$0xff]
    %v4966 = vld [vmem:[#allocation8 + $0x38] sm:$0xff]
    %v4967 = vld [vmem:[#allocation8 + $0x40] sm:$0xff]
    %v4968 = vld [vmem:[#allocation8 + $0x48] sm:$0xff]
    %v4969 = vld [vmem:[#allocation8 + $0x50] sm:$0xff]
    %v4970 = vld [vmem:[#allocation8 + $0x58] sm:$0xff]
    %v4971 = vld [vmem:[#allocation8 + $0x60] sm:$0xff]
    %v4972 = vld [vmem:[#allocation8 + $0x68] sm:$0xff]
    %v4973 = vld [vmem:[#allocation8 + $0x70] sm:$0xff]
    %v4974 = vld [vmem:[#allocation8 + $0x78] sm:$0xff]
    %v4975 = vld [vmem:[#allocation8 + $0x80] sm:$0xff]
    %v4976 = vld [vmem:[#allocation8 + $0x88] sm:$0xff]
    %v4977 = vld [vmem:[#allocation8 + $0x90] sm:$0xff]
    %v4978 = vld [vmem:[#allocation8 + $0x98] sm:$0xff]
    %v4979 = vld [vmem:[#allocation8 + $0xa0] sm:$0xff]
    %v4980 = vld [vmem:[#allocation8 + $0xa8] sm:$0xff]
    %v4981 = vld [vmem:[#allocation8 + $0xb0] sm:$0xff]
    %v4982 = vld [vmem:[#allocation8 + $0xb8] sm:$0xff]
    %v4983 = vld [vmem:[#allocation8 + $0xc0] sm:$0xff]
    %v4984 = vld [vmem:[#allocation8 + $0xc8] sm:$0xff]
    %v4985 = vld [vmem:[#allocation8 + $0xd0] sm:$0xff]
    %v4986 = vld [vmem:[#allocation8 + $0xd8] sm:$0xff]
    %v4987 = vld [vmem:[#allocation8 + $0xe0] sm:$0xff]
    %v4988 = vld [vmem:[#allocation8 + $0xe8] sm:$0xff]
    %v4989 = vld [vmem:[#allocation8 + $0xf0] sm:$0xff]
    %v4990 = vld [vmem:[#allocation8 + $0xf8] sm:$0xff]
    %v4991 = vld [vmem:[#allocation8 + $0x100] sm:$0xff]
    %v4992 = vld [vmem:[#allocation8 + $0x108] sm:$0xff]
    %v4993 = vld [vmem:[#allocation8 + $0x110] sm:$0xff]
    %v4994 = vld [vmem:[#allocation8 + $0x118] sm:$0xff]
    %v4995 = vld [vmem:[#allocation8 + $0x120] sm:$0xff]
    %v4996 = vld [vmem:[#allocation8 + $0x128] sm:$0xff]
    %v4997 = vld [vmem:[#allocation8 + $0x130] sm:$0xff]
    %v4998 = vld [vmem:[#allocation8 + $0x138] sm:$0xff]
    %v4999 = vld [vmem:[#allocation8 + $0x140] sm:$0xff]
    %v5000 = vld [vmem:[#allocation8 + $0x148] sm:$0xff]
    %v5001 = vld [vmem:[#allocation8 + $0x150] sm:$0xff]
    %v5002 = vld [vmem:[#allocation8 + $0x158] sm:$0xff]
    %v5003 = vld [vmem:[#allocation8 + $0x160] sm:$0xff]
    %v5004 = vld [vmem:[#allocation8 + $0x168] sm:$0xff]
    %v5005 = vld [vmem:[#allocation8 + $0x170] sm:$0xff]
    %v5006 = vld [vmem:[#allocation8 + $0x178] sm:$0xff]
    %v5007 = vld [vmem:[#allocation8 + $0x180] sm:$0xff]
    %v5008 = vld [vmem:[#allocation8 + $0x188] sm:$0xff]
    %v5009 = vld [vmem:[#allocation8 + $0x190] sm:$0xff]
    %v5010 = vld [vmem:[#allocation8 + $0x198] sm:$0xff]
    %v5011 = vld [vmem:[#allocation8 + $0x1a0] sm:$0xff]
    %v5012 = vld [vmem:[#allocation8 + $0x1a8] sm:$0xff]
    %v5013 = vld [vmem:[#allocation8 + $0x1b0] sm:$0xff]
    %v5014 = vld [vmem:[#allocation8 + $0x1b8] sm:$0xff]
    %v5015 = vld [vmem:[#allocation8 + $0x1c0] sm:$0xff]
    %v5016 = vld [vmem:[#allocation8 + $0x1c8] sm:$0xff]
    %v5017 = vld [vmem:[#allocation8 + $0x1d0] sm:$0xff]
    %v5018 = vld [vmem:[#allocation8 + $0x1d8] sm:$0xff]
    %v5019 = vld [vmem:[#allocation8 + $0x1e0] sm:$0xff]
    %v5020 = vld [vmem:[#allocation8 + $0x1e8] sm:$0xff]
    %v5021 = vld [vmem:[#allocation8 + $0x1f0] sm:$0xff]
    %v5022 = vld [vmem:[#allocation8 + $0x1f8] sm:$0xff]
    %v5023 = vld [vmem:[%s6] sm:$0xf]
    %v5024 = vld [vmem:[#allocation2] sm:$0xff]
    %v5025 = vld [vmem:[#allocation2 + $0x8] sm:$0xff]
    %v5026 = vld [vmem:[#allocation2 + $0x10] sm:$0xff]
    %v5027 = vld [vmem:[#allocation2 + $0x18] sm:$0xff]
    %v5028 = vld [vmem:[#allocation2 + $0x20] sm:$0xff]
    %v5029 = vld [vmem:[#allocation2 + $0x28] sm:$0xff]
    %v5030 = vld [vmem:[#allocation2 + $0x30] sm:$0xff]
    %v5031 = vld [vmem:[#allocation2 + $0x38] sm:$0xff]
    %v5033 = vlaneseq
    %v5034 = vshrl.u32 %v5033, 7
    %v5035 = vsub.s32 0, %v5034
    %v5036 = vrot.slane %v5023, %v5035
    %v5037 = vlaneseq
    %v5038 = vshrl.u32 %v5037, 7
    %v5039 = vsub.s32 1, %v5038
    %v5040 = vrot.slane %v5023, %v5039
    %v5041 = vlaneseq
    %v5042 = vshrl.u32 %v5041, 7
    %v5043 = vsub.s32 2, %v5042
    %v5044 = vrot.slane %v5023, %v5043
    %v5045 = vlaneseq
    %v5046 = vshrl.u32 %v5045, 7
    %v5047 = vsub.s32 3, %v5046
    %v5048 = vrot.slane %v5023, %v5047
    %5053 = vmatprep.subr.mxu0 %v4896
    %5054 = vmatpush1.msra.mxu0 %v4895
    %5055 = vmatprep.subr.mxu0 %v4900
    %5056 = vmatpush1.msra.mxu0 %v4899
    %5057 = vmatprep.subr.mxu0 %v4904
    %5058 = vmatpush1.msra.mxu0 %v4903
    %5059 = vmatprep.subr.mxu0 %v4908
    %5060 = vmatpush1.msra.mxu0 %v4907
    %5061 = vmatprep.subr.mxu0 %v4912
    %5062 = vmatpush1.msra.mxu0 %v4911
    %5063 = vmatprep.subr.mxu0 %v4916
    %5064 = vmatpush1.msra.mxu0 %v4915
    %5065 = vmatprep.subr.mxu0 %v4920
    %5066 = vmatpush1.msra.mxu0 %v4919
    %5067 = vmatprep.subr.mxu0 %v4924
    %5068 = vmatpush1.msra.mxu0 %v4923
    %5069 = vmatprep.subr.mxu0 %v4928
    %5070 = vmatpush1.msra.mxu0 %v4927
    %5071 = vmatprep.subr.mxu0 %v4932
    %5072 = vmatpush1.msra.mxu0 %v4931
    %5073 = vmatprep.subr.mxu0 %v4936
    %5074 = vmatpush1.msra.mxu0 %v4935
    %5075 = vmatprep.subr.mxu0 %v4940
    %5076 = vmatpush1.msra.mxu0 %v4939
    %5077 = vmatprep.subr.mxu0 %v4944
    %5078 = vmatpush1.msra.mxu0 %v4943
    %5079 = vmatprep.subr.mxu0 %v4948
    %5080 = vmatpush1.msra.mxu0 %v4947
    %5081 = vmatprep.subr.mxu0 %v4952
    %5082 = vmatpush1.msra.mxu0 %v4951
    %5083 = vmatprep.subr.mxu0 %v4956
    %5084 = vmatpush1.msra.mxu0 %v4955
    %5085 = vmatprep.subr.mxu0 0.0
    %5086 = vmatpush1.msra.mxu0 0.0
    %5087 = vmatprep.subr.mxu0 0.0
    %5088 = vmatpush1.msra.mxu0 0.0
    %5089 = vmatprep.subr.mxu0 0.0
    %5090 = vmatpush1.msra.mxu0 0.0
    %5091 = vmatprep.subr.mxu0 0.0
    %5092 = vmatpush1.msra.mxu0 0.0
    %5093 = vmatprep.subr.mxu0 0.0
    %5094 = vmatpush1.msra.mxu0 0.0
    %5095 = vmatprep.subr.mxu0 0.0
    %5096 = vmatpush1.msra.mxu0 0.0
    %5097 = vmatprep.subr.mxu0 0.0
    %5098 = vmatpush1.msra.mxu0 0.0
    %5099 = vmatprep.subr.mxu0 0.0
    %5100 = vmatpush1.msra.mxu0 0.0
    %5101 = vmatprep.subr.mxu0 0.0
    %5102 = vmatpush1.msra.mxu0 0.0
    %5103 = vmatprep.subr.mxu0 0.0
    %5104 = vmatpush1.msra.mxu0 0.0
    %5105 = vmatprep.subr.mxu0 0.0
    %5106 = vmatpush1.msra.mxu0 0.0
    %5107 = vmatprep.subr.mxu0 0.0
    %5108 = vmatpush1.msra.mxu0 0.0
    %5109 = vmatprep.subr.mxu0 0.0
    %5110 = vmatpush1.msra.mxu0 0.0
    %5111 = vmatprep.subr.mxu0 0.0
    %5112 = vmatpush1.msra.mxu0 0.0
    %5113 = vmatprep.subr.mxu0 0.0
    %5114 = vmatpush1.msra.mxu0 0.0
    %5115 = vmatprep.subr.mxu0 0.0
    %5116 = vmatpush1.msra.mxu0 0.0
    %5117 = vmatprep.mubr.f32.mxu0 0.0
    %5118 = vmatmul.mubr.f32.gmra.mrb[0].mxu0 %v5024
    %v5119 = vpop.f32.mrb[0].mxu0
    %v5120 = vadd.f32 %v5036, %v5119
    %v5121 = vpop.f32.mrb[0].mxu0
    %v5122 = vadd.f32 %v5040, %v5121
    %5123 = vmatprep.mubr.f32.mxu0 0.0
    %5124 = vmatmul.mubr.f32.gmra.mrb[0].mxu0 %v5025
    %v5125 = vpop.f32.mrb[0].mxu0
    %v5126 = vadd.f32 %v5036, %v5125
    %v5127 = vpop.f32.mrb[0].mxu0
    %v5128 = vadd.f32 %v5040, %v5127
    %5129 = vmatprep.mubr.f32.mxu0 0.0
    %5130 = vmatmul.mubr.f32.gmra.mrb[0].mxu0 %v5026
    %v5131 = vpop.f32.mrb[0].mxu0
    %v5132 = vadd.f32 %v5036, %v5131
    %v5133 = vpop.f32.mrb[0].mxu0
    %v5134 = vadd.f32 %v5040, %v5133
    %5135 = vmatprep.mubr.f32.mxu0 0.0
    %5136 = vmatmul.mubr.f32.gmra.mrb[0].mxu0 %v5027
    %v5137 = vpop.f32.mrb[0].mxu0
    %v5138 = vadd.f32 %v5036, %v5137
    %v5139 = vpop.f32.mrb[0].mxu0
    %v5140 = vadd.f32 %v5040, %v5139
    %5141 = vmatprep.mubr.f32.mxu0 0.0
    %5142 = vmatmul.mubr.f32.gmra.mrb[0].mxu0 %v5028
    %v5143 = vpop.f32.mrb[0].mxu0
    %v5144 = vadd.f32 %v5036, %v5143
    %v5145 = vpop.f32.mrb[0].mxu0
    %v5146 = vadd.f32 %v5040, %v5145
    %5147 = vmatprep.mubr.f32.mxu0 0.0
    %5148 = vmatmul.mubr.f32.gmra.mrb[0].mxu0 %v5029
    %v5149 = vpop.f32.mrb[0].mxu0
    %v5150 = vadd.f32 %v5036, %v5149
    %v5151 = vpop.f32.mrb[0].mxu0
    %v5152 = vadd.f32 %v5040, %v5151
    %5153 = vmatprep.mubr.f32.mxu0 0.0
    %5154 = vmatmul.mubr.f32.gmra.mrb[0].mxu0 %v5030
    %v5155 = vpop.f32.mrb[0].mxu0
    %v5156 = vadd.f32 %v5036, %v5155
    %v5157 = vpop.f32.mrb[0].mxu0
    %v5158 = vadd.f32 %v5040, %v5157
    %5159 = vmatprep.mubr.f32.mxu0 0.0
    %5160 = vmatmul.mubr.f32.gmra.mrb[0].mxu0 %v5031
    %v5161 = vpop.f32.mrb[0].mxu0
    %v5162 = vadd.f32 %v5036, %v5161
    %v5163 = vpop.f32.mrb[0].mxu0
    %v5164 = vadd.f32 %v5040, %v5163
    %5165 = vdwg.mxu0
    %5166 = vmatprep.subr.mxu0 %v4898
    %5167 = vmatpush1.msra.mxu0 %v4897
    %5168 = vmatprep.subr.mxu0 %v4902
    %5169 = vmatpush1.msra.mxu0 %v4901
    %5170 = vmatprep.subr.mxu0 %v4906
    %5171 = vmatpush1.msra.mxu0 %v4905
    %5172 = vmatprep.subr.mxu0 %v4910
    %5173 = vmatpush1.msra.mxu0 %v4909
    %5174 = vmatprep.subr.mxu0 %v4914
    %5175 = vmatpush1.msra.mxu0 %v4913
    %5176 = vmatprep.subr.mxu0 %v4918
    %5177 = vmatpush1.msra.mxu0 %v4917
    %5178 = vmatprep.subr.mxu0 %v4922
    %5179 = vmatpush1.msra.mxu0 %v4921
    %5180 = vmatprep.subr.mxu0 %v4926
    %5181 = vmatpush1.msra.mxu0 %v4925
    %5182 = vmatprep.subr.mxu0 %v4930
    %5183 = vmatpush1.msra.mxu0 %v4929
    %5184 = vmatprep.subr.mxu0 %v4934
    %5185 = vmatpush1.msra.mxu0 %v4933
    %5186 = vmatprep.subr.mxu0 %v4938
    %5187 = vmatpush1.msra.mxu0 %v4937
    %5188 = vmatprep.subr.mxu0 %v4942
    %5189 = vmatpush1.msra.mxu0 %v4941
    %5190 = vmatprep.subr.mxu0 %v4946
    %5191 = vmatpush1.msra.mxu0 %v4945
    %5192 = vmatprep.subr.mxu0 %v4950
    %5193 = vmatpush1.msra.mxu0 %v4949
    %5194 = vmatprep.subr.mxu0 %v4954
    %5195 = vmatpush1.msra.mxu0 %v4953
    %5196 = vmatprep.subr.mxu0 %v4958
    %5197 = vmatpush1.msra.mxu0 %v4957
    %5198 = vmatprep.subr.mxu0 0.0
    %5199 = vmatpush1.msra.mxu0 0.0
    %5200 = vmatprep.subr.mxu0 0.0
    %5201 = vmatpush1.msra.mxu0 0.0
    %5202 = vmatprep.subr.mxu0 0.0
    %5203 = vmatpush1.msra.mxu0 0.0
    %5204 = vmatprep.subr.mxu0 0.0
    %5205 = vmatpush1.msra.mxu0 0.0
    %5206 = vmatprep.subr.mxu0 0.0
    %5207 = vmatpush1.msra.mxu0 0.0
    %5208 = vmatprep.subr.mxu0 0.0
    %5209 = vmatpush1.msra.mxu0 0.0
    %5210 = vmatprep.subr.mxu0 0.0
    %5211 = vmatpush1.msra.mxu0 0.0
    %5212 = vmatprep.subr.mxu0 0.0
    %5213 = vmatpush1.msra.mxu0 0.0
    %5214 = vmatprep.subr.mxu0 0.0
    %5215 = vmatpush1.msra.mxu0 0.0
    %5216 = vmatprep.subr.mxu0 0.0
    %5217 = vmatpush1.msra.mxu0 0.0
    %5218 = vmatprep.subr.mxu0 0.0
    %5219 = vmatpush1.msra.mxu0 0.0
    %5220 = vmatprep.subr.mxu0 0.0
    %5221 = vmatpush1.msra.mxu0 0.0
    %5222 = vmatprep.subr.mxu0 0.0
    %5223 = vmatpush1.msra.mxu0 0.0
    %5224 = vmatprep.subr.mxu0 0.0
    %5225 = vmatpush1.msra.mxu0 0.0
    %5226 = vmatprep.subr.mxu0 0.0
    %5227 = vmatpush1.msra.mxu0 0.0
    %5228 = vmatprep.subr.mxu0 0.0
    %5229 = vmatpush1.msra.mxu0 0.0
    %5230 = vmatprep.mubr.f32.mxu0 0.0
    %5231 = vmatmul.mubr.f32.gmra.mrb[0].mxu0 %v5024
    %v5232 = vpop.f32.mrb[0].mxu0
    %v5233 = vadd.f32 %v5044, %v5232
    %v5234 = vpop.f32.mrb[0].mxu0
    %v5235 = vadd.f32 %v5048, %v5234
    %5236 = vmatprep.mubr.f32.mxu0 0.0
    %5237 = vmatmul.mubr.f32.gmra.mrb[0].mxu0 %v5025
    %v5238 = vpop.f32.mrb[0].mxu0
    %v5239 = vadd.f32 %v5044, %v5238
    %v5240 = vpop.f32.mrb[0].mxu0
    %v5241 = vadd.f32 %v5048, %v5240
    %5242 = vmatprep.mubr.f32.mxu0 0.0
    %5243 = vmatmul.mubr.f32.gmra.mrb[0].mxu0 %v5026
    %v5244 = vpop.f32.mrb[0].mxu0
    %v5245 = vadd.f32 %v5044, %v5244
    %v5246 = vpop.f32.mrb[0].mxu0
    %v5247 = vadd.f32 %v5048, %v5246
    %5248 = vmatprep.mubr.f32.mxu0 0.0
    %5249 = vmatmul.mubr.f32.gmra.mrb[0].mxu0 %v5027
    %v5250 = vpop.f32.mrb[0].mxu0
    %v5251 = vadd.f32 %v5044, %v5250
    %v5252 = vpop.f32.mrb[0].mxu0
    %v5253 = vadd.f32 %v5048, %v5252
    %5254 = vmatprep.mubr.f32.mxu0 0.0
    %5255 = vmatmul.mubr.f32.gmra.mrb[0].mxu0 %v5028
    %v5256 = vpop.f32.mrb[0].mxu0
    %v5257 = vadd.f32 %v5044, %v5256
    %v5258 = vpop.f32.mrb[0].mxu0
    %v5259 = vadd.f32 %v5048, %v5258
    %5260 = vmatprep.mubr.f32.mxu0 0.0
    %5261 = vmatmul.mubr.f32.gmra.mrb[0].mxu0 %v5029
    %v5262 = vpop.f32.mrb[0].mxu0
    %v5263 = vadd.f32 %v5044, %v5262
    %v5264 = vpop.f32.mrb[0].mxu0
    %v5265 = vadd.f32 %v5048, %v5264
    %5266 = vmatprep.mubr.f32.mxu0 0.0
    %5267 = vmatmul.mubr.f32.gmra.mrb[0].mxu0 %v5030
    %v5268 = vpop.f32.mrb[0].mxu0
    %v5269 = vadd.f32 %v5044, %v5268
    %v5270 = vpop.f32.mrb[0].mxu0
    %v5271 = vadd.f32 %v5048, %v5270
    %5272 = vmatprep.mubr.f32.mxu0 0.0
    %5273 = vmatmul.mubr.f32.gmra.mrb[0].mxu0 %v5031
    %v5274 = vpop.f32.mrb[0].mxu0
    %v5275 = vadd.f32 %v5044, %v5274
    %v5276 = vpop.f32.mrb[0].mxu0
    %v5277 = vadd.f32 %v5048, %v5276
    %5278 = vdwg.mxu0
    %5279 = vst [vmem:[#allocation3] sm:$0xff] %v5120
    %5280 = vst [vmem:[#allocation3 + $0x8] sm:$0xff] %v5122
    %5281 = vst [vmem:[#allocation3 + $0x10] sm:$0xff] %v5233
    %5282 = vst [vmem:[#allocation3 + $0x18] sm:$0xff] %v5235
    %5283 = vst [vmem:[#allocation3 + $0x20] sm:$0xff] %v5126
    %5284 = vst [vmem:[#allocation3 + $0x28] sm:$0xff] %v5128
    %5285 = vst [vmem:[#allocation3 + $0x30] sm:$0xff] %v5239
    %5286 = vst [vmem:[#allocation3 + $0x38] sm:$0xff] %v5241
    %5287 = vst [vmem:[#allocation3 + $0x40] sm:$0xff] %v5132
    %5288 = vst [vmem:[#allocation3 + $0x48] sm:$0xff] %v5134
    %5289 = vst [vmem:[#allocation3 + $0x50] sm:$0xff] %v5245
    %5290 = vst [vmem:[#allocation3 + $0x58] sm:$0xff] %v5247
    %5291 = vst [vmem:[#allocation3 + $0x60] sm:$0xff] %v5138
    %5292 = vst [vmem:[#allocation3 + $0x68] sm:$0xff] %v5140
    %5293 = vst [vmem:[#allocation3 + $0x70] sm:$0xff] %v5251
    %5294 = vst [vmem:[#allocation3 + $0x78] sm:$0xff] %v5253
    %5295 = vst [vmem:[#allocation3 + $0x80] sm:$0xff] %v5144
    %5296 = vst [vmem:[#allocation3 + $0x88] sm:$0xff] %v5146
    %5297 = vst [vmem:[#allocation3 + $0x90] sm:$0xff] %v5257
    %5298 = vst [vmem:[#allocation3 + $0x98] sm:$0xff] %v5259
    %5299 = vst [vmem:[#allocation3 + $0xa0] sm:$0xff] %v5150
    %5300 = vst [vmem:[#allocation3 + $0xa8] sm:$0xff] %v5152
    %5301 = vst [vmem:[#allocation3 + $0xb0] sm:$0xff] %v5263
    %5302 = vst [vmem:[#allocation3 + $0xb8] sm:$0xff] %v5265
    %5303 = vst [vmem:[#allocation3 + $0xc0] sm:$0xff] %v5156
    %5304 = vst [vmem:[#allocation3 + $0xc8] sm:$0xff] %v5158
    %5305 = vst [vmem:[#allocation3 + $0xd0] sm:$0xff] %v5269
    %5306 = vst [vmem:[#allocation3 + $0xd8] sm:$0xff] %v5271
    %5307 = vst [vmem:[#allocation3 + $0xe0] sm:$0xff] %v5162
    %5308 = vst [vmem:[#allocation3 + $0xe8] sm:$0xff] %v5164
    %5309 = vst [vmem:[#allocation3 + $0xf0] sm:$0xff] %v5275
    %5310 = vst [vmem:[#allocation3 + $0xf8] sm:$0xff] %v5277
    %v5311 = vld [vmem:[#allocation3] ss:$8 sm:$0xf]
    %v5312 = vld [vmem:[%s475] ss:$8 sm:$0xf]
    %v5313 = vld [vmem:[%s477] ss:$8 sm:$0xf]
    %v5314 = vld [vmem:[%s479] ss:$8 sm:$0xf]
    %v5315 = vld [vmem:[%s481] ss:$8 sm:$0xf]
    %v5316 = vld [vmem:[%s483] ss:$8 sm:$0xf]
    %v5317 = vld [vmem:[%s485] ss:$8 sm:$0xf]
    %v5318 = vld [vmem:[%s487] ss:$8 sm:$0xf]
    %5319 = vmatprep.subr.mxu0 %v4960
    %5320 = vmatpush1.msra.mxu0 %v4959
    %5321 = vmatprep.subr.mxu0 %v4964
    %5322 = vmatpush1.msra.mxu0 %v4963
    %5323 = vmatprep.subr.mxu0 %v4968
    %5324 = vmatpush1.msra.mxu0 %v4967
    %5325 = vmatprep.subr.mxu0 %v4972
    %5326 = vmatpush1.msra.mxu0 %v4971
    %5327 = vmatprep.subr.mxu0 %v4976
    %5328 = vmatpush1.msra.mxu0 %v4975
    %5329 = vmatprep.subr.mxu0 %v4980
    %5330 = vmatpush1.msra.mxu0 %v4979
    %5331 = vmatprep.subr.mxu0 %v4984
    %5332 = vmatpush1.msra.mxu0 %v4983
    %5333 = vmatprep.subr.mxu0 %v4988
    %5334 = vmatpush1.msra.mxu0 %v4987
    %5335 = vmatprep.subr.mxu0 %v4992
    %5336 = vmatpush1.msra.mxu0 %v4991
    %5337 = vmatprep.subr.mxu0 %v4996
    %5338 = vmatpush1.msra.mxu0 %v4995
    %5339 = vmatprep.subr.mxu0 %v5000
    %5340 = vmatpush1.msra.mxu0 %v4999
    %5341 = vmatprep.subr.mxu0 %v5004
    %5342 = vmatpush1.msra.mxu0 %v5003
    %5343 = vmatprep.subr.mxu0 %v5008
    %5344 = vmatpush1.msra.mxu0 %v5007
    %5345 = vmatprep.subr.mxu0 %v5012
    %5346 = vmatpush1.msra.mxu0 %v5011
    %5347 = vmatprep.subr.mxu0 %v5016
    %5348 = vmatpush1.msra.mxu0 %v5015
    %5349 = vmatprep.subr.mxu0 %v5020
    %5350 = vmatpush1.msra.mxu0 %v5019
    %5351 = vmatprep.subr.mxu0 0.0
    %5352 = vmatpush1.msra.mxu0 0.0
    %5353 = vmatprep.subr.mxu0 0.0
    %5354 = vmatpush1.msra.mxu0 0.0
    %5355 = vmatprep.subr.mxu0 0.0
    %5356 = vmatpush1.msra.mxu0 0.0
    %5357 = vmatprep.subr.mxu0 0.0
    %5358 = vmatpush1.msra.mxu0 0.0
    %5359 = vmatprep.subr.mxu0 0.0
    %5360 = vmatpush1.msra.mxu0 0.0
    %5361 = vmatprep.subr.mxu0 0.0
    %5362 = vmatpush1.msra.mxu0 0.0
    %5363 = vmatprep.subr.mxu0 0.0
    %5364 = vmatpush1.msra.mxu0 0.0
    %5365 = vmatprep.subr.mxu0 0.0
    %5366 = vmatpush1.msra.mxu0 0.0
    %5367 = vmatprep.subr.mxu0 0.0
    %5368 = vmatpush1.msra.mxu0 0.0
    %5369 = vmatprep.subr.mxu0 0.0
    %5370 = vmatpush1.msra.mxu0 0.0
    %5371 = vmatprep.subr.mxu0 0.0
    %5372 = vmatpush1.msra.mxu0 0.0
    %5373 = vmatprep.subr.mxu0 0.0
    %5374 = vmatpush1.msra.mxu0 0.0
    %5375 = vmatprep.subr.mxu0 0.0
    %5376 = vmatpush1.msra.mxu0 0.0
    %5377 = vmatprep.subr.mxu0 0.0
    %5378 = vmatpush1.msra.mxu0 0.0
    %5379 = vmatprep.subr.mxu0 0.0
    %5380 = vmatpush1.msra.mxu0 0.0
    %5381 = vmatprep.subr.mxu0 0.0
    %5382 = vmatpush1.msra.mxu0 0.0
    %5383 = vmatprep.mubr.f32.mxu0 0.0
    %5384 = vmatmul.mubr.f32.gmra.mrb[0].mxu0 0.0
    %v5385 = vpop.f32.mrb[0].mxu0
    %v5386 = vadd.f32 0.0, %v5385
    %v5387 = vpop.f32.mrb[0].mxu0
    %v5388 = vadd.f32 0.0, %v5387
    %5389 = vdwg.mxu0
    %5390 = vmatprep.subr.mxu0 %v4962
    %5391 = vmatpush1.msra.mxu0 %v4961
    %5392 = vmatprep.subr.mxu0 %v4966
    %5393 = vmatpush1.msra.mxu0 %v4965
    %5394 = vmatprep.subr.mxu0 %v4970
    %5395 = vmatpush1.msra.mxu0 %v4969
    %5396 = vmatprep.subr.mxu0 %v4974
    %5397 = vmatpush1.msra.mxu0 %v4973
    %5398 = vmatprep.subr.mxu0 %v4978
    %5399 = vmatpush1.msra.mxu0 %v4977
    %5400 = vmatprep.subr.mxu0 %v4982
    %5401 = vmatpush1.msra.mxu0 %v4981
    %5402 = vmatprep.subr.mxu0 %v4986
    %5403 = vmatpush1.msra.mxu0 %v4985
    %5404 = vmatprep.subr.mxu0 %v4990
    %5405 = vmatpush1.msra.mxu0 %v4989
    %5406 = vmatprep.subr.mxu0 %v4994
    %5407 = vmatpush1.msra.mxu0 %v4993
    %5408 = vmatprep.subr.mxu0 %v4998
    %5409 = vmatpush1.msra.mxu0 %v4997
    %5410 = vmatprep.subr.mxu0 %v5002
    %5411 = vmatpush1.msra.mxu0 %v5001
    %5412 = vmatprep.subr.mxu0 %v5006
    %5413 = vmatpush1.msra.mxu0 %v5005
    %5414 = vmatprep.subr.mxu0 %v5010
    %5415 = vmatpush1.msra.mxu0 %v5009
    %5416 = vmatprep.subr.mxu0 %v5014
    %5417 = vmatpush1.msra.mxu0 %v5013
    %5418 = vmatprep.subr.mxu0 %v5018
    %5419 = vmatpush1.msra.mxu0 %v5017
    %5420 = vmatprep.subr.mxu0 %v5022
    %5421 = vmatpush1.msra.mxu0 %v5021
    %5422 = vmatprep.subr.mxu0 0.0
    %5423 = vmatpush1.msra.mxu0 0.0
    %5424 = vmatprep.subr.mxu0 0.0
    %5425 = vmatpush1.msra.mxu0 0.0
    %5426 = vmatprep.subr.mxu0 0.0
    %5427 = vmatpush1.msra.mxu0 0.0
    %5428 = vmatprep.subr.mxu0 0.0
    %5429 = vmatpush1.msra.mxu0 0.0
    %5430 = vmatprep.subr.mxu0 0.0
    %5431 = vmatpush1.msra.mxu0 0.0
    %5432 = vmatprep.subr.mxu0 0.0
    %5433 = vmatpush1.msra.mxu0 0.0
    %5434 = vmatprep.subr.mxu0 0.0
    %5435 = vmatpush1.msra.mxu0 0.0
    %5436 = vmatprep.subr.mxu0 0.0
    %5437 = vmatpush1.msra.mxu0 0.0
    %5438 = vmatprep.subr.mxu0 0.0
    %5439 = vmatpush1.msra.mxu0 0.0
    %5440 = vmatprep.subr.mxu0 0.0
    %5441 = vmatpush1.msra.mxu0 0.0
    %5442 = vmatprep.subr.mxu0 0.0
    %5443 = vmatpush1.msra.mxu0 0.0
    %5444 = vmatprep.subr.mxu0 0.0
    %5445 = vmatpush1.msra.mxu0 0.0
    %5446 = vmatprep.subr.mxu0 0.0
    %5447 = vmatpush1.msra.mxu0 0.0
    %5448 = vmatprep.subr.mxu0 0.0
    %5449 = vmatpush1.msra.mxu0 0.0
    %5450 = vmatprep.subr.mxu0 0.0
    %5451 = vmatpush1.msra.mxu0 0.0
    %5452 = vmatprep.subr.mxu0 0.0
    %5453 = vmatpush1.msra.mxu0 0.0
    %5454 = vmatprep.mubr.f32.mxu0 0.0
    %5455 = vmatmul.mubr.f32.gmra.mrb[0].mxu0 0.0
    %v5456 = vpop.f32.mrb[0].mxu0
    %v5457 = vadd.f32 0.0, %v5456
    %v5458 = vpop.f32.mrb[0].mxu0
    %v5459 = vadd.f32 0.0, %v5458
    %5460 = vdwg.mxu0
    %v5465 = vcombine.low %v5386, %v5388
    %v5466 = vcombine.high %v5386, %v5388
    %v5467 = vcombine.low %v5457, %v5459
    %v5468 = vcombine.high %v5457, %v5459
    %v5470 = vunpack.c.l.s4 1966171168
    %v5471 = vunpack.c.0.s8 %v5470
    %v5472 = vlaneseq
    %v5473 = vshrl.u32 %v5472, 7
    %v5474 = vsub.s32 %v5471, %v5473
    %v5475 = vrot.slane %v5465, %v5474
    %v5477 = vunpack.c.l.s4 1966171168
    %v5478 = vunpack.c.0.s8 %v5477
    %v5479 = vlaneseq
    %v5480 = vshrl.u32 %v5479, 7
    %v5481 = vsub.s32 %v5478, %v5480
    %v5482 = vrot.slane %v5466, %v5481
    %v5484 = vunpack.c.l.s4 1966171168
    %v5485 = vunpack.c.0.s8 %v5484
    %v5486 = vlaneseq
    %v5487 = vshrl.u32 %v5486, 7
    %v5488 = vsub.s32 %v5485, %v5487
    %v5489 = vrot.slane %v5467, %v5488
    %v5491 = vunpack.c.l.s4 1966171168
    %v5492 = vunpack.c.0.s8 %v5491
    %v5493 = vlaneseq
    %v5494 = vshrl.u32 %v5493, 7
    %v5495 = vsub.s32 %v5492, %v5494
    %v5496 = vrot.slane %v5468, %v5495
    %v5497 = vcombine.low %v5475, %v5489
    %v5498 = vcombine.high %v5475, %v5489
    %v5499 = vcombine.low %v5482, %v5496
    %v5500 = vcombine.high %v5482, %v5496
    %v5502 = vunpack.c.l.s4 1966171168
    %v5503 = vunpack.c.0.s8 %v5502
    %v5504 = vlaneseq
    %v5505 = vshrl.u32 %v5504, 7
    %v5506 = vsub.s32 %v5503, %v5505
    %v5507 = vrot.slane %v5497, %v5506
    %v5509 = vunpack.c.l.s4 1966171168
    %v5510 = vunpack.c.0.s8 %v5509
    %v5511 = vlaneseq
    %v5512 = vshrl.u32 %v5511, 7
    %v5513 = vsub.s32 %v5510, %v5512
    %v5514 = vrot.slane %v5499, %v5513
    %v5516 = vunpack.c.l.s4 1966171168
    %v5517 = vunpack.c.0.s8 %v5516
    %v5518 = vlaneseq
    %v5519 = vshrl.u32 %v5518, 7
    %v5520 = vsub.s32 %v5517, %v5519
    %v5521 = vrot.slane %v5498, %v5520
    %v5523 = vunpack.c.l.s4 1966171168
    %v5524 = vunpack.c.0.s8 %v5523
    %v5525 = vlaneseq
    %v5526 = vshrl.u32 %v5525, 7
    %v5527 = vsub.s32 %v5524, %v5526
    %v5528 = vrot.slane %v5500, %v5527
    %v5529 = vcombine.high %v5507, %v5507
    %v5530 = vcombine.high %v5514, %v5514
    %v5531 = vcombine.high %v5521, %v5521
    %v5532 = vcombine.high %v5528, %v5528
    %v5541 = vadd.f32 %v5311, %v5507
    %v5542 = vadd.f32 %v5312, %v5521
    %v5543 = vadd.f32 %v5313, %v5529
    %v5544 = vadd.f32 %v5314, %v5531
    %v5545 = vadd.f32 %v5315, %v5514
    %v5546 = vadd.f32 %v5316, %v5528
    %v5547 = vadd.f32 %v5317, %v5530
    %v5548 = vadd.f32 %v5318, %v5532
    %v5557 = vrot.slane %v5541, 1
    %v5558 = vrot.slane %v5542, 1
    %v5559 = vrot.slane %v5543, 1
    %v5560 = vrot.slane %v5544, 1
    %v5561 = vrot.slane %v5545, 1
    %v5562 = vrot.slane %v5546, 1
    %v5563 = vrot.slane %v5547, 1
    %v5564 = vrot.slane %v5548, 1
    %v5573 = vxor.u32 %v5557, 2147483648
    %v5574 = vxor.u32 %v5558, 2147483648
    %v5575 = vxor.u32 %v5559, 2147483648
    %v5576 = vxor.u32 %v5560, 2147483648
    %v5577 = vxor.u32 %v5561, 2147483648
    %v5578 = vxor.u32 %v5562, 2147483648
    %v5579 = vxor.u32 %v5563, 2147483648
    %v5580 = vxor.u32 %v5564, 2147483648
    %v5581 = vmul.f32 %v5573, 1.442695
    %v5582 = vpow.pop %v5581
    %v5583 = vmul.f32 %v5574, 1.442695
    %v5584 = vpow.pop %v5583
    %v5585 = vmul.f32 %v5575, 1.442695
    %v5586 = vpow.pop %v5585
    %v5587 = vmul.f32 %v5576, 1.442695
    %v5588 = vpow.pop %v5587
    %v5589 = vmul.f32 %v5577, 1.442695
    %v5590 = vpow.pop %v5589
    %v5591 = vmul.f32 %v5578, 1.442695
    %v5592 = vpow.pop %v5591
    %v5593 = vmul.f32 %v5579, 1.442695
    %v5594 = vpow.pop %v5593
    %v5595 = vmul.f32 %v5580, 1.442695
    %v5596 = vpow.pop %v5595
    %v5597 = vadd.f32 %v5582, 1.0
    %v5598 = vadd.f32 %v5584, 1.0
    %v5599 = vadd.f32 %v5586, 1.0
    %v5600 = vadd.f32 %v5588, 1.0
    %v5601 = vadd.f32 %v5590, 1.0
    %v5602 = vadd.f32 %v5592, 1.0
    %v5603 = vadd.f32 %v5594, 1.0
    %v5604 = vadd.f32 %v5596, 1.0
    %v5605 = vrcp.pop %v5597
    %v5606 = vmul.f32 1.0, %v5605
    %v5607 = vrcp.pop %v5598
    %v5608 = vmul.f32 1.0, %v5607
    %v5609 = vrcp.pop %v5599
    %v5610 = vmul.f32 1.0, %v5609
    %v5611 = vrcp.pop %v5600
    %v5612 = vmul.f32 1.0, %v5611
    %v5613 = vrcp.pop %v5601
    %v5614 = vmul.f32 1.0, %v5613
    %v5615 = vrcp.pop %v5602
    %v5616 = vmul.f32 1.0, %v5615
    %v5617 = vrcp.pop %v5603
    %v5618 = vmul.f32 1.0, %v5617
    %v5619 = vrcp.pop %v5604
    %v5620 = vmul.f32 1.0, %v5619
    %v5621 = vmul.f32 %v5606, 0.0
    %v5622 = vmul.f32 %v5608, 0.0
    %v5623 = vmul.f32 %v5610, 0.0
    %v5624 = vmul.f32 %v5612, 0.0
    %v5625 = vmul.f32 %v5614, 0.0
    %v5626 = vmul.f32 %v5616, 0.0
    %v5627 = vmul.f32 %v5618, 0.0
    %v5628 = vmul.f32 %v5620, 0.0
    %v5629 = vxor.u32 %v5541, 2147483648
    %v5630 = vxor.u32 %v5542, 2147483648
    %v5631 = vxor.u32 %v5543, 2147483648
    %v5632 = vxor.u32 %v5544, 2147483648
    %v5633 = vxor.u32 %v5545, 2147483648
    %v5634 = vxor.u32 %v5546, 2147483648
    %v5635 = vxor.u32 %v5547, 2147483648
    %v5636 = vxor.u32 %v5548, 2147483648
    %v5637 = vmul.f32 %v5629, 1.442695
    %v5638 = vpow.pop %v5637
    %v5639 = vmul.f32 %v5630, 1.442695
    %v5640 = vpow.pop %v5639
    %v5641 = vmul.f32 %v5631, 1.442695
    %v5642 = vpow.pop %v5641
    %v5643 = vmul.f32 %v5632, 1.442695
    %v5644 = vpow.pop %v5643
    %v5645 = vmul.f32 %v5633, 1.442695
    %v5646 = vpow.pop %v5645
    %v5647 = vmul.f32 %v5634, 1.442695
    %v5648 = vpow.pop %v5647
    %v5649 = vmul.f32 %v5635, 1.442695
    %v5650 = vpow.pop %v5649
    %v5651 = vmul.f32 %v5636, 1.442695
    %v5652 = vpow.pop %v5651
    %v5653 = vadd.f32 %v5638, 1.0
    %v5654 = vadd.f32 %v5640, 1.0
    %v5655 = vadd.f32 %v5642, 1.0
    %v5656 = vadd.f32 %v5644, 1.0
    %v5657 = vadd.f32 %v5646, 1.0
    %v5658 = vadd.f32 %v5648, 1.0
    %v5659 = vadd.f32 %v5650, 1.0
    %v5660 = vadd.f32 %v5652, 1.0
    %v5661 = vrcp.pop %v5653
    %v5662 = vmul.f32 1.0, %v5661
    %v5663 = vrcp.pop %v5654
    %v5664 = vmul.f32 1.0, %v5663
    %v5665 = vrcp.pop %v5655
    %v5666 = vmul.f32 1.0, %v5665
    %v5667 = vrcp.pop %v5656
    %v5668 = vmul.f32 1.0, %v5667
    %v5669 = vrcp.pop %v5657
    %v5670 = vmul.f32 1.0, %v5669
    %v5671 = vrcp.pop %v5658
    %v5672 = vmul.f32 1.0, %v5671
    %v5673 = vrcp.pop %v5659
    %v5674 = vmul.f32 1.0, %v5673
    %v5675 = vrcp.pop %v5660
    %v5676 = vmul.f32 1.0, %v5675
    %v5677 = vrot.slane %v5541, 2
    %v5678 = vrot.slane %v5542, 2
    %v5679 = vrot.slane %v5543, 2
    %v5680 = vrot.slane %v5544, 2
    %v5681 = vrot.slane %v5545, 2
    %v5682 = vrot.slane %v5546, 2
    %v5683 = vrot.slane %v5547, 2
    %v5684 = vrot.slane %v5548, 2
    %v5693 = vtanh.pop %v5677
    %v5694 = vtanh.pop %v5678
    %v5695 = vtanh.pop %v5679
    %v5696 = vtanh.pop %v5680
    %v5697 = vtanh.pop %v5681
    %v5698 = vtanh.pop %v5682
    %v5699 = vtanh.pop %v5683
    %v5700 = vtanh.pop %v5684
    %v5701 = vmul.f32 %v5662, %v5693
    %v5702 = vmul.f32 %v5664, %v5694
    %v5703 = vmul.f32 %v5666, %v5695
    %v5704 = vmul.f32 %v5668, %v5696
    %v5705 = vmul.f32 %v5670, %v5697
    %v5706 = vmul.f32 %v5672, %v5698
    %v5707 = vmul.f32 %v5674, %v5699
    %v5708 = vmul.f32 %v5676, %v5700
    %v5709 = vadd.f32 %v5621, %v5701
    %v5710 = vadd.f32 %v5622, %v5702
    %v5711 = vadd.f32 %v5623, %v5703
    %v5712 = vadd.f32 %v5624, %v5704
    %v5713 = vadd.f32 %v5625, %v5705
    %v5714 = vadd.f32 %v5626, %v5706
    %v5715 = vadd.f32 %v5627, %v5707
    %v5716 = vadd.f32 %v5628, %v5708
    %v5717 = vrot.slane %v5541, 3
    %v5718 = vrot.slane %v5542, 3
    %v5719 = vrot.slane %v5543, 3
    %v5720 = vrot.slane %v5544, 3
    %v5721 = vrot.slane %v5545, 3
    %v5722 = vrot.slane %v5546, 3
    %v5723 = vrot.slane %v5547, 3
    %v5724 = vrot.slane %v5548, 3
    %v5733 = vxor.u32 %v5717, 2147483648
    %v5734 = vxor.u32 %v5718, 2147483648
    %v5735 = vxor.u32 %v5719, 2147483648
    %v5736 = vxor.u32 %v5720, 2147483648
    %v5737 = vxor.u32 %v5721, 2147483648
    %v5738 = vxor.u32 %v5722, 2147483648
    %v5739 = vxor.u32 %v5723, 2147483648
    %v5740 = vxor.u32 %v5724, 2147483648
    %v5741 = vmul.f32 %v5733, 1.442695
    %v5742 = vpow.pop %v5741
    %v5743 = vmul.f32 %v5734, 1.442695
    %v5744 = vpow.pop %v5743
    %v5745 = vmul.f32 %v5735, 1.442695
    %v5746 = vpow.pop %v5745
    %v5747 = vmul.f32 %v5736, 1.442695
    %v5748 = vpow.pop %v5747
    %v5749 = vmul.f32 %v5737, 1.442695
    %v5750 = vpow.pop %v5749
    %v5751 = vmul.f32 %v5738, 1.442695
    %v5752 = vpow.pop %v5751
    %v5753 = vmul.f32 %v5739, 1.442695
    %v5754 = vpow.pop %v5753
    %v5755 = vmul.f32 %v5740, 1.442695
    %v5756 = vpow.pop %v5755
    %v5757 = vadd.f32 %v5742, 1.0
    %v5758 = vadd.f32 %v5744, 1.0
    %v5759 = vadd.f32 %v5746, 1.0
    %v5760 = vadd.f32 %v5748, 1.0
    %v5761 = vadd.f32 %v5750, 1.0
    %v5762 = vadd.f32 %v5752, 1.0
    %v5763 = vadd.f32 %v5754, 1.0
    %v5764 = vadd.f32 %v5756, 1.0
    %v5765 = vrcp.pop %v5757
    %v5766 = vmul.f32 1.0, %v5765
    %v5767 = vrcp.pop %v5758
    %v5768 = vmul.f32 1.0, %v5767
    %v5769 = vrcp.pop %v5759
    %v5770 = vmul.f32 1.0, %v5769
    %v5771 = vrcp.pop %v5760
    %v5772 = vmul.f32 1.0, %v5771
    %v5773 = vrcp.pop %v5761
    %v5774 = vmul.f32 1.0, %v5773
    %v5775 = vrcp.pop %v5762
    %v5776 = vmul.f32 1.0, %v5775
    %v5777 = vrcp.pop %v5763
    %v5778 = vmul.f32 1.0, %v5777
    %v5779 = vrcp.pop %v5764
    %v5780 = vmul.f32 1.0, %v5779
    %v5781 = vtanh.pop %v5709
    %v5782 = vtanh.pop %v5710
    %v5783 = vtanh.pop %v5711
    %v5784 = vtanh.pop %v5712
    %v5785 = vtanh.pop %v5713
    %v5786 = vtanh.pop %v5714
    %v5787 = vtanh.pop %v5715
    %v5788 = vtanh.pop %v5716
    %v5789 = vmul.f32 %v5766, %v5781
    %v5790 = vmul.f32 %v5768, %v5782
    %v5791 = vmul.f32 %v5770, %v5783
    %v5792 = vmul.f32 %v5772, %v5784
    %v5793 = vmul.f32 %v5774, %v5785
    %v5794 = vmul.f32 %v5776, %v5786
    %v5795 = vmul.f32 %v5778, %v5787
    %v5796 = vmul.f32 %v5780, %v5788
    %v5797 = vld [vmem:[%s975] ss:$8 sm:$0xf]
    %v5798 = vld [vmem:[%s977] ss:$8 sm:$0xf]
    %v5799 = vld [vmem:[%s979] ss:$8 sm:$0xf]
    %v5800 = vld [vmem:[%s981] ss:$8 sm:$0xf]
    %v5801 = vld [vmem:[%s983] ss:$8 sm:$0xf]
    %v5802 = vld [vmem:[%s985] ss:$8 sm:$0xf]
    %v5803 = vld [vmem:[%s987] ss:$8 sm:$0xf]
    %v5804 = vld [vmem:[%s989] ss:$8 sm:$0xf]
    %v5813 = vcombine.low %v5789, %v5790
    %v5814 = vcombine.low %v5791, %v5792
    %v5815 = vcombine.low %v5793, %v5794
    %v5816 = vcombine.low %v5795, %v5796
    %v5818 = vunpack.c.l.s4 1966171168
    %v5819 = vunpack.c.0.s8 %v5818
    %v5820 = vlaneseq
    %v5821 = vshrl.u32 %v5820, 7
    %v5822 = vsub.s32 %v5819, %v5821
    %v5823 = vrot.slane %v5813, %v5822
    %v5825 = vunpack.c.l.s4 1966171168
    %v5826 = vunpack.c.0.s8 %v5825
    %v5827 = vlaneseq
    %v5828 = vshrl.u32 %v5827, 7
    %v5829 = vsub.s32 %v5826, %v5828
    %v5830 = vrot.slane %v5814, %v5829
    %v5832 = vunpack.c.l.s4 1966171168
    %v5833 = vunpack.c.0.s8 %v5832
    %v5834 = vlaneseq
    %v5835 = vshrl.u32 %v5834, 7
    %v5836 = vsub.s32 %v5833, %v5835
    %v5837 = vrot.slane %v5815, %v5836
    %v5839 = vunpack.c.l.s4 1966171168
    %v5840 = vunpack.c.0.s8 %v5839
    %v5841 = vlaneseq
    %v5842 = vshrl.u32 %v5841, 7
    %v5843 = vsub.s32 %v5840, %v5842
    %v5844 = vrot.slane %v5816, %v5843
    %v5845 = vcombine.low %v5823, %v5830
    %v5846 = vcombine.low %v5837, %v5844
    %v5848 = vunpack.c.l.s4 1966171168
    %v5849 = vunpack.c.0.s8 %v5848
    %v5850 = vlaneseq
    %v5851 = vshrl.u32 %v5850, 7
    %v5852 = vsub.s32 %v5849, %v5851
    %v5853 = vrot.slane %v5845, %v5852
    %v5855 = vunpack.c.l.s4 1966171168
    %v5856 = vunpack.c.0.s8 %v5855
    %v5857 = vlaneseq
    %v5858 = vshrl.u32 %v5857, 7
    %v5859 = vsub.s32 %v5856, %v5858
    %v5860 = vrot.slane %v5846, %v5859
    %v5861 = vcombine.low %v5853, %v5860
    %5863 = vmatprep.subr.mxu0 %v4960
    %5864 = vmatpush1.msra.mxu0 %v4959
    %5865 = vmatprep.subr.mxu0 %v4964
    %5866 = vmatpush1.msra.mxu0 %v4963
    %5867 = vmatprep.subr.mxu0 %v4968
    %5868 = vmatpush1.msra.mxu0 %v4967
    %5869 = vmatprep.subr.mxu0 %v4972
    %5870 = vmatpush1.msra.mxu0 %v4971
    %5871 = vmatprep.subr.mxu0 %v4976
    %5872 = vmatpush1.msra.mxu0 %v4975
    %5873 = vmatprep.subr.mxu0 %v4980
    %5874 = vmatpush1.msra.mxu0 %v4979
    %5875 = vmatprep.subr.mxu0 %v4984
    %5876 = vmatpush1.msra.mxu0 %v4983
    %5877 = vmatprep.subr.mxu0 %v4988
    %5878 = vmatpush1.msra.mxu0 %v4987
    %5879 = vmatprep.subr.mxu0 %v4992
    %5880 = vmatpush1.msra.mxu0 %v4991
    %5881 = vmatprep.subr.mxu0 %v4996
    %5882 = vmatpush1.msra.mxu0 %v4995
    %5883 = vmatprep.subr.mxu0 %v5000
    %5884 = vmatpush1.msra.mxu0 %v4999
    %5885 = vmatprep.subr.mxu0 %v5004
    %5886 = vmatpush1.msra.mxu0 %v5003
    %5887 = vmatprep.subr.mxu0 %v5008
    %5888 = vmatpush1.msra.mxu0 %v5007
    %5889 = vmatprep.subr.mxu0 %v5012
    %5890 = vmatpush1.msra.mxu0 %v5011
    %5891 = vmatprep.subr.mxu0 %v5016
    %5892 = vmatpush1.msra.mxu0 %v5015
    %5893 = vmatprep.subr.mxu0 %v5020
    %5894 = vmatpush1.msra.mxu0 %v5019
    %5895 = vmatprep.subr.mxu0 0.0
    %5896 = vmatpush1.msra.mxu0 0.0
    %5897 = vmatprep.subr.mxu0 0.0
    %5898 = vmatpush1.msra.mxu0 0.0
    %5899 = vmatprep.subr.mxu0 0.0
    %5900 = vmatpush1.msra.mxu0 0.0
    %5901 = vmatprep.subr.mxu0 0.0
    %5902 = vmatpush1.msra.mxu0 0.0
    %5903 = vmatprep.subr.mxu0 0.0
    %5904 = vmatpush1.msra.mxu0 0.0
    %5905 = vmatprep.subr.mxu0 0.0
    %5906 = vmatpush1.msra.mxu0 0.0
    %5907 = vmatprep.subr.mxu0 0.0
    %5908 = vmatpush1.msra.mxu0 0.0
    %5909 = vmatprep.subr.mxu0 0.0
    %5910 = vmatpush1.msra.mxu0 0.0
    %5911 = vmatprep.subr.mxu0 0.0
    %5912 = vmatpush1.msra.mxu0 0.0
    %5913 = vmatprep.subr.mxu0 0.0
    %5914 = vmatpush1.msra.mxu0 0.0
    %5915 = vmatprep.subr.mxu0 0.0
    %5916 = vmatpush1.msra.mxu0 0.0
    %5917 = vmatprep.subr.mxu0 0.0
    %5918 = vmatpush1.msra.mxu0 0.0
    %5919 = vmatprep.subr.mxu0 0.0
    %5920 = vmatpush1.msra.mxu0 0.0
    %5921 = vmatprep.subr.mxu0 0.0
    %5922 = vmatpush1.msra.mxu0 0.0
    %5923 = vmatprep.subr.mxu0 0.0
    %5924 = vmatpush1.msra.mxu0 0.0
    %5925 = vmatprep.subr.mxu0 0.0
    %5926 = vmatpush1.msra.mxu0 0.0
    %5927 = vmatprep.mubr.f32.mxu0 0.0
    %5928 = vmatmul.mubr.f32.gmra.mrb[0].mxu0 %v5861
    %v5929 = vpop.f32.mrb[0].mxu0
    %v5930 = vadd.f32 0.0, %v5929
    %v5931 = vpop.f32.mrb[0].mxu0
    %v5932 = vadd.f32 0.0, %v5931
    %5933 = vdwg.mxu0
    %5934 = vmatprep.subr.mxu0 %v4962
    %5935 = vmatpush1.msra.mxu0 %v4961
    %5936 = vmatprep.subr.mxu0 %v4966
    %5937 = vmatpush1.msra.mxu0 %v4965
    %5938 = vmatprep.subr.mxu0 %v4970
    %5939 = vmatpush1.msra.mxu0 %v4969
    %5940 = vmatprep.subr.mxu0 %v4974
    %5941 = vmatpush1.msra.mxu0 %v4973
    %5942 = vmatprep.subr.mxu0 %v4978
    %5943 = vmatpush1.msra.mxu0 %v4977
    %5944 = vmatprep.subr.mxu0 %v4982
    %5945 = vmatpush1.msra.mxu0 %v4981
    %5946 = vmatprep.subr.mxu0 %v4986
    %5947 = vmatpush1.msra.mxu0 %v4985
    %5948 = vmatprep.subr.mxu0 %v4990
    %5949 = vmatpush1.msra.mxu0 %v4989
    %5950 = vmatprep.subr.mxu0 %v4994
    %5951 = vmatpush1.msra.mxu0 %v4993
    %5952 = vmatprep.subr.mxu0 %v4998
    %5953 = vmatpush1.msra.mxu0 %v4997
    %5954 = vmatprep.subr.mxu0 %v5002
    %5955 = vmatpush1.msra.mxu0 %v5001
    %5956 = vmatprep.subr.mxu0 %v5006
    %5957 = vmatpush1.msra.mxu0 %v5005
    %5958 = vmatprep.subr.mxu0 %v5010
    %5959 = vmatpush1.msra.mxu0 %v5009
    %5960 = vmatprep.subr.mxu0 %v5014
    %5961 = vmatpush1.msra.mxu0 %v5013
    %5962 = vmatprep.subr.mxu0 %v5018
    %5963 = vmatpush1.msra.mxu0 %v5017
    %5964 = vmatprep.subr.mxu0 %v5022
    %5965 = vmatpush1.msra.mxu0 %v5021
    %5966 = vmatprep.subr.mxu0 0.0
    %5967 = vmatpush1.msra.mxu0 0.0
    %5968 = vmatprep.subr.mxu0 0.0
    %5969 = vmatpush1.msra.mxu0 0.0
    %5970 = vmatprep.subr.mxu0 0.0
    %5971 = vmatpush1.msra.mxu0 0.0
    %5972 = vmatprep.subr.mxu0 0.0
    %5973 = vmatpush1.msra.mxu0 0.0
    %5974 = vmatprep.subr.mxu0 0.0
    %5975 = vmatpush1.msra.mxu0 0.0
    %5976 = vmatprep.subr.mxu0 0.0
    %5977 = vmatpush1.msra.mxu0 0.0
    %5978 = vmatprep.subr.mxu0 0.0
    %5979 = vmatpush1.msra.mxu0 0.0
    %5980 = vmatprep.subr.mxu0 0.0
    %5981 = vmatpush1.msra.mxu0 0.0
    %5982 = vmatprep.subr.mxu0 0.0
    %5983 = vmatpush1.msra.mxu0 0.0
    %5984 = vmatprep.subr.mxu0 0.0
    %5985 = vmatpush1.msra.mxu0 0.0
    %5986 = vmatprep.subr.mxu0 0.0
    %5987 = vmatpush1.msra.mxu0 0.0
    %5988 = vmatprep.subr.mxu0 0.0
    %5989 = vmatpush1.msra.mxu0 0.0
    %5990 = vmatprep.subr.mxu0 0.0
    %5991 = vmatpush1.msra.mxu0 0.0
    %5992 = vmatprep.subr.mxu0 0.0
    %5993 = vmatpush1.msra.mxu0 0.0
    %5994 = vmatprep.subr.mxu0 0.0
    %5995 = vmatpush1.msra.mxu0 0.0
    %5996 = vmatprep.subr.mxu0 0.0
    %5997 = vmatpush1.msra.mxu0 0.0
    %5998 = vmatprep.mubr.f32.mxu0 0.0
    %5999 = vmatmul.mubr.f32.gmra.mrb[0].mxu0 %v5861
    %v6000 = vpop.f32.mrb[0].mxu0
    %v6001 = vadd.f32 0.0, %v6000
    %v6002 = vpop.f32.mrb[0].mxu0
    %v6003 = vadd.f32 0.0, %v6002
    %6004 = vdwg.mxu0
    %v6009 = vcombine.low %v5930, %v5932
    %v6010 = vcombine.high %v5930, %v5932
    %v6011 = vcombine.low %v6001, %v6003
    %v6012 = vcombine.high %v6001, %v6003
    %v6014 = vunpack.c.l.s4 1966171168
    %v6015 = vunpack.c.0.s8 %v6014
    %v6016 = vlaneseq
    %v6017 = vshrl.u32 %v6016, 7
    %v6018 = vsub.s32 %v6015, %v6017
    %v6019 = vrot.slane %v6009, %v6018
    %v6021 = vunpack.c.l.s4 1966171168
    %v6022 = vunpack.c.0.s8 %v6021
    %v6023 = vlaneseq
    %v6024 = vshrl.u32 %v6023, 7
    %v6025 = vsub.s32 %v6022, %v6024
    %v6026 = vrot.slane %v6010, %v6025
    %v6028 = vunpack.c.l.s4 1966171168
    %v6029 = vunpack.c.0.s8 %v6028
    %v6030 = vlaneseq
    %v6031 = vshrl.u32 %v6030, 7
    %v6032 = vsub.s32 %v6029, %v6031
    %v6033 = vrot.slane %v6011, %v6032
    %v6035 = vunpack.c.l.s4 1966171168
    %v6036 = vunpack.c.0.s8 %v6035
    %v6037 = vlaneseq
    %v6038 = vshrl.u32 %v6037, 7
    %v6039 = vsub.s32 %v6036, %v6038
    %v6040 = vrot.slane %v6012, %v6039
    %v6041 = vcombine.low %v6019, %v6033
    %v6042 = vcombine.high %v6019, %v6033
    %v6043 = vcombine.low %v6026, %v6040
    %v6044 = vcombine.high %v6026, %v6040
    %v6046 = vunpack.c.l.s4 1966171168
    %v6047 = vunpack.c.0.s8 %v6046
    %v6048 = vlaneseq
    %v6049 = vshrl.u32 %v6048, 7
    %v6050 = vsub.s32 %v6047, %v6049
    %v6051 = vrot.slane %v6041, %v6050
    %v6053 = vunpack.c.l.s4 1966171168
    %v6054 = vunpack.c.0.s8 %v6053
    %v6055 = vlaneseq
    %v6056 = vshrl.u32 %v6055, 7
    %v6057 = vsub.s32 %v6054, %v6056
    %v6058 = vrot.slane %v6043, %v6057
    %v6060 = vunpack.c.l.s4 1966171168
    %v6061 = vunpack.c.0.s8 %v6060
    %v6062 = vlaneseq
    %v6063 = vshrl.u32 %v6062, 7
    %v6064 = vsub.s32 %v6061, %v6063
    %v6065 = vrot.slane %v6042, %v6064
    %v6067 = vunpack.c.l.s4 1966171168
    %v6068 = vunpack.c.0.s8 %v6067
    %v6069 = vlaneseq
    %v6070 = vshrl.u32 %v6069, 7
    %v6071 = vsub.s32 %v6068, %v6070
    %v6072 = vrot.slane %v6044, %v6071
    %v6073 = vcombine.high %v6051, %v6051
    %v6074 = vcombine.high %v6058, %v6058
    %v6075 = vcombine.high %v6065, %v6065
    %v6076 = vcombine.high %v6072, %v6072
    %v6085 = vadd.f32 %v5797, %v6051
    %v6086 = vadd.f32 %v5798, %v6065
    %v6087 = vadd.f32 %v5799, %v6073
    %v6088 = vadd.f32 %v5800, %v6075
    %v6089 = vadd.f32 %v5801, %v6058
    %v6090 = vadd.f32 %v5802, %v6072
    %v6091 = vadd.f32 %v5803, %v6074
    %v6092 = vadd.f32 %v5804, %v6076
    %v6101 = vrot.slane %v6085, 1
    %v6102 = vrot.slane %v6086, 1
    %v6103 = vrot.slane %v6087, 1
    %v6104 = vrot.slane %v6088, 1
    %v6105 = vrot.slane %v6089, 1
    %v6106 = vrot.slane %v6090, 1
    %v6107 = vrot.slane %v6091, 1
    %v6108 = vrot.slane %v6092, 1
    %v6117 = vxor.u32 %v6101, 2147483648
    %v6118 = vxor.u32 %v6102, 2147483648
    %v6119 = vxor.u32 %v6103, 2147483648
    %v6120 = vxor.u32 %v6104, 2147483648
    %v6121 = vxor.u32 %v6105, 2147483648
    %v6122 = vxor.u32 %v6106, 2147483648
    %v6123 = vxor.u32 %v6107, 2147483648
    %v6124 = vxor.u32 %v6108, 2147483648
    %v6125 = vmul.f32 %v6117, 1.442695
    %v6126 = vpow.pop %v6125
    %v6127 = vmul.f32 %v6118, 1.442695
    %v6128 = vpow.pop %v6127
    %v6129 = vmul.f32 %v6119, 1.442695
    %v6130 = vpow.pop %v6129
    %v6131 = vmul.f32 %v6120, 1.442695
    %v6132 = vpow.pop %v6131
    %v6133 = vmul.f32 %v6121, 1.442695
    %v6134 = vpow.pop %v6133
    %v6135 = vmul.f32 %v6122, 1.442695
    %v6136 = vpow.pop %v6135
    %v6137 = vmul.f32 %v6123, 1.442695
    %v6138 = vpow.pop %v6137
    %v6139 = vmul.f32 %v6124, 1.442695
    %v6140 = vpow.pop %v6139
    %v6141 = vadd.f32 %v6126, 1.0
    %v6142 = vadd.f32 %v6128, 1.0
    %v6143 = vadd.f32 %v6130, 1.0
    %v6144 = vadd.f32 %v6132, 1.0
    %v6145 = vadd.f32 %v6134, 1.0
    %v6146 = vadd.f32 %v6136, 1.0
    %v6147 = vadd.f32 %v6138, 1.0
    %v6148 = vadd.f32 %v6140, 1.0
    %v6149 = vrcp.pop %v6141
    %v6150 = vmul.f32 1.0, %v6149
    %v6151 = vrcp.pop %v6142
    %v6152 = vmul.f32 1.0, %v6151
    %v6153 = vrcp.pop %v6143
    %v6154 = vmul.f32 1.0, %v6153
    %v6155 = vrcp.pop %v6144
    %v6156 = vmul.f32 1.0, %v6155
    %v6157 = vrcp.pop %v6145
    %v6158 = vmul.f32 1.0, %v6157
    %v6159 = vrcp.pop %v6146
    %v6160 = vmul.f32 1.0, %v6159
    %v6161 = vrcp.pop %v6147
    %v6162 = vmul.f32 1.0, %v6161
    %v6163 = vrcp.pop %v6148
    %v6164 = vmul.f32 1.0, %v6163
    %v6165 = vmul.f32 %v6150, %v5709
    %v6166 = vmul.f32 %v6152, %v5710
    %v6167 = vmul.f32 %v6154, %v5711
    %v6168 = vmul.f32 %v6156, %v5712
    %v6169 = vmul.f32 %v6158, %v5713
    %v6170 = vmul.f32 %v6160, %v5714
    %v6171 = vmul.f32 %v6162, %v5715
    %v6172 = vmul.f32 %v6164, %v5716
    %v6173 = vxor.u32 %v6085, 2147483648
    %v6174 = vxor.u32 %v6086, 2147483648
    %v6175 = vxor.u32 %v6087, 2147483648
    %v6176 = vxor.u32 %v6088, 2147483648
    %v6177 = vxor.u32 %v6089, 2147483648
    %v6178 = vxor.u32 %v6090, 2147483648
    %v6179 = vxor.u32 %v6091, 2147483648
    %v6180 = vxor.u32 %v6092, 2147483648
    %v6181 = vmul.f32 %v6173, 1.442695
    %v6182 = vpow.pop %v6181
    %v6183 = vmul.f32 %v6174, 1.442695
    %v6184 = vpow.pop %v6183
    %v6185 = vmul.f32 %v6175, 1.442695
    %v6186 = vpow.pop %v6185
    %v6187 = vmul.f32 %v6176, 1.442695
    %v6188 = vpow.pop %v6187
    %v6189 = vmul.f32 %v6177, 1.442695
    %v6190 = vpow.pop %v6189
    %v6191 = vmul.f32 %v6178, 1.442695
    %v6192 = vpow.pop %v6191
    %v6193 = vmul.f32 %v6179, 1.442695
    %v6194 = vpow.pop %v6193
    %v6195 = vmul.f32 %v6180, 1.442695
    %v6196 = vpow.pop %v6195
    %v6197 = vadd.f32 %v6182, 1.0
    %v6198 = vadd.f32 %v6184, 1.0
    %v6199 = vadd.f32 %v6186, 1.0
    %v6200 = vadd.f32 %v6188, 1.0
    %v6201 = vadd.f32 %v6190, 1.0
    %v6202 = vadd.f32 %v6192, 1.0
    %v6203 = vadd.f32 %v6194, 1.0
    %v6204 = vadd.f32 %v6196, 1.0
    %v6205 = vrcp.pop %v6197
    %v6206 = vmul.f32 1.0, %v6205
    %v6207 = vrcp.pop %v6198
    %v6208 = vmul.f32 1.0, %v6207
    %v6209 = vrcp.pop %v6199
    %v6210 = vmul.f32 1.0, %v6209
    %v6211 = vrcp.pop %v6200
    %v6212 = vmul.f32 1.0, %v6211
    %v6213 = vrcp.pop %v6201
    %v6214 = vmul.f32 1.0, %v6213
    %v6215 = vrcp.pop %v6202
    %v6216 = vmul.f32 1.0, %v6215
    %v6217 = vrcp.pop %v6203
    %v6218 = vmul.f32 1.0, %v6217
    %v6219 = vrcp.pop %v6204
    %v6220 = vmul.f32 1.0, %v6219
    %v6221 = vrot.slane %v6085, 2
    %v6222 = vrot.slane %v6086, 2
    %v6223 = vrot.slane %v6087, 2
    %v6224 = vrot.slane %v6088, 2
    %v6225 = vrot.slane %v6089, 2
    %v6226 = vrot.slane %v6090, 2
    %v6227 = vrot.slane %v6091, 2
    %v6228 = vrot.slane %v6092, 2
    %v6237 = vtanh.pop %v6221
    %v6238 = vtanh.pop %v6222
    %v6239 = vtanh.pop %v6223
    %v6240 = vtanh.pop %v6224
    %v6241 = vtanh.pop %v6225
    %v6242 = vtanh.pop %v6226
    %v6243 = vtanh.pop %v6227
    %v6244 = vtanh.pop %v6228
    %v6245 = vmul.f32 %v6206, %v6237
    %v6246 = vmul.f32 %v6208, %v6238
    %v6247 = vmul.f32 %v6210, %v6239
    %v6248 = vmul.f32 %v6212, %v6240
    %v6249 = vmul.f32 %v6214, %v6241
    %v6250 = vmul.f32 %v6216, %v6242
    %v6251 = vmul.f32 %v6218, %v6243
    %v6252 = vmul.f32 %v6220, %v6244
    %v6253 = vadd.f32 %v6165, %v6245
    %v6254 = vadd.f32 %v6166, %v6246
    %v6255 = vadd.f32 %v6167, %v6247
    %v6256 = vadd.f32 %v6168, %v6248
    %v6257 = vadd.f32 %v6169, %v6249
    %v6258 = vadd.f32 %v6170, %v6250
    %v6259 = vadd.f32 %v6171, %v6251
    %v6260 = vadd.f32 %v6172, %v6252
    %v6261 = vrot.slane %v6085, 3
    %v6262 = vrot.slane %v6086, 3
    %v6263 = vrot.slane %v6087, 3
    %v6264 = vrot.slane %v6088, 3
    %v6265 = vrot.slane %v6089, 3
    %v6266 = vrot.slane %v6090, 3
    %v6267 = vrot.slane %v6091, 3
    %v6268 = vrot.slane %v6092, 3
    %v6277 = vxor.u32 %v6261, 2147483648
    %v6278 = vxor.u32 %v6262, 2147483648
    %v6279 = vxor.u32 %v6263, 2147483648
    %v6280 = vxor.u32 %v6264, 2147483648
    %v6281 = vxor.u32 %v6265, 2147483648
    %v6282 = vxor.u32 %v6266, 2147483648
    %v6283 = vxor.u32 %v6267, 2147483648
    %v6284 = vxor.u32 %v6268, 2147483648
    %v6285 = vmul.f32 %v6277, 1.442695
    %v6286 = vpow.pop %v6285
    %v6287 = vmul.f32 %v6278, 1.442695
    %v6288 = vpow.pop %v6287
    %v6289 = vmul.f32 %v6279, 1.442695
    %v6290 = vpow.pop %v6289
    %v6291 = vmul.f32 %v6280, 1.442695
    %v6292 = vpow.pop %v6291
    %v6293 = vmul.f32 %v6281, 1.442695
    %v6294 = vpow.pop %v6293
    %v6295 = vmul.f32 %v6282, 1.442695
    %v6296 = vpow.pop %v6295
    %v6297 = vmul.f32 %v6283, 1.442695
    %v6298 = vpow.pop %v6297
    %v6299 = vmul.f32 %v6284, 1.442695
    %v6300 = vpow.pop %v6299
    %v6301 = vadd.f32 %v6286, 1.0
    %v6302 = vadd.f32 %v6288, 1.0
    %v6303 = vadd.f32 %v6290, 1.0
    %v6304 = vadd.f32 %v6292, 1.0
    %v6305 = vadd.f32 %v6294, 1.0
    %v6306 = vadd.f32 %v6296, 1.0
    %v6307 = vadd.f32 %v6298, 1.0
    %v6308 = vadd.f32 %v6300, 1.0
    %v6309 = vrcp.pop %v6301
    %v6310 = vmul.f32 1.0, %v6309
    %v6311 = vrcp.pop %v6302
    %v6312 = vmul.f32 1.0, %v6311
    %v6313 = vrcp.pop %v6303
    %v6314 = vmul.f32 1.0, %v6313
    %v6315 = vrcp.pop %v6304
    %v6316 = vmul.f32 1.0, %v6315
    %v6317 = vrcp.pop %v6305
    %v6318 = vmul.f32 1.0, %v6317
    %v6319 = vrcp.pop %v6306
    %v6320 = vmul.f32 1.0, %v6319
    %v6321 = vrcp.pop %v6307
    %v6322 = vmul.f32 1.0, %v6321
    %v6323 = vrcp.pop %v6308
    %v6324 = vmul.f32 1.0, %v6323
    %v6325 = vtanh.pop %v6253
    %v6326 = vtanh.pop %v6254
    %v6327 = vtanh.pop %v6255
    %v6328 = vtanh.pop %v6256
    %v6329 = vtanh.pop %v6257
    %v6330 = vtanh.pop %v6258
    %v6331 = vtanh.pop %v6259
    %v6332 = vtanh.pop %v6260
    %v6333 = vmul.f32 %v6310, %v6325
    %v6334 = vmul.f32 %v6312, %v6326
    %v6335 = vmul.f32 %v6314, %v6327
    %v6336 = vmul.f32 %v6316, %v6328
    %v6337 = vmul.f32 %v6318, %v6329
    %v6338 = vmul.f32 %v6320, %v6330
    %v6339 = vmul.f32 %v6322, %v6331
    %v6340 = vmul.f32 %v6324, %v6332
    %v6341 = vld [vmem:[%s1535] ss:$8 sm:$0xf]
    %v6342 = vld [vmem:[%s1537] ss:$8 sm:$0xf]
    %v6343 = vld [vmem:[%s1539] ss:$8 sm:$0xf]
    %v6344 = vld [vmem:[%s1541] ss:$8 sm:$0xf]
    %v6345 = vld [vmem:[%s1543] ss:$8 sm:$0xf]
    %v6346 = vld [vmem:[%s1545] ss:$8 sm:$0xf]
    %v6347 = vld [vmem:[%s1547] ss:$8 sm:$0xf]
    %v6348 = vld [vmem:[%s1549] ss:$8 sm:$0xf]
    %v6357 = vcombine.low %v6333, %v6334
    %v6358 = vcombine.low %v6335, %v6336
    %v6359 = vcombine.low %v6337, %v6338
    %v6360 = vcombine.low %v6339, %v6340
    %v6362 = vunpack.c.l.s4 1966171168
    %v6363 = vunpack.c.0.s8 %v6362
    %v6364 = vlaneseq
    %v6365 = vshrl.u32 %v6364, 7
    %v6366 = vsub.s32 %v6363, %v6365
    %v6367 = vrot.slane %v6357, %v6366
    %v6369 = vunpack.c.l.s4 1966171168
    %v6370 = vunpack.c.0.s8 %v6369
    %v6371 = vlaneseq
    %v6372 = vshrl.u32 %v6371, 7
    %v6373 = vsub.s32 %v6370, %v6372
    %v6374 = vrot.slane %v6358, %v6373
    %v6376 = vunpack.c.l.s4 1966171168
    %v6377 = vunpack.c.0.s8 %v6376
    %v6378 = vlaneseq
    %v6379 = vshrl.u32 %v6378, 7
    %v6380 = vsub.s32 %v6377, %v6379
    %v6381 = vrot.slane %v6359, %v6380
    %v6383 = vunpack.c.l.s4 1966171168
    %v6384 = vunpack.c.0.s8 %v6383
    %v6385 = vlaneseq
    %v6386 = vshrl.u32 %v6385, 7
    %v6387 = vsub.s32 %v6384, %v6386
    %v6388 = vrot.slane %v6360, %v6387
    %v6389 = vcombine.low %v6367, %v6374
    %v6390 = vcombine.low %v6381, %v6388
    %v6392 = vunpack.c.l.s4 1966171168
    %v6393 = vunpack.c.0.s8 %v6392
    %v6394 = vlaneseq
    %v6395 = vshrl.u32 %v6394, 7
    %v6396 = vsub.s32 %v6393, %v6395
    %v6397 = vrot.slane %v6389, %v6396
    %v6399 = vunpack.c.l.s4 1966171168
    %v6400 = vunpack.c.0.s8 %v6399
    %v6401 = vlaneseq
    %v6402 = vshrl.u32 %v6401, 7
    %v6403 = vsub.s32 %v6400, %v6402
    %v6404 = vrot.slane %v6390, %v6403
    %v6405 = vcombine.low %v6397, %v6404
    %6407 = vmatprep.subr.mxu0 %v4960
    %6408 = vmatpush1.msra.mxu0 %v4959
    %6409 = vmatprep.subr.mxu0 %v4964
    %6410 = vmatpush1.msra.mxu0 %v4963
    %6411 = vmatprep.subr.mxu0 %v4968
    %6412 = vmatpush1.msra.mxu0 %v4967
    %6413 = vmatprep.subr.mxu0 %v4972
    %6414 = vmatpush1.msra.mxu0 %v4971
    %6415 = vmatprep.subr.mxu0 %v4976
    %6416 = vmatpush1.msra.mxu0 %v4975
    %6417 = vmatprep.subr.mxu0 %v4980
    %6418 = vmatpush1.msra.mxu0 %v4979
    %6419 = vmatprep.subr.mxu0 %v4984
    %6420 = vmatpush1.msra.mxu0 %v4983
    %6421 = vmatprep.subr.mxu0 %v4988
    %6422 = vmatpush1.msra.mxu0 %v4987
    %6423 = vmatprep.subr.mxu0 %v4992
    %6424 = vmatpush1.msra.mxu0 %v4991
    %6425 = vmatprep.subr.mxu0 %v4996
    %6426 = vmatpush1.msra.mxu0 %v4995
    %6427 = vmatprep.subr.mxu0 %v5000
    %6428 = vmatpush1.msra.mxu0 %v4999
    %6429 = vmatprep.subr.mxu0 %v5004
    %6430 = vmatpush1.msra.mxu0 %v5003
    %6431 = vmatprep.subr.mxu0 %v5008
    %6432 = vmatpush1.msra.mxu0 %v5007
    %6433 = vmatprep.subr.mxu0 %v5012
    %6434 = vmatpush1.msra.mxu0 %v5011
    %6435 = vmatprep.subr.mxu0 %v5016
    %6436 = vmatpush1.msra.mxu0 %v5015
    %6437 = vmatprep.subr.mxu0 %v5020
    %6438 = vmatpush1.msra.mxu0 %v5019
    %6439 = vmatprep.subr.mxu0 0.0
    %6440 = vmatpush1.msra.mxu0 0.0
    %6441 = vmatprep.subr.mxu0 0.0
    %6442 = vmatpush1.msra.mxu0 0.0
    %6443 = vmatprep.subr.mxu0 0.0
    %6444 = vmatpush1.msra.mxu0 0.0
    %6445 = vmatprep.subr.mxu0 0.0
    %6446 = vmatpush1.msra.mxu0 0.0
    %6447 = vmatprep.subr.mxu0 0.0
    %6448 = vmatpush1.msra.mxu0 0.0
    %6449 = vmatprep.subr.mxu0 0.0
    %6450 = vmatpush1.msra.mxu0 0.0
    %6451 = vmatprep.subr.mxu0 0.0
    %6452 = vmatpush1.msra.mxu0 0.0
    %6453 = vmatprep.subr.mxu0 0.0
    %6454 = vmatpush1.msra.mxu0 0.0
    %6455 = vmatprep.subr.mxu0 0.0
    %6456 = vmatpush1.msra.mxu0 0.0
    %6457 = vmatprep.subr.mxu0 0.0
    %6458 = vmatpush1.msra.mxu0 0.0
    %6459 = vmatprep.subr.mxu0 0.0
    %6460 = vmatpush1.msra.mxu0 0.0
    %6461 = vmatprep.subr.mxu0 0.0
    %6462 = vmatpush1.msra.mxu0 0.0
    %6463 = vmatprep.subr.mxu0 0.0
    %6464 = vmatpush1.msra.mxu0 0.0
    %6465 = vmatprep.subr.mxu0 0.0
    %6466 = vmatpush1.msra.mxu0 0.0
    %6467 = vmatprep.subr.mxu0 0.0
    %6468 = vmatpush1.msra.mxu0 0.0
    %6469 = vmatprep.subr.mxu0 0.0
    %6470 = vmatpush1.msra.mxu0 0.0
    %6471 = vmatprep.mubr.f32.mxu0 0.0
    %6472 = vmatmul.mubr.f32.gmra.mrb[0].mxu0 %v6405
    %v6473 = vpop.f32.mrb[0].mxu0
    %v6474 = vadd.f32 0.0, %v6473
    %v6475 = vpop.f32.mrb[0].mxu0
    %v6476 = vadd.f32 0.0, %v6475
    %6477 = vdwg.mxu0
    %6478 = vmatprep.subr.mxu0 %v4962
    %6479 = vmatpush1.msra.mxu0 %v4961
    %6480 = vmatprep.subr.mxu0 %v4966
    %6481 = vmatpush1.msra.mxu0 %v4965
    %6482 = vmatprep.subr.mxu0 %v4970
    %6483 = vmatpush1.msra.mxu0 %v4969
    %6484 = vmatprep.subr.mxu0 %v4974
    %6485 = vmatpush1.msra.mxu0 %v4973
    %6486 = vmatprep.subr.mxu0 %v4978
    %6487 = vmatpush1.msra.mxu0 %v4977
    %6488 = vmatprep.subr.mxu0 %v4982
    %6489 = vmatpush1.msra.mxu0 %v4981
    %6490 = vmatprep.subr.mxu0 %v4986
    %6491 = vmatpush1.msra.mxu0 %v4985
    %6492 = vmatprep.subr.mxu0 %v4990
    %6493 = vmatpush1.msra.mxu0 %v4989
    %6494 = vmatprep.subr.mxu0 %v4994
    %6495 = vmatpush1.msra.mxu0 %v4993
    %6496 = vmatprep.subr.mxu0 %v4998
    %6497 = vmatpush1.msra.mxu0 %v4997
    %6498 = vmatprep.subr.mxu0 %v5002
    %6499 = vmatpush1.msra.mxu0 %v5001
    %6500 = vmatprep.subr.mxu0 %v5006
    %6501 = vmatpush1.msra.mxu0 %v5005
    %6502 = vmatprep.subr.mxu0 %v5010
    %6503 = vmatpush1.msra.mxu0 %v5009
    %6504 = vmatprep.subr.mxu0 %v5014
    %6505 = vmatpush1.msra.mxu0 %v5013
    %6506 = vmatprep.subr.mxu0 %v5018
    %6507 = vmatpush1.msra.mxu0 %v5017
    %6508 = vmatprep.subr.mxu0 %v5022
    %6509 = vmatpush1.msra.mxu0 %v5021
    %6510 = vmatprep.subr.mxu0 0.0
    %6511 = vmatpush1.msra.mxu0 0.0
    %6512 = vmatprep.subr.mxu0 0.0
    %6513 = vmatpush1.msra.mxu0 0.0
    %6514 = vmatprep.subr.mxu0 0.0
    %6515 = vmatpush1.msra.mxu0 0.0
    %6516 = vmatprep.subr.mxu0 0.0
    %6517 = vmatpush1.msra.mxu0 0.0
    %6518 = vmatprep.subr.mxu0 0.0
    %6519 = vmatpush1.msra.mxu0 0.0
    %6520 = vmatprep.subr.mxu0 0.0
    %6521 = vmatpush1.msra.mxu0 0.0
    %6522 = vmatprep.subr.mxu0 0.0
    %6523 = vmatpush1.msra.mxu0 0.0
    %6524 = vmatprep.subr.mxu0 0.0
    %6525 = vmatpush1.msra.mxu0 0.0
    %6526 = vmatprep.subr.mxu0 0.0
    %6527 = vmatpush1.msra.mxu0 0.0
    %6528 = vmatprep.subr.mxu0 0.0
    %6529 = vmatpush1.msra.mxu0 0.0
    %6530 = vmatprep.subr.mxu0 0.0
    %6531 = vmatpush1.msra.mxu0 0.0
    %6532 = vmatprep.subr.mxu0 0.0
    %6533 = vmatpush1.msra.mxu0 0.0
    %6534 = vmatprep.subr.mxu0 0.0
    %6535 = vmatpush1.msra.mxu0 0.0
    %6536 = vmatprep.subr.mxu0 0.0
    %6537 = vmatpush1.msra.mxu0 0.0
    %6538 = vmatprep.subr.mxu0 0.0
    %6539 = vmatpush1.msra.mxu0 0.0
    %6540 = vmatprep.subr.mxu0 0.0
    %6541 = vmatpush1.msra.mxu0 0.0
    %6542 = vmatprep.mubr.f32.mxu0 0.0
    %6543 = vmatmul.mubr.f32.gmra.mrb[0].mxu0 %v6405
    %v6544 = vpop.f32.mrb[0].mxu0
    %v6545 = vadd.f32 0.0, %v6544
    %v6546 = vpop.f32.mrb[0].mxu0
    %v6547 = vadd.f32 0.0, %v6546
    %6548 = vdwg.mxu0
    %v6553 = vcombine.low %v6474, %v6476
    %v6554 = vcombine.high %v6474, %v6476
    %v6555 = vcombine.low %v6545, %v6547
    %v6556 = vcombine.high %v6545, %v6547
    %v6558 = vunpack.c.l.s4 1966171168
    %v6559 = vunpack.c.0.s8 %v6558
    %v6560 = vlaneseq
    %v6561 = vshrl.u32 %v6560, 7
    %v6562 = vsub.s32 %v6559, %v6561
    %v6563 = vrot.slane %v6553, %v6562
    %v6565 = vunpack.c.l.s4 1966171168
    %v6566 = vunpack.c.0.s8 %v6565
    %v6567 = vlaneseq
    %v6568 = vshrl.u32 %v6567, 7
    %v6569 = vsub.s32 %v6566, %v6568
    %v6570 = vrot.slane %v6554, %v6569
    %v6572 = vunpack.c.l.s4 1966171168
    %v6573 = vunpack.c.0.s8 %v6572
    %v6574 = vlaneseq
    %v6575 = vshrl.u32 %v6574, 7
    %v6576 = vsub.s32 %v6573, %v6575
    %v6577 = vrot.slane %v6555, %v6576
    %v6579 = vunpack.c.l.s4 1966171168
    %v6580 = vunpack.c.0.s8 %v6579
    %v6581 = vlaneseq
    %v6582 = vshrl.u32 %v6581, 7
    %v6583 = vsub.s32 %v6580, %v6582
    %v6584 = vrot.slane %v6556, %v6583
    %v6585 = vcombine.low %v6563, %v6577
    %v6586 = vcombine.high %v6563, %v6577
    %v6587 = vcombine.low %v6570, %v6584
    %v6588 = vcombine.high %v6570, %v6584
    %v6590 = vunpack.c.l.s4 1966171168
    %v6591 = vunpack.c.0.s8 %v6590
    %v6592 = vlaneseq
    %v6593 = vshrl.u32 %v6592, 7
    %v6594 = vsub.s32 %v6591, %v6593
    %v6595 = vrot.slane %v6585, %v6594
    %v6597 = vunpack.c.l.s4 1966171168
    %v6598 = vunpack.c.0.s8 %v6597
    %v6599 = vlaneseq
    %v6600 = vshrl.u32 %v6599, 7
    %v6601 = vsub.s32 %v6598, %v6600
    %v6602 = vrot.slane %v6587, %v6601
    %v6604 = vunpack.c.l.s4 1966171168
    %v6605 = vunpack.c.0.s8 %v6604
    %v6606 = vlaneseq
    %v6607 = vshrl.u32 %v6606, 7
    %v6608 = vsub.s32 %v6605, %v6607
    %v6609 = vrot.slane %v6586, %v6608
    %v6611 = vunpack.c.l.s4 1966171168
    %v6612 = vunpack.c.0.s8 %v6611
    %v6613 = vlaneseq
    %v6614 = vshrl.u32 %v6613, 7
    %v6615 = vsub.s32 %v6612, %v6614
    %v6616 = vrot.slane %v6588, %v6615
    %v6617 = vcombine.high %v6595, %v6595
    %v6618 = vcombine.high %v6602, %v6602
    %v6619 = vcombine.high %v6609, %v6609
    %v6620 = vcombine.high %v6616, %v6616
    %v6629 = vadd.f32 %v6341, %v6595
    %v6630 = vadd.f32 %v6342, %v6609
    %v6631 = vadd.f32 %v6343, %v6617
    %v6632 = vadd.f32 %v6344, %v6619
    %v6633 = vadd.f32 %v6345, %v6602
    %v6634 = vadd.f32 %v6346, %v6616
    %v6635 = vadd.f32 %v6347, %v6618
    %v6636 = vadd.f32 %v6348, %v6620
    %v6645 = vrot.slane %v6629, 1
    %v6646 = vrot.slane %v6630, 1
    %v6647 = vrot.slane %v6631, 1
    %v6648 = vrot.slane %v6632, 1
    %v6649 = vrot.slane %v6633, 1
    %v6650 = vrot.slane %v6634, 1
    %v6651 = vrot.slane %v6635, 1
    %v6652 = vrot.slane %v6636, 1
    %v6661 = vxor.u32 %v6645, 2147483648
    %v6662 = vxor.u32 %v6646, 2147483648
    %v6663 = vxor.u32 %v6647, 2147483648
    %v6664 = vxor.u32 %v6648, 2147483648
    %v6665 = vxor.u32 %v6649, 2147483648
    %v6666 = vxor.u32 %v6650, 2147483648
    %v6667 = vxor.u32 %v6651, 2147483648
    %v6668 = vxor.u32 %v6652, 2147483648
    %v6669 = vmul.f32 %v6661, 1.442695
    %v6670 = vpow.pop %v6669
    %v6671 = vmul.f32 %v6662, 1.442695
    %v6672 = vpow.pop %v6671
    %v6673 = vmul.f32 %v6663, 1.442695
    %v6674 = vpow.pop %v6673
    %v6675 = vmul.f32 %v6664, 1.442695
    %v6676 = vpow.pop %v6675
    %v6677 = vmul.f32 %v6665, 1.442695
    %v6678 = vpow.pop %v6677
    %v6679 = vmul.f32 %v6666, 1.442695
    %v6680 = vpow.pop %v6679
    %v6681 = vmul.f32 %v6667, 1.442695
    %v6682 = vpow.pop %v6681
    %v6683 = vmul.f32 %v6668, 1.442695
    %v6684 = vpow.pop %v6683
    %v6685 = vadd.f32 %v6670, 1.0
    %v6686 = vadd.f32 %v6672, 1.0
    %v6687 = vadd.f32 %v6674, 1.0
    %v6688 = vadd.f32 %v6676, 1.0
    %v6689 = vadd.f32 %v6678, 1.0
    %v6690 = vadd.f32 %v6680, 1.0
    %v6691 = vadd.f32 %v6682, 1.0
    %v6692 = vadd.f32 %v6684, 1.0
    %v6693 = vrcp.pop %v6685
    %v6694 = vmul.f32 1.0, %v6693
    %v6695 = vrcp.pop %v6686
    %v6696 = vmul.f32 1.0, %v6695
    %v6697 = vrcp.pop %v6687
    %v6698 = vmul.f32 1.0, %v6697
    %v6699 = vrcp.pop %v6688
    %v6700 = vmul.f32 1.0, %v6699
    %v6701 = vrcp.pop %v6689
    %v6702 = vmul.f32 1.0, %v6701
    %v6703 = vrcp.pop %v6690
    %v6704 = vmul.f32 1.0, %v6703
    %v6705 = vrcp.pop %v6691
    %v6706 = vmul.f32 1.0, %v6705
    %v6707 = vrcp.pop %v6692
    %v6708 = vmul.f32 1.0, %v6707
    %v6709 = vmul.f32 %v6694, %v6253
    %v6710 = vmul.f32 %v6696, %v6254
    %v6711 = vmul.f32 %v6698, %v6255
    %v6712 = vmul.f32 %v6700, %v6256
    %v6713 = vmul.f32 %v6702, %v6257
    %v6714 = vmul.f32 %v6704, %v6258
    %v6715 = vmul.f32 %v6706, %v6259
    %v6716 = vmul.f32 %v6708, %v6260
    %v6717 = vxor.u32 %v6629, 2147483648
    %v6718 = vxor.u32 %v6630, 2147483648
    %v6719 = vxor.u32 %v6631, 2147483648
    %v6720 = vxor.u32 %v6632, 2147483648
    %v6721 = vxor.u32 %v6633, 2147483648
    %v6722 = vxor.u32 %v6634, 2147483648
    %v6723 = vxor.u32 %v6635, 2147483648
    %v6724 = vxor.u32 %v6636, 2147483648
    %v6725 = vmul.f32 %v6717, 1.442695
    %v6726 = vpow.pop %v6725
    %v6727 = vmul.f32 %v6718, 1.442695
    %v6728 = vpow.pop %v6727
    %v6729 = vmul.f32 %v6719, 1.442695
    %v6730 = vpow.pop %v6729
    %v6731 = vmul.f32 %v6720, 1.442695
    %v6732 = vpow.pop %v6731
    %v6733 = vmul.f32 %v6721, 1.442695
    %v6734 = vpow.pop %v6733
    %v6735 = vmul.f32 %v6722, 1.442695
    %v6736 = vpow.pop %v6735
    %v6737 = vmul.f32 %v6723, 1.442695
    %v6738 = vpow.pop %v6737
    %v6739 = vmul.f32 %v6724, 1.442695
    %v6740 = vpow.pop %v6739
    %v6741 = vadd.f32 %v6726, 1.0
    %v6742 = vadd.f32 %v6728, 1.0
    %v6743 = vadd.f32 %v6730, 1.0
    %v6744 = vadd.f32 %v6732, 1.0
    %v6745 = vadd.f32 %v6734, 1.0
    %v6746 = vadd.f32 %v6736, 1.0
    %v6747 = vadd.f32 %v6738, 1.0
    %v6748 = vadd.f32 %v6740, 1.0
    %v6749 = vrcp.pop %v6741
    %v6750 = vmul.f32 1.0, %v6749
    %v6751 = vrcp.pop %v6742
    %v6752 = vmul.f32 1.0, %v6751
    %v6753 = vrcp.pop %v6743
    %v6754 = vmul.f32 1.0, %v6753
    %v6755 = vrcp.pop %v6744
    %v6756 = vmul.f32 1.0, %v6755
    %v6757 = vrcp.pop %v6745
    %v6758 = vmul.f32 1.0, %v6757
    %v6759 = vrcp.pop %v6746
    %v6760 = vmul.f32 1.0, %v6759
    %v6761 = vrcp.pop %v6747
    %v6762 = vmul.f32 1.0, %v6761
    %v6763 = vrcp.pop %v6748
    %v6764 = vmul.f32 1.0, %v6763
    %v6765 = vrot.slane %v6629, 2
    %v6766 = vrot.slane %v6630, 2
    %v6767 = vrot.slane %v6631, 2
    %v6768 = vrot.slane %v6632, 2
    %v6769 = vrot.slane %v6633, 2
    %v6770 = vrot.slane %v6634, 2
    %v6771 = vrot.slane %v6635, 2
    %v6772 = vrot.slane %v6636, 2
    %v6781 = vtanh.pop %v6765
    %v6782 = vtanh.pop %v6766
    %v6783 = vtanh.pop %v6767
    %v6784 = vtanh.pop %v6768
    %v6785 = vtanh.pop %v6769
    %v6786 = vtanh.pop %v6770
    %v6787 = vtanh.pop %v6771
    %v6788 = vtanh.pop %v6772
    %v6789 = vmul.f32 %v6750, %v6781
    %v6790 = vmul.f32 %v6752, %v6782
    %v6791 = vmul.f32 %v6754, %v6783
    %v6792 = vmul.f32 %v6756, %v6784
    %v6793 = vmul.f32 %v6758, %v6785
    %v6794 = vmul.f32 %v6760, %v6786
    %v6795 = vmul.f32 %v6762, %v6787
    %v6796 = vmul.f32 %v6764, %v6788
    %v6797 = vadd.f32 %v6709, %v6789
    %v6798 = vadd.f32 %v6710, %v6790
    %v6799 = vadd.f32 %v6711, %v6791
    %v6800 = vadd.f32 %v6712, %v6792
    %v6801 = vadd.f32 %v6713, %v6793
    %v6802 = vadd.f32 %v6714, %v6794
    %v6803 = vadd.f32 %v6715, %v6795
    %v6804 = vadd.f32 %v6716, %v6796
    %v6805 = vrot.slane %v6629, 3
    %v6806 = vrot.slane %v6630, 3
    %v6807 = vrot.slane %v6631, 3
    %v6808 = vrot.slane %v6632, 3
    %v6809 = vrot.slane %v6633, 3
    %v6810 = vrot.slane %v6634, 3
    %v6811 = vrot.slane %v6635, 3
    %v6812 = vrot.slane %v6636, 3
    %v6821 = vxor.u32 %v6805, 2147483648
    %v6822 = vxor.u32 %v6806, 2147483648
    %v6823 = vxor.u32 %v6807, 2147483648
    %v6824 = vxor.u32 %v6808, 2147483648
    %v6825 = vxor.u32 %v6809, 2147483648
    %v6826 = vxor.u32 %v6810, 2147483648
    %v6827 = vxor.u32 %v6811, 2147483648
    %v6828 = vxor.u32 %v6812, 2147483648
    %v6829 = vmul.f32 %v6821, 1.442695
    %v6830 = vpow.pop %v6829
    %v6831 = vmul.f32 %v6822, 1.442695
    %v6832 = vpow.pop %v6831
    %v6833 = vmul.f32 %v6823, 1.442695
    %v6834 = vpow.pop %v6833
    %v6835 = vmul.f32 %v6824, 1.442695
    %v6836 = vpow.pop %v6835
    %v6837 = vmul.f32 %v6825, 1.442695
    %v6838 = vpow.pop %v6837
    %v6839 = vmul.f32 %v6826, 1.442695
    %v6840 = vpow.pop %v6839
    %v6841 = vmul.f32 %v6827, 1.442695
    %v6842 = vpow.pop %v6841
    %v6843 = vmul.f32 %v6828, 1.442695
    %v6844 = vpow.pop %v6843
    %v6845 = vadd.f32 %v6830, 1.0
    %v6846 = vadd.f32 %v6832, 1.0
    %v6847 = vadd.f32 %v6834, 1.0
    %v6848 = vadd.f32 %v6836, 1.0
    %v6849 = vadd.f32 %v6838, 1.0
    %v6850 = vadd.f32 %v6840, 1.0
    %v6851 = vadd.f32 %v6842, 1.0
    %v6852 = vadd.f32 %v6844, 1.0
    %v6853 = vrcp.pop %v6845
    %v6854 = vmul.f32 1.0, %v6853
    %v6855 = vrcp.pop %v6846
    %v6856 = vmul.f32 1.0, %v6855
    %v6857 = vrcp.pop %v6847
    %v6858 = vmul.f32 1.0, %v6857
    %v6859 = vrcp.pop %v6848
    %v6860 = vmul.f32 1.0, %v6859
    %v6861 = vrcp.pop %v6849
    %v6862 = vmul.f32 1.0, %v6861
    %v6863 = vrcp.pop %v6850
    %v6864 = vmul.f32 1.0, %v6863
    %v6865 = vrcp.pop %v6851
    %v6866 = vmul.f32 1.0, %v6865
    %v6867 = vrcp.pop %v6852
    %v6868 = vmul.f32 1.0, %v6867
    %v6869 = vtanh.pop %v6797
    %v6870 = vtanh.pop %v6798
    %v6871 = vtanh.pop %v6799
    %v6872 = vtanh.pop %v6800
    %v6873 = vtanh.pop %v6801
    %v6874 = vtanh.pop %v6802
    %v6875 = vtanh.pop %v6803
    %v6876 = vtanh.pop %v6804
    %v6877 = vmul.f32 %v6854, %v6869
    %v6878 = vmul.f32 %v6856, %v6870
    %v6879 = vmul.f32 %v6858, %v6871
    %v6880 = vmul.f32 %v6860, %v6872
    %v6881 = vmul.f32 %v6862, %v6873
    %v6882 = vmul.f32 %v6864, %v6874
    %v6883 = vmul.f32 %v6866, %v6875
    %v6884 = vmul.f32 %v6868, %v6876
    %v6885 = vld [vmem:[%s2095] ss:$8 sm:$0xf]
    %v6886 = vld [vmem:[%s2097] ss:$8 sm:$0xf]
    %v6887 = vld [vmem:[%s2099] ss:$8 sm:$0xf]
    %v6888 = vld [vmem:[%s2101] ss:$8 sm:$0xf]
    %v6889 = vld [vmem:[%s2103] ss:$8 sm:$0xf]
    %v6890 = vld [vmem:[%s2105] ss:$8 sm:$0xf]
    %v6891 = vld [vmem:[%s2107] ss:$8 sm:$0xf]
    %v6892 = vld [vmem:[%s2109] ss:$8 sm:$0xf]
    %v6901 = vcombine.low %v6877, %v6878
    %v6902 = vcombine.low %v6879, %v6880
    %v6903 = vcombine.low %v6881, %v6882
    %v6904 = vcombine.low %v6883, %v6884
    %v6906 = vunpack.c.l.s4 1966171168
    %v6907 = vunpack.c.0.s8 %v6906
    %v6908 = vlaneseq
    %v6909 = vshrl.u32 %v6908, 7
    %v6910 = vsub.s32 %v6907, %v6909
    %v6911 = vrot.slane %v6901, %v6910
    %v6913 = vunpack.c.l.s4 1966171168
    %v6914 = vunpack.c.0.s8 %v6913
    %v6915 = vlaneseq
    %v6916 = vshrl.u32 %v6915, 7
    %v6917 = vsub.s32 %v6914, %v6916
    %v6918 = vrot.slane %v6902, %v6917
    %v6920 = vunpack.c.l.s4 1966171168
    %v6921 = vunpack.c.0.s8 %v6920
    %v6922 = vlaneseq
    %v6923 = vshrl.u32 %v6922, 7
    %v6924 = vsub.s32 %v6921, %v6923
    %v6925 = vrot.slane %v6903, %v6924
    %v6927 = vunpack.c.l.s4 1966171168
    %v6928 = vunpack.c.0.s8 %v6927
    %v6929 = vlaneseq
    %v6930 = vshrl.u32 %v6929, 7
    %v6931 = vsub.s32 %v6928, %v6930
    %v6932 = vrot.slane %v6904, %v6931
    %v6933 = vcombine.low %v6911, %v6918
    %v6934 = vcombine.low %v6925, %v6932
    %v6936 = vunpack.c.l.s4 1966171168
    %v6937 = vunpack.c.0.s8 %v6936
    %v6938 = vlaneseq
    %v6939 = vshrl.u32 %v6938, 7
    %v6940 = vsub.s32 %v6937, %v6939
    %v6941 = vrot.slane %v6933, %v6940
    %v6943 = vunpack.c.l.s4 1966171168
    %v6944 = vunpack.c.0.s8 %v6943
    %v6945 = vlaneseq
    %v6946 = vshrl.u32 %v6945, 7
    %v6947 = vsub.s32 %v6944, %v6946
    %v6948 = vrot.slane %v6934, %v6947
    %v6949 = vcombine.low %v6941, %v6948
    %6951 = vmatprep.subr.mxu0 %v4960
    %6952 = vmatpush1.msra.mxu0 %v4959
    %6953 = vmatprep.subr.mxu0 %v4964
    %6954 = vmatpush1.msra.mxu0 %v4963
    %6955 = vmatprep.subr.mxu0 %v4968
    %6956 = vmatpush1.msra.mxu0 %v4967
    %6957 = vmatprep.subr.mxu0 %v4972
    %6958 = vmatpush1.msra.mxu0 %v4971
    %6959 = vmatprep.subr.mxu0 %v4976
    %6960 = vmatpush1.msra.mxu0 %v4975
    %6961 = vmatprep.subr.mxu0 %v4980
    %6962 = vmatpush1.msra.mxu0 %v4979
    %6963 = vmatprep.subr.mxu0 %v4984
    %6964 = vmatpush1.msra.mxu0 %v4983
    %6965 = vmatprep.subr.mxu0 %v4988
    %6966 = vmatpush1.msra.mxu0 %v4987
    %6967 = vmatprep.subr.mxu0 %v4992
    %6968 = vmatpush1.msra.mxu0 %v4991
    %6969 = vmatprep.subr.mxu0 %v4996
    %6970 = vmatpush1.msra.mxu0 %v4995
    %6971 = vmatprep.subr.mxu0 %v5000
    %6972 = vmatpush1.msra.mxu0 %v4999
    %6973 = vmatprep.subr.mxu0 %v5004
    %6974 = vmatpush1.msra.mxu0 %v5003
    %6975 = vmatprep.subr.mxu0 %v5008
    %6976 = vmatpush1.msra.mxu0 %v5007
    %6977 = vmatprep.subr.mxu0 %v5012
    %6978 = vmatpush1.msra.mxu0 %v5011
    %6979 = vmatprep.subr.mxu0 %v5016
    %6980 = vmatpush1.msra.mxu0 %v5015
    %6981 = vmatprep.subr.mxu0 %v5020
    %6982 = vmatpush1.msra.mxu0 %v5019
    %6983 = vmatprep.subr.mxu0 0.0
    %6984 = vmatpush1.msra.mxu0 0.0
    %6985 = vmatprep.subr.mxu0 0.0
    %6986 = vmatpush1.msra.mxu0 0.0
    %6987 = vmatprep.subr.mxu0 0.0
    %6988 = vmatpush1.msra.mxu0 0.0
    %6989 = vmatprep.subr.mxu0 0.0
    %6990 = vmatpush1.msra.mxu0 0.0
    %6991 = vmatprep.subr.mxu0 0.0
    %6992 = vmatpush1.msra.mxu0 0.0
    %6993 = vmatprep.subr.mxu0 0.0
    %6994 = vmatpush1.msra.mxu0 0.0
    %6995 = vmatprep.subr.mxu0 0.0
    %6996 = vmatpush1.msra.mxu0 0.0
    %6997 = vmatprep.subr.mxu0 0.0
    %6998 = vmatpush1.msra.mxu0 0.0
    %6999 = vmatprep.subr.mxu0 0.0
    %7000 = vmatpush1.msra.mxu0 0.0
    %7001 = vmatprep.subr.mxu0 0.0
    %7002 = vmatpush1.msra.mxu0 0.0
    %7003 = vmatprep.subr.mxu0 0.0
    %7004 = vmatpush1.msra.mxu0 0.0
    %7005 = vmatprep.subr.mxu0 0.0
    %7006 = vmatpush1.msra.mxu0 0.0
    %7007 = vmatprep.subr.mxu0 0.0
    %7008 = vmatpush1.msra.mxu0 0.0
    %7009 = vmatprep.subr.mxu0 0.0
    %7010 = vmatpush1.msra.mxu0 0.0
    %7011 = vmatprep.subr.mxu0 0.0
    %7012 = vmatpush1.msra.mxu0 0.0
    %7013 = vmatprep.subr.mxu0 0.0
    %7014 = vmatpush1.msra.mxu0 0.0
    %7015 = vmatprep.mubr.f32.mxu0 0.0
    %7016 = vmatmul.mubr.f32.gmra.mrb[0].mxu0 %v6949
    %v7017 = vpop.f32.mrb[0].mxu0
    %v7018 = vadd.f32 0.0, %v7017
    %v7019 = vpop.f32.mrb[0].mxu0
    %v7020 = vadd.f32 0.0, %v7019
    %7021 = vdwg.mxu0
    %7022 = vmatprep.subr.mxu0 %v4962
    %7023 = vmatpush1.msra.mxu0 %v4961
    %7024 = vmatprep.subr.mxu0 %v4966
    %7025 = vmatpush1.msra.mxu0 %v4965
    %7026 = vmatprep.subr.mxu0 %v4970
    %7027 = vmatpush1.msra.mxu0 %v4969
    %7028 = vmatprep.subr.mxu0 %v4974
    %7029 = vmatpush1.msra.mxu0 %v4973
    %7030 = vmatprep.subr.mxu0 %v4978
    %7031 = vmatpush1.msra.mxu0 %v4977
    %7032 = vmatprep.subr.mxu0 %v4982
    %7033 = vmatpush1.msra.mxu0 %v4981
    %7034 = vmatprep.subr.mxu0 %v4986
    %7035 = vmatpush1.msra.mxu0 %v4985
    %7036 = vmatprep.subr.mxu0 %v4990
    %7037 = vmatpush1.msra.mxu0 %v4989
    %7038 = vmatprep.subr.mxu0 %v4994
    %7039 = vmatpush1.msra.mxu0 %v4993
    %7040 = vmatprep.subr.mxu0 %v4998
    %7041 = vmatpush1.msra.mxu0 %v4997
    %7042 = vmatprep.subr.mxu0 %v5002
    %7043 = vmatpush1.msra.mxu0 %v5001
    %7044 = vmatprep.subr.mxu0 %v5006
    %7045 = vmatpush1.msra.mxu0 %v5005
    %7046 = vmatprep.subr.mxu0 %v5010
    %7047 = vmatpush1.msra.mxu0 %v5009
    %7048 = vmatprep.subr.mxu0 %v5014
    %7049 = vmatpush1.msra.mxu0 %v5013
    %7050 = vmatprep.subr.mxu0 %v5018
    %7051 = vmatpush1.msra.mxu0 %v5017
    %7052 = vmatprep.subr.mxu0 %v5022
    %7053 = vmatpush1.msra.mxu0 %v5021
    %7054 = vmatprep.subr.mxu0 0.0
    %7055 = vmatpush1.msra.mxu0 0.0
    %7056 = vmatprep.subr.mxu0 0.0
    %7057 = vmatpush1.msra.mxu0 0.0
    %7058 = vmatprep.subr.mxu0 0.0
    %7059 = vmatpush1.msra.mxu0 0.0
    %7060 = vmatprep.subr.mxu0 0.0
    %7061 = vmatpush1.msra.mxu0 0.0
    %7062 = vmatprep.subr.mxu0 0.0
    %7063 = vmatpush1.msra.mxu0 0.0
    %7064 = vmatprep.subr.mxu0 0.0
    %7065 = vmatpush1.msra.mxu0 0.0
    %7066 = vmatprep.subr.mxu0 0.0
    %7067 = vmatpush1.msra.mxu0 0.0
    %7068 = vmatprep.subr.mxu0 0.0
    %7069 = vmatpush1.msra.mxu0 0.0
    %7070 = vmatprep.subr.mxu0 0.0
    %7071 = vmatpush1.msra.mxu0 0.0
    %7072 = vmatprep.subr.mxu0 0.0
    %7073 = vmatpush1.msra.mxu0 0.0
    %7074 = vmatprep.subr.mxu0 0.0
    %7075 = vmatpush1.msra.mxu0 0.0
    %7076 = vmatprep.subr.mxu0 0.0
    %7077 = vmatpush1.msra.mxu0 0.0
    %7078 = vmatprep.subr.mxu0 0.0
    %7079 = vmatpush1.msra.mxu0 0.0
    %7080 = vmatprep.subr.mxu0 0.0
    %7081 = vmatpush1.msra.mxu0 0.0
    %7082 = vmatprep.subr.mxu0 0.0
    %7083 = vmatpush1.msra.mxu0 0.0
    %7084 = vmatprep.subr.mxu0 0.0
    %7085 = vmatpush1.msra.mxu0 0.0
    %7086 = vmatprep.mubr.f32.mxu0 0.0
    %7087 = vmatmul.mubr.f32.gmra.mrb[0].mxu0 %v6949
    %v7088 = vpop.f32.mrb[0].mxu0
    %v7089 = vadd.f32 0.0, %v7088
    %v7090 = vpop.f32.mrb[0].mxu0
    %v7091 = vadd.f32 0.0, %v7090
    %7092 = vdwg.mxu0
    %v7097 = vcombine.low %v7018, %v7020
    %v7098 = vcombine.high %v7018, %v7020
    %v7099 = vcombine.low %v7089, %v7091
    %v7100 = vcombine.high %v7089, %v7091
    %v7102 = vunpack.c.l.s4 1966171168
    %v7103 = vunpack.c.0.s8 %v7102
    %v7104 = vlaneseq
    %v7105 = vshrl.u32 %v7104, 7
    %v7106 = vsub.s32 %v7103, %v7105
    %v7107 = vrot.slane %v7097, %v7106
    %v7109 = vunpack.c.l.s4 1966171168
    %v7110 = vunpack.c.0.s8 %v7109
    %v7111 = vlaneseq
    %v7112 = vshrl.u32 %v7111, 7
    %v7113 = vsub.s32 %v7110, %v7112
    %v7114 = vrot.slane %v7098, %v7113
    %v7116 = vunpack.c.l.s4 1966171168
    %v7117 = vunpack.c.0.s8 %v7116
    %v7118 = vlaneseq
    %v7119 = vshrl.u32 %v7118, 7
    %v7120 = vsub.s32 %v7117, %v7119
    %v7121 = vrot.slane %v7099, %v7120
    %v7123 = vunpack.c.l.s4 1966171168
    %v7124 = vunpack.c.0.s8 %v7123
    %v7125 = vlaneseq
    %v7126 = vshrl.u32 %v7125, 7
    %v7127 = vsub.s32 %v7124, %v7126
    %v7128 = vrot.slane %v7100, %v7127
    %v7129 = vcombine.low %v7107, %v7121
    %v7130 = vcombine.high %v7107, %v7121
    %v7131 = vcombine.low %v7114, %v7128
    %v7132 = vcombine.high %v7114, %v7128
    %v7134 = vunpack.c.l.s4 1966171168
    %v7135 = vunpack.c.0.s8 %v7134
    %v7136 = vlaneseq
    %v7137 = vshrl.u32 %v7136, 7
    %v7138 = vsub.s32 %v7135, %v7137
    %v7139 = vrot.slane %v7129, %v7138
    %v7141 = vunpack.c.l.s4 1966171168
    %v7142 = vunpack.c.0.s8 %v7141
    %v7143 = vlaneseq
    %v7144 = vshrl.u32 %v7143, 7
    %v7145 = vsub.s32 %v7142, %v7144
    %v7146 = vrot.slane %v7131, %v7145
    %v7148 = vunpack.c.l.s4 1966171168
    %v7149 = vunpack.c.0.s8 %v7148
    %v7150 = vlaneseq
    %v7151 = vshrl.u32 %v7150, 7
    %v7152 = vsub.s32 %v7149, %v7151
    %v7153 = vrot.slane %v7130, %v7152
    %v7155 = vunpack.c.l.s4 1966171168
    %v7156 = vunpack.c.0.s8 %v7155
    %v7157 = vlaneseq
    %v7158 = vshrl.u32 %v7157, 7
    %v7159 = vsub.s32 %v7156, %v7158
    %v7160 = vrot.slane %v7132, %v7159
    %v7161 = vcombine.high %v7139, %v7139
    %v7162 = vcombine.high %v7146, %v7146
    %v7163 = vcombine.high %v7153, %v7153
    %v7164 = vcombine.high %v7160, %v7160
    %v7173 = vadd.f32 %v6885, %v7139
    %v7174 = vadd.f32 %v6886, %v7153
    %v7175 = vadd.f32 %v6887, %v7161
    %v7176 = vadd.f32 %v6888, %v7163
    %v7177 = vadd.f32 %v6889, %v7146
    %v7178 = vadd.f32 %v6890, %v7160
    %v7179 = vadd.f32 %v6891, %v7162
    %v7180 = vadd.f32 %v6892, %v7164
    %v7189 = vrot.slane %v7173, 1
    %v7190 = vrot.slane %v7174, 1
    %v7191 = vrot.slane %v7175, 1
    %v7192 = vrot.slane %v7176, 1
    %v7193 = vrot.slane %v7177, 1
    %v7194 = vrot.slane %v7178, 1
    %v7195 = vrot.slane %v7179, 1
    %v7196 = vrot.slane %v7180, 1
    %v7205 = vxor.u32 %v7189, 2147483648
    %v7206 = vxor.u32 %v7190, 2147483648
    %v7207 = vxor.u32 %v7191, 2147483648
    %v7208 = vxor.u32 %v7192, 2147483648
    %v7209 = vxor.u32 %v7193, 2147483648
    %v7210 = vxor.u32 %v7194, 2147483648
    %v7211 = vxor.u32 %v7195, 2147483648
    %v7212 = vxor.u32 %v7196, 2147483648
    %v7213 = vmul.f32 %v7205, 1.442695
    %v7214 = vpow.pop %v7213
    %v7215 = vmul.f32 %v7206, 1.442695
    %v7216 = vpow.pop %v7215
    %v7217 = vmul.f32 %v7207, 1.442695
    %v7218 = vpow.pop %v7217
    %v7219 = vmul.f32 %v7208, 1.442695
    %v7220 = vpow.pop %v7219
    %v7221 = vmul.f32 %v7209, 1.442695
    %v7222 = vpow.pop %v7221
    %v7223 = vmul.f32 %v7210, 1.442695
    %v7224 = vpow.pop %v7223
    %v7225 = vmul.f32 %v7211, 1.442695
    %v7226 = vpow.pop %v7225
    %v7227 = vmul.f32 %v7212, 1.442695
    %v7228 = vpow.pop %v7227
    %v7229 = vadd.f32 %v7214, 1.0
    %v7230 = vadd.f32 %v7216, 1.0
    %v7231 = vadd.f32 %v7218, 1.0
    %v7232 = vadd.f32 %v7220, 1.0
    %v7233 = vadd.f32 %v7222, 1.0
    %v7234 = vadd.f32 %v7224, 1.0
    %v7235 = vadd.f32 %v7226, 1.0
    %v7236 = vadd.f32 %v7228, 1.0
    %v7237 = vrcp.pop %v7229
    %v7238 = vmul.f32 1.0, %v7237
    %v7239 = vrcp.pop %v7230
    %v7240 = vmul.f32 1.0, %v7239
    %v7241 = vrcp.pop %v7231
    %v7242 = vmul.f32 1.0, %v7241
    %v7243 = vrcp.pop %v7232
    %v7244 = vmul.f32 1.0, %v7243
    %v7245 = vrcp.pop %v7233
    %v7246 = vmul.f32 1.0, %v7245
    %v7247 = vrcp.pop %v7234
    %v7248 = vmul.f32 1.0, %v7247
    %v7249 = vrcp.pop %v7235
    %v7250 = vmul.f32 1.0, %v7249
    %v7251 = vrcp.pop %v7236
    %v7252 = vmul.f32 1.0, %v7251
    %v7253 = vmul.f32 %v7238, %v6797
    %v7254 = vmul.f32 %v7240, %v6798
    %v7255 = vmul.f32 %v7242, %v6799
    %v7256 = vmul.f32 %v7244, %v6800
    %v7257 = vmul.f32 %v7246, %v6801
    %v7258 = vmul.f32 %v7248, %v6802
    %v7259 = vmul.f32 %v7250, %v6803
    %v7260 = vmul.f32 %v7252, %v6804
    %v7261 = vxor.u32 %v7173, 2147483648
    %v7262 = vxor.u32 %v7174, 2147483648
    %v7263 = vxor.u32 %v7175, 2147483648
    %v7264 = vxor.u32 %v7176, 2147483648
    %v7265 = vxor.u32 %v7177, 2147483648
    %v7266 = vxor.u32 %v7178, 2147483648
    %v7267 = vxor.u32 %v7179, 2147483648
    %v7268 = vxor.u32 %v7180, 2147483648
    %v7269 = vmul.f32 %v7261, 1.442695
    %v7270 = vpow.pop %v7269
    %v7271 = vmul.f32 %v7262, 1.442695
    %v7272 = vpow.pop %v7271
    %v7273 = vmul.f32 %v7263, 1.442695
    %v7274 = vpow.pop %v7273
    %v7275 = vmul.f32 %v7264, 1.442695
    %v7276 = vpow.pop %v7275
    %v7277 = vmul.f32 %v7265, 1.442695
    %v7278 = vpow.pop %v7277
    %v7279 = vmul.f32 %v7266, 1.442695
    %v7280 = vpow.pop %v7279
    %v7281 = vmul.f32 %v7267, 1.442695
    %v7282 = vpow.pop %v7281
    %v7283 = vmul.f32 %v7268, 1.442695
    %v7284 = vpow.pop %v7283
    %v7285 = vadd.f32 %v7270, 1.0
    %v7286 = vadd.f32 %v7272, 1.0
    %v7287 = vadd.f32 %v7274, 1.0
    %v7288 = vadd.f32 %v7276, 1.0
    %v7289 = vadd.f32 %v7278, 1.0
    %v7290 = vadd.f32 %v7280, 1.0
    %v7291 = vadd.f32 %v7282, 1.0
    %v7292 = vadd.f32 %v7284, 1.0
    %v7293 = vrcp.pop %v7285
    %v7294 = vmul.f32 1.0, %v7293
    %v7295 = vrcp.pop %v7286
    %v7296 = vmul.f32 1.0, %v7295
    %v7297 = vrcp.pop %v7287
    %v7298 = vmul.f32 1.0, %v7297
    %v7299 = vrcp.pop %v7288
    %v7300 = vmul.f32 1.0, %v7299
    %v7301 = vrcp.pop %v7289
    %v7302 = vmul.f32 1.0, %v7301
    %v7303 = vrcp.pop %v7290
    %v7304 = vmul.f32 1.0, %v7303
    %v7305 = vrcp.pop %v7291
    %v7306 = vmul.f32 1.0, %v7305
    %v7307 = vrcp.pop %v7292
    %v7308 = vmul.f32 1.0, %v7307
    %v7309 = vrot.slane %v7173, 2
    %v7310 = vrot.slane %v7174, 2
    %v7311 = vrot.slane %v7175, 2
    %v7312 = vrot.slane %v7176, 2
    %v7313 = vrot.slane %v7177, 2
    %v7314 = vrot.slane %v7178, 2
    %v7315 = vrot.slane %v7179, 2
    %v7316 = vrot.slane %v7180, 2
    %v7325 = vtanh.pop %v7309
    %v7326 = vtanh.pop %v7310
    %v7327 = vtanh.pop %v7311
    %v7328 = vtanh.pop %v7312
    %v7329 = vtanh.pop %v7313
    %v7330 = vtanh.pop %v7314
    %v7331 = vtanh.pop %v7315
    %v7332 = vtanh.pop %v7316
    %v7333 = vmul.f32 %v7294, %v7325
    %v7334 = vmul.f32 %v7296, %v7326
    %v7335 = vmul.f32 %v7298, %v7327
    %v7336 = vmul.f32 %v7300, %v7328
    %v7337 = vmul.f32 %v7302, %v7329
    %v7338 = vmul.f32 %v7304, %v7330
    %v7339 = vmul.f32 %v7306, %v7331
    %v7340 = vmul.f32 %v7308, %v7332
    %v7341 = vadd.f32 %v7253, %v7333
    %v7342 = vadd.f32 %v7254, %v7334
    %v7343 = vadd.f32 %v7255, %v7335
    %v7344 = vadd.f32 %v7256, %v7336
    %v7345 = vadd.f32 %v7257, %v7337
    %v7346 = vadd.f32 %v7258, %v7338
    %v7347 = vadd.f32 %v7259, %v7339
    %v7348 = vadd.f32 %v7260, %v7340
    %v7349 = vrot.slane %v7173, 3
    %v7350 = vrot.slane %v7174, 3
    %v7351 = vrot.slane %v7175, 3
    %v7352 = vrot.slane %v7176, 3
    %v7353 = vrot.slane %v7177, 3
    %v7354 = vrot.slane %v7178, 3
    %v7355 = vrot.slane %v7179, 3
    %v7356 = vrot.slane %v7180, 3
    %v7365 = vxor.u32 %v7349, 2147483648
    %v7366 = vxor.u32 %v7350, 2147483648
    %v7367 = vxor.u32 %v7351, 2147483648
    %v7368 = vxor.u32 %v7352, 2147483648
    %v7369 = vxor.u32 %v7353, 2147483648
    %v7370 = vxor.u32 %v7354, 2147483648
    %v7371 = vxor.u32 %v7355, 2147483648
    %v7372 = vxor.u32 %v7356, 2147483648
    %v7373 = vmul.f32 %v7365, 1.442695
    %v7374 = vpow.pop %v7373
    %v7375 = vmul.f32 %v7366, 1.442695
    %v7376 = vpow.pop %v7375
    %v7377 = vmul.f32 %v7367, 1.442695
    %v7378 = vpow.pop %v7377
    %v7379 = vmul.f32 %v7368, 1.442695
    %v7380 = vpow.pop %v7379
    %v7381 = vmul.f32 %v7369, 1.442695
    %v7382 = vpow.pop %v7381
    %v7383 = vmul.f32 %v7370, 1.442695
    %v7384 = vpow.pop %v7383
    %v7385 = vmul.f32 %v7371, 1.442695
    %v7386 = vpow.pop %v7385
    %v7387 = vmul.f32 %v7372, 1.442695
    %v7388 = vpow.pop %v7387
    %v7389 = vadd.f32 %v7374, 1.0
    %v7390 = vadd.f32 %v7376, 1.0
    %v7391 = vadd.f32 %v7378, 1.0
    %v7392 = vadd.f32 %v7380, 1.0
    %v7393 = vadd.f32 %v7382, 1.0
    %v7394 = vadd.f32 %v7384, 1.0
    %v7395 = vadd.f32 %v7386, 1.0
    %v7396 = vadd.f32 %v7388, 1.0
    %v7397 = vrcp.pop %v7389
    %v7398 = vmul.f32 1.0, %v7397
    %v7399 = vrcp.pop %v7390
    %v7400 = vmul.f32 1.0, %v7399
    %v7401 = vrcp.pop %v7391
    %v7402 = vmul.f32 1.0, %v7401
    %v7403 = vrcp.pop %v7392
    %v7404 = vmul.f32 1.0, %v7403
    %v7405 = vrcp.pop %v7393
    %v7406 = vmul.f32 1.0, %v7405
    %v7407 = vrcp.pop %v7394
    %v7408 = vmul.f32 1.0, %v7407
    %v7409 = vrcp.pop %v7395
    %v7410 = vmul.f32 1.0, %v7409
    %v7411 = vrcp.pop %v7396
    %v7412 = vmul.f32 1.0, %v7411
    %v7413 = vtanh.pop %v7341
    %v7414 = vtanh.pop %v7342
    %v7415 = vtanh.pop %v7343
    %v7416 = vtanh.pop %v7344
    %v7417 = vtanh.pop %v7345
    %v7418 = vtanh.pop %v7346
    %v7419 = vtanh.pop %v7347
    %v7420 = vtanh.pop %v7348
    %v7421 = vmul.f32 %v7398, %v7413
    %v7422 = vmul.f32 %v7400, %v7414
    %v7423 = vmul.f32 %v7402, %v7415
    %v7424 = vmul.f32 %v7404, %v7416
    %v7425 = vmul.f32 %v7406, %v7417
    %v7426 = vmul.f32 %v7408, %v7418
    %v7427 = vmul.f32 %v7410, %v7419
    %v7428 = vmul.f32 %v7412, %v7420
    %v7429 = vld [vmem:[%s2655] ss:$8 sm:$0xf]
    %v7430 = vld [vmem:[%s2657] ss:$8 sm:$0xf]
    %v7431 = vld [vmem:[%s2659] ss:$8 sm:$0xf]
    %v7432 = vld [vmem:[%s2661] ss:$8 sm:$0xf]
    %v7433 = vld [vmem:[%s2663] ss:$8 sm:$0xf]
    %v7434 = vld [vmem:[%s2665] ss:$8 sm:$0xf]
    %v7435 = vld [vmem:[%s2667] ss:$8 sm:$0xf]
    %v7436 = vld [vmem:[%s2669] ss:$8 sm:$0xf]
    %v7445 = vcombine.low %v7421, %v7422
    %v7446 = vcombine.low %v7423, %v7424
    %v7447 = vcombine.low %v7425, %v7426
    %v7448 = vcombine.low %v7427, %v7428
    %v7450 = vunpack.c.l.s4 1966171168
    %v7451 = vunpack.c.0.s8 %v7450
    %v7452 = vlaneseq
    %v7453 = vshrl.u32 %v7452, 7
    %v7454 = vsub.s32 %v7451, %v7453
    %v7455 = vrot.slane %v7445, %v7454
    %v7457 = vunpack.c.l.s4 1966171168
    %v7458 = vunpack.c.0.s8 %v7457
    %v7459 = vlaneseq
    %v7460 = vshrl.u32 %v7459, 7
    %v7461 = vsub.s32 %v7458, %v7460
    %v7462 = vrot.slane %v7446, %v7461
    %v7464 = vunpack.c.l.s4 1966171168
    %v7465 = vunpack.c.0.s8 %v7464
    %v7466 = vlaneseq
    %v7467 = vshrl.u32 %v7466, 7
    %v7468 = vsub.s32 %v7465, %v7467
    %v7469 = vrot.slane %v7447, %v7468
    %v7471 = vunpack.c.l.s4 1966171168
    %v7472 = vunpack.c.0.s8 %v7471
    %v7473 = vlaneseq
    %v7474 = vshrl.u32 %v7473, 7
    %v7475 = vsub.s32 %v7472, %v7474
    %v7476 = vrot.slane %v7448, %v7475
    %v7477 = vcombine.low %v7455, %v7462
    %v7478 = vcombine.low %v7469, %v7476
    %v7480 = vunpack.c.l.s4 1966171168
    %v7481 = vunpack.c.0.s8 %v7480
    %v7482 = vlaneseq
    %v7483 = vshrl.u32 %v7482, 7
    %v7484 = vsub.s32 %v7481, %v7483
    %v7485 = vrot.slane %v7477, %v7484
    %v7487 = vunpack.c.l.s4 1966171168
    %v7488 = vunpack.c.0.s8 %v7487
    %v7489 = vlaneseq
    %v7490 = vshrl.u32 %v7489, 7
    %v7491 = vsub.s32 %v7488, %v7490
    %v7492 = vrot.slane %v7478, %v7491
    %v7493 = vcombine.low %v7485, %v7492
    %7495 = vmatprep.subr.mxu0 %v4960
    %7496 = vmatpush1.msra.mxu0 %v4959
    %7497 = vmatprep.subr.mxu0 %v4964
    %7498 = vmatpush1.msra.mxu0 %v4963
    %7499 = vmatprep.subr.mxu0 %v4968
    %7500 = vmatpush1.msra.mxu0 %v4967
    %7501 = vmatprep.subr.mxu0 %v4972
    %7502 = vmatpush1.msra.mxu0 %v4971
    %7503 = vmatprep.subr.mxu0 %v4976
    %7504 = vmatpush1.msra.mxu0 %v4975
    %7505 = vmatprep.subr.mxu0 %v4980
    %7506 = vmatpush1.msra.mxu0 %v4979
    %7507 = vmatprep.subr.mxu0 %v4984
    %7508 = vmatpush1.msra.mxu0 %v4983
    %7509 = vmatprep.subr.mxu0 %v4988
    %7510 = vmatpush1.msra.mxu0 %v4987
    %7511 = vmatprep.subr.mxu0 %v4992
    %7512 = vmatpush1.msra.mxu0 %v4991
    %7513 = vmatprep.subr.mxu0 %v4996
    %7514 = vmatpush1.msra.mxu0 %v4995
    %7515 = vmatprep.subr.mxu0 %v5000
    %7516 = vmatpush1.msra.mxu0 %v4999
    %7517 = vmatprep.subr.mxu0 %v5004
    %7518 = vmatpush1.msra.mxu0 %v5003
    %7519 = vmatprep.subr.mxu0 %v5008
    %7520 = vmatpush1.msra.mxu0 %v5007
    %7521 = vmatprep.subr.mxu0 %v5012
    %7522 = vmatpush1.msra.mxu0 %v5011
    %7523 = vmatprep.subr.mxu0 %v5016
    %7524 = vmatpush1.msra.mxu0 %v5015
    %7525 = vmatprep.subr.mxu0 %v5020
    %7526 = vmatpush1.msra.mxu0 %v5019
    %7527 = vmatprep.subr.mxu0 0.0
    %7528 = vmatpush1.msra.mxu0 0.0
    %7529 = vmatprep.subr.mxu0 0.0
    %7530 = vmatpush1.msra.mxu0 0.0
    %7531 = vmatprep.subr.mxu0 0.0
    %7532 = vmatpush1.msra.mxu0 0.0
    %7533 = vmatprep.subr.mxu0 0.0
    %7534 = vmatpush1.msra.mxu0 0.0
    %7535 = vmatprep.subr.mxu0 0.0
    %7536 = vmatpush1.msra.mxu0 0.0
    %7537 = vmatprep.subr.mxu0 0.0
    %7538 = vmatpush1.msra.mxu0 0.0
    %7539 = vmatprep.subr.mxu0 0.0
    %7540 = vmatpush1.msra.mxu0 0.0
    %7541 = vmatprep.subr.mxu0 0.0
    %7542 = vmatpush1.msra.mxu0 0.0
    %7543 = vmatprep.subr.mxu0 0.0
    %7544 = vmatpush1.msra.mxu0 0.0
    %7545 = vmatprep.subr.mxu0 0.0
    %7546 = vmatpush1.msra.mxu0 0.0
    %7547 = vmatprep.subr.mxu0 0.0
    %7548 = vmatpush1.msra.mxu0 0.0
    %7549 = vmatprep.subr.mxu0 0.0
    %7550 = vmatpush1.msra.mxu0 0.0
    %7551 = vmatprep.subr.mxu0 0.0
    %7552 = vmatpush1.msra.mxu0 0.0
    %7553 = vmatprep.subr.mxu0 0.0
    %7554 = vmatpush1.msra.mxu0 0.0
    %7555 = vmatprep.subr.mxu0 0.0
    %7556 = vmatpush1.msra.mxu0 0.0
    %7557 = vmatprep.subr.mxu0 0.0
    %7558 = vmatpush1.msra.mxu0 0.0
    %7559 = vmatprep.mubr.f32.mxu0 0.0
    %7560 = vmatmul.mubr.f32.gmra.mrb[0].mxu0 %v7493
    %v7561 = vpop.f32.mrb[0].mxu0
    %v7562 = vadd.f32 0.0, %v7561
    %v7563 = vpop.f32.mrb[0].mxu0
    %v7564 = vadd.f32 0.0, %v7563
    %7565 = vdwg.mxu0
    %7566 = vmatprep.subr.mxu0 %v4962
    %7567 = vmatpush1.msra.mxu0 %v4961
    %7568 = vmatprep.subr.mxu0 %v4966
    %7569 = vmatpush1.msra.mxu0 %v4965
    %7570 = vmatprep.subr.mxu0 %v4970
    %7571 = vmatpush1.msra.mxu0 %v4969
    %7572 = vmatprep.subr.mxu0 %v4974
    %7573 = vmatpush1.msra.mxu0 %v4973
    %7574 = vmatprep.subr.mxu0 %v4978
    %7575 = vmatpush1.msra.mxu0 %v4977
    %7576 = vmatprep.subr.mxu0 %v4982
    %7577 = vmatpush1.msra.mxu0 %v4981
    %7578 = vmatprep.subr.mxu0 %v4986
    %7579 = vmatpush1.msra.mxu0 %v4985
    %7580 = vmatprep.subr.mxu0 %v4990
    %7581 = vmatpush1.msra.mxu0 %v4989
    %7582 = vmatprep.subr.mxu0 %v4994
    %7583 = vmatpush1.msra.mxu0 %v4993
    %7584 = vmatprep.subr.mxu0 %v4998
    %7585 = vmatpush1.msra.mxu0 %v4997
    %7586 = vmatprep.subr.mxu0 %v5002
    %7587 = vmatpush1.msra.mxu0 %v5001
    %7588 = vmatprep.subr.mxu0 %v5006
    %7589 = vmatpush1.msra.mxu0 %v5005
    %7590 = vmatprep.subr.mxu0 %v5010
    %7591 = vmatpush1.msra.mxu0 %v5009
    %7592 = vmatprep.subr.mxu0 %v5014
    %7593 = vmatpush1.msra.mxu0 %v5013
    %7594 = vmatprep.subr.mxu0 %v5018
    %7595 = vmatpush1.msra.mxu0 %v5017
    %7596 = vmatprep.subr.mxu0 %v5022
    %7597 = vmatpush1.msra.mxu0 %v5021
    %7598 = vmatprep.subr.mxu0 0.0
    %7599 = vmatpush1.msra.mxu0 0.0
    %7600 = vmatprep.subr.mxu0 0.0
    %7601 = vmatpush1.msra.mxu0 0.0
    %7602 = vmatprep.subr.mxu0 0.0
    %7603 = vmatpush1.msra.mxu0 0.0
    %7604 = vmatprep.subr.mxu0 0.0
    %7605 = vmatpush1.msra.mxu0 0.0
    %7606 = vmatprep.subr.mxu0 0.0
    %7607 = vmatpush1.msra.mxu0 0.0
    %7608 = vmatprep.subr.mxu0 0.0
    %7609 = vmatpush1.msra.mxu0 0.0
    %7610 = vmatprep.subr.mxu0 0.0
    %7611 = vmatpush1.msra.mxu0 0.0
    %7612 = vmatprep.subr.mxu0 0.0
    %7613 = vmatpush1.msra.mxu0 0.0
    %7614 = vmatprep.subr.mxu0 0.0
    %7615 = vmatpush1.msra.mxu0 0.0
    %7616 = vmatprep.subr.mxu0 0.0
    %7617 = vmatpush1.msra.mxu0 0.0
    %7618 = vmatprep.subr.mxu0 0.0
    %7619 = vmatpush1.msra.mxu0 0.0
    %7620 = vmatprep.subr.mxu0 0.0
    %7621 = vmatpush1.msra.mxu0 0.0
    %7622 = vmatprep.subr.mxu0 0.0
    %7623 = vmatpush1.msra.mxu0 0.0
    %7624 = vmatprep.subr.mxu0 0.0
    %7625 = vmatpush1.msra.mxu0 0.0
    %7626 = vmatprep.subr.mxu0 0.0
    %7627 = vmatpush1.msra.mxu0 0.0
    %7628 = vmatprep.subr.mxu0 0.0
    %7629 = vmatpush1.msra.mxu0 0.0
    %7630 = vmatprep.mubr.f32.mxu0 0.0
    %7631 = vmatmul.mubr.f32.gmra.mrb[0].mxu0 %v7493
    %v7632 = vpop.f32.mrb[0].mxu0
    %v7633 = vadd.f32 0.0, %v7632
    %v7634 = vpop.f32.mrb[0].mxu0
    %v7635 = vadd.f32 0.0, %v7634
    %7636 = vdwg.mxu0
    %v7641 = vcombine.low %v7562, %v7564
    %v7642 = vcombine.high %v7562, %v7564
    %v7643 = vcombine.low %v7633, %v7635
    %v7644 = vcombine.high %v7633, %v7635
    %v7646 = vunpack.c.l.s4 1966171168
    %v7647 = vunpack.c.0.s8 %v7646
    %v7648 = vlaneseq
    %v7649 = vshrl.u32 %v7648, 7
    %v7650 = vsub.s32 %v7647, %v7649
    %v7651 = vrot.slane %v7641, %v7650
    %v7653 = vunpack.c.l.s4 1966171168
    %v7654 = vunpack.c.0.s8 %v7653
    %v7655 = vlaneseq
    %v7656 = vshrl.u32 %v7655, 7
    %v7657 = vsub.s32 %v7654, %v7656
    %v7658 = vrot.slane %v7642, %v7657
    %v7660 = vunpack.c.l.s4 1966171168
    %v7661 = vunpack.c.0.s8 %v7660
    %v7662 = vlaneseq
    %v7663 = vshrl.u32 %v7662, 7
    %v7664 = vsub.s32 %v7661, %v7663
    %v7665 = vrot.slane %v7643, %v7664
    %v7667 = vunpack.c.l.s4 1966171168
    %v7668 = vunpack.c.0.s8 %v7667
    %v7669 = vlaneseq
    %v7670 = vshrl.u32 %v7669, 7
    %v7671 = vsub.s32 %v7668, %v7670
    %v7672 = vrot.slane %v7644, %v7671
    %v7673 = vcombine.low %v7651, %v7665
    %v7674 = vcombine.high %v7651, %v7665
    %v7675 = vcombine.low %v7658, %v7672
    %v7676 = vcombine.high %v7658, %v7672
    %v7678 = vunpack.c.l.s4 1966171168
    %v7679 = vunpack.c.0.s8 %v7678
    %v7680 = vlaneseq
    %v7681 = vshrl.u32 %v7680, 7
    %v7682 = vsub.s32 %v7679, %v7681
    %v7683 = vrot.slane %v7673, %v7682
    %v7685 = vunpack.c.l.s4 1966171168
    %v7686 = vunpack.c.0.s8 %v7685
    %v7687 = vlaneseq
    %v7688 = vshrl.u32 %v7687, 7
    %v7689 = vsub.s32 %v7686, %v7688
    %v7690 = vrot.slane %v7675, %v7689
    %v7692 = vunpack.c.l.s4 1966171168
    %v7693 = vunpack.c.0.s8 %v7692
    %v7694 = vlaneseq
    %v7695 = vshrl.u32 %v7694, 7
    %v7696 = vsub.s32 %v7693, %v7695
    %v7697 = vrot.slane %v7674, %v7696
    %v7699 = vunpack.c.l.s4 1966171168
    %v7700 = vunpack.c.0.s8 %v7699
    %v7701 = vlaneseq
    %v7702 = vshrl.u32 %v7701, 7
    %v7703 = vsub.s32 %v7700, %v7702
    %v7704 = vrot.slane %v7676, %v7703
    %v7705 = vcombine.high %v7683, %v7683
    %v7706 = vcombine.high %v7690, %v7690
    %v7707 = vcombine.high %v7697, %v7697
    %v7708 = vcombine.high %v7704, %v7704
    %v7717 = vadd.f32 %v7429, %v7683
    %v7718 = vadd.f32 %v7430, %v7697
    %v7719 = vadd.f32 %v7431, %v7705
    %v7720 = vadd.f32 %v7432, %v7707
    %v7721 = vadd.f32 %v7433, %v7690
    %v7722 = vadd.f32 %v7434, %v7704
    %v7723 = vadd.f32 %v7435, %v7706
    %v7724 = vadd.f32 %v7436, %v7708
    %v7733 = vrot.slane %v7717, 1
    %v7734 = vrot.slane %v7718, 1
    %v7735 = vrot.slane %v7719, 1
    %v7736 = vrot.slane %v7720, 1
    %v7737 = vrot.slane %v7721, 1
    %v7738 = vrot.slane %v7722, 1
    %v7739 = vrot.slane %v7723, 1
    %v7740 = vrot.slane %v7724, 1
    %v7749 = vxor.u32 %v7733, 2147483648
    %v7750 = vxor.u32 %v7734, 2147483648
    %v7751 = vxor.u32 %v7735, 2147483648
    %v7752 = vxor.u32 %v7736, 2147483648
    %v7753 = vxor.u32 %v7737, 2147483648
    %v7754 = vxor.u32 %v7738, 2147483648
    %v7755 = vxor.u32 %v7739, 2147483648
    %v7756 = vxor.u32 %v7740, 2147483648
    %v7757 = vmul.f32 %v7749, 1.442695
    %v7758 = vpow.pop %v7757
    %v7759 = vmul.f32 %v7750, 1.442695
    %v7760 = vpow.pop %v7759
    %v7761 = vmul.f32 %v7751, 1.442695
    %v7762 = vpow.pop %v7761
    %v7763 = vmul.f32 %v7752, 1.442695
    %v7764 = vpow.pop %v7763
    %v7765 = vmul.f32 %v7753, 1.442695
    %v7766 = vpow.pop %v7765
    %v7767 = vmul.f32 %v7754, 1.442695
    %v7768 = vpow.pop %v7767
    %v7769 = vmul.f32 %v7755, 1.442695
    %v7770 = vpow.pop %v7769
    %v7771 = vmul.f32 %v7756, 1.442695
    %v7772 = vpow.pop %v7771
    %v7773 = vadd.f32 %v7758, 1.0
    %v7774 = vadd.f32 %v7760, 1.0
    %v7775 = vadd.f32 %v7762, 1.0
    %v7776 = vadd.f32 %v7764, 1.0
    %v7777 = vadd.f32 %v7766, 1.0
    %v7778 = vadd.f32 %v7768, 1.0
    %v7779 = vadd.f32 %v7770, 1.0
    %v7780 = vadd.f32 %v7772, 1.0
    %v7781 = vrcp.pop %v7773
    %v7782 = vmul.f32 1.0, %v7781
    %v7783 = vrcp.pop %v7774
    %v7784 = vmul.f32 1.0, %v7783
    %v7785 = vrcp.pop %v7775
    %v7786 = vmul.f32 1.0, %v7785
    %v7787 = vrcp.pop %v7776
    %v7788 = vmul.f32 1.0, %v7787
    %v7789 = vrcp.pop %v7777
    %v7790 = vmul.f32 1.0, %v7789
    %v7791 = vrcp.pop %v7778
    %v7792 = vmul.f32 1.0, %v7791
    %v7793 = vrcp.pop %v7779
    %v7794 = vmul.f32 1.0, %v7793
    %v7795 = vrcp.pop %v7780
    %v7796 = vmul.f32 1.0, %v7795
    %v7797 = vmul.f32 %v7782, %v7341
    %v7798 = vmul.f32 %v7784, %v7342
    %v7799 = vmul.f32 %v7786, %v7343
    %v7800 = vmul.f32 %v7788, %v7344
    %v7801 = vmul.f32 %v7790, %v7345
    %v7802 = vmul.f32 %v7792, %v7346
    %v7803 = vmul.f32 %v7794, %v7347
    %v7804 = vmul.f32 %v7796, %v7348
    %v7805 = vxor.u32 %v7717, 2147483648
    %v7806 = vxor.u32 %v7718, 2147483648
    %v7807 = vxor.u32 %v7719, 2147483648
    %v7808 = vxor.u32 %v7720, 2147483648
    %v7809 = vxor.u32 %v7721, 2147483648
    %v7810 = vxor.u32 %v7722, 2147483648
    %v7811 = vxor.u32 %v7723, 2147483648
    %v7812 = vxor.u32 %v7724, 2147483648
    %v7813 = vmul.f32 %v7805, 1.442695
    %v7814 = vpow.pop %v7813
    %v7815 = vmul.f32 %v7806, 1.442695
    %v7816 = vpow.pop %v7815
    %v7817 = vmul.f32 %v7807, 1.442695
    %v7818 = vpow.pop %v7817
    %v7819 = vmul.f32 %v7808, 1.442695
    %v7820 = vpow.pop %v7819
    %v7821 = vmul.f32 %v7809, 1.442695
    %v7822 = vpow.pop %v7821
    %v7823 = vmul.f32 %v7810, 1.442695
    %v7824 = vpow.pop %v7823
    %v7825 = vmul.f32 %v7811, 1.442695
    %v7826 = vpow.pop %v7825
    %v7827 = vmul.f32 %v7812, 1.442695
    %v7828 = vpow.pop %v7827
    %v7829 = vadd.f32 %v7814, 1.0
    %v7830 = vadd.f32 %v7816, 1.0
    %v7831 = vadd.f32 %v7818, 1.0
    %v7832 = vadd.f32 %v7820, 1.0
    %v7833 = vadd.f32 %v7822, 1.0
    %v7834 = vadd.f32 %v7824, 1.0
    %v7835 = vadd.f32 %v7826, 1.0
    %v7836 = vadd.f32 %v7828, 1.0
    %v7837 = vrcp.pop %v7829
    %v7838 = vmul.f32 1.0, %v7837
    %v7839 = vrcp.pop %v7830
    %v7840 = vmul.f32 1.0, %v7839
    %v7841 = vrcp.pop %v7831
    %v7842 = vmul.f32 1.0, %v7841
    %v7843 = vrcp.pop %v7832
    %v7844 = vmul.f32 1.0, %v7843
    %v7845 = vrcp.pop %v7833
    %v7846 = vmul.f32 1.0, %v7845
    %v7847 = vrcp.pop %v7834
    %v7848 = vmul.f32 1.0, %v7847
    %v7849 = vrcp.pop %v7835
    %v7850 = vmul.f32 1.0, %v7849
    %v7851 = vrcp.pop %v7836
    %v7852 = vmul.f32 1.0, %v7851
    %v7853 = vrot.slane %v7717, 2
    %v7854 = vrot.slane %v7718, 2
    %v7855 = vrot.slane %v7719, 2
    %v7856 = vrot.slane %v7720, 2
    %v7857 = vrot.slane %v7721, 2
    %v7858 = vrot.slane %v7722, 2
    %v7859 = vrot.slane %v7723, 2
    %v7860 = vrot.slane %v7724, 2
    %v7869 = vtanh.pop %v7853
    %v7870 = vtanh.pop %v7854
    %v7871 = vtanh.pop %v7855
    %v7872 = vtanh.pop %v7856
    %v7873 = vtanh.pop %v7857
    %v7874 = vtanh.pop %v7858
    %v7875 = vtanh.pop %v7859
    %v7876 = vtanh.pop %v7860
    %v7877 = vmul.f32 %v7838, %v7869
    %v7878 = vmul.f32 %v7840, %v7870
    %v7879 = vmul.f32 %v7842, %v7871
    %v7880 = vmul.f32 %v7844, %v7872
    %v7881 = vmul.f32 %v7846, %v7873
    %v7882 = vmul.f32 %v7848, %v7874
    %v7883 = vmul.f32 %v7850, %v7875
    %v7884 = vmul.f32 %v7852, %v7876
    %v7885 = vadd.f32 %v7797, %v7877
    %v7886 = vadd.f32 %v7798, %v7878
    %v7887 = vadd.f32 %v7799, %v7879
    %v7888 = vadd.f32 %v7800, %v7880
    %v7889 = vadd.f32 %v7801, %v7881
    %v7890 = vadd.f32 %v7802, %v7882
    %v7891 = vadd.f32 %v7803, %v7883
    %v7892 = vadd.f32 %v7804, %v7884
    %v7893 = vrot.slane %v7717, 3
    %v7894 = vrot.slane %v7718, 3
    %v7895 = vrot.slane %v7719, 3
    %v7896 = vrot.slane %v7720, 3
    %v7897 = vrot.slane %v7721, 3
    %v7898 = vrot.slane %v7722, 3
    %v7899 = vrot.slane %v7723, 3
    %v7900 = vrot.slane %v7724, 3
    %v7909 = vxor.u32 %v7893, 2147483648
    %v7910 = vxor.u32 %v7894, 2147483648
    %v7911 = vxor.u32 %v7895, 2147483648
    %v7912 = vxor.u32 %v7896, 2147483648
    %v7913 = vxor.u32 %v7897, 2147483648
    %v7914 = vxor.u32 %v7898, 2147483648
    %v7915 = vxor.u32 %v7899, 2147483648
    %v7916 = vxor.u32 %v7900, 2147483648
    %v7917 = vmul.f32 %v7909, 1.442695
    %v7918 = vpow.pop %v7917
    %v7919 = vmul.f32 %v7910, 1.442695
    %v7920 = vpow.pop %v7919
    %v7921 = vmul.f32 %v7911, 1.442695
    %v7922 = vpow.pop %v7921
    %v7923 = vmul.f32 %v7912, 1.442695
    %v7924 = vpow.pop %v7923
    %v7925 = vmul.f32 %v7913, 1.442695
    %v7926 = vpow.pop %v7925
    %v7927 = vmul.f32 %v7914, 1.442695
    %v7928 = vpow.pop %v7927
    %v7929 = vmul.f32 %v7915, 1.442695
    %v7930 = vpow.pop %v7929
    %v7931 = vmul.f32 %v7916, 1.442695
    %v7932 = vpow.pop %v7931
    %v7933 = vadd.f32 %v7918, 1.0
    %v7934 = vadd.f32 %v7920, 1.0
    %v7935 = vadd.f32 %v7922, 1.0
    %v7936 = vadd.f32 %v7924, 1.0
    %v7937 = vadd.f32 %v7926, 1.0
    %v7938 = vadd.f32 %v7928, 1.0
    %v7939 = vadd.f32 %v7930, 1.0
    %v7940 = vadd.f32 %v7932, 1.0
    %v7941 = vrcp.pop %v7933
    %v7942 = vmul.f32 1.0, %v7941
    %v7943 = vrcp.pop %v7934
    %v7944 = vmul.f32 1.0, %v7943
    %v7945 = vrcp.pop %v7935
    %v7946 = vmul.f32 1.0, %v7945
    %v7947 = vrcp.pop %v7936
    %v7948 = vmul.f32 1.0, %v7947
    %v7949 = vrcp.pop %v7937
    %v7950 = vmul.f32 1.0, %v7949
    %v7951 = vrcp.pop %v7938
    %v7952 = vmul.f32 1.0, %v7951
    %v7953 = vrcp.pop %v7939
    %v7954 = vmul.f32 1.0, %v7953
    %v7955 = vrcp.pop %v7940
    %v7956 = vmul.f32 1.0, %v7955
    %v7957 = vtanh.pop %v7885
    %v7958 = vtanh.pop %v7886
    %v7959 = vtanh.pop %v7887
    %v7960 = vtanh.pop %v7888
    %v7961 = vtanh.pop %v7889
    %v7962 = vtanh.pop %v7890
    %v7963 = vtanh.pop %v7891
    %v7964 = vtanh.pop %v7892
    %v7965 = vmul.f32 %v7942, %v7957
    %v7966 = vmul.f32 %v7944, %v7958
    %v7967 = vmul.f32 %v7946, %v7959
    %v7968 = vmul.f32 %v7948, %v7960
    %v7969 = vmul.f32 %v7950, %v7961
    %v7970 = vmul.f32 %v7952, %v7962
    %v7971 = vmul.f32 %v7954, %v7963
    %v7972 = vmul.f32 %v7956, %v7964
    %v7973 = vld [vmem:[%s3215] ss:$8 sm:$0xf]
    %v7974 = vld [vmem:[%s3217] ss:$8 sm:$0xf]
    %v7975 = vld [vmem:[%s3219] ss:$8 sm:$0xf]
    %v7976 = vld [vmem:[%s3221] ss:$8 sm:$0xf]
    %v7977 = vld [vmem:[%s3223] ss:$8 sm:$0xf]
    %v7978 = vld [vmem:[%s3225] ss:$8 sm:$0xf]
    %v7979 = vld [vmem:[%s3227] ss:$8 sm:$0xf]
    %v7980 = vld [vmem:[%s3229] ss:$8 sm:$0xf]
    %v7989 = vcombine.low %v7965, %v7966
    %v7990 = vcombine.low %v7967, %v7968
    %v7991 = vcombine.low %v7969, %v7970
    %v7992 = vcombine.low %v7971, %v7972
    %v7994 = vunpack.c.l.s4 1966171168
    %v7995 = vunpack.c.0.s8 %v7994
    %v7996 = vlaneseq
    %v7997 = vshrl.u32 %v7996, 7
    %v7998 = vsub.s32 %v7995, %v7997
    %v7999 = vrot.slane %v7989, %v7998
    %v8001 = vunpack.c.l.s4 1966171168
    %v8002 = vunpack.c.0.s8 %v8001
    %v8003 = vlaneseq
    %v8004 = vshrl.u32 %v8003, 7
    %v8005 = vsub.s32 %v8002, %v8004
    %v8006 = vrot.slane %v7990, %v8005
    %v8008 = vunpack.c.l.s4 1966171168
    %v8009 = vunpack.c.0.s8 %v8008
    %v8010 = vlaneseq
    %v8011 = vshrl.u32 %v8010, 7
    %v8012 = vsub.s32 %v8009, %v8011
    %v8013 = vrot.slane %v7991, %v8012
    %v8015 = vunpack.c.l.s4 1966171168
    %v8016 = vunpack.c.0.s8 %v8015
    %v8017 = vlaneseq
    %v8018 = vshrl.u32 %v8017, 7
    %v8019 = vsub.s32 %v8016, %v8018
    %v8020 = vrot.slane %v7992, %v8019
    %v8021 = vcombine.low %v7999, %v8006
    %v8022 = vcombine.low %v8013, %v8020
    %v8024 = vunpack.c.l.s4 1966171168
    %v8025 = vunpack.c.0.s8 %v8024
    %v8026 = vlaneseq
    %v8027 = vshrl.u32 %v8026, 7
    %v8028 = vsub.s32 %v8025, %v8027
    %v8029 = vrot.slane %v8021, %v8028
    %v8031 = vunpack.c.l.s4 1966171168
    %v8032 = vunpack.c.0.s8 %v8031
    %v8033 = vlaneseq
    %v8034 = vshrl.u32 %v8033, 7
    %v8035 = vsub.s32 %v8032, %v8034
    %v8036 = vrot.slane %v8022, %v8035
    %v8037 = vcombine.low %v8029, %v8036
    %8039 = vmatprep.subr.mxu0 %v4960
    %8040 = vmatpush1.msra.mxu0 %v4959
    %8041 = vmatprep.subr.mxu0 %v4964
    %8042 = vmatpush1.msra.mxu0 %v4963
    %8043 = vmatprep.subr.mxu0 %v4968
    %8044 = vmatpush1.msra.mxu0 %v4967
    %8045 = vmatprep.subr.mxu0 %v4972
    %8046 = vmatpush1.msra.mxu0 %v4971
    %8047 = vmatprep.subr.mxu0 %v4976
    %8048 = vmatpush1.msra.mxu0 %v4975
    %8049 = vmatprep.subr.mxu0 %v4980
    %8050 = vmatpush1.msra.mxu0 %v4979
    %8051 = vmatprep.subr.mxu0 %v4984
    %8052 = vmatpush1.msra.mxu0 %v4983
    %8053 = vmatprep.subr.mxu0 %v4988
    %8054 = vmatpush1.msra.mxu0 %v4987
    %8055 = vmatprep.subr.mxu0 %v4992
    %8056 = vmatpush1.msra.mxu0 %v4991
    %8057 = vmatprep.subr.mxu0 %v4996
    %8058 = vmatpush1.msra.mxu0 %v4995
    %8059 = vmatprep.subr.mxu0 %v5000
    %8060 = vmatpush1.msra.mxu0 %v4999
    %8061 = vmatprep.subr.mxu0 %v5004
    %8062 = vmatpush1.msra.mxu0 %v5003
    %8063 = vmatprep.subr.mxu0 %v5008
    %8064 = vmatpush1.msra.mxu0 %v5007
    %8065 = vmatprep.subr.mxu0 %v5012
    %8066 = vmatpush1.msra.mxu0 %v5011
    %8067 = vmatprep.subr.mxu0 %v5016
    %8068 = vmatpush1.msra.mxu0 %v5015
    %8069 = vmatprep.subr.mxu0 %v5020
    %8070 = vmatpush1.msra.mxu0 %v5019
    %8071 = vmatprep.subr.mxu0 0.0
    %8072 = vmatpush1.msra.mxu0 0.0
    %8073 = vmatprep.subr.mxu0 0.0
    %8074 = vmatpush1.msra.mxu0 0.0
    %8075 = vmatprep.subr.mxu0 0.0
    %8076 = vmatpush1.msra.mxu0 0.0
    %8077 = vmatprep.subr.mxu0 0.0
    %8078 = vmatpush1.msra.mxu0 0.0
    %8079 = vmatprep.subr.mxu0 0.0
    %8080 = vmatpush1.msra.mxu0 0.0
    %8081 = vmatprep.subr.mxu0 0.0
    %8082 = vmatpush1.msra.mxu0 0.0
    %8083 = vmatprep.subr.mxu0 0.0
    %8084 = vmatpush1.msra.mxu0 0.0
    %8085 = vmatprep.subr.mxu0 0.0
    %8086 = vmatpush1.msra.mxu0 0.0
    %8087 = vmatprep.subr.mxu0 0.0
    %8088 = vmatpush1.msra.mxu0 0.0
    %8089 = vmatprep.subr.mxu0 0.0
    %8090 = vmatpush1.msra.mxu0 0.0
    %8091 = vmatprep.subr.mxu0 0.0
    %8092 = vmatpush1.msra.mxu0 0.0
    %8093 = vmatprep.subr.mxu0 0.0
    %8094 = vmatpush1.msra.mxu0 0.0
    %8095 = vmatprep.subr.mxu0 0.0
    %8096 = vmatpush1.msra.mxu0 0.0
    %8097 = vmatprep.subr.mxu0 0.0
    %8098 = vmatpush1.msra.mxu0 0.0
    %8099 = vmatprep.subr.mxu0 0.0
    %8100 = vmatpush1.msra.mxu0 0.0
    %8101 = vmatprep.subr.mxu0 0.0
    %8102 = vmatpush1.msra.mxu0 0.0
    %8103 = vmatprep.mubr.f32.mxu0 0.0
    %8104 = vmatmul.mubr.f32.gmra.mrb[0].mxu0 %v8037
    %v8105 = vpop.f32.mrb[0].mxu0
    %v8106 = vadd.f32 0.0, %v8105
    %v8107 = vpop.f32.mrb[0].mxu0
    %v8108 = vadd.f32 0.0, %v8107
    %8109 = vdwg.mxu0
    %8110 = vmatprep.subr.mxu0 %v4962
    %8111 = vmatpush1.msra.mxu0 %v4961
    %8112 = vmatprep.subr.mxu0 %v4966
    %8113 = vmatpush1.msra.mxu0 %v4965
    %8114 = vmatprep.subr.mxu0 %v4970
    %8115 = vmatpush1.msra.mxu0 %v4969
    %8116 = vmatprep.subr.mxu0 %v4974
    %8117 = vmatpush1.msra.mxu0 %v4973
    %8118 = vmatprep.subr.mxu0 %v4978
    %8119 = vmatpush1.msra.mxu0 %v4977
    %8120 = vmatprep.subr.mxu0 %v4982
    %8121 = vmatpush1.msra.mxu0 %v4981
    %8122 = vmatprep.subr.mxu0 %v4986
    %8123 = vmatpush1.msra.mxu0 %v4985
    %8124 = vmatprep.subr.mxu0 %v4990
    %8125 = vmatpush1.msra.mxu0 %v4989
    %8126 = vmatprep.subr.mxu0 %v4994
    %8127 = vmatpush1.msra.mxu0 %v4993
    %8128 = vmatprep.subr.mxu0 %v4998
    %8129 = vmatpush1.msra.mxu0 %v4997
    %8130 = vmatprep.subr.mxu0 %v5002
    %8131 = vmatpush1.msra.mxu0 %v5001
    %8132 = vmatprep.subr.mxu0 %v5006
    %8133 = vmatpush1.msra.mxu0 %v5005
    %8134 = vmatprep.subr.mxu0 %v5010
    %8135 = vmatpush1.msra.mxu0 %v5009
    %8136 = vmatprep.subr.mxu0 %v5014
    %8137 = vmatpush1.msra.mxu0 %v5013
    %8138 = vmatprep.subr.mxu0 %v5018
    %8139 = vmatpush1.msra.mxu0 %v5017
    %8140 = vmatprep.subr.mxu0 %v5022
    %8141 = vmatpush1.msra.mxu0 %v5021
    %8142 = vmatprep.subr.mxu0 0.0
    %8143 = vmatpush1.msra.mxu0 0.0
    %8144 = vmatprep.subr.mxu0 0.0
    %8145 = vmatpush1.msra.mxu0 0.0
    %8146 = vmatprep.subr.mxu0 0.0
    %8147 = vmatpush1.msra.mxu0 0.0
    %8148 = vmatprep.subr.mxu0 0.0
    %8149 = vmatpush1.msra.mxu0 0.0
    %8150 = vmatprep.subr.mxu0 0.0
    %8151 = vmatpush1.msra.mxu0 0.0
    %8152 = vmatprep.subr.mxu0 0.0
    %8153 = vmatpush1.msra.mxu0 0.0
    %8154 = vmatprep.subr.mxu0 0.0
    %8155 = vmatpush1.msra.mxu0 0.0
    %8156 = vmatprep.subr.mxu0 0.0
    %8157 = vmatpush1.msra.mxu0 0.0
    %8158 = vmatprep.subr.mxu0 0.0
    %8159 = vmatpush1.msra.mxu0 0.0
    %8160 = vmatprep.subr.mxu0 0.0
    %8161 = vmatpush1.msra.mxu0 0.0
    %8162 = vmatprep.subr.mxu0 0.0
    %8163 = vmatpush1.msra.mxu0 0.0
    %8164 = vmatprep.subr.mxu0 0.0
    %8165 = vmatpush1.msra.mxu0 0.0
    %8166 = vmatprep.subr.mxu0 0.0
    %8167 = vmatpush1.msra.mxu0 0.0
    %8168 = vmatprep.subr.mxu0 0.0
    %8169 = vmatpush1.msra.mxu0 0.0
    %8170 = vmatprep.subr.mxu0 0.0
    %8171 = vmatpush1.msra.mxu0 0.0
    %8172 = vmatprep.subr.mxu0 0.0
    %8173 = vmatpush1.msra.mxu0 0.0
    %8174 = vmatprep.mubr.f32.mxu0 0.0
    %8175 = vmatmul.mubr.f32.gmra.mrb[0].mxu0 %v8037
    %v8176 = vpop.f32.mrb[0].mxu0
    %v8177 = vadd.f32 0.0, %v8176
    %v8178 = vpop.f32.mrb[0].mxu0
    %v8179 = vadd.f32 0.0, %v8178
    %8180 = vdwg.mxu0
    %v8185 = vcombine.low %v8106, %v8108
    %v8186 = vcombine.high %v8106, %v8108
    %v8187 = vcombine.low %v8177, %v8179
    %v8188 = vcombine.high %v8177, %v8179
    %v8190 = vunpack.c.l.s4 1966171168
    %v8191 = vunpack.c.0.s8 %v8190
    %v8192 = vlaneseq
    %v8193 = vshrl.u32 %v8192, 7
    %v8194 = vsub.s32 %v8191, %v8193
    %v8195 = vrot.slane %v8185, %v8194
    %v8197 = vunpack.c.l.s4 1966171168
    %v8198 = vunpack.c.0.s8 %v8197
    %v8199 = vlaneseq
    %v8200 = vshrl.u32 %v8199, 7
    %v8201 = vsub.s32 %v8198, %v8200
    %v8202 = vrot.slane %v8186, %v8201
    %v8204 = vunpack.c.l.s4 1966171168
    %v8205 = vunpack.c.0.s8 %v8204
    %v8206 = vlaneseq
    %v8207 = vshrl.u32 %v8206, 7
    %v8208 = vsub.s32 %v8205, %v8207
    %v8209 = vrot.slane %v8187, %v8208
    %v8211 = vunpack.c.l.s4 1966171168
    %v8212 = vunpack.c.0.s8 %v8211
    %v8213 = vlaneseq
    %v8214 = vshrl.u32 %v8213, 7
    %v8215 = vsub.s32 %v8212, %v8214
    %v8216 = vrot.slane %v8188, %v8215
    %v8217 = vcombine.low %v8195, %v8209
    %v8218 = vcombine.high %v8195, %v8209
    %v8219 = vcombine.low %v8202, %v8216
    %v8220 = vcombine.high %v8202, %v8216
    %v8222 = vunpack.c.l.s4 1966171168
    %v8223 = vunpack.c.0.s8 %v8222
    %v8224 = vlaneseq
    %v8225 = vshrl.u32 %v8224, 7
    %v8226 = vsub.s32 %v8223, %v8225
    %v8227 = vrot.slane %v8217, %v8226
    %v8229 = vunpack.c.l.s4 1966171168
    %v8230 = vunpack.c.0.s8 %v8229
    %v8231 = vlaneseq
    %v8232 = vshrl.u32 %v8231, 7
    %v8233 = vsub.s32 %v8230, %v8232
    %v8234 = vrot.slane %v8219, %v8233
    %v8236 = vunpack.c.l.s4 1966171168
    %v8237 = vunpack.c.0.s8 %v8236
    %v8238 = vlaneseq
    %v8239 = vshrl.u32 %v8238, 7
    %v8240 = vsub.s32 %v8237, %v8239
    %v8241 = vrot.slane %v8218, %v8240
    %v8243 = vunpack.c.l.s4 1966171168
    %v8244 = vunpack.c.0.s8 %v8243
    %v8245 = vlaneseq
    %v8246 = vshrl.u32 %v8245, 7
    %v8247 = vsub.s32 %v8244, %v8246
    %v8248 = vrot.slane %v8220, %v8247
    %v8249 = vcombine.high %v8227, %v8227
    %v8250 = vcombine.high %v8234, %v8234
    %v8251 = vcombine.high %v8241, %v8241
    %v8252 = vcombine.high %v8248, %v8248
    %v8261 = vadd.f32 %v7973, %v8227
    %v8262 = vadd.f32 %v7974, %v8241
    %v8263 = vadd.f32 %v7975, %v8249
    %v8264 = vadd.f32 %v7976, %v8251
    %v8265 = vadd.f32 %v7977, %v8234
    %v8266 = vadd.f32 %v7978, %v8248
    %v8267 = vadd.f32 %v7979, %v8250
    %v8268 = vadd.f32 %v7980, %v8252
    %v8277 = vrot.slane %v8261, 1
    %v8278 = vrot.slane %v8262, 1
    %v8279 = vrot.slane %v8263, 1
    %v8280 = vrot.slane %v8264, 1
    %v8281 = vrot.slane %v8265, 1
    %v8282 = vrot.slane %v8266, 1
    %v8283 = vrot.slane %v8267, 1
    %v8284 = vrot.slane %v8268, 1
    %v8293 = vxor.u32 %v8277, 2147483648
    %v8294 = vxor.u32 %v8278, 2147483648
    %v8295 = vxor.u32 %v8279, 2147483648
    %v8296 = vxor.u32 %v8280, 2147483648
    %v8297 = vxor.u32 %v8281, 2147483648
    %v8298 = vxor.u32 %v8282, 2147483648
    %v8299 = vxor.u32 %v8283, 2147483648
    %v8300 = vxor.u32 %v8284, 2147483648
    %v8301 = vmul.f32 %v8293, 1.442695
    %v8302 = vpow.pop %v8301
    %v8303 = vmul.f32 %v8294, 1.442695
    %v8304 = vpow.pop %v8303
    %v8305 = vmul.f32 %v8295, 1.442695
    %v8306 = vpow.pop %v8305
    %v8307 = vmul.f32 %v8296, 1.442695
    %v8308 = vpow.pop %v8307
    %v8309 = vmul.f32 %v8297, 1.442695
    %v8310 = vpow.pop %v8309
    %v8311 = vmul.f32 %v8298, 1.442695
    %v8312 = vpow.pop %v8311
    %v8313 = vmul.f32 %v8299, 1.442695
    %v8314 = vpow.pop %v8313
    %v8315 = vmul.f32 %v8300, 1.442695
    %v8316 = vpow.pop %v8315
    %v8317 = vadd.f32 %v8302, 1.0
    %v8318 = vadd.f32 %v8304, 1.0
    %v8319 = vadd.f32 %v8306, 1.0
    %v8320 = vadd.f32 %v8308, 1.0
    %v8321 = vadd.f32 %v8310, 1.0
    %v8322 = vadd.f32 %v8312, 1.0
    %v8323 = vadd.f32 %v8314, 1.0
    %v8324 = vadd.f32 %v8316, 1.0
    %v8325 = vrcp.pop %v8317
    %v8326 = vmul.f32 1.0, %v8325
    %v8327 = vrcp.pop %v8318
    %v8328 = vmul.f32 1.0, %v8327
    %v8329 = vrcp.pop %v8319
    %v8330 = vmul.f32 1.0, %v8329
    %v8331 = vrcp.pop %v8320
    %v8332 = vmul.f32 1.0, %v8331
    %v8333 = vrcp.pop %v8321
    %v8334 = vmul.f32 1.0, %v8333
    %v8335 = vrcp.pop %v8322
    %v8336 = vmul.f32 1.0, %v8335
    %v8337 = vrcp.pop %v8323
    %v8338 = vmul.f32 1.0, %v8337
    %v8339 = vrcp.pop %v8324
    %v8340 = vmul.f32 1.0, %v8339
    %v8341 = vmul.f32 %v8326, %v7885
    %v8342 = vmul.f32 %v8328, %v7886
    %v8343 = vmul.f32 %v8330, %v7887
    %v8344 = vmul.f32 %v8332, %v7888
    %v8345 = vmul.f32 %v8334, %v7889
    %v8346 = vmul.f32 %v8336, %v7890
    %v8347 = vmul.f32 %v8338, %v7891
    %v8348 = vmul.f32 %v8340, %v7892
    %v8349 = vxor.u32 %v8261, 2147483648
    %v8350 = vxor.u32 %v8262, 2147483648
    %v8351 = vxor.u32 %v8263, 2147483648
    %v8352 = vxor.u32 %v8264, 2147483648
    %v8353 = vxor.u32 %v8265, 2147483648
    %v8354 = vxor.u32 %v8266, 2147483648
    %v8355 = vxor.u32 %v8267, 2147483648
    %v8356 = vxor.u32 %v8268, 2147483648
    %v8357 = vmul.f32 %v8349, 1.442695
    %v8358 = vpow.pop %v8357
    %v8359 = vmul.f32 %v8350, 1.442695
    %v8360 = vpow.pop %v8359
    %v8361 = vmul.f32 %v8351, 1.442695
    %v8362 = vpow.pop %v8361
    %v8363 = vmul.f32 %v8352, 1.442695
    %v8364 = vpow.pop %v8363
    %v8365 = vmul.f32 %v8353, 1.442695
    %v8366 = vpow.pop %v8365
    %v8367 = vmul.f32 %v8354, 1.442695
    %v8368 = vpow.pop %v8367
    %v8369 = vmul.f32 %v8355, 1.442695
    %v8370 = vpow.pop %v8369
    %v8371 = vmul.f32 %v8356, 1.442695
    %v8372 = vpow.pop %v8371
    %v8373 = vadd.f32 %v8358, 1.0
    %v8374 = vadd.f32 %v8360, 1.0
    %v8375 = vadd.f32 %v8362, 1.0
    %v8376 = vadd.f32 %v8364, 1.0
    %v8377 = vadd.f32 %v8366, 1.0
    %v8378 = vadd.f32 %v8368, 1.0
    %v8379 = vadd.f32 %v8370, 1.0
    %v8380 = vadd.f32 %v8372, 1.0
    %v8381 = vrcp.pop %v8373
    %v8382 = vmul.f32 1.0, %v8381
    %v8383 = vrcp.pop %v8374
    %v8384 = vmul.f32 1.0, %v8383
    %v8385 = vrcp.pop %v8375
    %v8386 = vmul.f32 1.0, %v8385
    %v8387 = vrcp.pop %v8376
    %v8388 = vmul.f32 1.0, %v8387
    %v8389 = vrcp.pop %v8377
    %v8390 = vmul.f32 1.0, %v8389
    %v8391 = vrcp.pop %v8378
    %v8392 = vmul.f32 1.0, %v8391
    %v8393 = vrcp.pop %v8379
    %v8394 = vmul.f32 1.0, %v8393
    %v8395 = vrcp.pop %v8380
    %v8396 = vmul.f32 1.0, %v8395
    %v8397 = vrot.slane %v8261, 2
    %v8398 = vrot.slane %v8262, 2
    %v8399 = vrot.slane %v8263, 2
    %v8400 = vrot.slane %v8264, 2
    %v8401 = vrot.slane %v8265, 2
    %v8402 = vrot.slane %v8266, 2
    %v8403 = vrot.slane %v8267, 2
    %v8404 = vrot.slane %v8268, 2
    %v8413 = vtanh.pop %v8397
    %v8414 = vtanh.pop %v8398
    %v8415 = vtanh.pop %v8399
    %v8416 = vtanh.pop %v8400
    %v8417 = vtanh.pop %v8401
    %v8418 = vtanh.pop %v8402
    %v8419 = vtanh.pop %v8403
    %v8420 = vtanh.pop %v8404
    %v8421 = vmul.f32 %v8382, %v8413
    %v8422 = vmul.f32 %v8384, %v8414
    %v8423 = vmul.f32 %v8386, %v8415
    %v8424 = vmul.f32 %v8388, %v8416
    %v8425 = vmul.f32 %v8390, %v8417
    %v8426 = vmul.f32 %v8392, %v8418
    %v8427 = vmul.f32 %v8394, %v8419
    %v8428 = vmul.f32 %v8396, %v8420
    %v8429 = vadd.f32 %v8341, %v8421
    %v8430 = vadd.f32 %v8342, %v8422
    %v8431 = vadd.f32 %v8343, %v8423
    %v8432 = vadd.f32 %v8344, %v8424
    %v8433 = vadd.f32 %v8345, %v8425
    %v8434 = vadd.f32 %v8346, %v8426
    %v8435 = vadd.f32 %v8347, %v8427
    %v8436 = vadd.f32 %v8348, %v8428
    %v8437 = vrot.slane %v8261, 3
    %v8438 = vrot.slane %v8262, 3
    %v8439 = vrot.slane %v8263, 3
    %v8440 = vrot.slane %v8264, 3
    %v8441 = vrot.slane %v8265, 3
    %v8442 = vrot.slane %v8266, 3
    %v8443 = vrot.slane %v8267, 3
    %v8444 = vrot.slane %v8268, 3
    %v8453 = vxor.u32 %v8437, 2147483648
    %v8454 = vxor.u32 %v8438, 2147483648
    %v8455 = vxor.u32 %v8439, 2147483648
    %v8456 = vxor.u32 %v8440, 2147483648
    %v8457 = vxor.u32 %v8441, 2147483648
    %v8458 = vxor.u32 %v8442, 2147483648
    %v8459 = vxor.u32 %v8443, 2147483648
    %v8460 = vxor.u32 %v8444, 2147483648
    %v8461 = vmul.f32 %v8453, 1.442695
    %v8462 = vpow.pop %v8461
    %v8463 = vmul.f32 %v8454, 1.442695
    %v8464 = vpow.pop %v8463
    %v8465 = vmul.f32 %v8455, 1.442695
    %v8466 = vpow.pop %v8465
    %v8467 = vmul.f32 %v8456, 1.442695
    %v8468 = vpow.pop %v8467
    %v8469 = vmul.f32 %v8457, 1.442695
    %v8470 = vpow.pop %v8469
    %v8471 = vmul.f32 %v8458, 1.442695
    %v8472 = vpow.pop %v8471
    %v8473 = vmul.f32 %v8459, 1.442695
    %v8474 = vpow.pop %v8473
    %v8475 = vmul.f32 %v8460, 1.442695
    %v8476 = vpow.pop %v8475
    %v8477 = vadd.f32 %v8462, 1.0
    %v8478 = vadd.f32 %v8464, 1.0
    %v8479 = vadd.f32 %v8466, 1.0
    %v8480 = vadd.f32 %v8468, 1.0
    %v8481 = vadd.f32 %v8470, 1.0
    %v8482 = vadd.f32 %v8472, 1.0
    %v8483 = vadd.f32 %v8474, 1.0
    %v8484 = vadd.f32 %v8476, 1.0
    %v8485 = vrcp.pop %v8477
    %v8486 = vmul.f32 1.0, %v8485
    %v8487 = vrcp.pop %v8478
    %v8488 = vmul.f32 1.0, %v8487
    %v8489 = vrcp.pop %v8479
    %v8490 = vmul.f32 1.0, %v8489
    %v8491 = vrcp.pop %v8480
    %v8492 = vmul.f32 1.0, %v8491
    %v8493 = vrcp.pop %v8481
    %v8494 = vmul.f32 1.0, %v8493
    %v8495 = vrcp.pop %v8482
    %v8496 = vmul.f32 1.0, %v8495
    %v8497 = vrcp.pop %v8483
    %v8498 = vmul.f32 1.0, %v8497
    %v8499 = vrcp.pop %v8484
    %v8500 = vmul.f32 1.0, %v8499
    %v8501 = vtanh.pop %v8429
    %v8502 = vtanh.pop %v8430
    %v8503 = vtanh.pop %v8431
    %v8504 = vtanh.pop %v8432
    %v8505 = vtanh.pop %v8433
    %v8506 = vtanh.pop %v8434
    %v8507 = vtanh.pop %v8435
    %v8508 = vtanh.pop %v8436
    %v8509 = vmul.f32 %v8486, %v8501
    %v8510 = vmul.f32 %v8488, %v8502
    %v8511 = vmul.f32 %v8490, %v8503
    %v8512 = vmul.f32 %v8492, %v8504
    %v8513 = vmul.f32 %v8494, %v8505
    %v8514 = vmul.f32 %v8496, %v8506
    %v8515 = vmul.f32 %v8498, %v8507
    %v8516 = vmul.f32 %v8500, %v8508
    %v8517 = vld [vmem:[%s3775] ss:$8 sm:$0xf]
    %v8518 = vld [vmem:[%s3777] ss:$8 sm:$0xf]
    %v8519 = vld [vmem:[%s3779] ss:$8 sm:$0xf]
    %v8520 = vld [vmem:[%s3781] ss:$8 sm:$0xf]
    %v8521 = vld [vmem:[%s3783] ss:$8 sm:$0xf]
    %v8522 = vld [vmem:[%s3785] ss:$8 sm:$0xf]
    %v8523 = vld [vmem:[%s3787] ss:$8 sm:$0xf]
    %v8524 = vld [vmem:[%s3789] ss:$8 sm:$0xf]
    %v8533 = vcombine.low %v8509, %v8510
    %v8534 = vcombine.low %v8511, %v8512
    %v8535 = vcombine.low %v8513, %v8514
    %v8536 = vcombine.low %v8515, %v8516
    %v8538 = vunpack.c.l.s4 1966171168
    %v8539 = vunpack.c.0.s8 %v8538
    %v8540 = vlaneseq
    %v8541 = vshrl.u32 %v8540, 7
    %v8542 = vsub.s32 %v8539, %v8541
    %v8543 = vrot.slane %v8533, %v8542
    %v8545 = vunpack.c.l.s4 1966171168
    %v8546 = vunpack.c.0.s8 %v8545
    %v8547 = vlaneseq
    %v8548 = vshrl.u32 %v8547, 7
    %v8549 = vsub.s32 %v8546, %v8548
    %v8550 = vrot.slane %v8534, %v8549
    %v8552 = vunpack.c.l.s4 1966171168
    %v8553 = vunpack.c.0.s8 %v8552
    %v8554 = vlaneseq
    %v8555 = vshrl.u32 %v8554, 7
    %v8556 = vsub.s32 %v8553, %v8555
    %v8557 = vrot.slane %v8535, %v8556
    %v8559 = vunpack.c.l.s4 1966171168
    %v8560 = vunpack.c.0.s8 %v8559
    %v8561 = vlaneseq
    %v8562 = vshrl.u32 %v8561, 7
    %v8563 = vsub.s32 %v8560, %v8562
    %v8564 = vrot.slane %v8536, %v8563
    %v8565 = vcombine.low %v8543, %v8550
    %v8566 = vcombine.low %v8557, %v8564
    %v8568 = vunpack.c.l.s4 1966171168
    %v8569 = vunpack.c.0.s8 %v8568
    %v8570 = vlaneseq
    %v8571 = vshrl.u32 %v8570, 7
    %v8572 = vsub.s32 %v8569, %v8571
    %v8573 = vrot.slane %v8565, %v8572
    %v8575 = vunpack.c.l.s4 1966171168
    %v8576 = vunpack.c.0.s8 %v8575
    %v8577 = vlaneseq
    %v8578 = vshrl.u32 %v8577, 7
    %v8579 = vsub.s32 %v8576, %v8578
    %v8580 = vrot.slane %v8566, %v8579
    %v8581 = vcombine.low %v8573, %v8580
    %8583 = vmatprep.subr.mxu0 %v4960
    %8584 = vmatpush1.msra.mxu0 %v4959
    %8585 = vmatprep.subr.mxu0 %v4964
    %8586 = vmatpush1.msra.mxu0 %v4963
    %8587 = vmatprep.subr.mxu0 %v4968
    %8588 = vmatpush1.msra.mxu0 %v4967
    %8589 = vmatprep.subr.mxu0 %v4972
    %8590 = vmatpush1.msra.mxu0 %v4971
    %8591 = vmatprep.subr.mxu0 %v4976
    %8592 = vmatpush1.msra.mxu0 %v4975
    %8593 = vmatprep.subr.mxu0 %v4980
    %8594 = vmatpush1.msra.mxu0 %v4979
    %8595 = vmatprep.subr.mxu0 %v4984
    %8596 = vmatpush1.msra.mxu0 %v4983
    %8597 = vmatprep.subr.mxu0 %v4988
    %8598 = vmatpush1.msra.mxu0 %v4987
    %8599 = vmatprep.subr.mxu0 %v4992
    %8600 = vmatpush1.msra.mxu0 %v4991
    %8601 = vmatprep.subr.mxu0 %v4996
    %8602 = vmatpush1.msra.mxu0 %v4995
    %8603 = vmatprep.subr.mxu0 %v5000
    %8604 = vmatpush1.msra.mxu0 %v4999
    %8605 = vmatprep.subr.mxu0 %v5004
    %8606 = vmatpush1.msra.mxu0 %v5003
    %8607 = vmatprep.subr.mxu0 %v5008
    %8608 = vmatpush1.msra.mxu0 %v5007
    %8609 = vmatprep.subr.mxu0 %v5012
    %8610 = vmatpush1.msra.mxu0 %v5011
    %8611 = vmatprep.subr.mxu0 %v5016
    %8612 = vmatpush1.msra.mxu0 %v5015
    %8613 = vmatprep.subr.mxu0 %v5020
    %8614 = vmatpush1.msra.mxu0 %v5019
    %8615 = vmatprep.subr.mxu0 0.0
    %8616 = vmatpush1.msra.mxu0 0.0
    %8617 = vmatprep.subr.mxu0 0.0
    %8618 = vmatpush1.msra.mxu0 0.0
    %8619 = vmatprep.subr.mxu0 0.0
    %8620 = vmatpush1.msra.mxu0 0.0
    %8621 = vmatprep.subr.mxu0 0.0
    %8622 = vmatpush1.msra.mxu0 0.0
    %8623 = vmatprep.subr.mxu0 0.0
    %8624 = vmatpush1.msra.mxu0 0.0
    %8625 = vmatprep.subr.mxu0 0.0
    %8626 = vmatpush1.msra.mxu0 0.0
    %8627 = vmatprep.subr.mxu0 0.0
    %8628 = vmatpush1.msra.mxu0 0.0
    %8629 = vmatprep.subr.mxu0 0.0
    %8630 = vmatpush1.msra.mxu0 0.0
    %8631 = vmatprep.subr.mxu0 0.0
    %8632 = vmatpush1.msra.mxu0 0.0
    %8633 = vmatprep.subr.mxu0 0.0
    %8634 = vmatpush1.msra.mxu0 0.0
    %8635 = vmatprep.subr.mxu0 0.0
    %8636 = vmatpush1.msra.mxu0 0.0
    %8637 = vmatprep.subr.mxu0 0.0
    %8638 = vmatpush1.msra.mxu0 0.0
    %8639 = vmatprep.subr.mxu0 0.0
    %8640 = vmatpush1.msra.mxu0 0.0
    %8641 = vmatprep.subr.mxu0 0.0
    %8642 = vmatpush1.msra.mxu0 0.0
    %8643 = vmatprep.subr.mxu0 0.0
    %8644 = vmatpush1.msra.mxu0 0.0
    %8645 = vmatprep.subr.mxu0 0.0
    %8646 = vmatpush1.msra.mxu0 0.0
    %8647 = vmatprep.mubr.f32.mxu0 0.0
    %8648 = vmatmul.mubr.f32.gmra.mrb[0].mxu0 %v8581
    %v8649 = vpop.f32.mrb[0].mxu0
    %v8650 = vadd.f32 0.0, %v8649
    %v8651 = vpop.f32.mrb[0].mxu0
    %v8652 = vadd.f32 0.0, %v8651
    %8653 = vdwg.mxu0
    %8654 = vmatprep.subr.mxu0 %v4962
    %8655 = vmatpush1.msra.mxu0 %v4961
    %8656 = vmatprep.subr.mxu0 %v4966
    %8657 = vmatpush1.msra.mxu0 %v4965
    %8658 = vmatprep.subr.mxu0 %v4970
    %8659 = vmatpush1.msra.mxu0 %v4969
    %8660 = vmatprep.subr.mxu0 %v4974
    %8661 = vmatpush1.msra.mxu0 %v4973
    %8662 = vmatprep.subr.mxu0 %v4978
    %8663 = vmatpush1.msra.mxu0 %v4977
    %8664 = vmatprep.subr.mxu0 %v4982
    %8665 = vmatpush1.msra.mxu0 %v4981
    %8666 = vmatprep.subr.mxu0 %v4986
    %8667 = vmatpush1.msra.mxu0 %v4985
    %8668 = vmatprep.subr.mxu0 %v4990
    %8669 = vmatpush1.msra.mxu0 %v4989
    %8670 = vmatprep.subr.mxu0 %v4994
    %8671 = vmatpush1.msra.mxu0 %v4993
    %8672 = vmatprep.subr.mxu0 %v4998
    %8673 = vmatpush1.msra.mxu0 %v4997
    %8674 = vmatprep.subr.mxu0 %v5002
    %8675 = vmatpush1.msra.mxu0 %v5001
    %8676 = vmatprep.subr.mxu0 %v5006
    %8677 = vmatpush1.msra.mxu0 %v5005
    %8678 = vmatprep.subr.mxu0 %v5010
    %8679 = vmatpush1.msra.mxu0 %v5009
    %8680 = vmatprep.subr.mxu0 %v5014
    %8681 = vmatpush1.msra.mxu0 %v5013
    %8682 = vmatprep.subr.mxu0 %v5018
    %8683 = vmatpush1.msra.mxu0 %v5017
    %8684 = vmatprep.subr.mxu0 %v5022
    %8685 = vmatpush1.msra.mxu0 %v5021
    %8686 = vmatprep.subr.mxu0 0.0
    %8687 = vmatpush1.msra.mxu0 0.0
    %8688 = vmatprep.subr.mxu0 0.0
    %8689 = vmatpush1.msra.mxu0 0.0
    %8690 = vmatprep.subr.mxu0 0.0
    %8691 = vmatpush1.msra.mxu0 0.0
    %8692 = vmatprep.subr.mxu0 0.0
    %8693 = vmatpush1.msra.mxu0 0.0
    %8694 = vmatprep.subr.mxu0 0.0
    %8695 = vmatpush1.msra.mxu0 0.0
    %8696 = vmatprep.subr.mxu0 0.0
    %8697 = vmatpush1.msra.mxu0 0.0
    %8698 = vmatprep.subr.mxu0 0.0
    %8699 = vmatpush1.msra.mxu0 0.0
    %8700 = vmatprep.subr.mxu0 0.0
    %8701 = vmatpush1.msra.mxu0 0.0
    %8702 = vmatprep.subr.mxu0 0.0
    %8703 = vmatpush1.msra.mxu0 0.0
    %8704 = vmatprep.subr.mxu0 0.0
    %8705 = vmatpush1.msra.mxu0 0.0
    %8706 = vmatprep.subr.mxu0 0.0
    %8707 = vmatpush1.msra.mxu0 0.0
    %8708 = vmatprep.subr.mxu0 0.0
    %8709 = vmatpush1.msra.mxu0 0.0
    %8710 = vmatprep.subr.mxu0 0.0
    %8711 = vmatpush1.msra.mxu0 0.0
    %8712 = vmatprep.subr.mxu0 0.0
    %8713 = vmatpush1.msra.mxu0 0.0
    %8714 = vmatprep.subr.mxu0 0.0
    %8715 = vmatpush1.msra.mxu0 0.0
    %8716 = vmatprep.subr.mxu0 0.0
    %8717 = vmatpush1.msra.mxu0 0.0
    %8718 = vmatprep.mubr.f32.mxu0 0.0
    %8719 = vmatmul.mubr.f32.gmra.mrb[0].mxu0 %v8581
    %v8720 = vpop.f32.mrb[0].mxu0
    %v8721 = vadd.f32 0.0, %v8720
    %v8722 = vpop.f32.mrb[0].mxu0
    %v8723 = vadd.f32 0.0, %v8722
    %8724 = vdwg.mxu0
    %v8729 = vcombine.low %v8650, %v8652
    %v8730 = vcombine.high %v8650, %v8652
    %v8731 = vcombine.low %v8721, %v8723
    %v8732 = vcombine.high %v8721, %v8723
    %v8734 = vunpack.c.l.s4 1966171168
    %v8735 = vunpack.c.0.s8 %v8734
    %v8736 = vlaneseq
    %v8737 = vshrl.u32 %v8736, 7
    %v8738 = vsub.s32 %v8735, %v8737
    %v8739 = vrot.slane %v8729, %v8738
    %v8741 = vunpack.c.l.s4 1966171168
    %v8742 = vunpack.c.0.s8 %v8741
    %v8743 = vlaneseq
    %v8744 = vshrl.u32 %v8743, 7
    %v8745 = vsub.s32 %v8742, %v8744
    %v8746 = vrot.slane %v8730, %v8745
    %v8748 = vunpack.c.l.s4 1966171168
    %v8749 = vunpack.c.0.s8 %v8748
    %v8750 = vlaneseq
    %v8751 = vshrl.u32 %v8750, 7
    %v8752 = vsub.s32 %v8749, %v8751
    %v8753 = vrot.slane %v8731, %v8752
    %v8755 = vunpack.c.l.s4 1966171168
    %v8756 = vunpack.c.0.s8 %v8755
    %v8757 = vlaneseq
    %v8758 = vshrl.u32 %v8757, 7
    %v8759 = vsub.s32 %v8756, %v8758
    %v8760 = vrot.slane %v8732, %v8759
    %v8761 = vcombine.low %v8739, %v8753
    %v8762 = vcombine.high %v8739, %v8753
    %v8763 = vcombine.low %v8746, %v8760
    %v8764 = vcombine.high %v8746, %v8760
    %v8766 = vunpack.c.l.s4 1966171168
    %v8767 = vunpack.c.0.s8 %v8766
    %v8768 = vlaneseq
    %v8769 = vshrl.u32 %v8768, 7
    %v8770 = vsub.s32 %v8767, %v8769
    %v8771 = vrot.slane %v8761, %v8770
    %v8773 = vunpack.c.l.s4 1966171168
    %v8774 = vunpack.c.0.s8 %v8773
    %v8775 = vlaneseq
    %v8776 = vshrl.u32 %v8775, 7
    %v8777 = vsub.s32 %v8774, %v8776
    %v8778 = vrot.slane %v8763, %v8777
    %v8780 = vunpack.c.l.s4 1966171168
    %v8781 = vunpack.c.0.s8 %v8780
    %v8782 = vlaneseq
    %v8783 = vshrl.u32 %v8782, 7
    %v8784 = vsub.s32 %v8781, %v8783
    %v8785 = vrot.slane %v8762, %v8784
    %v8787 = vunpack.c.l.s4 1966171168
    %v8788 = vunpack.c.0.s8 %v8787
    %v8789 = vlaneseq
    %v8790 = vshrl.u32 %v8789, 7
    %v8791 = vsub.s32 %v8788, %v8790
    %v8792 = vrot.slane %v8764, %v8791
    %v8793 = vcombine.high %v8771, %v8771
    %v8794 = vcombine.high %v8778, %v8778
    %v8795 = vcombine.high %v8785, %v8785
    %v8796 = vcombine.high %v8792, %v8792
    %v8805 = vadd.f32 %v8517, %v8771
    %v8806 = vadd.f32 %v8518, %v8785
    %v8807 = vadd.f32 %v8519, %v8793
    %v8808 = vadd.f32 %v8520, %v8795
    %v8809 = vadd.f32 %v8521, %v8778
    %v8810 = vadd.f32 %v8522, %v8792
    %v8811 = vadd.f32 %v8523, %v8794
    %v8812 = vadd.f32 %v8524, %v8796
    %v8821 = vrot.slane %v8805, 1
    %v8822 = vrot.slane %v8806, 1
    %v8823 = vrot.slane %v8807, 1
    %v8824 = vrot.slane %v8808, 1
    %v8825 = vrot.slane %v8809, 1
    %v8826 = vrot.slane %v8810, 1
    %v8827 = vrot.slane %v8811, 1
    %v8828 = vrot.slane %v8812, 1
    %v8837 = vxor.u32 %v8821, 2147483648
    %v8838 = vxor.u32 %v8822, 2147483648
    %v8839 = vxor.u32 %v8823, 2147483648
    %v8840 = vxor.u32 %v8824, 2147483648
    %v8841 = vxor.u32 %v8825, 2147483648
    %v8842 = vxor.u32 %v8826, 2147483648
    %v8843 = vxor.u32 %v8827, 2147483648
    %v8844 = vxor.u32 %v8828, 2147483648
    %v8845 = vmul.f32 %v8837, 1.442695
    %v8846 = vpow.pop %v8845
    %v8847 = vmul.f32 %v8838, 1.442695
    %v8848 = vpow.pop %v8847
    %v8849 = vmul.f32 %v8839, 1.442695
    %v8850 = vpow.pop %v8849
    %v8851 = vmul.f32 %v8840, 1.442695
    %v8852 = vpow.pop %v8851
    %v8853 = vmul.f32 %v8841, 1.442695
    %v8854 = vpow.pop %v8853
    %v8855 = vmul.f32 %v8842, 1.442695
    %v8856 = vpow.pop %v8855
    %v8857 = vmul.f32 %v8843, 1.442695
    %v8858 = vpow.pop %v8857
    %v8859 = vmul.f32 %v8844, 1.442695
    %v8860 = vpow.pop %v8859
    %v8861 = vadd.f32 %v8846, 1.0
    %v8862 = vadd.f32 %v8848, 1.0
    %v8863 = vadd.f32 %v8850, 1.0
    %v8864 = vadd.f32 %v8852, 1.0
    %v8865 = vadd.f32 %v8854, 1.0
    %v8866 = vadd.f32 %v8856, 1.0
    %v8867 = vadd.f32 %v8858, 1.0
    %v8868 = vadd.f32 %v8860, 1.0
    %v8869 = vrcp.pop %v8861
    %v8870 = vmul.f32 1.0, %v8869
    %v8871 = vrcp.pop %v8862
    %v8872 = vmul.f32 1.0, %v8871
    %v8873 = vrcp.pop %v8863
    %v8874 = vmul.f32 1.0, %v8873
    %v8875 = vrcp.pop %v8864
    %v8876 = vmul.f32 1.0, %v8875
    %v8877 = vrcp.pop %v8865
    %v8878 = vmul.f32 1.0, %v8877
    %v8879 = vrcp.pop %v8866
    %v8880 = vmul.f32 1.0, %v8879
    %v8881 = vrcp.pop %v8867
    %v8882 = vmul.f32 1.0, %v8881
    %v8883 = vrcp.pop %v8868
    %v8884 = vmul.f32 1.0, %v8883
    %v8885 = vmul.f32 %v8870, %v8429
    %v8886 = vmul.f32 %v8872, %v8430
    %v8887 = vmul.f32 %v8874, %v8431
    %v8888 = vmul.f32 %v8876, %v8432
    %v8889 = vmul.f32 %v8878, %v8433
    %v8890 = vmul.f32 %v8880, %v8434
    %v8891 = vmul.f32 %v8882, %v8435
    %v8892 = vmul.f32 %v8884, %v8436
    %v8893 = vxor.u32 %v8805, 2147483648
    %v8894 = vxor.u32 %v8806, 2147483648
    %v8895 = vxor.u32 %v8807, 2147483648
    %v8896 = vxor.u32 %v8808, 2147483648
    %v8897 = vxor.u32 %v8809, 2147483648
    %v8898 = vxor.u32 %v8810, 2147483648
    %v8899 = vxor.u32 %v8811, 2147483648
    %v8900 = vxor.u32 %v8812, 2147483648
    %v8901 = vmul.f32 %v8893, 1.442695
    %v8902 = vpow.pop %v8901
    %v8903 = vmul.f32 %v8894, 1.442695
    %v8904 = vpow.pop %v8903
    %v8905 = vmul.f32 %v8895, 1.442695
    %v8906 = vpow.pop %v8905
    %v8907 = vmul.f32 %v8896, 1.442695
    %v8908 = vpow.pop %v8907
    %v8909 = vmul.f32 %v8897, 1.442695
    %v8910 = vpow.pop %v8909
    %v8911 = vmul.f32 %v8898, 1.442695
    %v8912 = vpow.pop %v8911
    %v8913 = vmul.f32 %v8899, 1.442695
    %v8914 = vpow.pop %v8913
    %v8915 = vmul.f32 %v8900, 1.442695
    %v8916 = vpow.pop %v8915
    %v8917 = vadd.f32 %v8902, 1.0
    %v8918 = vadd.f32 %v8904, 1.0
    %v8919 = vadd.f32 %v8906, 1.0
    %v8920 = vadd.f32 %v8908, 1.0
    %v8921 = vadd.f32 %v8910, 1.0
    %v8922 = vadd.f32 %v8912, 1.0
    %v8923 = vadd.f32 %v8914, 1.0
    %v8924 = vadd.f32 %v8916, 1.0
    %v8925 = vrcp.pop %v8917
    %v8926 = vmul.f32 1.0, %v8925
    %v8927 = vrcp.pop %v8918
    %v8928 = vmul.f32 1.0, %v8927
    %v8929 = vrcp.pop %v8919
    %v8930 = vmul.f32 1.0, %v8929
    %v8931 = vrcp.pop %v8920
    %v8932 = vmul.f32 1.0, %v8931
    %v8933 = vrcp.pop %v8921
    %v8934 = vmul.f32 1.0, %v8933
    %v8935 = vrcp.pop %v8922
    %v8936 = vmul.f32 1.0, %v8935
    %v8937 = vrcp.pop %v8923
    %v8938 = vmul.f32 1.0, %v8937
    %v8939 = vrcp.pop %v8924
    %v8940 = vmul.f32 1.0, %v8939
    %v8941 = vrot.slane %v8805, 2
    %v8942 = vrot.slane %v8806, 2
    %v8943 = vrot.slane %v8807, 2
    %v8944 = vrot.slane %v8808, 2
    %v8945 = vrot.slane %v8809, 2
    %v8946 = vrot.slane %v8810, 2
    %v8947 = vrot.slane %v8811, 2
    %v8948 = vrot.slane %v8812, 2
    %v8957 = vtanh.pop %v8941
    %v8958 = vtanh.pop %v8942
    %v8959 = vtanh.pop %v8943
    %v8960 = vtanh.pop %v8944
    %v8961 = vtanh.pop %v8945
    %v8962 = vtanh.pop %v8946
    %v8963 = vtanh.pop %v8947
    %v8964 = vtanh.pop %v8948
    %v8965 = vmul.f32 %v8926, %v8957
    %v8966 = vmul.f32 %v8928, %v8958
    %v8967 = vmul.f32 %v8930, %v8959
    %v8968 = vmul.f32 %v8932, %v8960
    %v8969 = vmul.f32 %v8934, %v8961
    %v8970 = vmul.f32 %v8936, %v8962
    %v8971 = vmul.f32 %v8938, %v8963
    %v8972 = vmul.f32 %v8940, %v8964
    %v8973 = vadd.f32 %v8885, %v8965
    %v8974 = vadd.f32 %v8886, %v8966
    %v8975 = vadd.f32 %v8887, %v8967
    %v8976 = vadd.f32 %v8888, %v8968
    %v8977 = vadd.f32 %v8889, %v8969
    %v8978 = vadd.f32 %v8890, %v8970
    %v8979 = vadd.f32 %v8891, %v8971
    %v8980 = vadd.f32 %v8892, %v8972
    %v8981 = vrot.slane %v8805, 3
    %v8982 = vrot.slane %v8806, 3
    %v8983 = vrot.slane %v8807, 3
    %v8984 = vrot.slane %v8808, 3
    %v8985 = vrot.slane %v8809, 3
    %v8986 = vrot.slane %v8810, 3
    %v8987 = vrot.slane %v8811, 3
    %v8988 = vrot.slane %v8812, 3
    %v8997 = vxor.u32 %v8981, 2147483648
    %v8998 = vxor.u32 %v8982, 2147483648
    %v8999 = vxor.u32 %v8983, 2147483648
    %v9000 = vxor.u32 %v8984, 2147483648
    %v9001 = vxor.u32 %v8985, 2147483648
    %v9002 = vxor.u32 %v8986, 2147483648
    %v9003 = vxor.u32 %v8987, 2147483648
    %v9004 = vxor.u32 %v8988, 2147483648
    %v9005 = vmul.f32 %v8997, 1.442695
    %v9006 = vpow.pop %v9005
    %v9007 = vmul.f32 %v8998, 1.442695
    %v9008 = vpow.pop %v9007
    %v9009 = vmul.f32 %v8999, 1.442695
    %v9010 = vpow.pop %v9009
    %v9011 = vmul.f32 %v9000, 1.442695
    %v9012 = vpow.pop %v9011
    %v9013 = vmul.f32 %v9001, 1.442695
    %v9014 = vpow.pop %v9013
    %v9015 = vmul.f32 %v9002, 1.442695
    %v9016 = vpow.pop %v9015
    %v9017 = vmul.f32 %v9003, 1.442695
    %v9018 = vpow.pop %v9017
    %v9019 = vmul.f32 %v9004, 1.442695
    %v9020 = vpow.pop %v9019
    %v9021 = vadd.f32 %v9006, 1.0
    %v9022 = vadd.f32 %v9008, 1.0
    %v9023 = vadd.f32 %v9010, 1.0
    %v9024 = vadd.f32 %v9012, 1.0
    %v9025 = vadd.f32 %v9014, 1.0
    %v9026 = vadd.f32 %v9016, 1.0
    %v9027 = vadd.f32 %v9018, 1.0
    %v9028 = vadd.f32 %v9020, 1.0
    %v9029 = vrcp.pop %v9021
    %v9030 = vmul.f32 1.0, %v9029
    %v9031 = vrcp.pop %v9022
    %v9032 = vmul.f32 1.0, %v9031
    %v9033 = vrcp.pop %v9023
    %v9034 = vmul.f32 1.0, %v9033
    %v9035 = vrcp.pop %v9024
    %v9036 = vmul.f32 1.0, %v9035
    %v9037 = vrcp.pop %v9025
    %v9038 = vmul.f32 1.0, %v9037
    %v9039 = vrcp.pop %v9026
    %v9040 = vmul.f32 1.0, %v9039
    %v9041 = vrcp.pop %v9027
    %v9042 = vmul.f32 1.0, %v9041
    %v9043 = vrcp.pop %v9028
    %v9044 = vmul.f32 1.0, %v9043
    %v9045 = vtanh.pop %v8973
    %v9046 = vtanh.pop %v8974
    %v9047 = vtanh.pop %v8975
    %v9048 = vtanh.pop %v8976
    %v9049 = vtanh.pop %v8977
    %v9050 = vtanh.pop %v8978
    %v9051 = vtanh.pop %v8979
    %v9052 = vtanh.pop %v8980
    %v9053 = vmul.f32 %v9030, %v9045
    %v9054 = vmul.f32 %v9032, %v9046
    %v9055 = vmul.f32 %v9034, %v9047
    %v9056 = vmul.f32 %v9036, %v9048
    %v9057 = vmul.f32 %v9038, %v9049
    %v9058 = vmul.f32 %v9040, %v9050
    %v9059 = vmul.f32 %v9042, %v9051
    %v9060 = vmul.f32 %v9044, %v9052
    %v9061 = vld [vmem:[%s4335] ss:$8 sm:$0xf]
    %v9062 = vld [vmem:[%s4337] ss:$8 sm:$0xf]
    %v9063 = vld [vmem:[%s4339] ss:$8 sm:$0xf]
    %v9064 = vld [vmem:[%s4341] ss:$8 sm:$0xf]
    %v9065 = vld [vmem:[%s4343] ss:$8 sm:$0xf]
    %v9066 = vld [vmem:[%s4345] ss:$8 sm:$0xf]
    %v9067 = vld [vmem:[%s4347] ss:$8 sm:$0xf]
    %v9068 = vld [vmem:[%s4349] ss:$8 sm:$0xf]
    %v9077 = vcombine.low %v9053, %v9054
    %v9078 = vcombine.low %v9055, %v9056
    %v9079 = vcombine.low %v9057, %v9058
    %v9080 = vcombine.low %v9059, %v9060
    %v9082 = vunpack.c.l.s4 1966171168
    %v9083 = vunpack.c.0.s8 %v9082
    %v9084 = vlaneseq
    %v9085 = vshrl.u32 %v9084, 7
    %v9086 = vsub.s32 %v9083, %v9085
    %v9087 = vrot.slane %v9077, %v9086
    %v9089 = vunpack.c.l.s4 1966171168
    %v9090 = vunpack.c.0.s8 %v9089
    %v9091 = vlaneseq
    %v9092 = vshrl.u32 %v9091, 7
    %v9093 = vsub.s32 %v9090, %v9092
    %v9094 = vrot.slane %v9078, %v9093
    %v9096 = vunpack.c.l.s4 1966171168
    %v9097 = vunpack.c.0.s8 %v9096
    %v9098 = vlaneseq
    %v9099 = vshrl.u32 %v9098, 7
    %v9100 = vsub.s32 %v9097, %v9099
    %v9101 = vrot.slane %v9079, %v9100
    %v9103 = vunpack.c.l.s4 1966171168
    %v9104 = vunpack.c.0.s8 %v9103
    %v9105 = vlaneseq
    %v9106 = vshrl.u32 %v9105, 7
    %v9107 = vsub.s32 %v9104, %v9106
    %v9108 = vrot.slane %v9080, %v9107
    %v9109 = vcombine.low %v9087, %v9094
    %v9110 = vcombine.low %v9101, %v9108
    %v9112 = vunpack.c.l.s4 1966171168
    %v9113 = vunpack.c.0.s8 %v9112
    %v9114 = vlaneseq
    %v9115 = vshrl.u32 %v9114, 7
    %v9116 = vsub.s32 %v9113, %v9115
    %v9117 = vrot.slane %v9109, %v9116
    %v9119 = vunpack.c.l.s4 1966171168
    %v9120 = vunpack.c.0.s8 %v9119
    %v9121 = vlaneseq
    %v9122 = vshrl.u32 %v9121, 7
    %v9123 = vsub.s32 %v9120, %v9122
    %v9124 = vrot.slane %v9110, %v9123
    %v9125 = vcombine.low %v9117, %v9124
    %9127 = vmatprep.subr.mxu0 %v4960
    %9128 = vmatpush1.msra.mxu0 %v4959
    %9129 = vmatprep.subr.mxu0 %v4964
    %9130 = vmatpush1.msra.mxu0 %v4963
    %9131 = vmatprep.subr.mxu0 %v4968
    %9132 = vmatpush1.msra.mxu0 %v4967
    %9133 = vmatprep.subr.mxu0 %v4972
    %9134 = vmatpush1.msra.mxu0 %v4971
    %9135 = vmatprep.subr.mxu0 %v4976
    %9136 = vmatpush1.msra.mxu0 %v4975
    %9137 = vmatprep.subr.mxu0 %v4980
    %9138 = vmatpush1.msra.mxu0 %v4979
    %9139 = vmatprep.subr.mxu0 %v4984
    %9140 = vmatpush1.msra.mxu0 %v4983
    %9141 = vmatprep.subr.mxu0 %v4988
    %9142 = vmatpush1.msra.mxu0 %v4987
    %9143 = vmatprep.subr.mxu0 %v4992
    %9144 = vmatpush1.msra.mxu0 %v4991
    %9145 = vmatprep.subr.mxu0 %v4996
    %9146 = vmatpush1.msra.mxu0 %v4995
    %9147 = vmatprep.subr.mxu0 %v5000
    %9148 = vmatpush1.msra.mxu0 %v4999
    %9149 = vmatprep.subr.mxu0 %v5004
    %9150 = vmatpush1.msra.mxu0 %v5003
    %9151 = vmatprep.subr.mxu0 %v5008
    %9152 = vmatpush1.msra.mxu0 %v5007
    %9153 = vmatprep.subr.mxu0 %v5012
    %9154 = vmatpush1.msra.mxu0 %v5011
    %9155 = vmatprep.subr.mxu0 %v5016
    %9156 = vmatpush1.msra.mxu0 %v5015
    %9157 = vmatprep.subr.mxu0 %v5020
    %9158 = vmatpush1.msra.mxu0 %v5019
    %9159 = vmatprep.subr.mxu0 0.0
    %9160 = vmatpush1.msra.mxu0 0.0
    %9161 = vmatprep.subr.mxu0 0.0
    %9162 = vmatpush1.msra.mxu0 0.0
    %9163 = vmatprep.subr.mxu0 0.0
    %9164 = vmatpush1.msra.mxu0 0.0
    %9165 = vmatprep.subr.mxu0 0.0
    %9166 = vmatpush1.msra.mxu0 0.0
    %9167 = vmatprep.subr.mxu0 0.0
    %9168 = vmatpush1.msra.mxu0 0.0
    %9169 = vmatprep.subr.mxu0 0.0
    %9170 = vmatpush1.msra.mxu0 0.0
    %9171 = vmatprep.subr.mxu0 0.0
    %9172 = vmatpush1.msra.mxu0 0.0
    %9173 = vmatprep.subr.mxu0 0.0
    %9174 = vmatpush1.msra.mxu0 0.0
    %9175 = vmatprep.subr.mxu0 0.0
    %9176 = vmatpush1.msra.mxu0 0.0
    %9177 = vmatprep.subr.mxu0 0.0
    %9178 = vmatpush1.msra.mxu0 0.0
    %9179 = vmatprep.subr.mxu0 0.0
    %9180 = vmatpush1.msra.mxu0 0.0
    %9181 = vmatprep.subr.mxu0 0.0
    %9182 = vmatpush1.msra.mxu0 0.0
    %9183 = vmatprep.subr.mxu0 0.0
    %9184 = vmatpush1.msra.mxu0 0.0
    %9185 = vmatprep.subr.mxu0 0.0
    %9186 = vmatpush1.msra.mxu0 0.0
    %9187 = vmatprep.subr.mxu0 0.0
    %9188 = vmatpush1.msra.mxu0 0.0
    %9189 = vmatprep.subr.mxu0 0.0
    %9190 = vmatpush1.msra.mxu0 0.0
    %9191 = vmatprep.mubr.f32.mxu0 0.0
    %9192 = vmatmul.mubr.f32.gmra.mrb[0].mxu0 %v9125
    %v9193 = vpop.f32.mrb[0].mxu0
    %v9194 = vadd.f32 0.0, %v9193
    %v9195 = vpop.f32.mrb[0].mxu0
    %v9196 = vadd.f32 0.0, %v9195
    %9197 = vdwg.mxu0
    %9198 = vmatprep.subr.mxu0 %v4962
    %9199 = vmatpush1.msra.mxu0 %v4961
    %9200 = vmatprep.subr.mxu0 %v4966
    %9201 = vmatpush1.msra.mxu0 %v4965
    %9202 = vmatprep.subr.mxu0 %v4970
    %9203 = vmatpush1.msra.mxu0 %v4969
    %9204 = vmatprep.subr.mxu0 %v4974
    %9205 = vmatpush1.msra.mxu0 %v4973
    %9206 = vmatprep.subr.mxu0 %v4978
    %9207 = vmatpush1.msra.mxu0 %v4977
    %9208 = vmatprep.subr.mxu0 %v4982
    %9209 = vmatpush1.msra.mxu0 %v4981
    %9210 = vmatprep.subr.mxu0 %v4986
    %9211 = vmatpush1.msra.mxu0 %v4985
    %9212 = vmatprep.subr.mxu0 %v4990
    %9213 = vmatpush1.msra.mxu0 %v4989
    %9214 = vmatprep.subr.mxu0 %v4994
    %9215 = vmatpush1.msra.mxu0 %v4993
    %9216 = vmatprep.subr.mxu0 %v4998
    %9217 = vmatpush1.msra.mxu0 %v4997
    %9218 = vmatprep.subr.mxu0 %v5002
    %9219 = vmatpush1.msra.mxu0 %v5001
    %9220 = vmatprep.subr.mxu0 %v5006
    %9221 = vmatpush1.msra.mxu0 %v5005
    %9222 = vmatprep.subr.mxu0 %v5010
    %9223 = vmatpush1.msra.mxu0 %v5009
    %9224 = vmatprep.subr.mxu0 %v5014
    %9225 = vmatpush1.msra.mxu0 %v5013
    %9226 = vmatprep.subr.mxu0 %v5018
    %9227 = vmatpush1.msra.mxu0 %v5017
    %9228 = vmatprep.subr.mxu0 %v5022
    %9229 = vmatpush1.msra.mxu0 %v5021
    %9230 = vmatprep.subr.mxu0 0.0
    %9231 = vmatpush1.msra.mxu0 0.0
    %9232 = vmatprep.subr.mxu0 0.0
    %9233 = vmatpush1.msra.mxu0 0.0
    %9234 = vmatprep.subr.mxu0 0.0
    %9235 = vmatpush1.msra.mxu0 0.0
    %9236 = vmatprep.subr.mxu0 0.0
    %9237 = vmatpush1.msra.mxu0 0.0
    %9238 = vmatprep.subr.mxu0 0.0
    %9239 = vmatpush1.msra.mxu0 0.0
    %9240 = vmatprep.subr.mxu0 0.0
    %9241 = vmatpush1.msra.mxu0 0.0
    %9242 = vmatprep.subr.mxu0 0.0
    %9243 = vmatpush1.msra.mxu0 0.0
    %9244 = vmatprep.subr.mxu0 0.0
    %9245 = vmatpush1.msra.mxu0 0.0
    %9246 = vmatprep.subr.mxu0 0.0
    %9247 = vmatpush1.msra.mxu0 0.0
    %9248 = vmatprep.subr.mxu0 0.0
    %9249 = vmatpush1.msra.mxu0 0.0
    %9250 = vmatprep.subr.mxu0 0.0
    %9251 = vmatpush1.msra.mxu0 0.0
    %9252 = vmatprep.subr.mxu0 0.0
    %9253 = vmatpush1.msra.mxu0 0.0
    %9254 = vmatprep.subr.mxu0 0.0
    %9255 = vmatpush1.msra.mxu0 0.0
    %9256 = vmatprep.subr.mxu0 0.0
    %9257 = vmatpush1.msra.mxu0 0.0
    %9258 = vmatprep.subr.mxu0 0.0
    %9259 = vmatpush1.msra.mxu0 0.0
    %9260 = vmatprep.subr.mxu0 0.0
    %9261 = vmatpush1.msra.mxu0 0.0
    %9262 = vmatprep.mubr.f32.mxu0 0.0
    %9263 = vmatmul.mubr.f32.gmra.mrb[0].mxu0 %v9125
    %v9264 = vpop.f32.mrb[0].mxu0
    %v9265 = vadd.f32 0.0, %v9264
    %v9266 = vpop.f32.mrb[0].mxu0
    %v9267 = vadd.f32 0.0, %v9266
    %9268 = vdwg.mxu0
    %v9273 = vcombine.low %v9194, %v9196
    %v9274 = vcombine.high %v9194, %v9196
    %v9275 = vcombine.low %v9265, %v9267
    %v9276 = vcombine.high %v9265, %v9267
    %v9278 = vunpack.c.l.s4 1966171168
    %v9279 = vunpack.c.0.s8 %v9278
    %v9280 = vlaneseq
    %v9281 = vshrl.u32 %v9280, 7
    %v9282 = vsub.s32 %v9279, %v9281
    %v9283 = vrot.slane %v9273, %v9282
    %v9285 = vunpack.c.l.s4 1966171168
    %v9286 = vunpack.c.0.s8 %v9285
    %v9287 = vlaneseq
    %v9288 = vshrl.u32 %v9287, 7
    %v9289 = vsub.s32 %v9286, %v9288
    %v9290 = vrot.slane %v9274, %v9289
    %v9292 = vunpack.c.l.s4 1966171168
    %v9293 = vunpack.c.0.s8 %v9292
    %v9294 = vlaneseq
    %v9295 = vshrl.u32 %v9294, 7
    %v9296 = vsub.s32 %v9293, %v9295
    %v9297 = vrot.slane %v9275, %v9296
    %v9299 = vunpack.c.l.s4 1966171168
    %v9300 = vunpack.c.0.s8 %v9299
    %v9301 = vlaneseq
    %v9302 = vshrl.u32 %v9301, 7
    %v9303 = vsub.s32 %v9300, %v9302
    %v9304 = vrot.slane %v9276, %v9303
    %v9305 = vcombine.low %v9283, %v9297
    %v9306 = vcombine.high %v9283, %v9297
    %v9307 = vcombine.low %v9290, %v9304
    %v9308 = vcombine.high %v9290, %v9304
    %v9310 = vunpack.c.l.s4 1966171168
    %v9311 = vunpack.c.0.s8 %v9310
    %v9312 = vlaneseq
    %v9313 = vshrl.u32 %v9312, 7
    %v9314 = vsub.s32 %v9311, %v9313
    %v9315 = vrot.slane %v9305, %v9314
    %v9317 = vunpack.c.l.s4 1966171168
    %v9318 = vunpack.c.0.s8 %v9317
    %v9319 = vlaneseq
    %v9320 = vshrl.u32 %v9319, 7
    %v9321 = vsub.s32 %v9318, %v9320
    %v9322 = vrot.slane %v9307, %v9321
    %v9324 = vunpack.c.l.s4 1966171168
    %v9325 = vunpack.c.0.s8 %v9324
    %v9326 = vlaneseq
    %v9327 = vshrl.u32 %v9326, 7
    %v9328 = vsub.s32 %v9325, %v9327
    %v9329 = vrot.slane %v9306, %v9328
    %v9331 = vunpack.c.l.s4 1966171168
    %v9332 = vunpack.c.0.s8 %v9331
    %v9333 = vlaneseq
    %v9334 = vshrl.u32 %v9333, 7
    %v9335 = vsub.s32 %v9332, %v9334
    %v9336 = vrot.slane %v9308, %v9335
    %v9337 = vcombine.high %v9315, %v9315
    %v9338 = vcombine.high %v9322, %v9322
    %v9339 = vcombine.high %v9329, %v9329
    %v9340 = vcombine.high %v9336, %v9336
    %v9349 = vadd.f32 %v9061, %v9315
    %v9350 = vadd.f32 %v9062, %v9329
    %v9351 = vadd.f32 %v9063, %v9337
    %v9352 = vadd.f32 %v9064, %v9339
    %v9353 = vadd.f32 %v9065, %v9322
    %v9354 = vadd.f32 %v9066, %v9336
    %v9355 = vadd.f32 %v9067, %v9338
    %v9356 = vadd.f32 %v9068, %v9340
    %v9365 = vrot.slane %v9349, 1
    %v9366 = vrot.slane %v9350, 1
    %v9367 = vrot.slane %v9351, 1
    %v9368 = vrot.slane %v9352, 1
    %v9369 = vrot.slane %v9353, 1
    %v9370 = vrot.slane %v9354, 1
    %v9371 = vrot.slane %v9355, 1
    %v9372 = vrot.slane %v9356, 1
    %v9381 = vxor.u32 %v9365, 2147483648
    %v9382 = vxor.u32 %v9366, 2147483648
    %v9383 = vxor.u32 %v9367, 2147483648
    %v9384 = vxor.u32 %v9368, 2147483648
    %v9385 = vxor.u32 %v9369, 2147483648
    %v9386 = vxor.u32 %v9370, 2147483648
    %v9387 = vxor.u32 %v9371, 2147483648
    %v9388 = vxor.u32 %v9372, 2147483648
    %v9389 = vmul.f32 %v9381, 1.442695
    %v9390 = vpow.pop %v9389
    %v9391 = vmul.f32 %v9382, 1.442695
    %v9392 = vpow.pop %v9391
    %v9393 = vmul.f32 %v9383, 1.442695
    %v9394 = vpow.pop %v9393
    %v9395 = vmul.f32 %v9384, 1.442695
    %v9396 = vpow.pop %v9395
    %v9397 = vmul.f32 %v9385, 1.442695
    %v9398 = vpow.pop %v9397
    %v9399 = vmul.f32 %v9386, 1.442695
    %v9400 = vpow.pop %v9399
    %v9401 = vmul.f32 %v9387, 1.442695
    %v9402 = vpow.pop %v9401
    %v9403 = vmul.f32 %v9388, 1.442695
    %v9404 = vpow.pop %v9403
    %v9405 = vadd.f32 %v9390, 1.0
    %v9406 = vadd.f32 %v9392, 1.0
    %v9407 = vadd.f32 %v9394, 1.0
    %v9408 = vadd.f32 %v9396, 1.0
    %v9409 = vadd.f32 %v9398, 1.0
    %v9410 = vadd.f32 %v9400, 1.0
    %v9411 = vadd.f32 %v9402, 1.0
    %v9412 = vadd.f32 %v9404, 1.0
    %v9413 = vrcp.pop %v9405
    %v9414 = vmul.f32 1.0, %v9413
    %v9415 = vrcp.pop %v9406
    %v9416 = vmul.f32 1.0, %v9415
    %v9417 = vrcp.pop %v9407
    %v9418 = vmul.f32 1.0, %v9417
    %v9419 = vrcp.pop %v9408
    %v9420 = vmul.f32 1.0, %v9419
    %v9421 = vrcp.pop %v9409
    %v9422 = vmul.f32 1.0, %v9421
    %v9423 = vrcp.pop %v9410
    %v9424 = vmul.f32 1.0, %v9423
    %v9425 = vrcp.pop %v9411
    %v9426 = vmul.f32 1.0, %v9425
    %v9427 = vrcp.pop %v9412
    %v9428 = vmul.f32 1.0, %v9427
    %v9429 = vmul.f32 %v9414, %v8973
    %v9430 = vmul.f32 %v9416, %v8974
    %v9431 = vmul.f32 %v9418, %v8975
    %v9432 = vmul.f32 %v9420, %v8976
    %v9433 = vmul.f32 %v9422, %v8977
    %v9434 = vmul.f32 %v9424, %v8978
    %v9435 = vmul.f32 %v9426, %v8979
    %v9436 = vmul.f32 %v9428, %v8980
    %v9437 = vxor.u32 %v9349, 2147483648
    %v9438 = vxor.u32 %v9350, 2147483648
    %v9439 = vxor.u32 %v9351, 2147483648
    %v9440 = vxor.u32 %v9352, 2147483648
    %v9441 = vxor.u32 %v9353, 2147483648
    %v9442 = vxor.u32 %v9354, 2147483648
    %v9443 = vxor.u32 %v9355, 2147483648
    %v9444 = vxor.u32 %v9356, 2147483648
    %v9445 = vmul.f32 %v9437, 1.442695
    %v9446 = vpow.pop %v9445
    %v9447 = vmul.f32 %v9438, 1.442695
    %v9448 = vpow.pop %v9447
    %v9449 = vmul.f32 %v9439, 1.442695
    %v9450 = vpow.pop %v9449
    %v9451 = vmul.f32 %v9440, 1.442695
    %v9452 = vpow.pop %v9451
    %v9453 = vmul.f32 %v9441, 1.442695
    %v9454 = vpow.pop %v9453
    %v9455 = vmul.f32 %v9442, 1.442695
    %v9456 = vpow.pop %v9455
    %v9457 = vmul.f32 %v9443, 1.442695
    %v9458 = vpow.pop %v9457
    %v9459 = vmul.f32 %v9444, 1.442695
    %v9460 = vpow.pop %v9459
    %v9461 = vadd.f32 %v9446, 1.0
    %v9462 = vadd.f32 %v9448, 1.0
    %v9463 = vadd.f32 %v9450, 1.0
    %v9464 = vadd.f32 %v9452, 1.0
    %v9465 = vadd.f32 %v9454, 1.0
    %v9466 = vadd.f32 %v9456, 1.0
    %v9467 = vadd.f32 %v9458, 1.0
    %v9468 = vadd.f32 %v9460, 1.0
    %v9469 = vrcp.pop %v9461
    %v9470 = vmul.f32 1.0, %v9469
    %v9471 = vrcp.pop %v9462
    %v9472 = vmul.f32 1.0, %v9471
    %v9473 = vrcp.pop %v9463
    %v9474 = vmul.f32 1.0, %v9473
    %v9475 = vrcp.pop %v9464
    %v9476 = vmul.f32 1.0, %v9475
    %v9477 = vrcp.pop %v9465
    %v9478 = vmul.f32 1.0, %v9477
    %v9479 = vrcp.pop %v9466
    %v9480 = vmul.f32 1.0, %v9479
    %v9481 = vrcp.pop %v9467
    %v9482 = vmul.f32 1.0, %v9481
    %v9483 = vrcp.pop %v9468
    %v9484 = vmul.f32 1.0, %v9483
    %v9485 = vrot.slane %v9349, 2
    %v9486 = vrot.slane %v9350, 2
    %v9487 = vrot.slane %v9351, 2
    %v9488 = vrot.slane %v9352, 2
    %v9489 = vrot.slane %v9353, 2
    %v9490 = vrot.slane %v9354, 2
    %v9491 = vrot.slane %v9355, 2
    %v9492 = vrot.slane %v9356, 2
    %v9501 = vtanh.pop %v9485
    %v9502 = vtanh.pop %v9486
    %v9503 = vtanh.pop %v9487
    %v9504 = vtanh.pop %v9488
    %v9505 = vtanh.pop %v9489
    %v9506 = vtanh.pop %v9490
    %v9507 = vtanh.pop %v9491
    %v9508 = vtanh.pop %v9492
    %v9509 = vmul.f32 %v9470, %v9501
    %v9510 = vmul.f32 %v9472, %v9502
    %v9511 = vmul.f32 %v9474, %v9503
    %v9512 = vmul.f32 %v9476, %v9504
    %v9513 = vmul.f32 %v9478, %v9505
    %v9514 = vmul.f32 %v9480, %v9506
    %v9515 = vmul.f32 %v9482, %v9507
    %v9516 = vmul.f32 %v9484, %v9508
    %v9517 = vadd.f32 %v9429, %v9509
    %v9518 = vadd.f32 %v9430, %v9510
    %v9519 = vadd.f32 %v9431, %v9511
    %v9520 = vadd.f32 %v9432, %v9512
    %v9521 = vadd.f32 %v9433, %v9513
    %v9522 = vadd.f32 %v9434, %v9514
    %v9523 = vadd.f32 %v9435, %v9515
    %v9524 = vadd.f32 %v9436, %v9516
    %v9525 = vrot.slane %v9349, 3
    %v9526 = vrot.slane %v9350, 3
    %v9527 = vrot.slane %v9351, 3
    %v9528 = vrot.slane %v9352, 3
    %v9529 = vrot.slane %v9353, 3
    %v9530 = vrot.slane %v9354, 3
    %v9531 = vrot.slane %v9355, 3
    %v9532 = vrot.slane %v9356, 3
    %v9541 = vxor.u32 %v9525, 2147483648
    %v9542 = vxor.u32 %v9526, 2147483648
    %v9543 = vxor.u32 %v9527, 2147483648
    %v9544 = vxor.u32 %v9528, 2147483648
    %v9545 = vxor.u32 %v9529, 2147483648
    %v9546 = vxor.u32 %v9530, 2147483648
    %v9547 = vxor.u32 %v9531, 2147483648
    %v9548 = vxor.u32 %v9532, 2147483648
    %v9549 = vmul.f32 %v9541, 1.442695
    %v9550 = vpow.pop %v9549
    %v9551 = vmul.f32 %v9542, 1.442695
    %v9552 = vpow.pop %v9551
    %v9553 = vmul.f32 %v9543, 1.442695
    %v9554 = vpow.pop %v9553
    %v9555 = vmul.f32 %v9544, 1.442695
    %v9556 = vpow.pop %v9555
    %v9557 = vmul.f32 %v9545, 1.442695
    %v9558 = vpow.pop %v9557
    %v9559 = vmul.f32 %v9546, 1.442695
    %v9560 = vpow.pop %v9559
    %v9561 = vmul.f32 %v9547, 1.442695
    %v9562 = vpow.pop %v9561
    %v9563 = vmul.f32 %v9548, 1.442695
    %v9564 = vpow.pop %v9563
    %v9565 = vadd.f32 %v9550, 1.0
    %v9566 = vadd.f32 %v9552, 1.0
    %v9567 = vadd.f32 %v9554, 1.0
    %v9568 = vadd.f32 %v9556, 1.0
    %v9569 = vadd.f32 %v9558, 1.0
    %v9570 = vadd.f32 %v9560, 1.0
    %v9571 = vadd.f32 %v9562, 1.0
    %v9572 = vadd.f32 %v9564, 1.0
    %v9573 = vrcp.pop %v9565
    %v9574 = vmul.f32 1.0, %v9573
    %v9575 = vrcp.pop %v9566
    %v9576 = vmul.f32 1.0, %v9575
    %v9577 = vrcp.pop %v9567
    %v9578 = vmul.f32 1.0, %v9577
    %v9579 = vrcp.pop %v9568
    %v9580 = vmul.f32 1.0, %v9579
    %v9581 = vrcp.pop %v9569
    %v9582 = vmul.f32 1.0, %v9581
    %v9583 = vrcp.pop %v9570
    %v9584 = vmul.f32 1.0, %v9583
    %v9585 = vrcp.pop %v9571
    %v9586 = vmul.f32 1.0, %v9585
    %v9587 = vrcp.pop %v9572
    %v9588 = vmul.f32 1.0, %v9587
    %v9589 = vtanh.pop %v9517
    %v9590 = vtanh.pop %v9518
    %v9591 = vtanh.pop %v9519
    %v9592 = vtanh.pop %v9520
    %v9593 = vtanh.pop %v9521
    %v9594 = vtanh.pop %v9522
    %v9595 = vtanh.pop %v9523
    %v9596 = vtanh.pop %v9524
    %v9597 = vmul.f32 %v9574, %v9589
    %v9598 = vmul.f32 %v9576, %v9590
    %v9599 = vmul.f32 %v9578, %v9591
    %v9600 = vmul.f32 %v9580, %v9592
    %v9601 = vmul.f32 %v9582, %v9593
    %v9602 = vmul.f32 %v9584, %v9594
    %v9603 = vmul.f32 %v9586, %v9595
    %v9604 = vmul.f32 %v9588, %v9596
    %v9613 = vcombine.low %v9597, %v9598
    %v9614 = vcombine.low %v9599, %v9600
    %v9615 = vcombine.low %v9601, %v9602
    %v9616 = vcombine.low %v9603, %v9604
    %v9618 = vunpack.c.l.s4 1966171168
    %v9619 = vunpack.c.0.s8 %v9618
    %v9620 = vlaneseq
    %v9621 = vshrl.u32 %v9620, 7
    %v9622 = vsub.s32 %v9619, %v9621
    %v9623 = vrot.slane %v9613, %v9622
    %v9625 = vunpack.c.l.s4 1966171168
    %v9626 = vunpack.c.0.s8 %v9625
    %v9627 = vlaneseq
    %v9628 = vshrl.u32 %v9627, 7
    %v9629 = vsub.s32 %v9626, %v9628
    %v9630 = vrot.slane %v9614, %v9629
    %v9632 = vunpack.c.l.s4 1966171168
    %v9633 = vunpack.c.0.s8 %v9632
    %v9634 = vlaneseq
    %v9635 = vshrl.u32 %v9634, 7
    %v9636 = vsub.s32 %v9633, %v9635
    %v9637 = vrot.slane %v9615, %v9636
    %v9639 = vunpack.c.l.s4 1966171168
    %v9640 = vunpack.c.0.s8 %v9639
    %v9641 = vlaneseq
    %v9642 = vshrl.u32 %v9641, 7
    %v9643 = vsub.s32 %v9640, %v9642
    %v9644 = vrot.slane %v9616, %v9643
    %v9645 = vcombine.low %v9623, %v9630
    %v9646 = vcombine.low %v9637, %v9644
    %v9648 = vunpack.c.l.s4 1966171168
    %v9649 = vunpack.c.0.s8 %v9648
    %v9650 = vlaneseq
    %v9651 = vshrl.u32 %v9650, 7
    %v9652 = vsub.s32 %v9649, %v9651
    %v9653 = vrot.slane %v9645, %v9652
    %v9655 = vunpack.c.l.s4 1966171168
    %v9656 = vunpack.c.0.s8 %v9655
    %v9657 = vlaneseq
    %v9658 = vshrl.u32 %v9657, 7
    %v9659 = vsub.s32 %v9656, %v9658
    %v9660 = vrot.slane %v9646, %v9659
    %v9661 = vcombine.low %v9653, %v9660
    %9663 = vst [vmem:[%s9] sm:$0xff] %v9661
    %v9664 = vld [vmem:[#allocation9] sm:$0xff]
    %v9665 = vld [vmem:[#allocation9 + $0x8] sm:$0xff]
    %v9666 = vld [vmem:[#allocation9 + $0x10] sm:$0xff]
    %v9667 = vld [vmem:[#allocation9 + $0x18] sm:$0xff]
    %v9668 = vld [vmem:[#allocation9 + $0x20] sm:$0xff]
    %v9669 = vld [vmem:[#allocation9 + $0x28] sm:$0xff]
    %v9670 = vld [vmem:[#allocation9 + $0x30] sm:$0xff]
    %v9671 = vld [vmem:[#allocation9 + $0x38] sm:$0xff]
    %v9672 = vld [vmem:[#allocation9 + $0x40] sm:$0xff]
    %v9673 = vld [vmem:[#allocation9 + $0x48] sm:$0xff]
    %v9674 = vld [vmem:[#allocation9 + $0x50] sm:$0xff]
    %v9675 = vld [vmem:[#allocation9 + $0x58] sm:$0xff]
    %v9676 = vld [vmem:[#allocation9 + $0x60] sm:$0xff]
    %v9677 = vld [vmem:[#allocation9 + $0x68] sm:$0xff]
    %v9678 = vld [vmem:[#allocation9 + $0x70] sm:$0xff]
    %v9679 = vld [vmem:[#allocation9 + $0x78] sm:$0xff]
    %v9680 = vld [vmem:[%s8] sm:$0x1]
    %v9682 = vlaneseq
    %v9683 = vshrl.u32 %v9682, 7
    %v9684 = vsub.s32 0, %v9683
    %v9685 = vrot.slane %v9680, %v9684
    %9687 = vmatprep.subr.mxu0 0.0
    %9688 = vmatpush1.msra.mxu0 %v9664
    %9689 = vmatprep.subr.mxu0 0.0
    %9690 = vmatpush1.msra.mxu0 %v9665
    %9691 = vmatprep.subr.mxu0 0.0
    %9692 = vmatpush1.msra.mxu0 %v9666
    %9693 = vmatprep.subr.mxu0 0.0
    %9694 = vmatpush1.msra.mxu0 %v9667
    %9695 = vmatprep.subr.mxu0 0.0
    %9696 = vmatpush1.msra.mxu0 %v9668
    %9697 = vmatprep.subr.mxu0 0.0
    %9698 = vmatpush1.msra.mxu0 %v9669
    %9699 = vmatprep.subr.mxu0 0.0
    %9700 = vmatpush1.msra.mxu0 %v9670
    %9701 = vmatprep.subr.mxu0 0.0
    %9702 = vmatpush1.msra.mxu0 %v9671
    %9703 = vmatprep.subr.mxu0 0.0
    %9704 = vmatpush1.msra.mxu0 %v9672
    %9705 = vmatprep.subr.mxu0 0.0
    %9706 = vmatpush1.msra.mxu0 %v9673
    %9707 = vmatprep.subr.mxu0 0.0
    %9708 = vmatpush1.msra.mxu0 %v9674
    %9709 = vmatprep.subr.mxu0 0.0
    %9710 = vmatpush1.msra.mxu0 %v9675
    %9711 = vmatprep.subr.mxu0 0.0
    %9712 = vmatpush1.msra.mxu0 %v9676
    %9713 = vmatprep.subr.mxu0 0.0
    %9714 = vmatpush1.msra.mxu0 %v9677
    %9715 = vmatprep.subr.mxu0 0.0
    %9716 = vmatpush1.msra.mxu0 %v9678
    %9717 = vmatprep.subr.mxu0 0.0
    %9718 = vmatpush1.msra.mxu0 %v9679
    %9719 = vmatprep.subr.mxu0 0.0
    %9720 = vmatpush1.msra.mxu0 0.0
    %9721 = vmatprep.subr.mxu0 0.0
    %9722 = vmatpush1.msra.mxu0 0.0
    %9723 = vmatprep.subr.mxu0 0.0
    %9724 = vmatpush1.msra.mxu0 0.0
    %9725 = vmatprep.subr.mxu0 0.0
    %9726 = vmatpush1.msra.mxu0 0.0
    %9727 = vmatprep.subr.mxu0 0.0
    %9728 = vmatpush1.msra.mxu0 0.0
    %9729 = vmatprep.subr.mxu0 0.0
    %9730 = vmatpush1.msra.mxu0 0.0
    %9731 = vmatprep.subr.mxu0 0.0
    %9732 = vmatpush1.msra.mxu0 0.0
    %9733 = vmatprep.subr.mxu0 0.0
    %9734 = vmatpush1.msra.mxu0 0.0
    %9735 = vmatprep.subr.mxu0 0.0
    %9736 = vmatpush1.msra.mxu0 0.0
    %9737 = vmatprep.subr.mxu0 0.0
    %9738 = vmatpush1.msra.mxu0 0.0
    %9739 = vmatprep.subr.mxu0 0.0
    %9740 = vmatpush1.msra.mxu0 0.0
    %9741 = vmatprep.subr.mxu0 0.0
    %9742 = vmatpush1.msra.mxu0 0.0
    %9743 = vmatprep.subr.mxu0 0.0
    %9744 = vmatpush1.msra.mxu0 0.0
    %9745 = vmatprep.subr.mxu0 0.0
    %9746 = vmatpush1.msra.mxu0 0.0
    %9747 = vmatprep.subr.mxu0 0.0
    %9748 = vmatpush1.msra.mxu0 0.0
    %9749 = vmatprep.subr.mxu0 0.0
    %9750 = vmatpush1.msra.mxu0 0.0
    %9751 = vmatprep.mubr.f32.mxu0 0.0
    %9752 = vmatmul.mubr.f32.gmra.mrb[0].mxu0 %v9661
    %v9753 = vpop.f32.mrb[0].mxu0
    %v9754 = vadd.f32 %v9685, %v9753
    %v9755 = vpop.f32.mrb[0].mxu0
    %9756 = vdwg.mxu0
    %9757 = vst [vmem:[%s10] sm:$0xff] %v9754
    // Predicated region
    $region54: #{lstms_forward.1} parent=1 // pred_check
      _
    $region55: #{lstms_forward.1} parent=1 // pred_check_branch
      %9759 = sbr.rel (0) target = $region57
    $region56: #{lstms_forward.1} parent=1 // pred_region
      _
    $region57: #{lstms_forward.1} parent=1 // pred_fallthru
      _
    // Predicated region
    $region58: #{lstms_forward.1} parent=1 // pred_check
      _
    $region59: #{lstms_forward.1} parent=1 // pred_check_branch
      %9761 = sbr.rel (0) target = $region61
    $region60: #{lstms_forward.1} parent=1 // pred_region
      _
    $region61: #{lstms_forward.1} parent=1 // pred_fallthru
      _
    // Predicated region
    $region62: #{lstms_forward.1} parent=1 // pred_check
      _
    $region63: #{lstms_forward.1} parent=1 // pred_check_branch
      %9763 = sbr.rel (0) target = $region65
    $region64: #{lstms_forward.1} parent=1 // pred_region
      _
    $region65: #{lstms_forward.1} parent=1 // pred_fallthru
      _
    // Predicated region
    $region66: #{lstms_forward.1} parent=1 // pred_check
      _
    $region67: #{lstms_forward.1} parent=1 // pred_check_branch
      %9765 = sbr.rel (0) target = $region69
    $region68: #{lstms_forward.1} parent=1 // pred_region
      _
    $region69: #{lstms_forward.1} parent=1 // pred_fallthru
      _
    %9766 = vsyncpa [#allocation5], 1
    %9767 = vsyncpa [#allocation7], 1
    %9768 = vsyncpa [#allocation10], 1

</llo_original>
